<compile_context>
chip_gen: v7x
topology: tpu7x:2x2x1
jax: 0.10.0
libtpu: 0.0.40
codegen_flags: <defaults>
</compile_context>

<pallas_src>
import math
import numpy as np
import jax
import jax.numpy as jnp
from jax import lax
from jax.experimental import pallas as pl
from jax.experimental.pallas import tpu as pltpu

# ---------------- configuration (small, consistent with the module) ----------
B = 2
H = W = 16
DIM = 32                    # dim
HEADS = 2
HEAD_DIM = 16
INNER = HEADS * HEAD_DIM    # = DIM (so residuals line up, like real Swin)
MLP_DIM = 64
WS = 4                      # window_size
S = WS * WS                 # tokens per window
SHIFTED = True
DISP = WS // 2
NW_H = H // WS
NW_W = W // WS
NWIN = NW_H * NW_W
NTOK = H * W                # tokens per batch element (= NWIN * S = 256)
SCALE = HEAD_DIM ** (-0.5)
LN_EPS = 1e-5
BN_EPS = 1e-5
NEG = -1e9                  # finite "-inf": exp underflows to exactly 0 in f32


# ---------------- exact-ish erf / GELU (Eigen/XLA f32 rational approx) -------
def _erf_f32(x):
    # Same rational approximation XLA uses for f32 erf (~1e-7 abs error vs torch.erf).
    a = jnp.clip(x, -4.0, 4.0)
    x2 = a * a
    p = jnp.float32(-2.72614225801306e-10)
    for c in (2.77068142495902e-08, -2.10102402082508e-06, -5.69250639462346e-05,
              -7.34990630326855e-04, -2.95459980854025e-03, -1.60960333262415e-02):
        p = p * x2 + jnp.float32(c)
    p = p * a
    q = jnp.float32(-1.45660718464996e-05)
    for c in (-2.13374055278905e-04, -1.68282697438203e-03,
              -7.37332916720468e-03, -1.42647390514189e-02):
        q = q * x2 + jnp.float32(c)
    return p / q


def _gelu_exact(x):
    # nn.GELU() default (erf-based)
    return 0.5 * x * (1.0 + _erf_f32(x * jnp.float32(1.0 / math.sqrt(2.0))))


# ---------------- fused SwinBlock kernel (one batch element per grid step) ---
def _swin_block_kernel(x_ref, bias_ref, wqkv_ref, bqkv_ref, wout_ref, bout_ref,
                       convw_ref, convm_ref, bnsh_ref,
                       w1_ref, b1_ref, w2_ref, b2_ref, o_ref):
    x = x_ref[0]                                            # (NTOK, DIM), spatial order

    # ---- attention block: Residual(PreNorm(WindowAttention)) -----------------
    mu = jnp.mean(x, axis=-1, keepdims=True)
    var = jnp.mean(jnp.square(x - mu), axis=-1, keepdims=True)
    z = (x - mu) * lax.rsqrt(var + LN_EPS)                  # LN1 affine folded into wqkv

    qkv = jnp.dot(z, wqkv_ref[...], preferred_element_type=jnp.float32) + bqkv_ref[...]
    bias = bias_ref[...]                                    # (NTOK, NTOK) dense window bias

    x1 = x + bout_ref[...]                                  # residual + out-proj bias
    for h in range(HEADS):                                  # 2 heads, fully unrolled
        lo = h * HEAD_DIM
        qh = qkv[:, lo:lo + HEAD_DIM]                       # already scaled by HEAD_DIM**-.5
        kh = qkv[:, INNER + lo:INNER + lo + HEAD_DIM]
        vh = qkv[:, 2 * INNER + lo:2 * INNER + lo + HEAD_DIM]
        # lane-dense (256, 256) scores; the dense bias realises shifted-window masking
        scores = jnp.einsum('qd,kd->qk', qh, kh,
                            preferred_element_type=jnp.float32) + bias
        m = jnp.max(scores, axis=-1, keepdims=True)
        e = jnp.exp(scores - m)
        denom = jnp.sum(e, axis=-1, keepdims=True)
        ctx = jnp.dot(e, vh, preferred_element_type=jnp.float32)
        ctx = ctx * pl.reciprocal(denom, approx=False)      # exact reciprocal (EUP)
        # fold this head's slice of the out-projection (no head concat)
        x1 = x1 + jnp.dot(ctx, wout_ref[lo:lo + HEAD_DIM, :],
                          preferred_element_type=jnp.float32)

    # ---- local_conv: depthwise 3x3 Conv2d + BatchNorm (eval mode, folded) ----
    # TODO(synk): BatchNorm2d is fused with running statistics (eval mode); the
    # training-mode batch-statistics path is not implemented.
    cw = convw_ref[...]                                     # (9, DIM), BN scale folded in
    cm = convm_ref[...]                                     # (NTOK, 9) zero-padding mask
    acc = x1 * cw[4:5, :]                                   # centre tap, always in bounds
    for kh in range(3):
        for kw in range(3):
            t = kh * 3 + kw
            if t == 4:
                continue
            s = (kh - 1) * W + (kw - 1)                     # flat token offset of this tap
            src = pltpu.roll(x1, (-s) % NTOK, axis=0)       # src[i] = x1[(i + s) % NTOK]
            acc = acc + src * cm[:, t:t + 1] * cw[t:t + 1, :]
    x2 = acc + bnsh_ref[...]

    # ---- MLP block: Residual(PreNorm(FeedForward)) ----------------------------
    mu2 = jnp.mean(x2, axis=-1, keepdims=True)
    var2 = jnp.mean(jnp.square(x2 - mu2), axis=-1, keepdims=True)
    z2 = (x2 - mu2) * lax.rsqrt(var2 + LN_EPS)              # LN2 affine folded into w1/b1
    hid = jnp.dot(z2, w1_ref[...], preferred_element_type=jnp.float32) + b1_ref[...]
    hid = _gelu_exact(hid)
    y = jnp.dot(hid, w2_ref[...], preferred_element_type=jnp.float32) + b2_ref[...]
    o_ref[0] = y + x2


# ---------------- host-side constant builders ---------------------------------
def _create_mask_np(ws, disp, upper_lower, left_right):
    ss = ws * ws
    mask = np.zeros((ss, ss), np.float32)
    if upper_lower:
        mask[-disp * ws:, :-disp * ws] = NEG
        mask[:-disp * ws, -disp * ws:] = NEG
    if left_right:
        mask = mask.reshape(ws, ws, ws, ws)
        mask[:, -disp:, :, :-disp] = NEG
        mask[:, :-disp, :, -disp:] = NEG
        mask = mask.reshape(ss, ss)
    return mask


def _build_pos_bias(pos_emb):
    coords = np.array([[i, j] for i in range(WS) for j in range(WS)])
    rel = coords[None, :, :] - coords[:, None, :] + WS - 1          # (S, S, 2)
    return pos_emb[rel[..., 0], rel[..., 1]].astype(np.float32)     # (S, S)


def _build_dense_bias(pos_emb):
    """(NTOK, NTOK) bias in SPATIAL token order.

    bias[p, q] = rel-pos bias + shift mask if p and q share a shifted window, else NEG.
    Adding this to dense 256x256 scores reproduces shifted-window attention exactly
    (masked entries underflow to exactly 0 after the softmax exp).
    """
    pos_bias = _build_pos_bias(pos_emb)
    wm = np.zeros((NW_H, NW_W, S, S), np.float32)
    if SHIFTED:
        wm[-1, :, :, :] += _create_mask_np(WS, DISP, True, False)   # dots[:, :, -nw_w:]
        wm[:, -1, :, :] += _create_mask_np(WS, DISP, False, True)   # dots[:, :, nw_w-1::nw_w]
    small = wm.reshape(NWIN, S, S) + pos_bias[None]

    disp = DISP if SHIFTED else 0
    win = np.zeros(NTOK, np.int64)
    loc = np.zeros(NTOK, np.int64)
    for r in range(H):
        for c in range(W):
            sr, sc = (r - disp) % H, (c - disp) % W                 # shifted coordinates
            win[r * W + c] = (sr // WS) * NW_W + (sc // WS)
            loc[r * W + c] = (sr % WS) * WS + (sc % WS)

    dense = np.full((NTOK, NTOK), NEG, np.float32)
    for p in range(NTOK):
        same = win == win[p]
        dense[p, same] = small[win[p], loc[p], loc[same]]
    return dense


def _build_conv_mask():
    """(NTOK, 9): 1 where the 3x3 tap stays in-bounds (emulates zero padding)."""
    m = np.zeros((NTOK, 9), np.float32)
    for i in range(NTOK):
        h, w = divmod(i, W)
        for kh in range(3):
            for kw in range(3):
                if 0 <= h + kh - 1 < H and 0 <= w + kw - 1 < W:
                    m[i, kh * 3 + kw] = 1.0
    return m


# ---------------- parameters ---------------------------------------------------
def init_raw_params(key):
    """Torch-equivalent raw parameters (LN gamma/beta slightly randomised so the
    host-side constant folding is actually exercised by the self-check)."""
    ks = jax.random.split(key, 16)

    def uni(k, shape, fan_in):
        bound = 1.0 / math.sqrt(fan_in)
        return jax.random.uniform(k, shape, jnp.float32, -bound, bound)

    raw = {}
    raw["ln1_g"] = 1.0 + 0.1 * jax.random.normal(ks[0], (DIM,), jnp.float32)
    raw["ln1_b"] = 0.1 * jax.random.normal(ks[1], (DIM,), jnp.float32)
    raw["wqkv"] = uni(ks[2], (DIM, 3 * INNER), DIM)            # to_qkv (no bias)
    raw["pos_emb"] = jax.random.normal(ks[3], (2 * WS - 1, 2 * WS - 1), jnp.float32)
    raw["wout"] = uni(ks[4], (INNER, DIM), INNER)              # to_out weight
    raw["bout"] = uni(ks[5], (DIM,), INNER)                    # to_out bias
    raw["conv_w"] = uni(ks[6], (3, 3, DIM), 9)                 # depthwise 3x3, per channel
    raw["bn_w"] = jnp.ones((DIM,), jnp.float32)                # bn_weight_init=1
    raw["bn_b"] = jnp.zeros((DIM,), jnp.float32)
    raw["bn_rm"] = 0.1 * jax.random.normal(ks[7], (DIM,), jnp.float32)
    raw["bn_rv"] = 1.0 + 0.1 * jax.random.uniform(ks[8], (DIM,), jnp.float32)
    raw["ln2_g"] = 1.0 + 0.1 * jax.random.normal(ks[9], (DIM,), jnp.float32)
    raw["ln2_b"] = 0.1 * jax.random.normal(ks[10], (DIM,), jnp.float32)
    raw["w1"] = uni(ks[11], (DIM, MLP_DIM), DIM)
    raw["b1"] = uni(ks[12], (MLP_DIM,), DIM)
    raw["w2"] = uni(ks[13], (MLP_DIM, DIM), MLP_DIM)
    raw["b2"] = uni(ks[14], (DIM,), MLP_DIM)
    return raw


def prepare_kernel_params(raw):
    """Host-side constant folding (review item 8) + dense-bias construction."""
    p = {}
    p["attn_bias"] = jnp.asarray(_build_dense_bias(np.asarray(raw["pos_emb"])))

    # LN1 affine + attention scale folded into the QKV projection.
    wqkv_f = raw["wqkv"] * raw["ln1_g"][:, None]
    bqkv_f = raw["ln1_b"] @ raw["wqkv"]
    wqkv_f = wqkv_f.at[:, :INNER].multiply(SCALE)
    bqkv_f = bqkv_f.at[:INNER].multiply(SCALE)
    p["wqkv"] = wqkv_f
    p["bqkv"] = bqkv_f.reshape(1, 3 * INNER)
    p["wout"] = raw["wout"]
    p["bout"] = raw["bout"].reshape(1, DIM)

    # Depthwise conv taps with eval-mode BN scale folded in; BN shift kept as bias.
    bn_scale = raw["bn_w"] / jnp.sqrt(raw["bn_rv"] + BN_EPS)
    p["conv_w9"] = raw["conv_w"].reshape(9, DIM) * bn_scale[None, :]
    p["conv_mask"] = jnp.asarray(_build_conv_mask())
    p["bn_shift"] = (raw["bn_b"] - raw["bn_rm"] * bn_scale).reshape(1, DIM)

    # LN2 affine folded into the first MLP matmul.
    p["w1"] = raw["w1"] * raw["ln2_g"][:, None]
    p["b1"] = (raw["ln2_b"] @ raw["w1"] + raw["b1"]).reshape(1, MLP_DIM)
    p["w2"] = raw["w2"]
    p["b2"] = raw["b2"].reshape(1, DIM)
    return p


# ---------------- JAX wrapper ---------------------------------------------------
def swin_block_forward(x, p):
    xt = x.reshape(B, NTOK, DIM)                              # free contiguous relabel

    def rep(shape):
        return pl.BlockSpec(shape, lambda b, _s=len(shape): (0,) * _s)

    out = pl.pallas_call(
        _swin_block_kernel,
        out_shape=jax.ShapeDtypeStruct((B, NTOK, DIM), jnp.float32),
        grid=(B,),
        in_specs=[
            pl.BlockSpec((1, NTOK, DIM), lambda b: (b, 0, 0)),     # x tokens (spatial order)
            rep((NTOK, NTOK)),                                     # dense attention bias
            rep((DIM, 3 * INNER)),                                 # folded qkv weight
            rep((1, 3 * INNER)),                                   # folded qkv bias
            rep((INNER, DIM)),                                     # out-proj weight
            rep((1, DIM)),                                         # out-proj bias
            rep((9, DIM)),                                         # conv taps (BN folded)
            rep((NTOK, 9)),                                        # conv validity mask
            rep((1, DIM)),                                         # BN shift
            rep((DIM, MLP_DIM)),                                   # folded MLP w1
            rep((1, MLP_DIM)),                                     # folded MLP b1
            rep((MLP_DIM, DIM)),                                   # MLP w2
            rep((1, DIM)),                                         # MLP b2
        ],
        out_specs=pl.BlockSpec((1, NTOK, DIM), lambda b: (b, 0, 0)),
        compiler_params=pltpu.CompilerParams(dimension_semantics=("parallel",)),
    )(xt, p["attn_bias"], p["wqkv"], p["bqkv"], p["wout"], p["bout"],
      p["conv_w9"], p["conv_mask"], p["bn_shift"],
      p["w1"], p["b1"], p["w2"], p["b2"])
    return out.reshape(B, H, W, DIM)


# ---------------- pure-JAX reference of the PyTorch module ----------------------
def _layer_norm(t, g, b):
    mu = jnp.mean(t, axis=-1, keepdims=True)
    var = jnp.mean(jnp.square(t - mu), axis=-1, keepdims=True)
    return (t - mu) * lax.rsqrt(var + LN_EPS) * g + b


def reference_forward(x, raw):
    """Mirror of SwinBlock.forward (eval-mode BatchNorm), used to validate the kernel."""
    with jax.default_matmul_precision("highest"):
        # Residual(PreNorm(WindowAttention))
        xn = _layer_norm(x, raw["ln1_g"], raw["ln1_b"])
        xs = jnp.roll(xn, shift=(-DISP, -DISP), axis=(1, 2)) if SHIFTED else xn
        qkv = jnp.dot(xs, raw["wqkv"])
        q, k, v = jnp.split(qkv, 3, axis=-1)

        def to_win(t):
            t = t.reshape(B, NW_H, WS, NW_W, WS, HEADS, HEAD_DIM)
            t = t.transpose(0, 5, 1, 3, 2, 4, 6)
            return t.reshape(B, HEADS, NWIN, S, HEAD_DIM)

        q, k, v = map(to_win, (q, k, v))
        dots = jnp.einsum('bhwid,bhwjd->bhwij', q, k) * SCALE
        dots = dots + jnp.asarray(_build_pos_bias(np.asarray(raw["pos_emb"])))
        if SHIFTED:
            ul = jnp.asarray(_create_mask_np(WS, DISP, True, False))
            lr = jnp.asarray(_create_mask_np(WS, DISP, False, True))
            dots = dots.at[:, :, -NW_W:].add(ul)
            dots = dots.at[:, :, NW_W - 1::NW_W].add(lr)
        m = jnp.max(dots, axis=-1, keepdims=True)
        e = jnp.exp(dots - m)
        attn = e / jnp.sum(e, axis=-1, keepdims=True)
        out = jnp.einsum('bhwij,bhwjd->bhwid', attn, v)
        out = out.reshape(B, HEADS, NW_H, NW_W, WS, WS, HEAD_DIM)
        out = out.transpose(0, 2, 4, 3, 5, 1, 6).reshape(B, H, W, INNER)
        out = jnp.dot(out, raw["wout"]) + raw["bout"]
        if SHIFTED:
            out = jnp.roll(out, shift=(DISP, DISP), axis=(1, 2))
        x1 = out + x

        # Conv2d_BN (depthwise 3x3, eval-mode BN)
        xp = jnp.pad(x1, ((0, 0), (1, 1), (1, 1), (0, 0)))
        conv = jnp.zeros_like(x1)
        for kh in range(3):
            for kw in range(3):
                conv = conv + xp[:, kh:kh + H, kw:kw + W, :] * raw["conv_w"][kh, kw]
        bn_scale = raw["bn_w"] / jnp.sqrt(raw["bn_rv"] + BN_EPS)
        bn_shift = raw["bn_b"] - raw["bn_rm"] * bn_scale
        x2 = conv * bn_scale + bn_shift

        # Residual(PreNorm(FeedForward))
        x2n = _layer_norm(x2, raw["ln2_g"], raw["ln2_b"])
        hid = jax.nn.gelu(jnp.dot(x2n, raw["w1"]) + raw["b1"], approximate=False)
        y = jnp.dot(hid, raw["w2"]) + raw["b2"]
        return y + x2


if __name__ == "__main__":
    key = jax.random.PRNGKey(0)
    kx, kp = jax.random.split(key)
    x = jax.random.normal(kx, (B, H, W, DIM), jnp.float32)

    raw = init_raw_params(kp)
    kparams = prepare_kernel_params(raw)

    fwd = jax.jit(swin_block_forward)
    y = jax.block_until_ready(fwd(x, kparams))

    assert y.shape == (B, H, W, DIM), y.shape
    assert bool(jnp.all(jnp.isfinite(y))), "non-finite output"

    y_ref = jax.block_until_ready(reference_forward(x, raw))
    err = float(jnp.max(jnp.abs(y - y_ref)))
    assert err < 5e-3, f"kernel/reference mismatch: max abs err = {err}"

    print("KERNEL_OK")
</pallas_src>

<mosaic_0001>
module attributes {stable_mosaic.version = 11 : i64} {
  func.func @_swin_block_kernel(%arg0: i32, %arg1: memref<1x256x32xf32, #tpu.memory_space<vmem>>, %arg2: memref<256x256xf32, #tpu.memory_space<vmem>>, %arg3: memref<32x96xf32, #tpu.memory_space<vmem>>, %arg4: memref<1x96xf32, #tpu.memory_space<vmem>>, %arg5: memref<32x32xf32, #tpu.memory_space<vmem>>, %arg6: memref<1x32xf32, #tpu.memory_space<vmem>>, %arg7: memref<9x32xf32, #tpu.memory_space<vmem>>, %arg8: memref<256x9xf32, #tpu.memory_space<vmem>>, %arg9: memref<1x32xf32, #tpu.memory_space<vmem>>, %arg10: memref<32x64xf32, #tpu.memory_space<vmem>>, %arg11: memref<1x64xf32, #tpu.memory_space<vmem>>, %arg12: memref<64x32xf32, #tpu.memory_space<vmem>>, %arg13: memref<1x32xf32, #tpu.memory_space<vmem>>, %arg14: memref<1x256x32xf32, #tpu.memory_space<vmem>>) attributes {dimension_semantics = [#tpu.dimension_semantics<parallel>], iteration_bounds = array<i64: 2>, scalar_prefetch = 0 : i64, scratch_operands = 0 : i64, tpu.core_type = #tpu.core_type<tc>, window_params = [{transform_indices = @transform_0, window_bounds = array<i64: 1, 256, 32>}, {pipeline_mode = #tpu.pipeline_mode<synchronous>, transform_indices = @transform_1, window_bounds = array<i64: 256, 256>}, {pipeline_mode = #tpu.pipeline_mode<synchronous>, transform_indices = @transform_2, window_bounds = array<i64: 32, 96>}, {pipeline_mode = #tpu.pipeline_mode<synchronous>, transform_indices = @transform_3, window_bounds = array<i64: 1, 96>}, {pipeline_mode = #tpu.pipeline_mode<synchronous>, transform_indices = @transform_4, window_bounds = array<i64: 32, 32>}, {pipeline_mode = #tpu.pipeline_mode<synchronous>, transform_indices = @transform_5, window_bounds = array<i64: 1, 32>}, {pipeline_mode = #tpu.pipeline_mode<synchronous>, transform_indices = @transform_6, window_bounds = array<i64: 9, 32>}, {pipeline_mode = #tpu.pipeline_mode<synchronous>, transform_indices = @transform_7, window_bounds = array<i64: 256, 9>}, {pipeline_mode = #tpu.pipeline_mode<synchronous>, transform_indices = @transform_8, window_bounds = array<i64: 1, 32>}, {pipeline_mode = #tpu.pipeline_mode<synchronous>, transform_indices = @transform_9, window_bounds = array<i64: 32, 64>}, {pipeline_mode = #tpu.pipeline_mode<synchronous>, transform_indices = @transform_10, window_bounds = array<i64: 1, 64>}, {pipeline_mode = #tpu.pipeline_mode<synchronous>, transform_indices = @transform_11, window_bounds = array<i64: 64, 32>}, {pipeline_mode = #tpu.pipeline_mode<synchronous>, transform_indices = @transform_12, window_bounds = array<i64: 1, 32>}, {transform_indices = @transform_13, window_bounds = array<i64: 1, 256, 32>}]} {
    %c0 = arith.constant 0 : index
    %c0_0 = arith.constant 0 : index
    %c0_1 = arith.constant 0 : index
    %0 = vector.load %arg1[%c0, %c0_0, %c0_1] : memref<1x256x32xf32, #tpu.memory_space<vmem>>, vector<1x256x32xf32>
    %1 = vector.shape_cast %0 : vector<1x256x32xf32> to vector<256x32xf32>
    %cst = arith.constant dense<0.000000e+00> : vector<256xf32>
    %2 = vector.multi_reduction <add>, %1, %cst [1] : vector<256x32xf32> to vector<256xf32>
    %3 = vector.shape_cast %2 : vector<256xf32> to vector<256x1xf32>
    %cst_2 = arith.constant 3.200000e+01 : f32
    %4 = vector.broadcast %cst_2 : f32 to vector<256x1xf32>
    %5 = arith.divf %3, %4 : vector<256x1xf32>
    %6 = vector.broadcast %5 : vector<256x1xf32> to vector<256x32xf32>
    %7 = arith.subf %1, %6 : vector<256x32xf32>
    %8 = arith.mulf %7, %7 : vector<256x32xf32>
    %cst_3 = arith.constant dense<0.000000e+00> : vector<256xf32>
    %9 = vector.multi_reduction <add>, %8, %cst_3 [1] : vector<256x32xf32> to vector<256xf32>
    %10 = vector.shape_cast %9 : vector<256xf32> to vector<256x1xf32>
    %cst_4 = arith.constant 3.200000e+01 : f32
    %11 = vector.broadcast %cst_4 : f32 to vector<256x1xf32>
    %12 = arith.divf %10, %11 : vector<256x1xf32>
    %13 = vector.broadcast %5 : vector<256x1xf32> to vector<256x32xf32>
    %14 = arith.subf %1, %13 : vector<256x32xf32>
    %cst_5 = arith.constant 9.99999974E-6 : f32
    %15 = vector.broadcast %cst_5 : f32 to vector<256x1xf32>
    %16 = arith.addf %12, %15 : vector<256x1xf32>
    %17 = math.rsqrt %16 : vector<256x1xf32>
    %18 = vector.broadcast %17 : vector<256x1xf32> to vector<256x32xf32>
    %19 = arith.mulf %14, %18 : vector<256x32xf32>
    %c0_6 = arith.constant 0 : index
    %c0_7 = arith.constant 0 : index
    %20 = vector.load %arg3[%c0_6, %c0_7] : memref<32x96xf32, #tpu.memory_space<vmem>>, vector<32x96xf32>
    %cst_8 = arith.constant dense<0.000000e+00> : vector<256x96xf32>
    %21 = tpu.matmul %19, %20, %cst_8 {dimension_numbers = #tpu.dot_dimension_numbers<[1], [0], [0], [1], [0, 0, 1, 1], [], []>} : vector<256x32xf32>, vector<32x96xf32>, vector<256x96xf32> -> vector<256x96xf32>
    %c0_9 = arith.constant 0 : index
    %c0_10 = arith.constant 0 : index
    %22 = vector.load %arg4[%c0_9, %c0_10] : memref<1x96xf32, #tpu.memory_space<vmem>>, vector<1x96xf32>
    %23 = vector.broadcast %22 : vector<1x96xf32> to vector<256x96xf32>
    %24 = arith.addf %21, %23 : vector<256x96xf32>
    %c0_11 = arith.constant 0 : index
    %c0_12 = arith.constant 0 : index
    %25 = vector.load %arg2[%c0_11, %c0_12] : memref<256x256xf32, #tpu.memory_space<vmem>>, vector<256x256xf32>
    %c0_13 = arith.constant 0 : index
    %c0_14 = arith.constant 0 : index
    %26 = vector.load %arg6[%c0_13, %c0_14] : memref<1x32xf32, #tpu.memory_space<vmem>>, vector<1x32xf32>
    %27 = vector.broadcast %26 : vector<1x32xf32> to vector<256x32xf32>
    %28 = arith.addf %1, %27 : vector<256x32xf32>
    %29 = vector.extract_strided_slice %24 {offsets = [0, 0], sizes = [256, 16], strides = [1, 1]} : vector<256x96xf32> to vector<256x16xf32>
    %30 = vector.extract_strided_slice %24 {offsets = [0, 32], sizes = [256, 16], strides = [1, 1]} : vector<256x96xf32> to vector<256x16xf32>
    %31 = vector.extract_strided_slice %24 {offsets = [0, 64], sizes = [256, 16], strides = [1, 1]} : vector<256x96xf32> to vector<256x16xf32>
    "tpu.trace_start"() <{level = 10 : i32, message = "qd,kd->qk"}> : () -> ()
    %cst_15 = arith.constant dense<0.000000e+00> : vector<256x256xf32>
    %32 = tpu.matmul %29, %30, %cst_15 {dimension_numbers = #tpu.dot_dimension_numbers<[1], [1], [0], [0], [0, 0, 1, 0], [], []>} : vector<256x16xf32>, vector<256x16xf32>, vector<256x256xf32> -> vector<256x256xf32>
    "tpu.trace_stop"() : () -> ()
    %33 = arith.addf %32, %25 : vector<256x256xf32>
    %cst_16 = arith.constant dense<0xFF800000> : vector<256xf32>
    %34 = vector.multi_reduction <maximumf>, %33, %cst_16 [1] : vector<256x256xf32> to vector<256xf32>
    %35 = vector.shape_cast %34 : vector<256xf32> to vector<256x1xf32>
    %36 = vector.broadcast %35 : vector<256x1xf32> to vector<256x256xf32>
    %37 = arith.subf %33, %36 : vector<256x256xf32>
    %38 = math.exp %37 : vector<256x256xf32>
    %cst_17 = arith.constant dense<0.000000e+00> : vector<256xf32>
    %39 = vector.multi_reduction <add>, %38, %cst_17 [1] : vector<256x256xf32> to vector<256xf32>
    %40 = vector.shape_cast %39 : vector<256xf32> to vector<256x1xf32>
    %cst_18 = arith.constant dense<0.000000e+00> : vector<256x16xf32>
    %41 = tpu.matmul %38, %31, %cst_18 {dimension_numbers = #tpu.dot_dimension_numbers<[1], [0], [0], [1], [0, 0, 1, 1], [], []>} : vector<256x256xf32>, vector<256x16xf32>, vector<256x16xf32> -> vector<256x16xf32>
    %42 = tpu.reciprocal %40 : vector<256x1xf32> -> vector<256x1xf32>
    %43 = vector.broadcast %42 : vector<256x1xf32> to vector<256x16xf32>
    %44 = arith.mulf %41, %43 : vector<256x16xf32>
    %c0_19 = arith.constant 0 : index
    %c0_20 = arith.constant 0 : index
    %45 = vector.load %arg5[%c0_19, %c0_20] : memref<32x32xf32, #tpu.memory_space<vmem>>, vector<16x32xf32>
    %cst_21 = arith.constant dense<0.000000e+00> : vector<256x32xf32>
    %46 = tpu.matmul %44, %45, %cst_21 {dimension_numbers = #tpu.dot_dimension_numbers<[1], [0], [0], [1], [0, 0, 1, 1], [], []>} : vector<256x16xf32>, vector<16x32xf32>, vector<256x32xf32> -> vector<256x32xf32>
    %47 = arith.addf %28, %46 : vector<256x32xf32>
    %48 = vector.extract_strided_slice %24 {offsets = [0, 16], sizes = [256, 16], strides = [1, 1]} : vector<256x96xf32> to vector<256x16xf32>
    %49 = vector.extract_strided_slice %24 {offsets = [0, 48], sizes = [256, 16], strides = [1, 1]} : vector<256x96xf32> to vector<256x16xf32>
    %50 = vector.extract_strided_slice %24 {offsets = [0, 80], sizes = [256, 16], strides = [1, 1]} : vector<256x96xf32> to vector<256x16xf32>
    "tpu.trace_start"() <{level = 10 : i32, message = "qd,kd->qk"}> : () -> ()
    %cst_22 = arith.constant dense<0.000000e+00> : vector<256x256xf32>
    %51 = tpu.matmul %48, %49, %cst_22 {dimension_numbers = #tpu.dot_dimension_numbers<[1], [1], [0], [0], [0, 0, 1, 0], [], []>} : vector<256x16xf32>, vector<256x16xf32>, vector<256x256xf32> -> vector<256x256xf32>
    "tpu.trace_stop"() : () -> ()
    %52 = arith.addf %51, %25 : vector<256x256xf32>
    %cst_23 = arith.constant dense<0xFF800000> : vector<256xf32>
    %53 = vector.multi_reduction <maximumf>, %52, %cst_23 [1] : vector<256x256xf32> to vector<256xf32>
    %54 = vector.shape_cast %53 : vector<256xf32> to vector<256x1xf32>
    %55 = vector.broadcast %54 : vector<256x1xf32> to vector<256x256xf32>
    %56 = arith.subf %52, %55 : vector<256x256xf32>
    %57 = math.exp %56 : vector<256x256xf32>
    %cst_24 = arith.constant dense<0.000000e+00> : vector<256xf32>
    %58 = vector.multi_reduction <add>, %57, %cst_24 [1] : vector<256x256xf32> to vector<256xf32>
    %59 = vector.shape_cast %58 : vector<256xf32> to vector<256x1xf32>
    %cst_25 = arith.constant dense<0.000000e+00> : vector<256x16xf32>
    %60 = tpu.matmul %57, %50, %cst_25 {dimension_numbers = #tpu.dot_dimension_numbers<[1], [0], [0], [1], [0, 0, 1, 1], [], []>} : vector<256x256xf32>, vector<256x16xf32>, vector<256x16xf32> -> vector<256x16xf32>
    %61 = tpu.reciprocal %59 : vector<256x1xf32> -> vector<256x1xf32>
    %62 = vector.broadcast %61 : vector<256x1xf32> to vector<256x16xf32>
    %63 = arith.mulf %60, %62 : vector<256x16xf32>
    %c16 = arith.constant 16 : index
    %c0_26 = arith.constant 0 : index
    %64 = vector.load %arg5[%c16, %c0_26] : memref<32x32xf32, #tpu.memory_space<vmem>>, vector<16x32xf32>
    %cst_27 = arith.constant dense<0.000000e+00> : vector<256x32xf32>
    %65 = tpu.matmul %63, %64, %cst_27 {dimension_numbers = #tpu.dot_dimension_numbers<[1], [0], [0], [1], [0, 0, 1, 1], [], []>} : vector<256x16xf32>, vector<16x32xf32>, vector<256x32xf32> -> vector<256x32xf32>
    %66 = arith.addf %47, %65 : vector<256x32xf32>
    %c0_28 = arith.constant 0 : index
    %c0_29 = arith.constant 0 : index
    %67 = vector.load %arg7[%c0_28, %c0_29] : memref<9x32xf32, #tpu.memory_space<vmem>>, vector<9x32xf32>
    %c0_30 = arith.constant 0 : index
    %c0_31 = arith.constant 0 : index
    %68 = vector.load %arg8[%c0_30, %c0_31] : memref<256x9xf32, #tpu.memory_space<vmem>>, vector<256x9xf32>
    %69 = vector.extract_strided_slice %67 {offsets = [4, 0], sizes = [1, 32], strides = [1, 1]} : vector<9x32xf32> to vector<1x32xf32>
    %70 = vector.broadcast %69 : vector<1x32xf32> to vector<256x32xf32>
    %71 = arith.mulf %66, %70 : vector<256x32xf32>
    %c17_i32 = arith.constant 17 : i32
    %72 = tpu.dynamic_rotate %66 by %c17_i32 dim 0 : vector<256x32xf32>, i32 -> vector<256x32xf32>
    %73 = vector.extract_strided_slice %68 {offsets = [0, 0], sizes = [256, 1], strides = [1, 1]} : vector<256x9xf32> to vector<256x1xf32>
    %74 = vector.broadcast %73 : vector<256x1xf32> to vector<256x32xf32>
    %75 = arith.mulf %72, %74 : vector<256x32xf32>
    %76 = vector.extract_strided_slice %67 {offsets = [0, 0], sizes = [1, 32], strides = [1, 1]} : vector<9x32xf32> to vector<1x32xf32>
    %77 = vector.broadcast %76 : vector<1x32xf32> to vector<256x32xf32>
    %78 = arith.mulf %75, %77 : vector<256x32xf32>
    %79 = arith.addf %71, %78 : vector<256x32xf32>
    %c16_i32 = arith.constant 16 : i32
    %80 = tpu.dynamic_rotate %66 by %c16_i32 dim 0 : vector<256x32xf32>, i32 -> vector<256x32xf32>
    %81 = vector.extract_strided_slice %68 {offsets = [0, 1], sizes = [256, 1], strides = [1, 1]} : vector<256x9xf32> to vector<256x1xf32>
    %82 = vector.broadcast %81 : vector<256x1xf32> to vector<256x32xf32>
    %83 = arith.mulf %80, %82 : vector<256x32xf32>
    %84 = vector.extract_strided_slice %67 {offsets = [1, 0], sizes = [1, 32], strides = [1, 1]} : vector<9x32xf32> to vector<1x32xf32>
    %85 = vector.broadcast %84 : vector<1x32xf32> to vector<256x32xf32>
    %86 = arith.mulf %83, %85 : vector<256x32xf32>
    %87 = arith.addf %79, %86 : vector<256x32xf32>
    %c15_i32 = arith.constant 15 : i32
    %88 = tpu.dynamic_rotate %66 by %c15_i32 dim 0 : vector<256x32xf32>, i32 -> vector<256x32xf32>
    %89 = vector.extract_strided_slice %68 {offsets = [0, 2], sizes = [256, 1], strides = [1, 1]} : vector<256x9xf32> to vector<256x1xf32>
    %90 = vector.broadcast %89 : vector<256x1xf32> to vector<256x32xf32>
    %91 = arith.mulf %88, %90 : vector<256x32xf32>
    %92 = vector.extract_strided_slice %67 {offsets = [2, 0], sizes = [1, 32], strides = [1, 1]} : vector<9x32xf32> to vector<1x32xf32>
    %93 = vector.broadcast %92 : vector<1x32xf32> to vector<256x32xf32>
    %94 = arith.mulf %91, %93 : vector<256x32xf32>
    %95 = arith.addf %87, %94 : vector<256x32xf32>
    %c1_i32 = arith.constant 1 : i32
    %96 = tpu.dynamic_rotate %66 by %c1_i32 dim 0 : vector<256x32xf32>, i32 -> vector<256x32xf32>
    %97 = vector.extract_strided_slice %68 {offsets = [0, 3], sizes = [256, 1], strides = [1, 1]} : vector<256x9xf32> to vector<256x1xf32>
    %98 = vector.broadcast %97 : vector<256x1xf32> to vector<256x32xf32>
    %99 = arith.mulf %96, %98 : vector<256x32xf32>
    %100 = vector.extract_strided_slice %67 {offsets = [3, 0], sizes = [1, 32], strides = [1, 1]} : vector<9x32xf32> to vector<1x32xf32>
    %101 = vector.broadcast %100 : vector<1x32xf32> to vector<256x32xf32>
    %102 = arith.mulf %99, %101 : vector<256x32xf32>
    %103 = arith.addf %95, %102 : vector<256x32xf32>
    %c255_i32 = arith.constant 255 : i32
    %104 = tpu.dynamic_rotate %66 by %c255_i32 dim 0 : vector<256x32xf32>, i32 -> vector<256x32xf32>
    %105 = vector.extract_strided_slice %68 {offsets = [0, 5], sizes = [256, 1], strides = [1, 1]} : vector<256x9xf32> to vector<256x1xf32>
    %106 = vector.broadcast %105 : vector<256x1xf32> to vector<256x32xf32>
    %107 = arith.mulf %104, %106 : vector<256x32xf32>
    %108 = vector.extract_strided_slice %67 {offsets = [5, 0], sizes = [1, 32], strides = [1, 1]} : vector<9x32xf32> to vector<1x32xf32>
    %109 = vector.broadcast %108 : vector<1x32xf32> to vector<256x32xf32>
    %110 = arith.mulf %107, %109 : vector<256x32xf32>
    %111 = arith.addf %103, %110 : vector<256x32xf32>
    %c241_i32 = arith.constant 241 : i32
    %112 = tpu.dynamic_rotate %66 by %c241_i32 dim 0 : vector<256x32xf32>, i32 -> vector<256x32xf32>
    %113 = vector.extract_strided_slice %68 {offsets = [0, 6], sizes = [256, 1], strides = [1, 1]} : vector<256x9xf32> to vector<256x1xf32>
    %114 = vector.broadcast %113 : vector<256x1xf32> to vector<256x32xf32>
    %115 = arith.mulf %112, %114 : vector<256x32xf32>
    %116 = vector.extract_strided_slice %67 {offsets = [6, 0], sizes = [1, 32], strides = [1, 1]} : vector<9x32xf32> to vector<1x32xf32>
    %117 = vector.broadcast %116 : vector<1x32xf32> to vector<256x32xf32>
    %118 = arith.mulf %115, %117 : vector<256x32xf32>
    %119 = arith.addf %111, %118 : vector<256x32xf32>
    %c240_i32 = arith.constant 240 : i32
    %120 = tpu.dynamic_rotate %66 by %c240_i32 dim 0 : vector<256x32xf32>, i32 -> vector<256x32xf32>
    %121 = vector.extract_strided_slice %68 {offsets = [0, 7], sizes = [256, 1], strides = [1, 1]} : vector<256x9xf32> to vector<256x1xf32>
    %122 = vector.broadcast %121 : vector<256x1xf32> to vector<256x32xf32>
    %123 = arith.mulf %120, %122 : vector<256x32xf32>
    %124 = vector.extract_strided_slice %67 {offsets = [7, 0], sizes = [1, 32], strides = [1, 1]} : vector<9x32xf32> to vector<1x32xf32>
    %125 = vector.broadcast %124 : vector<1x32xf32> to vector<256x32xf32>
    %126 = arith.mulf %123, %125 : vector<256x32xf32>
    %127 = arith.addf %119, %126 : vector<256x32xf32>
    %c239_i32 = arith.constant 239 : i32
    %128 = tpu.dynamic_rotate %66 by %c239_i32 dim 0 : vector<256x32xf32>, i32 -> vector<256x32xf32>
    %129 = vector.extract_strided_slice %68 {offsets = [0, 8], sizes = [256, 1], strides = [1, 1]} : vector<256x9xf32> to vector<256x1xf32>
    %130 = vector.broadcast %129 : vector<256x1xf32> to vector<256x32xf32>
    %131 = arith.mulf %128, %130 : vector<256x32xf32>
    %132 = vector.extract_strided_slice %67 {offsets = [8, 0], sizes = [1, 32], strides = [1, 1]} : vector<9x32xf32> to vector<1x32xf32>
    %133 = vector.broadcast %132 : vector<1x32xf32> to vector<256x32xf32>
    %134 = arith.mulf %131, %133 : vector<256x32xf32>
    %135 = arith.addf %127, %134 : vector<256x32xf32>
    %c0_32 = arith.constant 0 : index
    %c0_33 = arith.constant 0 : index
    %136 = vector.load %arg9[%c0_32, %c0_33] : memref<1x32xf32, #tpu.memory_space<vmem>>, vector<1x32xf32>
    %137 = vector.broadcast %136 : vector<1x32xf32> to vector<256x32xf32>
    %138 = arith.addf %135, %137 : vector<256x32xf32>
    %cst_34 = arith.constant dense<0.000000e+00> : vector<256xf32>
    %139 = vector.multi_reduction <add>, %138, %cst_34 [1] : vector<256x32xf32> to vector<256xf32>
    %140 = vector.shape_cast %139 : vector<256xf32> to vector<256x1xf32>
    %cst_35 = arith.constant 3.200000e+01 : f32
    %141 = vector.broadcast %cst_35 : f32 to vector<256x1xf32>
    %142 = arith.divf %140, %141 : vector<256x1xf32>
    %143 = vector.broadcast %142 : vector<256x1xf32> to vector<256x32xf32>
    %144 = arith.subf %138, %143 : vector<256x32xf32>
    %145 = arith.mulf %144, %144 : vector<256x32xf32>
    %cst_36 = arith.constant dense<0.000000e+00> : vector<256xf32>
    %146 = vector.multi_reduction <add>, %145, %cst_36 [1] : vector<256x32xf32> to vector<256xf32>
    %147 = vector.shape_cast %146 : vector<256xf32> to vector<256x1xf32>
    %cst_37 = arith.constant 3.200000e+01 : f32
    %148 = vector.broadcast %cst_37 : f32 to vector<256x1xf32>
    %149 = arith.divf %147, %148 : vector<256x1xf32>
    %150 = vector.broadcast %142 : vector<256x1xf32> to vector<256x32xf32>
    %151 = arith.subf %138, %150 : vector<256x32xf32>
    %cst_38 = arith.constant 9.99999974E-6 : f32
    %152 = vector.broadcast %cst_38 : f32 to vector<256x1xf32>
    %153 = arith.addf %149, %152 : vector<256x1xf32>
    %154 = math.rsqrt %153 : vector<256x1xf32>
    %155 = vector.broadcast %154 : vector<256x1xf32> to vector<256x32xf32>
    %156 = arith.mulf %151, %155 : vector<256x32xf32>
    %c0_39 = arith.constant 0 : index
    %c0_40 = arith.constant 0 : index
    %157 = vector.load %arg10[%c0_39, %c0_40] : memref<32x64xf32, #tpu.memory_space<vmem>>, vector<32x64xf32>
    %cst_41 = arith.constant dense<0.000000e+00> : vector<256x64xf32>
    %158 = tpu.matmul %156, %157, %cst_41 {dimension_numbers = #tpu.dot_dimension_numbers<[1], [0], [0], [1], [0, 0, 1, 1], [], []>} : vector<256x32xf32>, vector<32x64xf32>, vector<256x64xf32> -> vector<256x64xf32>
    %c0_42 = arith.constant 0 : index
    %c0_43 = arith.constant 0 : index
    %159 = vector.load %arg11[%c0_42, %c0_43] : memref<1x64xf32, #tpu.memory_space<vmem>>, vector<1x64xf32>
    %160 = vector.broadcast %159 : vector<1x64xf32> to vector<256x64xf32>
    %161 = arith.addf %158, %160 : vector<256x64xf32>
    %cst_44 = arith.constant 5.000000e-01 : f32
    %162 = vector.broadcast %cst_44 : f32 to vector<256x64xf32>
    %163 = arith.mulf %162, %161 : vector<256x64xf32>
    %cst_45 = arith.constant 0.707106769 : f32
    %164 = vector.broadcast %cst_45 : f32 to vector<256x64xf32>
    %165 = arith.mulf %161, %164 : vector<256x64xf32>
    %cst_46 = arith.constant -4.000000e+00 : f32
    %cst_47 = arith.constant 4.000000e+00 : f32
    %166 = vector.broadcast %cst_46 : f32 to vector<256x64xf32>
    %167 = arith.maximumf %166, %165 : vector<256x64xf32>
    %168 = vector.broadcast %cst_47 : f32 to vector<256x64xf32>
    %169 = arith.minimumf %168, %167 : vector<256x64xf32>
    %170 = arith.mulf %169, %169 : vector<256x64xf32>
    %cst_48 = arith.constant -2.72614237E-10 : f32
    %171 = vector.broadcast %cst_48 : f32 to vector<256x64xf32>
    %172 = arith.mulf %171, %170 : vector<256x64xf32>
    %cst_49 = arith.constant 2.77068146E-8 : f32
    %173 = vector.broadcast %cst_49 : f32 to vector<256x64xf32>
    %174 = arith.addf %172, %173 : vector<256x64xf32>
    %175 = arith.mulf %174, %170 : vector<256x64xf32>
    %cst_50 = arith.constant -2.10102394E-6 : f32
    %176 = vector.broadcast %cst_50 : f32 to vector<256x64xf32>
    %177 = arith.addf %175, %176 : vector<256x64xf32>
    %178 = arith.mulf %177, %170 : vector<256x64xf32>
    %cst_51 = arith.constant -5.69250624E-5 : f32
    %179 = vector.broadcast %cst_51 : f32 to vector<256x64xf32>
    %180 = arith.addf %178, %179 : vector<256x64xf32>
    %181 = arith.mulf %180, %170 : vector<256x64xf32>
    %cst_52 = arith.constant -7.34990637E-4 : f32
    %182 = vector.broadcast %cst_52 : f32 to vector<256x64xf32>
    %183 = arith.addf %181, %182 : vector<256x64xf32>
    %184 = arith.mulf %183, %170 : vector<256x64xf32>
    %cst_53 = arith.constant -2.954600e-03 : f32
    %185 = vector.broadcast %cst_53 : f32 to vector<256x64xf32>
    %186 = arith.addf %184, %185 : vector<256x64xf32>
    %187 = arith.mulf %186, %170 : vector<256x64xf32>
    %cst_54 = arith.constant -0.0160960332 : f32
    %188 = vector.broadcast %cst_54 : f32 to vector<256x64xf32>
    %189 = arith.addf %187, %188 : vector<256x64xf32>
    %190 = arith.mulf %189, %169 : vector<256x64xf32>
    %cst_55 = arith.constant -1.45660715E-5 : f32
    %191 = vector.broadcast %cst_55 : f32 to vector<256x64xf32>
    %192 = arith.mulf %191, %170 : vector<256x64xf32>
    %cst_56 = arith.constant -2.13374049E-4 : f32
    %193 = vector.broadcast %cst_56 : f32 to vector<256x64xf32>
    %194 = arith.addf %192, %193 : vector<256x64xf32>
    %195 = arith.mulf %194, %170 : vector<256x64xf32>
    %cst_57 = arith.constant -0.00168282702 : f32
    %196 = vector.broadcast %cst_57 : f32 to vector<256x64xf32>
    %197 = arith.addf %195, %196 : vector<256x64xf32>
    %198 = arith.mulf %197, %170 : vector<256x64xf32>
    %cst_58 = arith.constant -0.00737332925 : f32
    %199 = vector.broadcast %cst_58 : f32 to vector<256x64xf32>
    %200 = arith.addf %198, %199 : vector<256x64xf32>
    %201 = arith.mulf %200, %170 : vector<256x64xf32>
    %cst_59 = arith.constant -0.0142647391 : f32
    %202 = vector.broadcast %cst_59 : f32 to vector<256x64xf32>
    %203 = arith.addf %201, %202 : vector<256x64xf32>
    %204 = arith.divf %190, %203 : vector<256x64xf32>
    %cst_60 = arith.constant 1.000000e+00 : f32
    %205 = vector.broadcast %cst_60 : f32 to vector<256x64xf32>
    %206 = arith.addf %205, %204 : vector<256x64xf32>
    %207 = arith.mulf %163, %206 : vector<256x64xf32>
    %c0_61 = arith.constant 0 : index
    %c0_62 = arith.constant 0 : index
    %208 = vector.load %arg12[%c0_61, %c0_62] : memref<64x32xf32, #tpu.memory_space<vmem>>, vector<64x32xf32>
    %cst_63 = arith.constant dense<0.000000e+00> : vector<256x32xf32>
    %209 = tpu.matmul %207, %208, %cst_63 {dimension_numbers = #tpu.dot_dimension_numbers<[1], [0], [0], [1], [0, 0, 1, 1], [], []>} : vector<256x64xf32>, vector<64x32xf32>, vector<256x32xf32> -> vector<256x32xf32>
    %c0_64 = arith.constant 0 : index
    %c0_65 = arith.constant 0 : index
    %210 = vector.load %arg13[%c0_64, %c0_65] : memref<1x32xf32, #tpu.memory_space<vmem>>, vector<1x32xf32>
    %211 = vector.broadcast %210 : vector<1x32xf32> to vector<256x32xf32>
    %212 = arith.addf %209, %211 : vector<256x32xf32>
    %213 = arith.addf %212, %138 : vector<256x32xf32>
    %c0_66 = arith.constant 0 : index
    %c0_67 = arith.constant 0 : index
    %c0_68 = arith.constant 0 : index
    %214 = vector.load %arg14[%c0_66, %c0_67, %c0_68] : memref<1x256x32xf32, #tpu.memory_space<vmem>>, vector<1x256x32xf32>
    %215 = vector.shape_cast %214 : vector<1x256x32xf32> to vector<256x32xf32>
    %216 = vector.shape_cast %213 : vector<256x32xf32> to vector<1x256x32xf32>
    tpu.vector_store %arg14[%c0_66, %c0_67, %c0_68], %216 {strides = array<i32>} : memref<1x256x32xf32, #tpu.memory_space<vmem>>, vector<1x256x32xf32>,
    return
  }
  func.func @transform_0(%arg0: i32) -> (i32, i32, i32) {
    %c0_i32 = arith.constant 0 : i32
    %c0_i32_0 = arith.constant 0 : i32
    %c0_i32_1 = arith.constant 0 : i32
    return %arg0, %c0_i32, %c0_i32_0 : i32, i32, i32
  }
  func.func @transform_1(%arg0: i32) -> (i32, i32) {
    %c0_i32 = arith.constant 0 : i32
    %c0_i32_0 = arith.constant 0 : i32
    %c0_i32_1 = arith.constant 0 : i32
    return %c0_i32, %c0_i32_0 : i32, i32
  }
  func.func @transform_2(%arg0: i32) -> (i32, i32) {
    %c0_i32 = arith.constant 0 : i32
    %c0_i32_0 = arith.constant 0 : i32
    %c0_i32_1 = arith.constant 0 : i32
    return %c0_i32, %c0_i32_0 : i32, i32
  }
  func.func @transform_3(%arg0: i32) -> (i32, i32) {
    %c0_i32 = arith.constant 0 : i32
    %c0_i32_0 = arith.constant 0 : i32
    %c0_i32_1 = arith.constant 0 : i32
    return %c0_i32, %c0_i32_0 : i32, i32
  }
  func.func @transform_4(%arg0: i32) -> (i32, i32) {
    %c0_i32 = arith.constant 0 : i32
    %c0_i32_0 = arith.constant 0 : i32
    %c0_i32_1 = arith.constant 0 : i32
    return %c0_i32, %c0_i32_0 : i32, i32
  }
  func.func @transform_5(%arg0: i32) -> (i32, i32) {
    %c0_i32 = arith.constant 0 : i32
    %c0_i32_0 = arith.constant 0 : i32
    %c0_i32_1 = arith.constant 0 : i32
    return %c0_i32, %c0_i32_0 : i32, i32
  }
  func.func @transform_6(%arg0: i32) -> (i32, i32) {
    %c0_i32 = arith.constant 0 : i32
    %c0_i32_0 = arith.constant 0 : i32
    %c0_i32_1 = arith.constant 0 : i32
    return %c0_i32, %c0_i32_0 : i32, i32
  }
  func.func @transform_7(%arg0: i32) -> (i32, i32) {
    %c0_i32 = arith.constant 0 : i32
    %c0_i32_0 = arith.constant 0 : i32
    %c0_i32_1 = arith.constant 0 : i32
    return %c0_i32, %c0_i32_0 : i32, i32
  }
  func.func @transform_8(%arg0: i32) -> (i32, i32) {
    %c0_i32 = arith.constant 0 : i32
    %c0_i32_0 = arith.constant 0 : i32
    %c0_i32_1 = arith.constant 0 : i32
    return %c0_i32, %c0_i32_0 : i32, i32
  }
  func.func @transform_9(%arg0: i32) -> (i32, i32) {
    %c0_i32 = arith.constant 0 : i32
    %c0_i32_0 = arith.constant 0 : i32
    %c0_i32_1 = arith.constant 0 : i32
    return %c0_i32, %c0_i32_0 : i32, i32
  }
  func.func @transform_10(%arg0: i32) -> (i32, i32) {
    %c0_i32 = arith.constant 0 : i32
    %c0_i32_0 = arith.constant 0 : i32
    %c0_i32_1 = arith.constant 0 : i32
    return %c0_i32, %c0_i32_0 : i32, i32
  }
  func.func @transform_11(%arg0: i32) -> (i32, i32) {
    %c0_i32 = arith.constant 0 : i32
    %c0_i32_0 = arith.constant 0 : i32
    %c0_i32_1 = arith.constant 0 : i32
    return %c0_i32, %c0_i32_0 : i32, i32
  }
  func.func @transform_12(%arg0: i32) -> (i32, i32) {
    %c0_i32 = arith.constant 0 : i32
    %c0_i32_0 = arith.constant 0 : i32
    %c0_i32_1 = arith.constant 0 : i32
    return %c0_i32, %c0_i32_0 : i32, i32
  }
  func.func @transform_13(%arg0: i32) -> (i32, i32, i32) {
    %c0_i32 = arith.constant 0 : i32
    %c0_i32_0 = arith.constant 0 : i32
    %c0_i32_1 = arith.constant 0 : i32
    return %arg0, %c0_i32, %c0_i32_0 : i32, i32, i32
  }
}

</mosaic_0001>

<llo_original>
// kernel: swin_block_forward.1
$region0: #{swin_block_forward.1}
  #allocation0 [shape = 'u32[]', space=smem, size = 0x4, offset = 0x4, fixed_abs, tag = 'smem constant byte address 0x4 - core index']
  #allocation1 [shape = 'u32[144,128]{1,0:T(1,128)}', space=vmem, size = 0x12000, scoped, tag = 'internal scratch']
  %s0 = inlined_call_operand.hbm [shape: f32[2,256,32], index: 0, kind: input, shape index: {}]
  %s1 = inlined_call_operand.hbm [shape: f32[256,256], index: 1, kind: input, shape index: {}]
  %s2 = inlined_call_operand.vmem [shape: f32[32,96], index: 2, kind: input, shape index: {}]
  %s3 = inlined_call_operand.vmem [shape: f32[1,96], index: 3, kind: input, shape index: {}]
  %s4 = inlined_call_operand.vmem [shape: f32[32,32], index: 4, kind: input, shape index: {}]
  %s5 = inlined_call_operand.vmem [shape: f32[1,32], index: 5, kind: input, shape index: {}]
  %s6 = inlined_call_operand.vmem [shape: f32[9,32], index: 6, kind: input, shape index: {}]
  %s7 = inlined_call_operand.vmem [shape: f32[256,9], index: 7, kind: input, shape index: {}]
  %s8 = inlined_call_operand.vmem [shape: f32[1,32], index: 8, kind: input, shape index: {}]
  %s9 = inlined_call_operand.vmem [shape: f32[32,64], index: 9, kind: input, shape index: {}]
  %s10 = inlined_call_operand.vmem [shape: f32[1,64], index: 10, kind: input, shape index: {}]
  %s11 = inlined_call_operand.vmem [shape: f32[64,32], index: 11, kind: input, shape index: {}]
  %s12 = inlined_call_operand.vmem [shape: f32[1,32], index: 12, kind: input, shape index: {}]
  %s13 = inlined_call_operand.hbm [shape: f32[2,256,32], index: 13, kind: output, shape index: {}]
  %s14 = sld [smem:[#allocation0]]
  $region93: #{swin_block_forward.1} parent=0
    _
  %s16 = ssub.s32 1, %s14
  %s17 = scalar_select 0, %s16, %s14
  $region1: #{swin_block_forward.1} parent=0
    #allocation2 [shape = 'u8[262144]{0}', space=vmem, size = 0x40000, scoped, tag = 'input window, operand 0']
    #allocation3 [shape = 's32[2]{0}', space=sflag, size = 0x8, scoped, tag = 'scoped memory for swin_block_forward.1']
    #allocation4 [shape = 's32[2]{0}', space=sflag, size = 0x8, scoped, tag = 'scoped memory for swin_block_forward.1']
    #allocation5 [shape = 'u8[262144]{0}', space=vmem, size = 0x40000, scoped, tag = 'input window, operand 1, single buffered']
    #allocation6 [shape = 's32[1]{0}', space=sflag, size = 0x4, scoped, tag = 'scoped memory for swin_block_forward.1']
    #allocation7 [shape = 'u8[262144]{0}', space=vmem, size = 0x40000, scoped, tag = 'output window, operand 0']
    %18 = vsyncpa [#allocation3], 0
    %s19 = scalar_lea.sflag [#allocation3], 1
    %20 = vsyncpa %s19, 0
    %21 = vsyncpa [#allocation6], 0
    %22 = vsyncpa [#allocation4], 0
    %s23 = scalar_lea.sflag [#allocation4], 1
    %24 = vsyncpa %s23, 0
    loop: start=0, step=1, limit=4
    $region2: #{swin_block_forward.1} parent=1 // loop_pre_header
      _
    $region3: #{swin_block_forward.1} parent=1 // loop_header
      %s26 = sphi 0, %s30
      %p27 = scmp.ge.s32.totalorder %s26, 4
      %s36 = sphi 0, %s38
      %s39 = sphi 0, %s36
      %s40 = sphi 0, %s39
      %s56 = sphi 0, %s40
      %s60 = sphi 0, %s60
      %s62 = sphi 0, %s60
      %s63 = sphi 0, %s62
      %s77 = sphi 0, %s63
      %s81 = sphi 0, %s81
      %s83 = sphi 0, %s81
      %s84 = sphi 0, %s83
      %s98 = sphi 0, %s84
      %s102 = sphi 0, %s102
      %s104 = sphi 0, %s102
      %s105 = sphi 0, %s104
      %s119 = sphi 0, %s105
      %s123 = sphi 0, %s123
      %s125 = sphi 0, %s123
      %s126 = sphi 0, %s125
      %s140 = sphi 0, %s126
      %s144 = sphi 0, %s144
      %s146 = sphi 0, %s144
      %s147 = sphi 0, %s146
      %s161 = sphi 0, %s147
      %s165 = sphi 0, %s165
      %s167 = sphi 0, %s165
      %s168 = sphi 0, %s167
      %s182 = sphi 0, %s168
      %s186 = sphi 0, %s186
      %s188 = sphi 0, %s186
      %s189 = sphi 0, %s188
      %s203 = sphi 0, %s189
      %s207 = sphi 0, %s207
      %s209 = sphi 0, %s207
      %s210 = sphi 0, %s209
      %s224 = sphi 0, %s210
      %s228 = sphi 0, %s228
      %s230 = sphi 0, %s228
      %s231 = sphi 0, %s230
      %s245 = sphi 0, %s231
      %s249 = sphi 0, %s249
      %s251 = sphi 0, %s249
      %s252 = sphi 0, %s251
      %s266 = sphi 0, %s252
      %s270 = sphi 0, %s270
      %s272 = sphi 0, %s270
      %s273 = sphi 0, %s272
      %s287 = sphi 0, %s273
      %s291 = sphi 0, %s291
      %s293 = sphi 0, %s291
      %s294 = sphi 0, %s293
      %s308 = sphi 0, %s294
      %s314 = sphi 0, %s316
      %s317 = sphi 0, %s314
      %s318 = sphi 0, %s317
      %s334 = sphi 0, %s318
    $region4: #{swin_block_forward.1} parent=1 // loop_header_branch
      %29 = sbr.rel (%p27) target = $region8
    $region5: #{swin_block_forward.1} parent=1 // loop_body
      %s31 = ssub.s32 %s26, 1
      %s32 = ssub.s32 %s26, 2
      %s33 = sadd.s32 %s26, 1
      %s34 = ssub.s32 %s26, %s33
      %p35 = scmp.eq.s32.totalorder %s34, 0
      %s37 = sadd.s32 %s36, 1
      %s38 = scalar_select %p35, %s36, %s37
      %p41 = pneg %p35
      %p42 = scmp.eq.s32.totalorder %s26, 1
      %p43 = por %p41, %p42
      %p44 = scmp.ne.s32.totalorder %s36, %s39
      %p45 = scmp.eq.s32.totalorder %s26, 0
      %p46 = por %p44, %p45
      %p47 = scmp.ne.s32.totalorder %s36, %s39
      %p48 = scmp.eq.s32.totalorder %s31, 1
      %p49 = por %p47, %p48
      %p50 = scmp.ne.s32.totalorder %s39, %s40
      %p51 = scmp.eq.s32.totalorder %s31, 0
      %p52 = por %p50, %p51
      %p53 = scmp.ne.s32.totalorder %s39, %s40
      %p54 = scmp.eq.s32.totalorder %s32, 1
      %p55 = por %p53, %p54
      %p57 = scmp.ne.s32.totalorder %s40, %s56
      %p58 = scmp.eq.s32.totalorder %s32, 0
      %p59 = por %p57, %p58
      %s61 = sadd.s32 %s60, 1
      %p64 = scmp.eq.s32.totalorder %s26, 1
      %p65 = scmp.ne.s32.totalorder %s60, %s62
      %p66 = scmp.eq.s32.totalorder %s26, 0
      %p67 = por %p65, %p66
      %p68 = scmp.ne.s32.totalorder %s60, %s62
      %p69 = scmp.eq.s32.totalorder %s31, 1
      %p70 = por %p68, %p69
      %p71 = scmp.ne.s32.totalorder %s62, %s63
      %p72 = scmp.eq.s32.totalorder %s31, 0
      %p73 = por %p71, %p72
      %p74 = scmp.ne.s32.totalorder %s62, %s63
      %p75 = scmp.eq.s32.totalorder %s32, 1
      %p76 = por %p74, %p75
      %p78 = scmp.ne.s32.totalorder %s63, %s77
      %p79 = scmp.eq.s32.totalorder %s32, 0
      %p80 = por %p78, %p79
      %s82 = sadd.s32 %s81, 1
      %p85 = scmp.eq.s32.totalorder %s26, 1
      %p86 = scmp.ne.s32.totalorder %s81, %s83
      %p87 = scmp.eq.s32.totalorder %s26, 0
      %p88 = por %p86, %p87
      %p89 = scmp.ne.s32.totalorder %s81, %s83
      %p90 = scmp.eq.s32.totalorder %s31, 1
      %p91 = por %p89, %p90
      %p92 = scmp.ne.s32.totalorder %s83, %s84
      %p93 = scmp.eq.s32.totalorder %s31, 0
      %p94 = por %p92, %p93
      %p95 = scmp.ne.s32.totalorder %s83, %s84
      %p96 = scmp.eq.s32.totalorder %s32, 1
      %p97 = por %p95, %p96
      %p99 = scmp.ne.s32.totalorder %s84, %s98
      %p100 = scmp.eq.s32.totalorder %s32, 0
      %p101 = por %p99, %p100
      %s103 = sadd.s32 %s102, 1
      %p106 = scmp.eq.s32.totalorder %s26, 1
      %p107 = scmp.ne.s32.totalorder %s102, %s104
      %p108 = scmp.eq.s32.totalorder %s26, 0
      %p109 = por %p107, %p108
      %p110 = scmp.ne.s32.totalorder %s102, %s104
      %p111 = scmp.eq.s32.totalorder %s31, 1
      %p112 = por %p110, %p111
      %p113 = scmp.ne.s32.totalorder %s104, %s105
      %p114 = scmp.eq.s32.totalorder %s31, 0
      %p115 = por %p113, %p114
      %p116 = scmp.ne.s32.totalorder %s104, %s105
      %p117 = scmp.eq.s32.totalorder %s32, 1
      %p118 = por %p116, %p117
      %p120 = scmp.ne.s32.totalorder %s105, %s119
      %p121 = scmp.eq.s32.totalorder %s32, 0
      %p122 = por %p120, %p121
      %s124 = sadd.s32 %s123, 1
      %p127 = scmp.eq.s32.totalorder %s26, 1
      %p128 = scmp.ne.s32.totalorder %s123, %s125
      %p129 = scmp.eq.s32.totalorder %s26, 0
      %p130 = por %p128, %p129
      %p131 = scmp.ne.s32.totalorder %s123, %s125
      %p132 = scmp.eq.s32.totalorder %s31, 1
      %p133 = por %p131, %p132
      %p134 = scmp.ne.s32.totalorder %s125, %s126
      %p135 = scmp.eq.s32.totalorder %s31, 0
      %p136 = por %p134, %p135
      %p137 = scmp.ne.s32.totalorder %s125, %s126
      %p138 = scmp.eq.s32.totalorder %s32, 1
      %p139 = por %p137, %p138
      %p141 = scmp.ne.s32.totalorder %s126, %s140
      %p142 = scmp.eq.s32.totalorder %s32, 0
      %p143 = por %p141, %p142
      %s145 = sadd.s32 %s144, 1
      %p148 = scmp.eq.s32.totalorder %s26, 1
      %p149 = scmp.ne.s32.totalorder %s144, %s146
      %p150 = scmp.eq.s32.totalorder %s26, 0
      %p151 = por %p149, %p150
      %p152 = scmp.ne.s32.totalorder %s144, %s146
      %p153 = scmp.eq.s32.totalorder %s31, 1
      %p154 = por %p152, %p153
      %p155 = scmp.ne.s32.totalorder %s146, %s147
      %p156 = scmp.eq.s32.totalorder %s31, 0
      %p157 = por %p155, %p156
      %p158 = scmp.ne.s32.totalorder %s146, %s147
      %p159 = scmp.eq.s32.totalorder %s32, 1
      %p160 = por %p158, %p159
      %p162 = scmp.ne.s32.totalorder %s147, %s161
      %p163 = scmp.eq.s32.totalorder %s32, 0
      %p164 = por %p162, %p163
      %s166 = sadd.s32 %s165, 1
      %p169 = scmp.eq.s32.totalorder %s26, 1
      %p170 = scmp.ne.s32.totalorder %s165, %s167
      %p171 = scmp.eq.s32.totalorder %s26, 0
      %p172 = por %p170, %p171
      %p173 = scmp.ne.s32.totalorder %s165, %s167
      %p174 = scmp.eq.s32.totalorder %s31, 1
      %p175 = por %p173, %p174
      %p176 = scmp.ne.s32.totalorder %s167, %s168
      %p177 = scmp.eq.s32.totalorder %s31, 0
      %p178 = por %p176, %p177
      %p179 = scmp.ne.s32.totalorder %s167, %s168
      %p180 = scmp.eq.s32.totalorder %s32, 1
      %p181 = por %p179, %p180
      %p183 = scmp.ne.s32.totalorder %s168, %s182
      %p184 = scmp.eq.s32.totalorder %s32, 0
      %p185 = por %p183, %p184
      %s187 = sadd.s32 %s186, 1
      %p190 = scmp.eq.s32.totalorder %s26, 1
      %p191 = scmp.ne.s32.totalorder %s186, %s188
      %p192 = scmp.eq.s32.totalorder %s26, 0
      %p193 = por %p191, %p192
      %p194 = scmp.ne.s32.totalorder %s186, %s188
      %p195 = scmp.eq.s32.totalorder %s31, 1
      %p196 = por %p194, %p195
      %p197 = scmp.ne.s32.totalorder %s188, %s189
      %p198 = scmp.eq.s32.totalorder %s31, 0
      %p199 = por %p197, %p198
      %p200 = scmp.ne.s32.totalorder %s188, %s189
      %p201 = scmp.eq.s32.totalorder %s32, 1
      %p202 = por %p200, %p201
      %p204 = scmp.ne.s32.totalorder %s189, %s203
      %p205 = scmp.eq.s32.totalorder %s32, 0
      %p206 = por %p204, %p205
      %s208 = sadd.s32 %s207, 1
      %p211 = scmp.eq.s32.totalorder %s26, 1
      %p212 = scmp.ne.s32.totalorder %s207, %s209
      %p213 = scmp.eq.s32.totalorder %s26, 0
      %p214 = por %p212, %p213
      %p215 = scmp.ne.s32.totalorder %s207, %s209
      %p216 = scmp.eq.s32.totalorder %s31, 1
      %p217 = por %p215, %p216
      %p218 = scmp.ne.s32.totalorder %s209, %s210
      %p219 = scmp.eq.s32.totalorder %s31, 0
      %p220 = por %p218, %p219
      %p221 = scmp.ne.s32.totalorder %s209, %s210
      %p222 = scmp.eq.s32.totalorder %s32, 1
      %p223 = por %p221, %p222
      %p225 = scmp.ne.s32.totalorder %s210, %s224
      %p226 = scmp.eq.s32.totalorder %s32, 0
      %p227 = por %p225, %p226
      %s229 = sadd.s32 %s228, 1
      %p232 = scmp.eq.s32.totalorder %s26, 1
      %p233 = scmp.ne.s32.totalorder %s228, %s230
      %p234 = scmp.eq.s32.totalorder %s26, 0
      %p235 = por %p233, %p234
      %p236 = scmp.ne.s32.totalorder %s228, %s230
      %p237 = scmp.eq.s32.totalorder %s31, 1
      %p238 = por %p236, %p237
      %p239 = scmp.ne.s32.totalorder %s230, %s231
      %p240 = scmp.eq.s32.totalorder %s31, 0
      %p241 = por %p239, %p240
      %p242 = scmp.ne.s32.totalorder %s230, %s231
      %p243 = scmp.eq.s32.totalorder %s32, 1
      %p244 = por %p242, %p243
      %p246 = scmp.ne.s32.totalorder %s231, %s245
      %p247 = scmp.eq.s32.totalorder %s32, 0
      %p248 = por %p246, %p247
      %s250 = sadd.s32 %s249, 1
      %p253 = scmp.eq.s32.totalorder %s26, 1
      %p254 = scmp.ne.s32.totalorder %s249, %s251
      %p255 = scmp.eq.s32.totalorder %s26, 0
      %p256 = por %p254, %p255
      %p257 = scmp.ne.s32.totalorder %s249, %s251
      %p258 = scmp.eq.s32.totalorder %s31, 1
      %p259 = por %p257, %p258
      %p260 = scmp.ne.s32.totalorder %s251, %s252
      %p261 = scmp.eq.s32.totalorder %s31, 0
      %p262 = por %p260, %p261
      %p263 = scmp.ne.s32.totalorder %s251, %s252
      %p264 = scmp.eq.s32.totalorder %s32, 1
      %p265 = por %p263, %p264
      %p267 = scmp.ne.s32.totalorder %s252, %s266
      %p268 = scmp.eq.s32.totalorder %s32, 0
      %p269 = por %p267, %p268
      %s271 = sadd.s32 %s270, 1
      %p274 = scmp.eq.s32.totalorder %s26, 1
      %p275 = scmp.ne.s32.totalorder %s270, %s272
      %p276 = scmp.eq.s32.totalorder %s26, 0
      %p277 = por %p275, %p276
      %p278 = scmp.ne.s32.totalorder %s270, %s272
      %p279 = scmp.eq.s32.totalorder %s31, 1
      %p280 = por %p278, %p279
      %p281 = scmp.ne.s32.totalorder %s272, %s273
      %p282 = scmp.eq.s32.totalorder %s31, 0
      %p283 = por %p281, %p282
      %p284 = scmp.ne.s32.totalorder %s272, %s273
      %p285 = scmp.eq.s32.totalorder %s32, 1
      %p286 = por %p284, %p285
      %p288 = scmp.ne.s32.totalorder %s273, %s287
      %p289 = scmp.eq.s32.totalorder %s32, 0
      %p290 = por %p288, %p289
      %s292 = sadd.s32 %s291, 1
      %p295 = scmp.eq.s32.totalorder %s26, 1
      %p296 = scmp.ne.s32.totalorder %s291, %s293
      %p297 = scmp.eq.s32.totalorder %s26, 0
      %p298 = por %p296, %p297
      %p299 = scmp.ne.s32.totalorder %s291, %s293
      %p300 = scmp.eq.s32.totalorder %s31, 1
      %p301 = por %p299, %p300
      %p302 = scmp.ne.s32.totalorder %s293, %s294
      %p303 = scmp.eq.s32.totalorder %s31, 0
      %p304 = por %p302, %p303
      %p305 = scmp.ne.s32.totalorder %s293, %s294
      %p306 = scmp.eq.s32.totalorder %s32, 1
      %p307 = por %p305, %p306
      %p309 = scmp.ne.s32.totalorder %s294, %s308
      %p310 = scmp.eq.s32.totalorder %s32, 0
      %p311 = por %p309, %p310
      %s312 = ssub.s32 %s26, %s33
      %p313 = scmp.eq.s32.totalorder %s312, 0
      %s315 = sadd.s32 %s314, 1
      %s316 = scalar_select %p313, %s314, %s315
      %p319 = pneg %p313
      %p320 = scmp.eq.s32.totalorder %s26, 1
      %p321 = por %p319, %p320
      %p322 = scmp.ne.s32.totalorder %s314, %s317
      %p323 = scmp.eq.s32.totalorder %s26, 0
      %p324 = por %p322, %p323
      %p325 = scmp.ne.s32.totalorder %s314, %s317
      %p326 = scmp.eq.s32.totalorder %s31, 1
      %p327 = por %p325, %p326
      %p328 = scmp.ne.s32.totalorder %s317, %s318
      %p329 = scmp.eq.s32.totalorder %s31, 0
      %p330 = por %p328, %p329
      %p331 = scmp.ne.s32.totalorder %s317, %s318
      %p332 = scmp.eq.s32.totalorder %s32, 1
      %p333 = por %p331, %p332
      %p335 = scmp.ne.s32.totalorder %s318, %s334
      %p336 = scmp.eq.s32.totalorder %s32, 0
      %p337 = por %p335, %p336
      %p338 = scmp.le.s32.totalorder 1, %s26
      %p339 = scmp.lt.s32.totalorder %s26, 3
      %p340 = pnand %p338, %p339
      %p341 = pneg %p340
      // Predicated region
      $region9: #{swin_block_forward.1} parent=5 // pred_check
        _
      $region10: #{swin_block_forward.1} parent=5 // pred_check_branch
        %343 = sbr.rel (%p340) target = $region12
      $region11: #{swin_block_forward.1} parent=5 // pred_region
        %s344 = ssub.s32 %s26, 1
        // Predicated region
        $region13: #{swin_block_forward.1} parent=11 // pred_check
          %p345 = pneg %p73
        $region14: #{swin_block_forward.1} parent=11 // pred_check_branch
          %347 = sbr.rel (%p345) target = $region16
        $region15: #{swin_block_forward.1} parent=11 // pred_region
          %s349 = ssub.s32 8192, 8192
          %350 = vsyncadd [#allocation6], %s349
          %s351 = sshll.u32 [#allocation5], 4
          %s352 = int_to_ptr.vmem [resolvable:$true] %s351
          %357 = dma.hbm_to_vmem [thread:$0]  %s1, 8192, %s352, [#allocation6], 256, 256, 16
        $region16: #{swin_block_forward.1} parent=11 // pred_fallthru
          _
        // Predicated region
        $region17: #{swin_block_forward.1} parent=11 // pred_check
          %p358 = pneg %p94
        $region18: #{swin_block_forward.1} parent=11 // pred_check_branch
          %360 = sbr.rel (%p358) target = $region20
        $region19: #{swin_block_forward.1} parent=11 // pred_region
          _
        $region20: #{swin_block_forward.1} parent=11 // pred_fallthru
          _
        // Predicated region
        $region21: #{swin_block_forward.1} parent=11 // pred_check
          %p361 = pneg %p115
        $region22: #{swin_block_forward.1} parent=11 // pred_check_branch
          %363 = sbr.rel (%p361) target = $region24
        $region23: #{swin_block_forward.1} parent=11 // pred_region
          _
        $region24: #{swin_block_forward.1} parent=11 // pred_fallthru
          _
        // Predicated region
        $region25: #{swin_block_forward.1} parent=11 // pred_check
          %p364 = pneg %p136
        $region26: #{swin_block_forward.1} parent=11 // pred_check_branch
          %366 = sbr.rel (%p364) target = $region28
        $region27: #{swin_block_forward.1} parent=11 // pred_region
          _
        $region28: #{swin_block_forward.1} parent=11 // pred_fallthru
          _
        // Predicated region
        $region29: #{swin_block_forward.1} parent=11 // pred_check
          %p367 = pneg %p157
        $region30: #{swin_block_forward.1} parent=11 // pred_check_branch
          %369 = sbr.rel (%p367) target = $region32
        $region31: #{swin_block_forward.1} parent=11 // pred_region
          _
        $region32: #{swin_block_forward.1} parent=11 // pred_fallthru
          _
        // Predicated region
        $region33: #{swin_block_forward.1} parent=11 // pred_check
          %p370 = pneg %p178
        $region34: #{swin_block_forward.1} parent=11 // pred_check_branch
          %372 = sbr.rel (%p370) target = $region36
        $region35: #{swin_block_forward.1} parent=11 // pred_region
          _
        $region36: #{swin_block_forward.1} parent=11 // pred_fallthru
          _
        // Predicated region
        $region37: #{swin_block_forward.1} parent=11 // pred_check
          %p373 = pneg %p199
        $region38: #{swin_block_forward.1} parent=11 // pred_check_branch
          %375 = sbr.rel (%p373) target = $region40
        $region39: #{swin_block_forward.1} parent=11 // pred_region
          _
        $region40: #{swin_block_forward.1} parent=11 // pred_fallthru
          _
        // Predicated region
        $region41: #{swin_block_forward.1} parent=11 // pred_check
          %p376 = pneg %p220
        $region42: #{swin_block_forward.1} parent=11 // pred_check_branch
          %378 = sbr.rel (%p376) target = $region44
        $region43: #{swin_block_forward.1} parent=11 // pred_region
          _
        $region44: #{swin_block_forward.1} parent=11 // pred_fallthru
          _
        // Predicated region
        $region45: #{swin_block_forward.1} parent=11 // pred_check
          %p379 = pneg %p241
        $region46: #{swin_block_forward.1} parent=11 // pred_check_branch
          %381 = sbr.rel (%p379) target = $region48
        $region47: #{swin_block_forward.1} parent=11 // pred_region
          _
        $region48: #{swin_block_forward.1} parent=11 // pred_fallthru
          _
        // Predicated region
        $region49: #{swin_block_forward.1} parent=11 // pred_check
          %p382 = pneg %p262
        $region50: #{swin_block_forward.1} parent=11 // pred_check_branch
          %384 = sbr.rel (%p382) target = $region52
        $region51: #{swin_block_forward.1} parent=11 // pred_region
          _
        $region52: #{swin_block_forward.1} parent=11 // pred_fallthru
          _
        // Predicated region
        $region53: #{swin_block_forward.1} parent=11 // pred_check
          %p385 = pneg %p283
        $region54: #{swin_block_forward.1} parent=11 // pred_check_branch
          %387 = sbr.rel (%p385) target = $region56
        $region55: #{swin_block_forward.1} parent=11 // pred_region
          _
        $region56: #{swin_block_forward.1} parent=11 // pred_fallthru
          _
        // Predicated region
        $region57: #{swin_block_forward.1} parent=11 // pred_check
          %p388 = pneg %p304
        $region58: #{swin_block_forward.1} parent=11 // pred_check_branch
          %390 = sbr.rel (%p388) target = $region60
        $region59: #{swin_block_forward.1} parent=11 // pred_region
          _
        $region60: #{swin_block_forward.1} parent=11 // pred_fallthru
          _
      $region12: #{swin_block_forward.1} parent=5 // pred_fallthru
        _
      %p391 = scmp.lt.s32.totalorder %s26, 2
      // Predicated region
      $region61: #{swin_block_forward.1} parent=5 // pred_check
        %p392 = pneg %p391
      $region62: #{swin_block_forward.1} parent=5 // pred_check_branch
        %394 = sbr.rel (%p392) target = $region64
      $region63: #{swin_block_forward.1} parent=5 // pred_region
        // Predicated region
        $region65: #{swin_block_forward.1} parent=63 // pred_check
          %p395 = pneg %p46
        $region66: #{swin_block_forward.1} parent=63 // pred_check_branch
          %397 = sbr.rel (%p395) target = $region68
        $region67: #{swin_block_forward.1} parent=63 // pred_region
          %s398 = sand.u32 %s36, 1
          %s399 = scalar_lea.sflag [#allocation3], %s398
          %s400 = sand.u32 %s36, 1
          %s401 = smul.addr %s400, 256
          %s402 = scalar_lea.vmem [#allocation2], %s401
          %s404 = ssub.s32 4096, 4096
          %405 = vsyncadd %s399, %s404
          %s406 = smul.addr %s26, 32
          %s407 = smul.addr %s406, 128
          %s408 = scalar_lea.hbm %s0, %s407
          %s409 = sshll.u32 %s402, 4
          %s410 = int_to_ptr.vmem [resolvable:$true] %s409
          %415 = dma.hbm_to_vmem [thread:$0]  %s408, 4096, %s410, %s399, 128, 128, 8
        $region68: #{swin_block_forward.1} parent=63 // pred_fallthru
          _
      $region64: #{swin_block_forward.1} parent=5 // pred_fallthru
        _
      %p416 = scmp.le.s32.totalorder 1, %s26
      %p417 = scmp.lt.s32.totalorder %s26, 3
      %p418 = pnand %p416, %p417
      %p419 = pneg %p418
      // Predicated region
      $region69: #{swin_block_forward.1} parent=5 // pred_check
        _
      $region70: #{swin_block_forward.1} parent=5 // pred_check_branch
        %421 = sbr.rel (%p418) target = $region72
      $region71: #{swin_block_forward.1} parent=5 // pred_region
        %s422 = ssub.s32 %s26, 1
        %s423 = sand.u32 %s39, 1
        %s424 = scalar_lea.sflag [#allocation3], %s423
        %s425 = sand.u32 %s39, 1
        %s426 = smul.addr %s425, 256
        %s427 = scalar_lea.vmem [#allocation2], %s426
        // Predicated region
        $region73: #{swin_block_forward.1} parent=71 // pred_check
          %p428 = pneg %p52
        $region74: #{swin_block_forward.1} parent=71 // pred_check_branch
          %430 = sbr.rel (%p428) target = $region76
        $region75: #{swin_block_forward.1} parent=71 // pred_region
          %431 = dma.done %s424, 4096
        $region76: #{swin_block_forward.1} parent=71 // pred_fallthru
          _
        // Predicated region
        $region77: #{swin_block_forward.1} parent=71 // pred_check
          %p432 = pneg %p73
        $region78: #{swin_block_forward.1} parent=71 // pred_check_branch
          %434 = sbr.rel (%p432) target = $region80
        $region79: #{swin_block_forward.1} parent=71 // pred_region
          %435 = dma.done [#allocation6], 8192
        $region80: #{swin_block_forward.1} parent=71 // pred_fallthru
          _
        %s436 = sand.u32 %s39, 1
        %s437 = scalar_lea.sflag [#allocation3], %s436
        %s438 = sand.u32 %s39, 1
        %s439 = smul.addr %s438, 256
        %s440 = scalar_lea.vmem [#allocation2], %s439
        %p441 = pneg %p52
        %p442 = pneg %p49
        %p443 = pneg %p73
        %p444 = pneg %p70
        %p445 = pneg %p94
        %p446 = pneg %p91
        %p447 = pneg %p115
        %p448 = pneg %p112
        %p449 = pneg %p136
        %p450 = pneg %p133
        %p451 = pneg %p157
        %p452 = pneg %p154
        %p453 = pneg %p178
        %p454 = pneg %p175
        %p455 = pneg %p199
        %p456 = pneg %p196
        %p457 = pneg %p220
        %p458 = pneg %p217
        %p459 = pneg %p241
        %p460 = pneg %p238
        %p461 = pneg %p262
        %p462 = pneg %p259
        %p463 = pneg %p283
        %p464 = pneg %p280
        %p465 = pneg %p304
        %p466 = pneg %p301
        %p467 = pneg %p330
        %p468 = pneg %p327
        %s469 = sand.u32 %s317, 1
        %s470 = scalar_lea.sflag [#allocation4], %s469
        %s471 = sand.u32 %s317, 1
        %s472 = smul.addr %s471, 256
        %s473 = scalar_lea.vmem [#allocation7], %s472
        %v474 = vld [vmem:[%s427] sm:$0xff]
        %v475 = vld [vmem:[%s427 + $0x8] sm:$0xff]
        %v476 = vld [vmem:[%s427 + $0x10] sm:$0xff]
        %v477 = vld [vmem:[%s427 + $0x18] sm:$0xff]
        %v478 = vld [vmem:[%s427 + $0x20] sm:$0xff]
        %v479 = vld [vmem:[%s427 + $0x28] sm:$0xff]
        %v480 = vld [vmem:[%s427 + $0x30] sm:$0xff]
        %v481 = vld [vmem:[%s427 + $0x38] sm:$0xff]
        %v482 = vld [vmem:[%s427 + $0x40] sm:$0xff]
        %v483 = vld [vmem:[%s427 + $0x48] sm:$0xff]
        %v484 = vld [vmem:[%s427 + $0x50] sm:$0xff]
        %v485 = vld [vmem:[%s427 + $0x58] sm:$0xff]
        %v486 = vld [vmem:[%s427 + $0x60] sm:$0xff]
        %v487 = vld [vmem:[%s427 + $0x68] sm:$0xff]
        %v488 = vld [vmem:[%s427 + $0x70] sm:$0xff]
        %v489 = vld [vmem:[%s427 + $0x78] sm:$0xff]
        %v490 = vld [vmem:[%s427 + $0x80] sm:$0xff]
        %v491 = vld [vmem:[%s427 + $0x88] sm:$0xff]
        %v492 = vld [vmem:[%s427 + $0x90] sm:$0xff]
        %v493 = vld [vmem:[%s427 + $0x98] sm:$0xff]
        %v494 = vld [vmem:[%s427 + $0xa0] sm:$0xff]
        %v495 = vld [vmem:[%s427 + $0xa8] sm:$0xff]
        %v496 = vld [vmem:[%s427 + $0xb0] sm:$0xff]
        %v497 = vld [vmem:[%s427 + $0xb8] sm:$0xff]
        %v498 = vld [vmem:[%s427 + $0xc0] sm:$0xff]
        %v499 = vld [vmem:[%s427 + $0xc8] sm:$0xff]
        %v500 = vld [vmem:[%s427 + $0xd0] sm:$0xff]
        %v501 = vld [vmem:[%s427 + $0xd8] sm:$0xff]
        %v502 = vld [vmem:[%s427 + $0xe0] sm:$0xff]
        %v503 = vld [vmem:[%s427 + $0xe8] sm:$0xff]
        %v504 = vld [vmem:[%s427 + $0xf0] sm:$0xff]
        %v505 = vld [vmem:[%s427 + $0xf8] sm:$0xff]
        %vm506 = vcmask 261120
        %v507 = vsel %vm506, %v474, 0.0
        %508 = vadd.xlane.f32.xlu0 %v507
        %v509 = vpop.xlane.xlu0 %508
        %v510 = vsel %vm506, %v475, 0.0
        %511 = vadd.xlane.f32.xlu0 %v510
        %v512 = vpop.xlane.xlu0 %511
        %v513 = vsel %vm506, %v476, 0.0
        %514 = vadd.xlane.f32.xlu0 %v513
        %v515 = vpop.xlane.xlu0 %514
        %v516 = vsel %vm506, %v477, 0.0
        %517 = vadd.xlane.f32.xlu0 %v516
        %v518 = vpop.xlane.xlu0 %517
        %v519 = vsel %vm506, %v478, 0.0
        %520 = vadd.xlane.f32.xlu0 %v519
        %v521 = vpop.xlane.xlu0 %520
        %v522 = vsel %vm506, %v479, 0.0
        %523 = vadd.xlane.f32.xlu0 %v522
        %v524 = vpop.xlane.xlu0 %523
        %v525 = vsel %vm506, %v480, 0.0
        %526 = vadd.xlane.f32.xlu0 %v525
        %v527 = vpop.xlane.xlu0 %526
        %v528 = vsel %vm506, %v481, 0.0
        %529 = vadd.xlane.f32.xlu0 %v528
        %v530 = vpop.xlane.xlu0 %529
        %v531 = vsel %vm506, %v482, 0.0
        %532 = vadd.xlane.f32.xlu0 %v531
        %v533 = vpop.xlane.xlu0 %532
        %v534 = vsel %vm506, %v483, 0.0
        %535 = vadd.xlane.f32.xlu0 %v534
        %v536 = vpop.xlane.xlu0 %535
        %v537 = vsel %vm506, %v484, 0.0
        %538 = vadd.xlane.f32.xlu0 %v537
        %v539 = vpop.xlane.xlu0 %538
        %v540 = vsel %vm506, %v485, 0.0
        %541 = vadd.xlane.f32.xlu0 %v540
        %v542 = vpop.xlane.xlu0 %541
        %v543 = vsel %vm506, %v486, 0.0
        %544 = vadd.xlane.f32.xlu0 %v543
        %v545 = vpop.xlane.xlu0 %544
        %v546 = vsel %vm506, %v487, 0.0
        %547 = vadd.xlane.f32.xlu0 %v546
        %v548 = vpop.xlane.xlu0 %547
        %v549 = vsel %vm506, %v488, 0.0
        %550 = vadd.xlane.f32.xlu0 %v549
        %v551 = vpop.xlane.xlu0 %550
        %v552 = vsel %vm506, %v489, 0.0
        %553 = vadd.xlane.f32.xlu0 %v552
        %v554 = vpop.xlane.xlu0 %553
        %v555 = vsel %vm506, %v490, 0.0
        %556 = vadd.xlane.f32.xlu0 %v555
        %v557 = vpop.xlane.xlu0 %556
        %v558 = vsel %vm506, %v491, 0.0
        %559 = vadd.xlane.f32.xlu0 %v558
        %v560 = vpop.xlane.xlu0 %559
        %v561 = vsel %vm506, %v492, 0.0
        %562 = vadd.xlane.f32.xlu0 %v561
        %v563 = vpop.xlane.xlu0 %562
        %v564 = vsel %vm506, %v493, 0.0
        %565 = vadd.xlane.f32.xlu0 %v564
        %v566 = vpop.xlane.xlu0 %565
        %v567 = vsel %vm506, %v494, 0.0
        %568 = vadd.xlane.f32.xlu0 %v567
        %v569 = vpop.xlane.xlu0 %568
        %v570 = vsel %vm506, %v495, 0.0
        %571 = vadd.xlane.f32.xlu0 %v570
        %v572 = vpop.xlane.xlu0 %571
        %v573 = vsel %vm506, %v496, 0.0
        %574 = vadd.xlane.f32.xlu0 %v573
        %v575 = vpop.xlane.xlu0 %574
        %v576 = vsel %vm506, %v497, 0.0
        %577 = vadd.xlane.f32.xlu0 %v576
        %v578 = vpop.xlane.xlu0 %577
        %v579 = vsel %vm506, %v498, 0.0
        %580 = vadd.xlane.f32.xlu0 %v579
        %v581 = vpop.xlane.xlu0 %580
        %v582 = vsel %vm506, %v499, 0.0
        %583 = vadd.xlane.f32.xlu0 %v582
        %v584 = vpop.xlane.xlu0 %583
        %v585 = vsel %vm506, %v500, 0.0
        %586 = vadd.xlane.f32.xlu0 %v585
        %v587 = vpop.xlane.xlu0 %586
        %v588 = vsel %vm506, %v501, 0.0
        %589 = vadd.xlane.f32.xlu0 %v588
        %v590 = vpop.xlane.xlu0 %589
        %v591 = vsel %vm506, %v502, 0.0
        %592 = vadd.xlane.f32.xlu0 %v591
        %v593 = vpop.xlane.xlu0 %592
        %v594 = vsel %vm506, %v503, 0.0
        %595 = vadd.xlane.f32.xlu0 %v594
        %v596 = vpop.xlane.xlu0 %595
        %v597 = vsel %vm506, %v504, 0.0
        %598 = vadd.xlane.f32.xlu0 %v597
        %v599 = vpop.xlane.xlu0 %598
        %v600 = vsel %vm506, %v505, 0.0
        %601 = vadd.xlane.f32.xlu0 %v600
        %v602 = vpop.xlane.xlu0 %601
        %v603 = vrcp.pop 32.0
        %v604 = vmul.f32 %v509, %v603
        %v605 = vmul.f32 %v512, %v603
        %v606 = vmul.f32 %v515, %v603
        %v607 = vmul.f32 %v518, %v603
        %v608 = vmul.f32 %v521, %v603
        %v609 = vmul.f32 %v524, %v603
        %v610 = vmul.f32 %v527, %v603
        %v611 = vmul.f32 %v530, %v603
        %v612 = vmul.f32 %v533, %v603
        %v613 = vmul.f32 %v536, %v603
        %v614 = vmul.f32 %v539, %v603
        %v615 = vmul.f32 %v542, %v603
        %v616 = vmul.f32 %v545, %v603
        %v617 = vmul.f32 %v548, %v603
        %v618 = vmul.f32 %v551, %v603
        %v619 = vmul.f32 %v554, %v603
        %v620 = vmul.f32 %v557, %v603
        %v621 = vmul.f32 %v560, %v603
        %v622 = vmul.f32 %v563, %v603
        %v623 = vmul.f32 %v566, %v603
        %v624 = vmul.f32 %v569, %v603
        %v625 = vmul.f32 %v572, %v603
        %v626 = vmul.f32 %v575, %v603
        %v627 = vmul.f32 %v578, %v603
        %v628 = vmul.f32 %v581, %v603
        %v629 = vmul.f32 %v584, %v603
        %v630 = vmul.f32 %v587, %v603
        %v631 = vmul.f32 %v590, %v603
        %v632 = vmul.f32 %v593, %v603
        %v633 = vmul.f32 %v596, %v603
        %v634 = vmul.f32 %v599, %v603
        %v635 = vmul.f32 %v602, %v603
        %v636 = vsub.f32 %v474, %v604
        %v637 = vsub.f32 %v475, %v605
        %v638 = vsub.f32 %v476, %v606
        %v639 = vsub.f32 %v477, %v607
        %v640 = vsub.f32 %v478, %v608
        %v641 = vsub.f32 %v479, %v609
        %v642 = vsub.f32 %v480, %v610
        %v643 = vsub.f32 %v481, %v611
        %v644 = vsub.f32 %v482, %v612
        %v645 = vsub.f32 %v483, %v613
        %v646 = vsub.f32 %v484, %v614
        %v647 = vsub.f32 %v485, %v615
        %v648 = vsub.f32 %v486, %v616
        %v649 = vsub.f32 %v487, %v617
        %v650 = vsub.f32 %v488, %v618
        %v651 = vsub.f32 %v489, %v619
        %v652 = vsub.f32 %v490, %v620
        %v653 = vsub.f32 %v491, %v621
        %v654 = vsub.f32 %v492, %v622
        %v655 = vsub.f32 %v493, %v623
        %v656 = vsub.f32 %v494, %v624
        %v657 = vsub.f32 %v495, %v625
        %v658 = vsub.f32 %v496, %v626
        %v659 = vsub.f32 %v497, %v627
        %v660 = vsub.f32 %v498, %v628
        %v661 = vsub.f32 %v499, %v629
        %v662 = vsub.f32 %v500, %v630
        %v663 = vsub.f32 %v501, %v631
        %v664 = vsub.f32 %v502, %v632
        %v665 = vsub.f32 %v503, %v633
        %v666 = vsub.f32 %v504, %v634
        %v667 = vsub.f32 %v505, %v635
        %v668 = vmul.f32 %v636, %v636
        %v669 = vmul.f32 %v637, %v637
        %v670 = vmul.f32 %v638, %v638
        %v671 = vmul.f32 %v639, %v639
        %v672 = vmul.f32 %v640, %v640
        %v673 = vmul.f32 %v641, %v641
        %v674 = vmul.f32 %v642, %v642
        %v675 = vmul.f32 %v643, %v643
        %v676 = vmul.f32 %v644, %v644
        %v677 = vmul.f32 %v645, %v645
        %v678 = vmul.f32 %v646, %v646
        %v679 = vmul.f32 %v647, %v647
        %v680 = vmul.f32 %v648, %v648
        %v681 = vmul.f32 %v649, %v649
        %v682 = vmul.f32 %v650, %v650
        %v683 = vmul.f32 %v651, %v651
        %v684 = vmul.f32 %v652, %v652
        %v685 = vmul.f32 %v653, %v653
        %v686 = vmul.f32 %v654, %v654
        %v687 = vmul.f32 %v655, %v655
        %v688 = vmul.f32 %v656, %v656
        %v689 = vmul.f32 %v657, %v657
        %v690 = vmul.f32 %v658, %v658
        %v691 = vmul.f32 %v659, %v659
        %v692 = vmul.f32 %v660, %v660
        %v693 = vmul.f32 %v661, %v661
        %v694 = vmul.f32 %v662, %v662
        %v695 = vmul.f32 %v663, %v663
        %v696 = vmul.f32 %v664, %v664
        %v697 = vmul.f32 %v665, %v665
        %v698 = vmul.f32 %v666, %v666
        %v699 = vmul.f32 %v667, %v667
        %v700 = vsel %vm506, %v668, 0.0
        %701 = vadd.xlane.f32.xlu0 %v700
        %v702 = vpop.xlane.xlu0 %701
        %v703 = vsel %vm506, %v669, 0.0
        %704 = vadd.xlane.f32.xlu0 %v703
        %v705 = vpop.xlane.xlu0 %704
        %v706 = vsel %vm506, %v670, 0.0
        %707 = vadd.xlane.f32.xlu0 %v706
        %v708 = vpop.xlane.xlu0 %707
        %v709 = vsel %vm506, %v671, 0.0
        %710 = vadd.xlane.f32.xlu0 %v709
        %v711 = vpop.xlane.xlu0 %710
        %v712 = vsel %vm506, %v672, 0.0
        %713 = vadd.xlane.f32.xlu0 %v712
        %v714 = vpop.xlane.xlu0 %713
        %v715 = vsel %vm506, %v673, 0.0
        %716 = vadd.xlane.f32.xlu0 %v715
        %v717 = vpop.xlane.xlu0 %716
        %v718 = vsel %vm506, %v674, 0.0
        %719 = vadd.xlane.f32.xlu0 %v718
        %v720 = vpop.xlane.xlu0 %719
        %v721 = vsel %vm506, %v675, 0.0
        %722 = vadd.xlane.f32.xlu0 %v721
        %v723 = vpop.xlane.xlu0 %722
        %v724 = vsel %vm506, %v676, 0.0
        %725 = vadd.xlane.f32.xlu0 %v724
        %v726 = vpop.xlane.xlu0 %725
        %v727 = vsel %vm506, %v677, 0.0
        %728 = vadd.xlane.f32.xlu0 %v727
        %v729 = vpop.xlane.xlu0 %728
        %v730 = vsel %vm506, %v678, 0.0
        %731 = vadd.xlane.f32.xlu0 %v730
        %v732 = vpop.xlane.xlu0 %731
        %v733 = vsel %vm506, %v679, 0.0
        %734 = vadd.xlane.f32.xlu0 %v733
        %v735 = vpop.xlane.xlu0 %734
        %v736 = vsel %vm506, %v680, 0.0
        %737 = vadd.xlane.f32.xlu0 %v736
        %v738 = vpop.xlane.xlu0 %737
        %v739 = vsel %vm506, %v681, 0.0
        %740 = vadd.xlane.f32.xlu0 %v739
        %v741 = vpop.xlane.xlu0 %740
        %v742 = vsel %vm506, %v682, 0.0
        %743 = vadd.xlane.f32.xlu0 %v742
        %v744 = vpop.xlane.xlu0 %743
        %v745 = vsel %vm506, %v683, 0.0
        %746 = vadd.xlane.f32.xlu0 %v745
        %v747 = vpop.xlane.xlu0 %746
        %v748 = vsel %vm506, %v684, 0.0
        %749 = vadd.xlane.f32.xlu0 %v748
        %v750 = vpop.xlane.xlu0 %749
        %v751 = vsel %vm506, %v685, 0.0
        %752 = vadd.xlane.f32.xlu0 %v751
        %v753 = vpop.xlane.xlu0 %752
        %v754 = vsel %vm506, %v686, 0.0
        %755 = vadd.xlane.f32.xlu0 %v754
        %v756 = vpop.xlane.xlu0 %755
        %v757 = vsel %vm506, %v687, 0.0
        %758 = vadd.xlane.f32.xlu0 %v757
        %v759 = vpop.xlane.xlu0 %758
        %v760 = vsel %vm506, %v688, 0.0
        %761 = vadd.xlane.f32.xlu0 %v760
        %v762 = vpop.xlane.xlu0 %761
        %v763 = vsel %vm506, %v689, 0.0
        %764 = vadd.xlane.f32.xlu0 %v763
        %v765 = vpop.xlane.xlu0 %764
        %v766 = vsel %vm506, %v690, 0.0
        %767 = vadd.xlane.f32.xlu0 %v766
        %v768 = vpop.xlane.xlu0 %767
        %v769 = vsel %vm506, %v691, 0.0
        %770 = vadd.xlane.f32.xlu0 %v769
        %v771 = vpop.xlane.xlu0 %770
        %v772 = vsel %vm506, %v692, 0.0
        %773 = vadd.xlane.f32.xlu0 %v772
        %v774 = vpop.xlane.xlu0 %773
        %v775 = vsel %vm506, %v693, 0.0
        %776 = vadd.xlane.f32.xlu0 %v775
        %v777 = vpop.xlane.xlu0 %776
        %v778 = vsel %vm506, %v694, 0.0
        %779 = vadd.xlane.f32.xlu0 %v778
        %v780 = vpop.xlane.xlu0 %779
        %v781 = vsel %vm506, %v695, 0.0
        %782 = vadd.xlane.f32.xlu0 %v781
        %v783 = vpop.xlane.xlu0 %782
        %v784 = vsel %vm506, %v696, 0.0
        %785 = vadd.xlane.f32.xlu0 %v784
        %v786 = vpop.xlane.xlu0 %785
        %v787 = vsel %vm506, %v697, 0.0
        %788 = vadd.xlane.f32.xlu0 %v787
        %v789 = vpop.xlane.xlu0 %788
        %v790 = vsel %vm506, %v698, 0.0
        %791 = vadd.xlane.f32.xlu0 %v790
        %v792 = vpop.xlane.xlu0 %791
        %v793 = vsel %vm506, %v699, 0.0
        %794 = vadd.xlane.f32.xlu0 %v793
        %v795 = vpop.xlane.xlu0 %794
        %v796 = vmul.f32 %v702, %v603
        %v797 = vmul.f32 %v705, %v603
        %v798 = vmul.f32 %v708, %v603
        %v799 = vmul.f32 %v711, %v603
        %v800 = vmul.f32 %v714, %v603
        %v801 = vmul.f32 %v717, %v603
        %v802 = vmul.f32 %v720, %v603
        %v803 = vmul.f32 %v723, %v603
        %v804 = vmul.f32 %v726, %v603
        %v805 = vmul.f32 %v729, %v603
        %v806 = vmul.f32 %v732, %v603
        %v807 = vmul.f32 %v735, %v603
        %v808 = vmul.f32 %v738, %v603
        %v809 = vmul.f32 %v741, %v603
        %v810 = vmul.f32 %v744, %v603
        %v811 = vmul.f32 %v747, %v603
        %v812 = vmul.f32 %v750, %v603
        %v813 = vmul.f32 %v753, %v603
        %v814 = vmul.f32 %v756, %v603
        %v815 = vmul.f32 %v759, %v603
        %v816 = vmul.f32 %v762, %v603
        %v817 = vmul.f32 %v765, %v603
        %v818 = vmul.f32 %v768, %v603
        %v819 = vmul.f32 %v771, %v603
        %v820 = vmul.f32 %v774, %v603
        %v821 = vmul.f32 %v777, %v603
        %v822 = vmul.f32 %v780, %v603
        %v823 = vmul.f32 %v783, %v603
        %v824 = vmul.f32 %v786, %v603
        %v825 = vmul.f32 %v789, %v603
        %v826 = vmul.f32 %v792, %v603
        %v827 = vmul.f32 %v795, %v603
        %v828 = vadd.f32 %v796, 1e-05
        %v829 = vadd.f32 %v797, 1e-05
        %v830 = vadd.f32 %v798, 1e-05
        %v831 = vadd.f32 %v799, 1e-05
        %v832 = vadd.f32 %v800, 1e-05
        %v833 = vadd.f32 %v801, 1e-05
        %v834 = vadd.f32 %v802, 1e-05
        %v835 = vadd.f32 %v803, 1e-05
        %v836 = vadd.f32 %v804, 1e-05
        %v837 = vadd.f32 %v805, 1e-05
        %v838 = vadd.f32 %v806, 1e-05
        %v839 = vadd.f32 %v807, 1e-05
        %v840 = vadd.f32 %v808, 1e-05
        %v841 = vadd.f32 %v809, 1e-05
        %v842 = vadd.f32 %v810, 1e-05
        %v843 = vadd.f32 %v811, 1e-05
        %v844 = vadd.f32 %v812, 1e-05
        %v845 = vadd.f32 %v813, 1e-05
        %v846 = vadd.f32 %v814, 1e-05
        %v847 = vadd.f32 %v815, 1e-05
        %v848 = vadd.f32 %v816, 1e-05
        %v849 = vadd.f32 %v817, 1e-05
        %v850 = vadd.f32 %v818, 1e-05
        %v851 = vadd.f32 %v819, 1e-05
        %v852 = vadd.f32 %v820, 1e-05
        %v853 = vadd.f32 %v821, 1e-05
        %v854 = vadd.f32 %v822, 1e-05
        %v855 = vadd.f32 %v823, 1e-05
        %v856 = vadd.f32 %v824, 1e-05
        %v857 = vadd.f32 %v825, 1e-05
        %v858 = vadd.f32 %v826, 1e-05
        %v859 = vadd.f32 %v827, 1e-05
        %v860 = vrsqrt.pop %v828
        %v861 = vrsqrt.pop %v829
        %v862 = vrsqrt.pop %v830
        %v863 = vrsqrt.pop %v831
        %v864 = vrsqrt.pop %v832
        %v865 = vrsqrt.pop %v833
        %v866 = vrsqrt.pop %v834
        %v867 = vrsqrt.pop %v835
        %v868 = vrsqrt.pop %v836
        %v869 = vrsqrt.pop %v837
        %v870 = vrsqrt.pop %v838
        %v871 = vrsqrt.pop %v839
        %v872 = vrsqrt.pop %v840
        %v873 = vrsqrt.pop %v841
        %v874 = vrsqrt.pop %v842
        %v875 = vrsqrt.pop %v843
        %v876 = vrsqrt.pop %v844
        %v877 = vrsqrt.pop %v845
        %v878 = vrsqrt.pop %v846
        %v879 = vrsqrt.pop %v847
        %v880 = vrsqrt.pop %v848
        %v881 = vrsqrt.pop %v849
        %v882 = vrsqrt.pop %v850
        %v883 = vrsqrt.pop %v851
        %v884 = vrsqrt.pop %v852
        %v885 = vrsqrt.pop %v853
        %v886 = vrsqrt.pop %v854
        %v887 = vrsqrt.pop %v855
        %v888 = vrsqrt.pop %v856
        %v889 = vrsqrt.pop %v857
        %v890 = vrsqrt.pop %v858
        %v891 = vrsqrt.pop %v859
        %v892 = vmul.f32 %v636, %v860
        %v893 = vmul.f32 %v637, %v861
        %v894 = vmul.f32 %v638, %v862
        %v895 = vmul.f32 %v639, %v863
        %v896 = vmul.f32 %v640, %v864
        %v897 = vmul.f32 %v641, %v865
        %v898 = vmul.f32 %v642, %v866
        %v899 = vmul.f32 %v643, %v867
        %v900 = vmul.f32 %v644, %v868
        %v901 = vmul.f32 %v645, %v869
        %v902 = vmul.f32 %v646, %v870
        %v903 = vmul.f32 %v647, %v871
        %v904 = vmul.f32 %v648, %v872
        %v905 = vmul.f32 %v649, %v873
        %v906 = vmul.f32 %v650, %v874
        %v907 = vmul.f32 %v651, %v875
        %v908 = vmul.f32 %v652, %v876
        %v909 = vmul.f32 %v653, %v877
        %v910 = vmul.f32 %v654, %v878
        %v911 = vmul.f32 %v655, %v879
        %v912 = vmul.f32 %v656, %v880
        %v913 = vmul.f32 %v657, %v881
        %v914 = vmul.f32 %v658, %v882
        %v915 = vmul.f32 %v659, %v883
        %v916 = vmul.f32 %v660, %v884
        %v917 = vmul.f32 %v661, %v885
        %v918 = vmul.f32 %v662, %v886
        %v919 = vmul.f32 %v663, %v887
        %v920 = vmul.f32 %v664, %v888
        %v921 = vmul.f32 %v665, %v889
        %v922 = vmul.f32 %v666, %v890
        %v923 = vmul.f32 %v667, %v891
        %v924 = vld [vmem:[%s2] sm:$0xff]
        %v925 = vld [vmem:[%s2 + $0x8] sm:$0xff]
        %v926 = vld [vmem:[%s2 + $0x10] sm:$0xff]
        %v927 = vld [vmem:[%s2 + $0x18] sm:$0xff]
        %v928 = vld [vmem:[%s3] sm:$0x1]
        %v930 = vlaneseq
        %v931 = vshrl.u32 %v930, 7
        %v932 = vsub.s32 0, %v931
        %v933 = vrot.slane %v928, %v932
        %v936 = vsel %vm506, %v892, 0
        %v939 = vsel %vm506, %v893, 0
        %v942 = vsel %vm506, %v894, 0
        %v945 = vsel %vm506, %v895, 0
        %v948 = vsel %vm506, %v896, 0
        %v951 = vsel %vm506, %v897, 0
        %v954 = vsel %vm506, %v898, 0
        %v957 = vsel %vm506, %v899, 0
        %v960 = vsel %vm506, %v900, 0
        %v963 = vsel %vm506, %v901, 0
        %v966 = vsel %vm506, %v902, 0
        %v969 = vsel %vm506, %v903, 0
        %v972 = vsel %vm506, %v904, 0
        %v975 = vsel %vm506, %v905, 0
        %v978 = vsel %vm506, %v906, 0
        %v981 = vsel %vm506, %v907, 0
        %v984 = vsel %vm506, %v908, 0
        %v987 = vsel %vm506, %v909, 0
        %v990 = vsel %vm506, %v910, 0
        %v993 = vsel %vm506, %v911, 0
        %v996 = vsel %vm506, %v912, 0
        %v999 = vsel %vm506, %v913, 0
        %v1002 = vsel %vm506, %v914, 0
        %v1005 = vsel %vm506, %v915, 0
        %v1008 = vsel %vm506, %v916, 0
        %v1011 = vsel %vm506, %v917, 0
        %v1014 = vsel %vm506, %v918, 0
        %v1017 = vsel %vm506, %v919, 0
        %v1020 = vsel %vm506, %v920, 0
        %v1023 = vsel %vm506, %v921, 0
        %v1026 = vsel %vm506, %v922, 0
        %v1029 = vsel %vm506, %v923, 0
        %1031 = vmatprep.subr.mxu0 0.0
        %1032 = vmatpush1.msra.mxu0 %v924
        %1033 = vmatprep.subr.mxu0 0.0
        %1034 = vmatpush1.msra.mxu0 %v925
        %1035 = vmatprep.subr.mxu0 0.0
        %1036 = vmatpush1.msra.mxu0 %v926
        %1037 = vmatprep.subr.mxu0 0.0
        %1038 = vmatpush1.msra.mxu0 %v927
        %1039 = vmatprep.subr.mxu0 0.0
        %1040 = vmatpush1.msra.mxu0 0.0
        %1041 = vmatprep.subr.mxu0 0.0
        %1042 = vmatpush1.msra.mxu0 0.0
        %1043 = vmatprep.subr.mxu0 0.0
        %1044 = vmatpush1.msra.mxu0 0.0
        %1045 = vmatprep.subr.mxu0 0.0
        %1046 = vmatpush1.msra.mxu0 0.0
        %1047 = vmatprep.subr.mxu0 0.0
        %1048 = vmatpush1.msra.mxu0 0.0
        %1049 = vmatprep.subr.mxu0 0.0
        %1050 = vmatpush1.msra.mxu0 0.0
        %1051 = vmatprep.subr.mxu0 0.0
        %1052 = vmatpush1.msra.mxu0 0.0
        %1053 = vmatprep.subr.mxu0 0.0
        %1054 = vmatpush1.msra.mxu0 0.0
        %1055 = vmatprep.subr.mxu0 0.0
        %1056 = vmatpush1.msra.mxu0 0.0
        %1057 = vmatprep.subr.mxu0 0.0
        %1058 = vmatpush1.msra.mxu0 0.0
        %1059 = vmatprep.subr.mxu0 0.0
        %1060 = vmatpush1.msra.mxu0 0.0
        %1061 = vmatprep.subr.mxu0 0.0
        %1062 = vmatpush1.msra.mxu0 0.0
        %1063 = vmatprep.subr.mxu0 0.0
        %1064 = vmatpush1.msra.mxu0 0.0
        %1065 = vmatprep.subr.mxu0 0.0
        %1066 = vmatpush1.msra.mxu0 0.0
        %1067 = vmatprep.subr.mxu0 0.0
        %1068 = vmatpush1.msra.mxu0 0.0
        %1069 = vmatprep.subr.mxu0 0.0
        %1070 = vmatpush1.msra.mxu0 0.0
        %1071 = vmatprep.subr.mxu0 0.0
        %1072 = vmatpush1.msra.mxu0 0.0
        %1073 = vmatprep.subr.mxu0 0.0
        %1074 = vmatpush1.msra.mxu0 0.0
        %1075 = vmatprep.subr.mxu0 0.0
        %1076 = vmatpush1.msra.mxu0 0.0
        %1077 = vmatprep.subr.mxu0 0.0
        %1078 = vmatpush1.msra.mxu0 0.0
        %1079 = vmatprep.subr.mxu0 0.0
        %1080 = vmatpush1.msra.mxu0 0.0
        %1081 = vmatprep.subr.mxu0 0.0
        %1082 = vmatpush1.msra.mxu0 0.0
        %1083 = vmatprep.subr.mxu0 0.0
        %1084 = vmatpush1.msra.mxu0 0.0
        %1085 = vmatprep.subr.mxu0 0.0
        %1086 = vmatpush1.msra.mxu0 0.0
        %1087 = vmatprep.subr.mxu0 0.0
        %1088 = vmatpush1.msra.mxu0 0.0
        %1089 = vmatprep.subr.mxu0 0.0
        %1090 = vmatpush1.msra.mxu0 0.0
        %1091 = vmatprep.subr.mxu0 0.0
        %1092 = vmatpush1.msra.mxu0 0.0
        %1093 = vmatprep.subr.mxu0 0.0
        %1094 = vmatpush1.msra.mxu0 0.0
        %1095 = vmatprep.mubr.f32.mxu0 0.0
        %1096 = vmatmul.mubr.f32.gmra.mrb[0].mxu0 %v936
        %v1097 = vpop.f32.mrb[0].mxu0
        %v1098 = vadd.f32 %v933, %v1097
        %v1099 = vpop.f32.mrb[0].mxu0
        %1100 = vmatprep.mubr.f32.mxu0 0.0
        %1101 = vmatmul.mubr.f32.gmra.mrb[0].mxu0 %v939
        %v1102 = vpop.f32.mrb[0].mxu0
        %v1103 = vadd.f32 %v933, %v1102
        %v1104 = vpop.f32.mrb[0].mxu0
        %1105 = vmatprep.mubr.f32.mxu0 0.0
        %1106 = vmatmul.mubr.f32.gmra.mrb[0].mxu0 %v942
        %v1107 = vpop.f32.mrb[0].mxu0
        %v1108 = vadd.f32 %v933, %v1107
        %v1109 = vpop.f32.mrb[0].mxu0
        %1110 = vmatprep.mubr.f32.mxu0 0.0
        %1111 = vmatmul.mubr.f32.gmra.mrb[0].mxu0 %v945
        %v1112 = vpop.f32.mrb[0].mxu0
        %v1113 = vadd.f32 %v933, %v1112
        %v1114 = vpop.f32.mrb[0].mxu0
        %1115 = vmatprep.mubr.f32.mxu0 0.0
        %1116 = vmatmul.mubr.f32.gmra.mrb[0].mxu0 %v948
        %v1117 = vpop.f32.mrb[0].mxu0
        %v1118 = vadd.f32 %v933, %v1117
        %v1119 = vpop.f32.mrb[0].mxu0
        %1120 = vmatprep.mubr.f32.mxu0 0.0
        %1121 = vmatmul.mubr.f32.gmra.mrb[0].mxu0 %v951
        %v1122 = vpop.f32.mrb[0].mxu0
        %v1123 = vadd.f32 %v933, %v1122
        %v1124 = vpop.f32.mrb[0].mxu0
        %1125 = vmatprep.mubr.f32.mxu0 0.0
        %1126 = vmatmul.mubr.f32.gmra.mrb[0].mxu0 %v954
        %v1127 = vpop.f32.mrb[0].mxu0
        %v1128 = vadd.f32 %v933, %v1127
        %v1129 = vpop.f32.mrb[0].mxu0
        %1130 = vmatprep.mubr.f32.mxu0 0.0
        %1131 = vmatmul.mubr.f32.gmra.mrb[0].mxu0 %v957
        %v1132 = vpop.f32.mrb[0].mxu0
        %v1133 = vadd.f32 %v933, %v1132
        %v1134 = vpop.f32.mrb[0].mxu0
        %1135 = vmatprep.mubr.f32.mxu0 0.0
        %1136 = vmatmul.mubr.f32.gmra.mrb[0].mxu0 %v960
        %v1137 = vpop.f32.mrb[0].mxu0
        %v1138 = vadd.f32 %v933, %v1137
        %v1139 = vpop.f32.mrb[0].mxu0
        %1140 = vmatprep.mubr.f32.mxu0 0.0
        %1141 = vmatmul.mubr.f32.gmra.mrb[0].mxu0 %v963
        %v1142 = vpop.f32.mrb[0].mxu0
        %v1143 = vadd.f32 %v933, %v1142
        %v1144 = vpop.f32.mrb[0].mxu0
        %1145 = vmatprep.mubr.f32.mxu0 0.0
        %1146 = vmatmul.mubr.f32.gmra.mrb[0].mxu0 %v966
        %v1147 = vpop.f32.mrb[0].mxu0
        %v1148 = vadd.f32 %v933, %v1147
        %v1149 = vpop.f32.mrb[0].mxu0
        %1150 = vmatprep.mubr.f32.mxu0 0.0
        %1151 = vmatmul.mubr.f32.gmra.mrb[0].mxu0 %v969
        %v1152 = vpop.f32.mrb[0].mxu0
        %v1153 = vadd.f32 %v933, %v1152
        %v1154 = vpop.f32.mrb[0].mxu0
        %1155 = vmatprep.mubr.f32.mxu0 0.0
        %1156 = vmatmul.mubr.f32.gmra.mrb[0].mxu0 %v972
        %v1157 = vpop.f32.mrb[0].mxu0
        %v1158 = vadd.f32 %v933, %v1157
        %v1159 = vpop.f32.mrb[0].mxu0
        %1160 = vmatprep.mubr.f32.mxu0 0.0
        %1161 = vmatmul.mubr.f32.gmra.mrb[0].mxu0 %v975
        %v1162 = vpop.f32.mrb[0].mxu0
        %v1163 = vadd.f32 %v933, %v1162
        %v1164 = vpop.f32.mrb[0].mxu0
        %1165 = vmatprep.mubr.f32.mxu0 0.0
        %1166 = vmatmul.mubr.f32.gmra.mrb[0].mxu0 %v978
        %v1167 = vpop.f32.mrb[0].mxu0
        %v1168 = vadd.f32 %v933, %v1167
        %v1169 = vpop.f32.mrb[0].mxu0
        %1170 = vmatprep.mubr.f32.mxu0 0.0
        %1171 = vmatmul.mubr.f32.gmra.mrb[0].mxu0 %v981
        %v1172 = vpop.f32.mrb[0].mxu0
        %v1173 = vadd.f32 %v933, %v1172
        %v1174 = vpop.f32.mrb[0].mxu0
        %1175 = vmatprep.mubr.f32.mxu0 0.0
        %1176 = vmatmul.mubr.f32.gmra.mrb[0].mxu0 %v984
        %v1177 = vpop.f32.mrb[0].mxu0
        %v1178 = vadd.f32 %v933, %v1177
        %v1179 = vpop.f32.mrb[0].mxu0
        %1180 = vmatprep.mubr.f32.mxu0 0.0
        %1181 = vmatmul.mubr.f32.gmra.mrb[0].mxu0 %v987
        %v1182 = vpop.f32.mrb[0].mxu0
        %v1183 = vadd.f32 %v933, %v1182
        %v1184 = vpop.f32.mrb[0].mxu0
        %1185 = vmatprep.mubr.f32.mxu0 0.0
        %1186 = vmatmul.mubr.f32.gmra.mrb[0].mxu0 %v990
        %v1187 = vpop.f32.mrb[0].mxu0
        %v1188 = vadd.f32 %v933, %v1187
        %v1189 = vpop.f32.mrb[0].mxu0
        %1190 = vmatprep.mubr.f32.mxu0 0.0
        %1191 = vmatmul.mubr.f32.gmra.mrb[0].mxu0 %v993
        %v1192 = vpop.f32.mrb[0].mxu0
        %v1193 = vadd.f32 %v933, %v1192
        %v1194 = vpop.f32.mrb[0].mxu0
        %1195 = vmatprep.mubr.f32.mxu0 0.0
        %1196 = vmatmul.mubr.f32.gmra.mrb[0].mxu0 %v996
        %v1197 = vpop.f32.mrb[0].mxu0
        %v1198 = vadd.f32 %v933, %v1197
        %v1199 = vpop.f32.mrb[0].mxu0
        %1200 = vmatprep.mubr.f32.mxu0 0.0
        %1201 = vmatmul.mubr.f32.gmra.mrb[0].mxu0 %v999
        %v1202 = vpop.f32.mrb[0].mxu0
        %v1203 = vadd.f32 %v933, %v1202
        %v1204 = vpop.f32.mrb[0].mxu0
        %1205 = vmatprep.mubr.f32.mxu0 0.0
        %1206 = vmatmul.mubr.f32.gmra.mrb[0].mxu0 %v1002
        %v1207 = vpop.f32.mrb[0].mxu0
        %v1208 = vadd.f32 %v933, %v1207
        %v1209 = vpop.f32.mrb[0].mxu0
        %1210 = vmatprep.mubr.f32.mxu0 0.0
        %1211 = vmatmul.mubr.f32.gmra.mrb[0].mxu0 %v1005
        %v1212 = vpop.f32.mrb[0].mxu0
        %v1213 = vadd.f32 %v933, %v1212
        %v1214 = vpop.f32.mrb[0].mxu0
        %1215 = vmatprep.mubr.f32.mxu0 0.0
        %1216 = vmatmul.mubr.f32.gmra.mrb[0].mxu0 %v1008
        %v1217 = vpop.f32.mrb[0].mxu0
        %v1218 = vadd.f32 %v933, %v1217
        %v1219 = vpop.f32.mrb[0].mxu0
        %1220 = vmatprep.mubr.f32.mxu0 0.0
        %1221 = vmatmul.mubr.f32.gmra.mrb[0].mxu0 %v1011
        %v1222 = vpop.f32.mrb[0].mxu0
        %v1223 = vadd.f32 %v933, %v1222
        %v1224 = vpop.f32.mrb[0].mxu0
        %1225 = vmatprep.mubr.f32.mxu0 0.0
        %1226 = vmatmul.mubr.f32.gmra.mrb[0].mxu0 %v1014
        %v1227 = vpop.f32.mrb[0].mxu0
        %v1228 = vadd.f32 %v933, %v1227
        %v1229 = vpop.f32.mrb[0].mxu0
        %1230 = vmatprep.mubr.f32.mxu0 0.0
        %1231 = vmatmul.mubr.f32.gmra.mrb[0].mxu0 %v1017
        %v1232 = vpop.f32.mrb[0].mxu0
        %v1233 = vadd.f32 %v933, %v1232
        %v1234 = vpop.f32.mrb[0].mxu0
        %1235 = vmatprep.mubr.f32.mxu0 0.0
        %1236 = vmatmul.mubr.f32.gmra.mrb[0].mxu0 %v1020
        %v1237 = vpop.f32.mrb[0].mxu0
        %v1238 = vadd.f32 %v933, %v1237
        %v1239 = vpop.f32.mrb[0].mxu0
        %1240 = vmatprep.mubr.f32.mxu0 0.0
        %1241 = vmatmul.mubr.f32.gmra.mrb[0].mxu0 %v1023
        %v1242 = vpop.f32.mrb[0].mxu0
        %v1243 = vadd.f32 %v933, %v1242
        %v1244 = vpop.f32.mrb[0].mxu0
        %1245 = vmatprep.mubr.f32.mxu0 0.0
        %1246 = vmatmul.mubr.f32.gmra.mrb[0].mxu0 %v1026
        %v1247 = vpop.f32.mrb[0].mxu0
        %v1248 = vadd.f32 %v933, %v1247
        %v1249 = vpop.f32.mrb[0].mxu0
        %1250 = vmatprep.mubr.f32.mxu0 0.0
        %1251 = vmatmul.mubr.f32.gmra.mrb[0].mxu0 %v1029
        %v1252 = vpop.f32.mrb[0].mxu0
        %v1253 = vadd.f32 %v933, %v1252
        %v1254 = vpop.f32.mrb[0].mxu0
        %1255 = vdwg.mxu0
        %v1256 = vld [vmem:[#allocation5] sm:$0xff]
        %v1257 = vld [vmem:[#allocation5 + $0x8] sm:$0xff]
        %v1258 = vld [vmem:[#allocation5 + $0x10] sm:$0xff]
        %v1259 = vld [vmem:[#allocation5 + $0x18] sm:$0xff]
        %v1260 = vld [vmem:[#allocation5 + $0x20] sm:$0xff]
        %v1261 = vld [vmem:[#allocation5 + $0x28] sm:$0xff]
        %v1262 = vld [vmem:[#allocation5 + $0x30] sm:$0xff]
        %v1263 = vld [vmem:[#allocation5 + $0x38] sm:$0xff]
        %v1264 = vld [vmem:[#allocation5 + $0x40] sm:$0xff]
        %v1265 = vld [vmem:[#allocation5 + $0x48] sm:$0xff]
        %v1266 = vld [vmem:[#allocation5 + $0x50] sm:$0xff]
        %v1267 = vld [vmem:[#allocation5 + $0x58] sm:$0xff]
        %v1268 = vld [vmem:[#allocation5 + $0x60] sm:$0xff]
        %v1269 = vld [vmem:[#allocation5 + $0x68] sm:$0xff]
        %v1270 = vld [vmem:[#allocation5 + $0x70] sm:$0xff]
        %v1271 = vld [vmem:[#allocation5 + $0x78] sm:$0xff]
        %v1272 = vld [vmem:[#allocation5 + $0x80] sm:$0xff]
        %v1273 = vld [vmem:[#allocation5 + $0x88] sm:$0xff]
        %v1274 = vld [vmem:[#allocation5 + $0x90] sm:$0xff]
        %v1275 = vld [vmem:[#allocation5 + $0x98] sm:$0xff]
        %v1276 = vld [vmem:[#allocation5 + $0xa0] sm:$0xff]
        %v1277 = vld [vmem:[#allocation5 + $0xa8] sm:$0xff]
        %v1278 = vld [vmem:[#allocation5 + $0xb0] sm:$0xff]
        %v1279 = vld [vmem:[#allocation5 + $0xb8] sm:$0xff]
        %v1280 = vld [vmem:[#allocation5 + $0xc0] sm:$0xff]
        %v1281 = vld [vmem:[#allocation5 + $0xc8] sm:$0xff]
        %v1282 = vld [vmem:[#allocation5 + $0xd0] sm:$0xff]
        %v1283 = vld [vmem:[#allocation5 + $0xd8] sm:$0xff]
        %v1284 = vld [vmem:[#allocation5 + $0xe0] sm:$0xff]
        %v1285 = vld [vmem:[#allocation5 + $0xe8] sm:$0xff]
        %v1286 = vld [vmem:[#allocation5 + $0xf0] sm:$0xff]
        %v1287 = vld [vmem:[#allocation5 + $0xf8] sm:$0xff]
        %v1288 = vld [vmem:[#allocation5 + $0x100] sm:$0xff]
        %v1289 = vld [vmem:[#allocation5 + $0x108] sm:$0xff]
        %v1290 = vld [vmem:[#allocation5 + $0x110] sm:$0xff]
        %v1291 = vld [vmem:[#allocation5 + $0x118] sm:$0xff]
        %v1292 = vld [vmem:[#allocation5 + $0x120] sm:$0xff]
        %v1293 = vld [vmem:[#allocation5 + $0x128] sm:$0xff]
        %v1294 = vld [vmem:[#allocation5 + $0x130] sm:$0xff]
        %v1295 = vld [vmem:[#allocation5 + $0x138] sm:$0xff]
        %v1296 = vld [vmem:[#allocation5 + $0x140] sm:$0xff]
        %v1297 = vld [vmem:[#allocation5 + $0x148] sm:$0xff]
        %v1298 = vld [vmem:[#allocation5 + $0x150] sm:$0xff]
        %v1299 = vld [vmem:[#allocation5 + $0x158] sm:$0xff]
        %v1300 = vld [vmem:[#allocation5 + $0x160] sm:$0xff]
        %v1301 = vld [vmem:[#allocation5 + $0x168] sm:$0xff]
        %v1302 = vld [vmem:[#allocation5 + $0x170] sm:$0xff]
        %v1303 = vld [vmem:[#allocation5 + $0x178] sm:$0xff]
        %v1304 = vld [vmem:[#allocation5 + $0x180] sm:$0xff]
        %v1305 = vld [vmem:[#allocation5 + $0x188] sm:$0xff]
        %v1306 = vld [vmem:[#allocation5 + $0x190] sm:$0xff]
        %v1307 = vld [vmem:[#allocation5 + $0x198] sm:$0xff]
        %v1308 = vld [vmem:[#allocation5 + $0x1a0] sm:$0xff]
        %v1309 = vld [vmem:[#allocation5 + $0x1a8] sm:$0xff]
        %v1310 = vld [vmem:[#allocation5 + $0x1b0] sm:$0xff]
        %v1311 = vld [vmem:[#allocation5 + $0x1b8] sm:$0xff]
        %v1312 = vld [vmem:[#allocation5 + $0x1c0] sm:$0xff]
        %v1313 = vld [vmem:[#allocation5 + $0x1c8] sm:$0xff]
        %v1314 = vld [vmem:[#allocation5 + $0x1d0] sm:$0xff]
        %v1315 = vld [vmem:[#allocation5 + $0x1d8] sm:$0xff]
        %v1316 = vld [vmem:[#allocation5 + $0x1e0] sm:$0xff]
        %v1317 = vld [vmem:[#allocation5 + $0x1e8] sm:$0xff]
        %v1318 = vld [vmem:[#allocation5 + $0x1f0] sm:$0xff]
        %v1319 = vld [vmem:[#allocation5 + $0x1f8] sm:$0xff]
        %v1320 = vld [vmem:[%s5] sm:$0x1]
        %v1322 = vlaneseq
        %v1323 = vshrl.u32 %v1322, 7
        %v1324 = vsub.s32 0, %v1323
        %v1325 = vrot.slane %v1320, %v1324
        %v1327 = vadd.f32 %v474, %v1325
        %v1328 = vadd.f32 %v475, %v1325
        %v1329 = vadd.f32 %v476, %v1325
        %v1330 = vadd.f32 %v477, %v1325
        %v1331 = vadd.f32 %v478, %v1325
        %v1332 = vadd.f32 %v479, %v1325
        %v1333 = vadd.f32 %v480, %v1325
        %v1334 = vadd.f32 %v481, %v1325
        %v1335 = vadd.f32 %v482, %v1325
        %v1336 = vadd.f32 %v483, %v1325
        %v1337 = vadd.f32 %v484, %v1325
        %v1338 = vadd.f32 %v485, %v1325
        %v1339 = vadd.f32 %v486, %v1325
        %v1340 = vadd.f32 %v487, %v1325
        %v1341 = vadd.f32 %v488, %v1325
        %v1342 = vadd.f32 %v489, %v1325
        %v1343 = vadd.f32 %v490, %v1325
        %v1344 = vadd.f32 %v491, %v1325
        %v1345 = vadd.f32 %v492, %v1325
        %v1346 = vadd.f32 %v493, %v1325
        %v1347 = vadd.f32 %v494, %v1325
        %v1348 = vadd.f32 %v495, %v1325
        %v1349 = vadd.f32 %v496, %v1325
        %v1350 = vadd.f32 %v497, %v1325
        %v1351 = vadd.f32 %v498, %v1325
        %v1352 = vadd.f32 %v499, %v1325
        %v1353 = vadd.f32 %v500, %v1325
        %v1354 = vadd.f32 %v501, %v1325
        %v1355 = vadd.f32 %v502, %v1325
        %v1356 = vadd.f32 %v503, %v1325
        %v1357 = vadd.f32 %v504, %v1325
        %v1358 = vadd.f32 %v505, %v1325
        %1391 = vrot.lane.b32.xlu0 %v1098, 96
        %v1392 = vpop.permute.xlu0 %1391
        %1393 = vrot.lane.b32.xlu0 %v1103, 96
        %v1394 = vpop.permute.xlu0 %1393
        %1395 = vrot.lane.b32.xlu0 %v1108, 96
        %v1396 = vpop.permute.xlu0 %1395
        %1397 = vrot.lane.b32.xlu0 %v1113, 96
        %v1398 = vpop.permute.xlu0 %1397
        %1399 = vrot.lane.b32.xlu0 %v1118, 96
        %v1400 = vpop.permute.xlu0 %1399
        %1401 = vrot.lane.b32.xlu0 %v1123, 96
        %v1402 = vpop.permute.xlu0 %1401
        %1403 = vrot.lane.b32.xlu0 %v1128, 96
        %v1404 = vpop.permute.xlu0 %1403
        %1405 = vrot.lane.b32.xlu0 %v1133, 96
        %v1406 = vpop.permute.xlu0 %1405
        %1407 = vrot.lane.b32.xlu0 %v1138, 96
        %v1408 = vpop.permute.xlu0 %1407
        %1409 = vrot.lane.b32.xlu0 %v1143, 96
        %v1410 = vpop.permute.xlu0 %1409
        %1411 = vrot.lane.b32.xlu0 %v1148, 96
        %v1412 = vpop.permute.xlu0 %1411
        %1413 = vrot.lane.b32.xlu0 %v1153, 96
        %v1414 = vpop.permute.xlu0 %1413
        %1415 = vrot.lane.b32.xlu0 %v1158, 96
        %v1416 = vpop.permute.xlu0 %1415
        %1417 = vrot.lane.b32.xlu0 %v1163, 96
        %v1418 = vpop.permute.xlu0 %1417
        %1419 = vrot.lane.b32.xlu0 %v1168, 96
        %v1420 = vpop.permute.xlu0 %1419
        %1421 = vrot.lane.b32.xlu0 %v1173, 96
        %v1422 = vpop.permute.xlu0 %1421
        %1423 = vrot.lane.b32.xlu0 %v1178, 96
        %v1424 = vpop.permute.xlu0 %1423
        %1425 = vrot.lane.b32.xlu0 %v1183, 96
        %v1426 = vpop.permute.xlu0 %1425
        %1427 = vrot.lane.b32.xlu0 %v1188, 96
        %v1428 = vpop.permute.xlu0 %1427
        %1429 = vrot.lane.b32.xlu0 %v1193, 96
        %v1430 = vpop.permute.xlu0 %1429
        %1431 = vrot.lane.b32.xlu0 %v1198, 96
        %v1432 = vpop.permute.xlu0 %1431
        %1433 = vrot.lane.b32.xlu0 %v1203, 96
        %v1434 = vpop.permute.xlu0 %1433
        %1435 = vrot.lane.b32.xlu0 %v1208, 96
        %v1436 = vpop.permute.xlu0 %1435
        %1437 = vrot.lane.b32.xlu0 %v1213, 96
        %v1438 = vpop.permute.xlu0 %1437
        %1439 = vrot.lane.b32.xlu0 %v1218, 96
        %v1440 = vpop.permute.xlu0 %1439
        %1441 = vrot.lane.b32.xlu0 %v1223, 96
        %v1442 = vpop.permute.xlu0 %1441
        %1443 = vrot.lane.b32.xlu0 %v1228, 96
        %v1444 = vpop.permute.xlu0 %1443
        %1445 = vrot.lane.b32.xlu0 %v1233, 96
        %v1446 = vpop.permute.xlu0 %1445
        %1447 = vrot.lane.b32.xlu0 %v1238, 96
        %v1448 = vpop.permute.xlu0 %1447
        %1449 = vrot.lane.b32.xlu0 %v1243, 96
        %v1450 = vpop.permute.xlu0 %1449
        %1451 = vrot.lane.b32.xlu0 %v1248, 96
        %v1452 = vpop.permute.xlu0 %1451
        %1453 = vrot.lane.b32.xlu0 %v1253, 96
        %v1454 = vpop.permute.xlu0 %1453
        %vm1455 = vcmask 130048
        %v1456 = vsel %vm1455, %v1098, 0
        %v1458 = vsel %vm1455, %v1103, 0
        %v1460 = vsel %vm1455, %v1108, 0
        %v1462 = vsel %vm1455, %v1113, 0
        %v1464 = vsel %vm1455, %v1118, 0
        %v1466 = vsel %vm1455, %v1123, 0
        %v1468 = vsel %vm1455, %v1128, 0
        %v1470 = vsel %vm1455, %v1133, 0
        %v1472 = vsel %vm1455, %v1138, 0
        %v1474 = vsel %vm1455, %v1143, 0
        %v1476 = vsel %vm1455, %v1148, 0
        %v1478 = vsel %vm1455, %v1153, 0
        %v1480 = vsel %vm1455, %v1158, 0
        %v1482 = vsel %vm1455, %v1163, 0
        %v1484 = vsel %vm1455, %v1168, 0
        %v1486 = vsel %vm1455, %v1173, 0
        %v1488 = vsel %vm1455, %v1178, 0
        %v1490 = vsel %vm1455, %v1183, 0
        %v1492 = vsel %vm1455, %v1188, 0
        %v1494 = vsel %vm1455, %v1193, 0
        %v1496 = vsel %vm1455, %v1198, 0
        %v1498 = vsel %vm1455, %v1203, 0
        %v1500 = vsel %vm1455, %v1208, 0
        %v1502 = vsel %vm1455, %v1213, 0
        %v1504 = vsel %vm1455, %v1218, 0
        %v1506 = vsel %vm1455, %v1223, 0
        %v1508 = vsel %vm1455, %v1228, 0
        %v1510 = vsel %vm1455, %v1233, 0
        %v1512 = vsel %vm1455, %v1238, 0
        %v1514 = vsel %vm1455, %v1243, 0
        %v1516 = vsel %vm1455, %v1248, 0
        %v1518 = vsel %vm1455, %v1253, 0
        %v1520 = vsel %vm1455, %v1392, 0
        %v1522 = vsel %vm1455, %v1394, 0
        %v1524 = vsel %vm1455, %v1396, 0
        %v1526 = vsel %vm1455, %v1398, 0
        %v1528 = vsel %vm1455, %v1400, 0
        %v1530 = vsel %vm1455, %v1402, 0
        %v1532 = vsel %vm1455, %v1404, 0
        %v1534 = vsel %vm1455, %v1406, 0
        %v1536 = vsel %vm1455, %v1408, 0
        %v1538 = vsel %vm1455, %v1410, 0
        %v1540 = vsel %vm1455, %v1412, 0
        %v1542 = vsel %vm1455, %v1414, 0
        %v1544 = vsel %vm1455, %v1416, 0
        %v1546 = vsel %vm1455, %v1418, 0
        %v1548 = vsel %vm1455, %v1420, 0
        %v1550 = vsel %vm1455, %v1422, 0
        %v1552 = vsel %vm1455, %v1424, 0
        %v1554 = vsel %vm1455, %v1426, 0
        %v1556 = vsel %vm1455, %v1428, 0
        %v1558 = vsel %vm1455, %v1430, 0
        %v1560 = vsel %vm1455, %v1432, 0
        %v1562 = vsel %vm1455, %v1434, 0
        %v1564 = vsel %vm1455, %v1436, 0
        %v1566 = vsel %vm1455, %v1438, 0
        %v1568 = vsel %vm1455, %v1440, 0
        %v1570 = vsel %vm1455, %v1442, 0
        %v1572 = vsel %vm1455, %v1444, 0
        %v1574 = vsel %vm1455, %v1446, 0
        %v1576 = vsel %vm1455, %v1448, 0
        %v1578 = vsel %vm1455, %v1450, 0
        %v1580 = vsel %vm1455, %v1452, 0
        %v1582 = vsel %vm1455, %v1454, 0
        %1584 = vmatprep.subr.mxu0 0.0
        %1585 = vmatpush1.xpose.msra.mxu0 %v1520
        %1586 = vmatprep.subr.mxu0 0.0
        %1587 = vmatpush1.xpose.msra.mxu0 %v1522
        %1588 = vmatprep.subr.mxu0 0.0
        %1589 = vmatpush1.xpose.msra.mxu0 %v1524
        %1590 = vmatprep.subr.mxu0 0.0
        %1591 = vmatpush1.xpose.msra.mxu0 %v1526
        %1592 = vmatprep.subr.mxu0 0.0
        %1593 = vmatpush1.xpose.msra.mxu0 %v1528
        %1594 = vmatprep.subr.mxu0 0.0
        %1595 = vmatpush1.xpose.msra.mxu0 %v1530
        %1596 = vmatprep.subr.mxu0 0.0
        %1597 = vmatpush1.xpose.msra.mxu0 %v1532
        %1598 = vmatprep.subr.mxu0 0.0
        %1599 = vmatpush1.xpose.msra.mxu0 %v1534
        %1600 = vmatprep.subr.mxu0 0.0
        %1601 = vmatpush1.xpose.msra.mxu0 %v1536
        %1602 = vmatprep.subr.mxu0 0.0
        %1603 = vmatpush1.xpose.msra.mxu0 %v1538
        %1604 = vmatprep.subr.mxu0 0.0
        %1605 = vmatpush1.xpose.msra.mxu0 %v1540
        %1606 = vmatprep.subr.mxu0 0.0
        %1607 = vmatpush1.xpose.msra.mxu0 %v1542
        %1608 = vmatprep.subr.mxu0 0.0
        %1609 = vmatpush1.xpose.msra.mxu0 %v1544
        %1610 = vmatprep.subr.mxu0 0.0
        %1611 = vmatpush1.xpose.msra.mxu0 %v1546
        %1612 = vmatprep.subr.mxu0 0.0
        %1613 = vmatpush1.xpose.msra.mxu0 %v1548
        %1614 = vmatprep.subr.mxu0 0.0
        %1615 = vmatpush1.xpose.msra.mxu0 %v1550
        %1616 = vmatprep.subr.mxu0 0.0
        %1617 = vmatpush1.xpose.msra.mxu0 %v1552
        %1618 = vmatprep.subr.mxu0 0.0
        %1619 = vmatpush1.xpose.msra.mxu0 %v1554
        %1620 = vmatprep.subr.mxu0 0.0
        %1621 = vmatpush1.xpose.msra.mxu0 %v1556
        %1622 = vmatprep.subr.mxu0 0.0
        %1623 = vmatpush1.xpose.msra.mxu0 %v1558
        %1624 = vmatprep.subr.mxu0 0.0
        %1625 = vmatpush1.xpose.msra.mxu0 %v1560
        %1626 = vmatprep.subr.mxu0 0.0
        %1627 = vmatpush1.xpose.msra.mxu0 %v1562
        %1628 = vmatprep.subr.mxu0 0.0
        %1629 = vmatpush1.xpose.msra.mxu0 %v1564
        %1630 = vmatprep.subr.mxu0 0.0
        %1631 = vmatpush1.xpose.msra.mxu0 %v1566
        %1632 = vmatprep.subr.mxu0 0.0
        %1633 = vmatpush1.xpose.msra.mxu0 %v1568
        %1634 = vmatprep.subr.mxu0 0.0
        %1635 = vmatpush1.xpose.msra.mxu0 %v1570
        %1636 = vmatprep.subr.mxu0 0.0
        %1637 = vmatpush1.xpose.msra.mxu0 %v1572
        %1638 = vmatprep.subr.mxu0 0.0
        %1639 = vmatpush1.xpose.msra.mxu0 %v1574
        %1640 = vmatprep.subr.mxu0 0.0
        %1641 = vmatpush1.xpose.msra.mxu0 %v1576
        %1642 = vmatprep.subr.mxu0 0.0
        %1643 = vmatpush1.xpose.msra.mxu0 %v1578
        %1644 = vmatprep.subr.mxu0 0.0
        %1645 = vmatpush1.xpose.msra.mxu0 %v1580
        %1646 = vmatprep.subr.mxu0 0.0
        %1647 = vmatpush1.xpose.msra.mxu0 %v1582
        %1648 = vmatprep.mubr.f32.mxu0 0.0
        %1649 = vmatmul.mubr.f32.gmra.mrb[0].mxu0 %v1456
        %v1650 = vpop.f32.mrb[0].mxu0
        %v1651 = vadd.f32 %v1256, %v1650
        %v1652 = vpop.f32.mrb[0].mxu0
        %v1653 = vadd.f32 %v1257, %v1652
        %1654 = vmatprep.mubr.f32.mxu0 0.0
        %1655 = vmatmul.mubr.f32.gmra.mrb[0].mxu0 %v1458
        %v1656 = vpop.f32.mrb[0].mxu0
        %v1657 = vadd.f32 %v1258, %v1656
        %v1658 = vpop.f32.mrb[0].mxu0
        %v1659 = vadd.f32 %v1259, %v1658
        %1660 = vmatprep.mubr.f32.mxu0 0.0
        %1661 = vmatmul.mubr.f32.gmra.mrb[0].mxu0 %v1460
        %v1662 = vpop.f32.mrb[0].mxu0
        %v1663 = vadd.f32 %v1260, %v1662
        %v1664 = vpop.f32.mrb[0].mxu0
        %v1665 = vadd.f32 %v1261, %v1664
        %1666 = vmatprep.mubr.f32.mxu0 0.0
        %1667 = vmatmul.mubr.f32.gmra.mrb[0].mxu0 %v1462
        %v1668 = vpop.f32.mrb[0].mxu0
        %v1669 = vadd.f32 %v1262, %v1668
        %v1670 = vpop.f32.mrb[0].mxu0
        %v1671 = vadd.f32 %v1263, %v1670
        %1672 = vmatprep.mubr.f32.mxu0 0.0
        %1673 = vmatmul.mubr.f32.gmra.mrb[0].mxu0 %v1464
        %v1674 = vpop.f32.mrb[0].mxu0
        %v1675 = vadd.f32 %v1264, %v1674
        %v1676 = vpop.f32.mrb[0].mxu0
        %v1677 = vadd.f32 %v1265, %v1676
        %1678 = vmatprep.mubr.f32.mxu0 0.0
        %1679 = vmatmul.mubr.f32.gmra.mrb[0].mxu0 %v1466
        %v1680 = vpop.f32.mrb[0].mxu0
        %v1681 = vadd.f32 %v1266, %v1680
        %v1682 = vpop.f32.mrb[0].mxu0
        %v1683 = vadd.f32 %v1267, %v1682
        %1684 = vmatprep.mubr.f32.mxu0 0.0
        %1685 = vmatmul.mubr.f32.gmra.mrb[0].mxu0 %v1468
        %v1686 = vpop.f32.mrb[0].mxu0
        %v1687 = vadd.f32 %v1268, %v1686
        %v1688 = vpop.f32.mrb[0].mxu0
        %v1689 = vadd.f32 %v1269, %v1688
        %1690 = vmatprep.mubr.f32.mxu0 0.0
        %1691 = vmatmul.mubr.f32.gmra.mrb[0].mxu0 %v1470
        %v1692 = vpop.f32.mrb[0].mxu0
        %v1693 = vadd.f32 %v1270, %v1692
        %v1694 = vpop.f32.mrb[0].mxu0
        %v1695 = vadd.f32 %v1271, %v1694
        %1696 = vmatprep.mubr.f32.mxu0 0.0
        %1697 = vmatmul.mubr.f32.gmra.mrb[0].mxu0 %v1472
        %v1698 = vpop.f32.mrb[0].mxu0
        %v1699 = vadd.f32 %v1272, %v1698
        %v1700 = vpop.f32.mrb[0].mxu0
        %v1701 = vadd.f32 %v1273, %v1700
        %1702 = vmatprep.mubr.f32.mxu0 0.0
        %1703 = vmatmul.mubr.f32.gmra.mrb[0].mxu0 %v1474
        %v1704 = vpop.f32.mrb[0].mxu0
        %v1705 = vadd.f32 %v1274, %v1704
        %v1706 = vpop.f32.mrb[0].mxu0
        %v1707 = vadd.f32 %v1275, %v1706
        %1708 = vmatprep.mubr.f32.mxu0 0.0
        %1709 = vmatmul.mubr.f32.gmra.mrb[0].mxu0 %v1476
        %v1710 = vpop.f32.mrb[0].mxu0
        %v1711 = vadd.f32 %v1276, %v1710
        %v1712 = vpop.f32.mrb[0].mxu0
        %v1713 = vadd.f32 %v1277, %v1712
        %1714 = vmatprep.mubr.f32.mxu0 0.0
        %1715 = vmatmul.mubr.f32.gmra.mrb[0].mxu0 %v1478
        %v1716 = vpop.f32.mrb[0].mxu0
        %v1717 = vadd.f32 %v1278, %v1716
        %v1718 = vpop.f32.mrb[0].mxu0
        %v1719 = vadd.f32 %v1279, %v1718
        %1720 = vmatprep.mubr.f32.mxu0 0.0
        %1721 = vmatmul.mubr.f32.gmra.mrb[0].mxu0 %v1480
        %v1722 = vpop.f32.mrb[0].mxu0
        %v1723 = vadd.f32 %v1280, %v1722
        %v1724 = vpop.f32.mrb[0].mxu0
        %v1725 = vadd.f32 %v1281, %v1724
        %1726 = vmatprep.mubr.f32.mxu0 0.0
        %1727 = vmatmul.mubr.f32.gmra.mrb[0].mxu0 %v1482
        %v1728 = vpop.f32.mrb[0].mxu0
        %v1729 = vadd.f32 %v1282, %v1728
        %v1730 = vpop.f32.mrb[0].mxu0
        %v1731 = vadd.f32 %v1283, %v1730
        %1732 = vmatprep.mubr.f32.mxu0 0.0
        %1733 = vmatmul.mubr.f32.gmra.mrb[0].mxu0 %v1484
        %v1734 = vpop.f32.mrb[0].mxu0
        %v1735 = vadd.f32 %v1284, %v1734
        %v1736 = vpop.f32.mrb[0].mxu0
        %v1737 = vadd.f32 %v1285, %v1736
        %1738 = vmatprep.mubr.f32.mxu0 0.0
        %1739 = vmatmul.mubr.f32.gmra.mrb[0].mxu0 %v1486
        %v1740 = vpop.f32.mrb[0].mxu0
        %v1741 = vadd.f32 %v1286, %v1740
        %v1742 = vpop.f32.mrb[0].mxu0
        %v1743 = vadd.f32 %v1287, %v1742
        %1744 = vmatprep.mubr.f32.mxu0 0.0
        %1745 = vmatmul.mubr.f32.gmra.mrb[0].mxu0 %v1488
        %v1746 = vpop.f32.mrb[0].mxu0
        %v1747 = vadd.f32 %v1288, %v1746
        %v1748 = vpop.f32.mrb[0].mxu0
        %v1749 = vadd.f32 %v1289, %v1748
        %1750 = vmatprep.mubr.f32.mxu0 0.0
        %1751 = vmatmul.mubr.f32.gmra.mrb[0].mxu0 %v1490
        %v1752 = vpop.f32.mrb[0].mxu0
        %v1753 = vadd.f32 %v1290, %v1752
        %v1754 = vpop.f32.mrb[0].mxu0
        %v1755 = vadd.f32 %v1291, %v1754
        %1756 = vmatprep.mubr.f32.mxu0 0.0
        %1757 = vmatmul.mubr.f32.gmra.mrb[0].mxu0 %v1492
        %v1758 = vpop.f32.mrb[0].mxu0
        %v1759 = vadd.f32 %v1292, %v1758
        %v1760 = vpop.f32.mrb[0].mxu0
        %v1761 = vadd.f32 %v1293, %v1760
        %1762 = vmatprep.mubr.f32.mxu0 0.0
        %1763 = vmatmul.mubr.f32.gmra.mrb[0].mxu0 %v1494
        %v1764 = vpop.f32.mrb[0].mxu0
        %v1765 = vadd.f32 %v1294, %v1764
        %v1766 = vpop.f32.mrb[0].mxu0
        %v1767 = vadd.f32 %v1295, %v1766
        %1768 = vmatprep.mubr.f32.mxu0 0.0
        %1769 = vmatmul.mubr.f32.gmra.mrb[0].mxu0 %v1496
        %v1770 = vpop.f32.mrb[0].mxu0
        %v1771 = vadd.f32 %v1296, %v1770
        %v1772 = vpop.f32.mrb[0].mxu0
        %v1773 = vadd.f32 %v1297, %v1772
        %1774 = vmatprep.mubr.f32.mxu0 0.0
        %1775 = vmatmul.mubr.f32.gmra.mrb[0].mxu0 %v1498
        %v1776 = vpop.f32.mrb[0].mxu0
        %v1777 = vadd.f32 %v1298, %v1776
        %v1778 = vpop.f32.mrb[0].mxu0
        %v1779 = vadd.f32 %v1299, %v1778
        %1780 = vmatprep.mubr.f32.mxu0 0.0
        %1781 = vmatmul.mubr.f32.gmra.mrb[0].mxu0 %v1500
        %v1782 = vpop.f32.mrb[0].mxu0
        %v1783 = vadd.f32 %v1300, %v1782
        %v1784 = vpop.f32.mrb[0].mxu0
        %v1785 = vadd.f32 %v1301, %v1784
        %1786 = vmatprep.mubr.f32.mxu0 0.0
        %1787 = vmatmul.mubr.f32.gmra.mrb[0].mxu0 %v1502
        %v1788 = vpop.f32.mrb[0].mxu0
        %v1789 = vadd.f32 %v1302, %v1788
        %v1790 = vpop.f32.mrb[0].mxu0
        %v1791 = vadd.f32 %v1303, %v1790
        %1792 = vmatprep.mubr.f32.mxu0 0.0
        %1793 = vmatmul.mubr.f32.gmra.mrb[0].mxu0 %v1504
        %v1794 = vpop.f32.mrb[0].mxu0
        %v1795 = vadd.f32 %v1304, %v1794
        %v1796 = vpop.f32.mrb[0].mxu0
        %v1797 = vadd.f32 %v1305, %v1796
        %1798 = vmatprep.mubr.f32.mxu0 0.0
        %1799 = vmatmul.mubr.f32.gmra.mrb[0].mxu0 %v1506
        %v1800 = vpop.f32.mrb[0].mxu0
        %v1801 = vadd.f32 %v1306, %v1800
        %v1802 = vpop.f32.mrb[0].mxu0
        %v1803 = vadd.f32 %v1307, %v1802
        %1804 = vmatprep.mubr.f32.mxu0 0.0
        %1805 = vmatmul.mubr.f32.gmra.mrb[0].mxu0 %v1508
        %v1806 = vpop.f32.mrb[0].mxu0
        %v1807 = vadd.f32 %v1308, %v1806
        %v1808 = vpop.f32.mrb[0].mxu0
        %v1809 = vadd.f32 %v1309, %v1808
        %1810 = vmatprep.mubr.f32.mxu0 0.0
        %1811 = vmatmul.mubr.f32.gmra.mrb[0].mxu0 %v1510
        %v1812 = vpop.f32.mrb[0].mxu0
        %v1813 = vadd.f32 %v1310, %v1812
        %v1814 = vpop.f32.mrb[0].mxu0
        %v1815 = vadd.f32 %v1311, %v1814
        %1816 = vmatprep.mubr.f32.mxu0 0.0
        %1817 = vmatmul.mubr.f32.gmra.mrb[0].mxu0 %v1512
        %v1818 = vpop.f32.mrb[0].mxu0
        %v1819 = vadd.f32 %v1312, %v1818
        %v1820 = vpop.f32.mrb[0].mxu0
        %v1821 = vadd.f32 %v1313, %v1820
        %1822 = vmatprep.mubr.f32.mxu0 0.0
        %1823 = vmatmul.mubr.f32.gmra.mrb[0].mxu0 %v1514
        %v1824 = vpop.f32.mrb[0].mxu0
        %v1825 = vadd.f32 %v1314, %v1824
        %v1826 = vpop.f32.mrb[0].mxu0
        %v1827 = vadd.f32 %v1315, %v1826
        %1828 = vmatprep.mubr.f32.mxu0 0.0
        %1829 = vmatmul.mubr.f32.gmra.mrb[0].mxu0 %v1516
        %v1830 = vpop.f32.mrb[0].mxu0
        %v1831 = vadd.f32 %v1316, %v1830
        %v1832 = vpop.f32.mrb[0].mxu0
        %v1833 = vadd.f32 %v1317, %v1832
        %1834 = vmatprep.mubr.f32.mxu0 0.0
        %1835 = vmatmul.mubr.f32.gmra.mrb[0].mxu0 %v1518
        %v1836 = vpop.f32.mrb[0].mxu0
        %v1837 = vadd.f32 %v1318, %v1836
        %v1838 = vpop.f32.mrb[0].mxu0
        %v1839 = vadd.f32 %v1319, %v1838
        %1840 = vdwg.mxu0
        %v1841 = vmax.f32 %v1651, %v1653
        %1842 = vmax.xlane.f32.xlu0 %v1841
        %v1843 = vpop.xlane.xlu0 %1842
        %v1844 = vmax.f32 %v1657, %v1659
        %1845 = vmax.xlane.f32.xlu0 %v1844
        %v1846 = vpop.xlane.xlu0 %1845
        %v1847 = vmax.f32 %v1663, %v1665
        %1848 = vmax.xlane.f32.xlu0 %v1847
        %v1849 = vpop.xlane.xlu0 %1848
        %v1850 = vmax.f32 %v1669, %v1671
        %1851 = vmax.xlane.f32.xlu0 %v1850
        %v1852 = vpop.xlane.xlu0 %1851
        %v1853 = vmax.f32 %v1675, %v1677
        %1854 = vmax.xlane.f32.xlu0 %v1853
        %v1855 = vpop.xlane.xlu0 %1854
        %v1856 = vmax.f32 %v1681, %v1683
        %1857 = vmax.xlane.f32.xlu0 %v1856
        %v1858 = vpop.xlane.xlu0 %1857
        %v1859 = vmax.f32 %v1687, %v1689
        %1860 = vmax.xlane.f32.xlu0 %v1859
        %v1861 = vpop.xlane.xlu0 %1860
        %v1862 = vmax.f32 %v1693, %v1695
        %1863 = vmax.xlane.f32.xlu0 %v1862
        %v1864 = vpop.xlane.xlu0 %1863
        %v1865 = vmax.f32 %v1699, %v1701
        %1866 = vmax.xlane.f32.xlu0 %v1865
        %v1867 = vpop.xlane.xlu0 %1866
        %v1868 = vmax.f32 %v1705, %v1707
        %1869 = vmax.xlane.f32.xlu0 %v1868
        %v1870 = vpop.xlane.xlu0 %1869
        %v1871 = vmax.f32 %v1711, %v1713
        %1872 = vmax.xlane.f32.xlu0 %v1871
        %v1873 = vpop.xlane.xlu0 %1872
        %v1874 = vmax.f32 %v1717, %v1719
        %1875 = vmax.xlane.f32.xlu0 %v1874
        %v1876 = vpop.xlane.xlu0 %1875
        %v1877 = vmax.f32 %v1723, %v1725
        %1878 = vmax.xlane.f32.xlu0 %v1877
        %v1879 = vpop.xlane.xlu0 %1878
        %v1880 = vmax.f32 %v1729, %v1731
        %1881 = vmax.xlane.f32.xlu0 %v1880
        %v1882 = vpop.xlane.xlu0 %1881
        %v1883 = vmax.f32 %v1735, %v1737
        %1884 = vmax.xlane.f32.xlu0 %v1883
        %v1885 = vpop.xlane.xlu0 %1884
        %v1886 = vmax.f32 %v1741, %v1743
        %1887 = vmax.xlane.f32.xlu0 %v1886
        %v1888 = vpop.xlane.xlu0 %1887
        %v1889 = vmax.f32 %v1747, %v1749
        %1890 = vmax.xlane.f32.xlu0 %v1889
        %v1891 = vpop.xlane.xlu0 %1890
        %v1892 = vmax.f32 %v1753, %v1755
        %1893 = vmax.xlane.f32.xlu0 %v1892
        %v1894 = vpop.xlane.xlu0 %1893
        %v1895 = vmax.f32 %v1759, %v1761
        %1896 = vmax.xlane.f32.xlu0 %v1895
        %v1897 = vpop.xlane.xlu0 %1896
        %v1898 = vmax.f32 %v1765, %v1767
        %1899 = vmax.xlane.f32.xlu0 %v1898
        %v1900 = vpop.xlane.xlu0 %1899
        %v1901 = vmax.f32 %v1771, %v1773
        %1902 = vmax.xlane.f32.xlu0 %v1901
        %v1903 = vpop.xlane.xlu0 %1902
        %v1904 = vmax.f32 %v1777, %v1779
        %1905 = vmax.xlane.f32.xlu0 %v1904
        %v1906 = vpop.xlane.xlu0 %1905
        %v1907 = vmax.f32 %v1783, %v1785
        %1908 = vmax.xlane.f32.xlu0 %v1907
        %v1909 = vpop.xlane.xlu0 %1908
        %v1910 = vmax.f32 %v1789, %v1791
        %1911 = vmax.xlane.f32.xlu0 %v1910
        %v1912 = vpop.xlane.xlu0 %1911
        %v1913 = vmax.f32 %v1795, %v1797
        %1914 = vmax.xlane.f32.xlu0 %v1913
        %v1915 = vpop.xlane.xlu0 %1914
        %v1916 = vmax.f32 %v1801, %v1803
        %1917 = vmax.xlane.f32.xlu0 %v1916
        %v1918 = vpop.xlane.xlu0 %1917
        %v1919 = vmax.f32 %v1807, %v1809
        %1920 = vmax.xlane.f32.xlu0 %v1919
        %v1921 = vpop.xlane.xlu0 %1920
        %v1922 = vmax.f32 %v1813, %v1815
        %1923 = vmax.xlane.f32.xlu0 %v1922
        %v1924 = vpop.xlane.xlu0 %1923
        %v1925 = vmax.f32 %v1819, %v1821
        %1926 = vmax.xlane.f32.xlu0 %v1925
        %v1927 = vpop.xlane.xlu0 %1926
        %v1928 = vmax.f32 %v1825, %v1827
        %1929 = vmax.xlane.f32.xlu0 %v1928
        %v1930 = vpop.xlane.xlu0 %1929
        %v1931 = vmax.f32 %v1831, %v1833
        %1932 = vmax.xlane.f32.xlu0 %v1931
        %v1933 = vpop.xlane.xlu0 %1932
        %v1934 = vmax.f32 %v1837, %v1839
        %1935 = vmax.xlane.f32.xlu0 %v1934
        %v1936 = vpop.xlane.xlu0 %1935
        %v1937 = vsub.f32 %v1651, %v1843
        %v1938 = vsub.f32 %v1653, %v1843
        %v1939 = vsub.f32 %v1657, %v1846
        %v1940 = vsub.f32 %v1659, %v1846
        %v1941 = vsub.f32 %v1663, %v1849
        %v1942 = vsub.f32 %v1665, %v1849
        %v1943 = vsub.f32 %v1669, %v1852
        %v1944 = vsub.f32 %v1671, %v1852
        %v1945 = vsub.f32 %v1675, %v1855
        %v1946 = vsub.f32 %v1677, %v1855
        %v1947 = vsub.f32 %v1681, %v1858
        %v1948 = vsub.f32 %v1683, %v1858
        %v1949 = vsub.f32 %v1687, %v1861
        %v1950 = vsub.f32 %v1689, %v1861
        %v1951 = vsub.f32 %v1693, %v1864
        %v1952 = vsub.f32 %v1695, %v1864
        %v1953 = vsub.f32 %v1699, %v1867
        %v1954 = vsub.f32 %v1701, %v1867
        %v1955 = vsub.f32 %v1705, %v1870
        %v1956 = vsub.f32 %v1707, %v1870
        %v1957 = vsub.f32 %v1711, %v1873
        %v1958 = vsub.f32 %v1713, %v1873
        %v1959 = vsub.f32 %v1717, %v1876
        %v1960 = vsub.f32 %v1719, %v1876
        %v1961 = vsub.f32 %v1723, %v1879
        %v1962 = vsub.f32 %v1725, %v1879
        %v1963 = vsub.f32 %v1729, %v1882
        %v1964 = vsub.f32 %v1731, %v1882
        %v1965 = vsub.f32 %v1735, %v1885
        %v1966 = vsub.f32 %v1737, %v1885
        %v1967 = vsub.f32 %v1741, %v1888
        %v1968 = vsub.f32 %v1743, %v1888
        %v1969 = vsub.f32 %v1747, %v1891
        %v1970 = vsub.f32 %v1749, %v1891
        %v1971 = vsub.f32 %v1753, %v1894
        %v1972 = vsub.f32 %v1755, %v1894
        %v1973 = vsub.f32 %v1759, %v1897
        %v1974 = vsub.f32 %v1761, %v1897
        %v1975 = vsub.f32 %v1765, %v1900
        %v1976 = vsub.f32 %v1767, %v1900
        %v1977 = vsub.f32 %v1771, %v1903
        %v1978 = vsub.f32 %v1773, %v1903
        %v1979 = vsub.f32 %v1777, %v1906
        %v1980 = vsub.f32 %v1779, %v1906
        %v1981 = vsub.f32 %v1783, %v1909
        %v1982 = vsub.f32 %v1785, %v1909
        %v1983 = vsub.f32 %v1789, %v1912
        %v1984 = vsub.f32 %v1791, %v1912
        %v1985 = vsub.f32 %v1795, %v1915
        %v1986 = vsub.f32 %v1797, %v1915
        %v1987 = vsub.f32 %v1801, %v1918
        %v1988 = vsub.f32 %v1803, %v1918
        %v1989 = vsub.f32 %v1807, %v1921
        %v1990 = vsub.f32 %v1809, %v1921
        %v1991 = vsub.f32 %v1813, %v1924
        %v1992 = vsub.f32 %v1815, %v1924
        %v1993 = vsub.f32 %v1819, %v1927
        %v1994 = vsub.f32 %v1821, %v1927
        %v1995 = vsub.f32 %v1825, %v1930
        %v1996 = vsub.f32 %v1827, %v1930
        %v1997 = vsub.f32 %v1831, %v1933
        %v1998 = vsub.f32 %v1833, %v1933
        %v1999 = vsub.f32 %v1837, %v1936
        %v2000 = vsub.f32 %v1839, %v1936
        %v2001 = vmul.f32 %v1937, 1.442695
        %v2002 = vpow.pop %v2001
        %v2003 = vmul.f32 %v1938, 1.442695
        %v2004 = vpow.pop %v2003
        %v2005 = vmul.f32 %v1939, 1.442695
        %v2006 = vpow.pop %v2005
        %v2007 = vmul.f32 %v1940, 1.442695
        %v2008 = vpow.pop %v2007
        %v2009 = vmul.f32 %v1941, 1.442695
        %v2010 = vpow.pop %v2009
        %v2011 = vmul.f32 %v1942, 1.442695
        %v2012 = vpow.pop %v2011
        %v2013 = vmul.f32 %v1943, 1.442695
        %v2014 = vpow.pop %v2013
        %v2015 = vmul.f32 %v1944, 1.442695
        %v2016 = vpow.pop %v2015
        %v2017 = vmul.f32 %v1945, 1.442695
        %v2018 = vpow.pop %v2017
        %v2019 = vmul.f32 %v1946, 1.442695
        %v2020 = vpow.pop %v2019
        %v2021 = vmul.f32 %v1947, 1.442695
        %v2022 = vpow.pop %v2021
        %v2023 = vmul.f32 %v1948, 1.442695
        %v2024 = vpow.pop %v2023
        %v2025 = vmul.f32 %v1949, 1.442695
        %v2026 = vpow.pop %v2025
        %v2027 = vmul.f32 %v1950, 1.442695
        %v2028 = vpow.pop %v2027
        %v2029 = vmul.f32 %v1951, 1.442695
        %v2030 = vpow.pop %v2029
        %v2031 = vmul.f32 %v1952, 1.442695
        %v2032 = vpow.pop %v2031
        %v2033 = vmul.f32 %v1953, 1.442695
        %v2034 = vpow.pop %v2033
        %v2035 = vmul.f32 %v1954, 1.442695
        %v2036 = vpow.pop %v2035
        %v2037 = vmul.f32 %v1955, 1.442695
        %v2038 = vpow.pop %v2037
        %v2039 = vmul.f32 %v1956, 1.442695
        %v2040 = vpow.pop %v2039
        %v2041 = vmul.f32 %v1957, 1.442695
        %v2042 = vpow.pop %v2041
        %v2043 = vmul.f32 %v1958, 1.442695
        %v2044 = vpow.pop %v2043
        %v2045 = vmul.f32 %v1959, 1.442695
        %v2046 = vpow.pop %v2045
        %v2047 = vmul.f32 %v1960, 1.442695
        %v2048 = vpow.pop %v2047
        %v2049 = vmul.f32 %v1961, 1.442695
        %v2050 = vpow.pop %v2049
        %v2051 = vmul.f32 %v1962, 1.442695
        %v2052 = vpow.pop %v2051
        %v2053 = vmul.f32 %v1963, 1.442695
        %v2054 = vpow.pop %v2053
        %v2055 = vmul.f32 %v1964, 1.442695
        %v2056 = vpow.pop %v2055
        %v2057 = vmul.f32 %v1965, 1.442695
        %v2058 = vpow.pop %v2057
        %v2059 = vmul.f32 %v1966, 1.442695
        %v2060 = vpow.pop %v2059
        %v2061 = vmul.f32 %v1967, 1.442695
        %v2062 = vpow.pop %v2061
        %v2063 = vmul.f32 %v1968, 1.442695
        %v2064 = vpow.pop %v2063
        %v2065 = vmul.f32 %v1969, 1.442695
        %v2066 = vpow.pop %v2065
        %v2067 = vmul.f32 %v1970, 1.442695
        %v2068 = vpow.pop %v2067
        %v2069 = vmul.f32 %v1971, 1.442695
        %v2070 = vpow.pop %v2069
        %v2071 = vmul.f32 %v1972, 1.442695
        %v2072 = vpow.pop %v2071
        %v2073 = vmul.f32 %v1973, 1.442695
        %v2074 = vpow.pop %v2073
        %v2075 = vmul.f32 %v1974, 1.442695
        %v2076 = vpow.pop %v2075
        %v2077 = vmul.f32 %v1975, 1.442695
        %v2078 = vpow.pop %v2077
        %v2079 = vmul.f32 %v1976, 1.442695
        %v2080 = vpow.pop %v2079
        %v2081 = vmul.f32 %v1977, 1.442695
        %v2082 = vpow.pop %v2081
        %v2083 = vmul.f32 %v1978, 1.442695
        %v2084 = vpow.pop %v2083
        %v2085 = vmul.f32 %v1979, 1.442695
        %v2086 = vpow.pop %v2085
        %v2087 = vmul.f32 %v1980, 1.442695
        %v2088 = vpow.pop %v2087
        %v2089 = vmul.f32 %v1981, 1.442695
        %v2090 = vpow.pop %v2089
        %v2091 = vmul.f32 %v1982, 1.442695
        %v2092 = vpow.pop %v2091
        %v2093 = vmul.f32 %v1983, 1.442695
        %v2094 = vpow.pop %v2093
        %v2095 = vmul.f32 %v1984, 1.442695
        %v2096 = vpow.pop %v2095
        %v2097 = vmul.f32 %v1985, 1.442695
        %v2098 = vpow.pop %v2097
        %v2099 = vmul.f32 %v1986, 1.442695
        %v2100 = vpow.pop %v2099
        %v2101 = vmul.f32 %v1987, 1.442695
        %v2102 = vpow.pop %v2101
        %v2103 = vmul.f32 %v1988, 1.442695
        %v2104 = vpow.pop %v2103
        %v2105 = vmul.f32 %v1989, 1.442695
        %v2106 = vpow.pop %v2105
        %v2107 = vmul.f32 %v1990, 1.442695
        %v2108 = vpow.pop %v2107
        %v2109 = vmul.f32 %v1991, 1.442695
        %v2110 = vpow.pop %v2109
        %v2111 = vmul.f32 %v1992, 1.442695
        %v2112 = vpow.pop %v2111
        %v2113 = vmul.f32 %v1993, 1.442695
        %v2114 = vpow.pop %v2113
        %v2115 = vmul.f32 %v1994, 1.442695
        %v2116 = vpow.pop %v2115
        %v2117 = vmul.f32 %v1995, 1.442695
        %v2118 = vpow.pop %v2117
        %v2119 = vmul.f32 %v1996, 1.442695
        %v2120 = vpow.pop %v2119
        %v2121 = vmul.f32 %v1997, 1.442695
        %v2122 = vpow.pop %v2121
        %v2123 = vmul.f32 %v1998, 1.442695
        %v2124 = vpow.pop %v2123
        %v2125 = vmul.f32 %v1999, 1.442695
        %v2126 = vpow.pop %v2125
        %v2127 = vmul.f32 %v2000, 1.442695
        %v2128 = vpow.pop %v2127
        %v2129 = vadd.f32 %v2002, %v2004
        %2130 = vadd.xlane.f32.xlu0 %v2129
        %v2131 = vpop.xlane.xlu0 %2130
        %v2132 = vadd.f32 %v2006, %v2008
        %2133 = vadd.xlane.f32.xlu0 %v2132
        %v2134 = vpop.xlane.xlu0 %2133
        %v2135 = vadd.f32 %v2010, %v2012
        %2136 = vadd.xlane.f32.xlu0 %v2135
        %v2137 = vpop.xlane.xlu0 %2136
        %v2138 = vadd.f32 %v2014, %v2016
        %2139 = vadd.xlane.f32.xlu0 %v2138
        %v2140 = vpop.xlane.xlu0 %2139
        %v2141 = vadd.f32 %v2018, %v2020
        %2142 = vadd.xlane.f32.xlu0 %v2141
        %v2143 = vpop.xlane.xlu0 %2142
        %v2144 = vadd.f32 %v2022, %v2024
        %2145 = vadd.xlane.f32.xlu0 %v2144
        %v2146 = vpop.xlane.xlu0 %2145
        %v2147 = vadd.f32 %v2026, %v2028
        %2148 = vadd.xlane.f32.xlu0 %v2147
        %v2149 = vpop.xlane.xlu0 %2148
        %v2150 = vadd.f32 %v2030, %v2032
        %2151 = vadd.xlane.f32.xlu0 %v2150
        %v2152 = vpop.xlane.xlu0 %2151
        %v2153 = vadd.f32 %v2034, %v2036
        %2154 = vadd.xlane.f32.xlu0 %v2153
        %v2155 = vpop.xlane.xlu0 %2154
        %v2156 = vadd.f32 %v2038, %v2040
        %2157 = vadd.xlane.f32.xlu0 %v2156
        %v2158 = vpop.xlane.xlu0 %2157
        %v2159 = vadd.f32 %v2042, %v2044
        %2160 = vadd.xlane.f32.xlu0 %v2159
        %v2161 = vpop.xlane.xlu0 %2160
        %v2162 = vadd.f32 %v2046, %v2048
        %2163 = vadd.xlane.f32.xlu0 %v2162
        %v2164 = vpop.xlane.xlu0 %2163
        %v2165 = vadd.f32 %v2050, %v2052
        %2166 = vadd.xlane.f32.xlu0 %v2165
        %v2167 = vpop.xlane.xlu0 %2166
        %v2168 = vadd.f32 %v2054, %v2056
        %2169 = vadd.xlane.f32.xlu0 %v2168
        %v2170 = vpop.xlane.xlu0 %2169
        %v2171 = vadd.f32 %v2058, %v2060
        %2172 = vadd.xlane.f32.xlu0 %v2171
        %v2173 = vpop.xlane.xlu0 %2172
        %v2174 = vadd.f32 %v2062, %v2064
        %2175 = vadd.xlane.f32.xlu0 %v2174
        %v2176 = vpop.xlane.xlu0 %2175
        %v2177 = vadd.f32 %v2066, %v2068
        %2178 = vadd.xlane.f32.xlu0 %v2177
        %v2179 = vpop.xlane.xlu0 %2178
        %v2180 = vadd.f32 %v2070, %v2072
        %2181 = vadd.xlane.f32.xlu0 %v2180
        %v2182 = vpop.xlane.xlu0 %2181
        %v2183 = vadd.f32 %v2074, %v2076
        %2184 = vadd.xlane.f32.xlu0 %v2183
        %v2185 = vpop.xlane.xlu0 %2184
        %v2186 = vadd.f32 %v2078, %v2080
        %2187 = vadd.xlane.f32.xlu0 %v2186
        %v2188 = vpop.xlane.xlu0 %2187
        %v2189 = vadd.f32 %v2082, %v2084
        %2190 = vadd.xlane.f32.xlu0 %v2189
        %v2191 = vpop.xlane.xlu0 %2190
        %v2192 = vadd.f32 %v2086, %v2088
        %2193 = vadd.xlane.f32.xlu0 %v2192
        %v2194 = vpop.xlane.xlu0 %2193
        %v2195 = vadd.f32 %v2090, %v2092
        %2196 = vadd.xlane.f32.xlu0 %v2195
        %v2197 = vpop.xlane.xlu0 %2196
        %v2198 = vadd.f32 %v2094, %v2096
        %2199 = vadd.xlane.f32.xlu0 %v2198
        %v2200 = vpop.xlane.xlu0 %2199
        %v2201 = vadd.f32 %v2098, %v2100
        %2202 = vadd.xlane.f32.xlu0 %v2201
        %v2203 = vpop.xlane.xlu0 %2202
        %v2204 = vadd.f32 %v2102, %v2104
        %2205 = vadd.xlane.f32.xlu0 %v2204
        %v2206 = vpop.xlane.xlu0 %2205
        %v2207 = vadd.f32 %v2106, %v2108
        %2208 = vadd.xlane.f32.xlu0 %v2207
        %v2209 = vpop.xlane.xlu0 %2208
        %v2210 = vadd.f32 %v2110, %v2112
        %2211 = vadd.xlane.f32.xlu0 %v2210
        %v2212 = vpop.xlane.xlu0 %2211
        %v2213 = vadd.f32 %v2114, %v2116
        %2214 = vadd.xlane.f32.xlu0 %v2213
        %v2215 = vpop.xlane.xlu0 %2214
        %v2216 = vadd.f32 %v2118, %v2120
        %2217 = vadd.xlane.f32.xlu0 %v2216
        %v2218 = vpop.xlane.xlu0 %2217
        %v2219 = vadd.f32 %v2122, %v2124
        %2220 = vadd.xlane.f32.xlu0 %v2219
        %v2221 = vpop.xlane.xlu0 %2220
        %v2222 = vadd.f32 %v2126, %v2128
        %2223 = vadd.xlane.f32.xlu0 %v2222
        %v2224 = vpop.xlane.xlu0 %2223
        %2225 = vrot.lane.b32.xlu0 %v1098, 64
        %v2226 = vpop.permute.xlu0 %2225
        %2227 = vrot.lane.b32.xlu0 %v1103, 64
        %v2228 = vpop.permute.xlu0 %2227
        %2229 = vrot.lane.b32.xlu0 %v1108, 64
        %v2230 = vpop.permute.xlu0 %2229
        %2231 = vrot.lane.b32.xlu0 %v1113, 64
        %v2232 = vpop.permute.xlu0 %2231
        %2233 = vrot.lane.b32.xlu0 %v1118, 64
        %v2234 = vpop.permute.xlu0 %2233
        %2235 = vrot.lane.b32.xlu0 %v1123, 64
        %v2236 = vpop.permute.xlu0 %2235
        %2237 = vrot.lane.b32.xlu0 %v1128, 64
        %v2238 = vpop.permute.xlu0 %2237
        %2239 = vrot.lane.b32.xlu0 %v1133, 64
        %v2240 = vpop.permute.xlu0 %2239
        %2241 = vrot.lane.b32.xlu0 %v1138, 64
        %v2242 = vpop.permute.xlu0 %2241
        %2243 = vrot.lane.b32.xlu0 %v1143, 64
        %v2244 = vpop.permute.xlu0 %2243
        %2245 = vrot.lane.b32.xlu0 %v1148, 64
        %v2246 = vpop.permute.xlu0 %2245
        %2247 = vrot.lane.b32.xlu0 %v1153, 64
        %v2248 = vpop.permute.xlu0 %2247
        %2249 = vrot.lane.b32.xlu0 %v1158, 64
        %v2250 = vpop.permute.xlu0 %2249
        %2251 = vrot.lane.b32.xlu0 %v1163, 64
        %v2252 = vpop.permute.xlu0 %2251
        %2253 = vrot.lane.b32.xlu0 %v1168, 64
        %v2254 = vpop.permute.xlu0 %2253
        %2255 = vrot.lane.b32.xlu0 %v1173, 64
        %v2256 = vpop.permute.xlu0 %2255
        %2257 = vrot.lane.b32.xlu0 %v1178, 64
        %v2258 = vpop.permute.xlu0 %2257
        %2259 = vrot.lane.b32.xlu0 %v1183, 64
        %v2260 = vpop.permute.xlu0 %2259
        %2261 = vrot.lane.b32.xlu0 %v1188, 64
        %v2262 = vpop.permute.xlu0 %2261
        %2263 = vrot.lane.b32.xlu0 %v1193, 64
        %v2264 = vpop.permute.xlu0 %2263
        %2265 = vrot.lane.b32.xlu0 %v1198, 64
        %v2266 = vpop.permute.xlu0 %2265
        %2267 = vrot.lane.b32.xlu0 %v1203, 64
        %v2268 = vpop.permute.xlu0 %2267
        %2269 = vrot.lane.b32.xlu0 %v1208, 64
        %v2270 = vpop.permute.xlu0 %2269
        %2271 = vrot.lane.b32.xlu0 %v1213, 64
        %v2272 = vpop.permute.xlu0 %2271
        %2273 = vrot.lane.b32.xlu0 %v1218, 64
        %v2274 = vpop.permute.xlu0 %2273
        %2275 = vrot.lane.b32.xlu0 %v1223, 64
        %v2276 = vpop.permute.xlu0 %2275
        %2277 = vrot.lane.b32.xlu0 %v1228, 64
        %v2278 = vpop.permute.xlu0 %2277
        %2279 = vrot.lane.b32.xlu0 %v1233, 64
        %v2280 = vpop.permute.xlu0 %2279
        %2281 = vrot.lane.b32.xlu0 %v1238, 64
        %v2282 = vpop.permute.xlu0 %2281
        %2283 = vrot.lane.b32.xlu0 %v1243, 64
        %v2284 = vpop.permute.xlu0 %2283
        %2285 = vrot.lane.b32.xlu0 %v1248, 64
        %v2286 = vpop.permute.xlu0 %2285
        %2287 = vrot.lane.b32.xlu0 %v1253, 64
        %v2288 = vpop.permute.xlu0 %2287
        %2321 = vmatprep.subr.mxu0 0.0
        %2322 = vmatpush1.msra.mxu0 %v2226
        %2323 = vmatprep.subr.mxu0 0.0
        %2324 = vmatpush1.msra.mxu0 %v2228
        %2325 = vmatprep.subr.mxu0 0.0
        %2326 = vmatpush1.msra.mxu0 %v2230
        %2327 = vmatprep.subr.mxu0 0.0
        %2328 = vmatpush1.msra.mxu0 %v2232
        %2329 = vmatprep.subr.mxu0 0.0
        %2330 = vmatpush1.msra.mxu0 %v2234
        %2331 = vmatprep.subr.mxu0 0.0
        %2332 = vmatpush1.msra.mxu0 %v2236
        %2333 = vmatprep.subr.mxu0 0.0
        %2334 = vmatpush1.msra.mxu0 %v2238
        %2335 = vmatprep.subr.mxu0 0.0
        %2336 = vmatpush1.msra.mxu0 %v2240
        %2337 = vmatprep.subr.mxu0 0.0
        %2338 = vmatpush1.msra.mxu0 %v2242
        %2339 = vmatprep.subr.mxu0 0.0
        %2340 = vmatpush1.msra.mxu0 %v2244
        %2341 = vmatprep.subr.mxu0 0.0
        %2342 = vmatpush1.msra.mxu0 %v2246
        %2343 = vmatprep.subr.mxu0 0.0
        %2344 = vmatpush1.msra.mxu0 %v2248
        %2345 = vmatprep.subr.mxu0 0.0
        %2346 = vmatpush1.msra.mxu0 %v2250
        %2347 = vmatprep.subr.mxu0 0.0
        %2348 = vmatpush1.msra.mxu0 %v2252
        %2349 = vmatprep.subr.mxu0 0.0
        %2350 = vmatpush1.msra.mxu0 %v2254
        %2351 = vmatprep.subr.mxu0 0.0
        %2352 = vmatpush1.msra.mxu0 %v2256
        %2353 = vmatprep.subr.mxu0 0.0
        %2354 = vmatpush1.msra.mxu0 %v2258
        %2355 = vmatprep.subr.mxu0 0.0
        %2356 = vmatpush1.msra.mxu0 %v2260
        %2357 = vmatprep.subr.mxu0 0.0
        %2358 = vmatpush1.msra.mxu0 %v2262
        %2359 = vmatprep.subr.mxu0 0.0
        %2360 = vmatpush1.msra.mxu0 %v2264
        %2361 = vmatprep.subr.mxu0 0.0
        %2362 = vmatpush1.msra.mxu0 %v2266
        %2363 = vmatprep.subr.mxu0 0.0
        %2364 = vmatpush1.msra.mxu0 %v2268
        %2365 = vmatprep.subr.mxu0 0.0
        %2366 = vmatpush1.msra.mxu0 %v2270
        %2367 = vmatprep.subr.mxu0 0.0
        %2368 = vmatpush1.msra.mxu0 %v2272
        %2369 = vmatprep.subr.mxu0 0.0
        %2370 = vmatpush1.msra.mxu0 %v2274
        %2371 = vmatprep.subr.mxu0 0.0
        %2372 = vmatpush1.msra.mxu0 %v2276
        %2373 = vmatprep.subr.mxu0 0.0
        %2374 = vmatpush1.msra.mxu0 %v2278
        %2375 = vmatprep.subr.mxu0 0.0
        %2376 = vmatpush1.msra.mxu0 %v2280
        %2377 = vmatprep.subr.mxu0 0.0
        %2378 = vmatpush1.msra.mxu0 %v2282
        %2379 = vmatprep.subr.mxu0 0.0
        %2380 = vmatpush1.msra.mxu0 %v2284
        %2381 = vmatprep.subr.mxu0 0.0
        %2382 = vmatpush1.msra.mxu0 %v2286
        %2383 = vmatprep.subr.mxu0 0.0
        %2384 = vmatpush1.msra.mxu0 %v2288
        %2385 = vmatprep.mubr.f32.mxu0 %v2004
        %2386 = vmatmul.mubr.f32.gmra.mrb[0].mxu0 %v2002
        %v2387 = vpop.f32.mrb[0].mxu0
        %v2388 = vadd.f32 0.0, %v2387
        %v2389 = vpop.f32.mrb[0].mxu0
        %2390 = vmatprep.mubr.f32.mxu0 %v2008
        %2391 = vmatmul.mubr.f32.gmra.mrb[0].mxu0 %v2006
        %v2392 = vpop.f32.mrb[0].mxu0
        %v2393 = vadd.f32 0.0, %v2392
        %v2394 = vpop.f32.mrb[0].mxu0
        %2395 = vmatprep.mubr.f32.mxu0 %v2012
        %2396 = vmatmul.mubr.f32.gmra.mrb[0].mxu0 %v2010
        %v2397 = vpop.f32.mrb[0].mxu0
        %v2398 = vadd.f32 0.0, %v2397
        %v2399 = vpop.f32.mrb[0].mxu0
        %2400 = vmatprep.mubr.f32.mxu0 %v2016
        %2401 = vmatmul.mubr.f32.gmra.mrb[0].mxu0 %v2014
        %v2402 = vpop.f32.mrb[0].mxu0
        %v2403 = vadd.f32 0.0, %v2402
        %v2404 = vpop.f32.mrb[0].mxu0
        %2405 = vmatprep.mubr.f32.mxu0 %v2020
        %2406 = vmatmul.mubr.f32.gmra.mrb[0].mxu0 %v2018
        %v2407 = vpop.f32.mrb[0].mxu0
        %v2408 = vadd.f32 0.0, %v2407
        %v2409 = vpop.f32.mrb[0].mxu0
        %2410 = vmatprep.mubr.f32.mxu0 %v2024
        %2411 = vmatmul.mubr.f32.gmra.mrb[0].mxu0 %v2022
        %v2412 = vpop.f32.mrb[0].mxu0
        %v2413 = vadd.f32 0.0, %v2412
        %v2414 = vpop.f32.mrb[0].mxu0
        %2415 = vmatprep.mubr.f32.mxu0 %v2028
        %2416 = vmatmul.mubr.f32.gmra.mrb[0].mxu0 %v2026
        %v2417 = vpop.f32.mrb[0].mxu0
        %v2418 = vadd.f32 0.0, %v2417
        %v2419 = vpop.f32.mrb[0].mxu0
        %2420 = vmatprep.mubr.f32.mxu0 %v2032
        %2421 = vmatmul.mubr.f32.gmra.mrb[0].mxu0 %v2030
        %v2422 = vpop.f32.mrb[0].mxu0
        %v2423 = vadd.f32 0.0, %v2422
        %v2424 = vpop.f32.mrb[0].mxu0
        %2425 = vmatprep.mubr.f32.mxu0 %v2036
        %2426 = vmatmul.mubr.f32.gmra.mrb[0].mxu0 %v2034
        %v2427 = vpop.f32.mrb[0].mxu0
        %v2428 = vadd.f32 0.0, %v2427
        %v2429 = vpop.f32.mrb[0].mxu0
        %2430 = vmatprep.mubr.f32.mxu0 %v2040
        %2431 = vmatmul.mubr.f32.gmra.mrb[0].mxu0 %v2038
        %v2432 = vpop.f32.mrb[0].mxu0
        %v2433 = vadd.f32 0.0, %v2432
        %v2434 = vpop.f32.mrb[0].mxu0
        %2435 = vmatprep.mubr.f32.mxu0 %v2044
        %2436 = vmatmul.mubr.f32.gmra.mrb[0].mxu0 %v2042
        %v2437 = vpop.f32.mrb[0].mxu0
        %v2438 = vadd.f32 0.0, %v2437
        %v2439 = vpop.f32.mrb[0].mxu0
        %2440 = vmatprep.mubr.f32.mxu0 %v2048
        %2441 = vmatmul.mubr.f32.gmra.mrb[0].mxu0 %v2046
        %v2442 = vpop.f32.mrb[0].mxu0
        %v2443 = vadd.f32 0.0, %v2442
        %v2444 = vpop.f32.mrb[0].mxu0
        %2445 = vmatprep.mubr.f32.mxu0 %v2052
        %2446 = vmatmul.mubr.f32.gmra.mrb[0].mxu0 %v2050
        %v2447 = vpop.f32.mrb[0].mxu0
        %v2448 = vadd.f32 0.0, %v2447
        %v2449 = vpop.f32.mrb[0].mxu0
        %2450 = vmatprep.mubr.f32.mxu0 %v2056
        %2451 = vmatmul.mubr.f32.gmra.mrb[0].mxu0 %v2054
        %v2452 = vpop.f32.mrb[0].mxu0
        %v2453 = vadd.f32 0.0, %v2452
        %v2454 = vpop.f32.mrb[0].mxu0
        %2455 = vmatprep.mubr.f32.mxu0 %v2060
        %2456 = vmatmul.mubr.f32.gmra.mrb[0].mxu0 %v2058
        %v2457 = vpop.f32.mrb[0].mxu0
        %v2458 = vadd.f32 0.0, %v2457
        %v2459 = vpop.f32.mrb[0].mxu0
        %2460 = vmatprep.mubr.f32.mxu0 %v2064
        %2461 = vmatmul.mubr.f32.gmra.mrb[0].mxu0 %v2062
        %v2462 = vpop.f32.mrb[0].mxu0
        %v2463 = vadd.f32 0.0, %v2462
        %v2464 = vpop.f32.mrb[0].mxu0
        %2465 = vmatprep.mubr.f32.mxu0 %v2068
        %2466 = vmatmul.mubr.f32.gmra.mrb[0].mxu0 %v2066
        %v2467 = vpop.f32.mrb[0].mxu0
        %v2468 = vadd.f32 0.0, %v2467
        %v2469 = vpop.f32.mrb[0].mxu0
        %2470 = vmatprep.mubr.f32.mxu0 %v2072
        %2471 = vmatmul.mubr.f32.gmra.mrb[0].mxu0 %v2070
        %v2472 = vpop.f32.mrb[0].mxu0
        %v2473 = vadd.f32 0.0, %v2472
        %v2474 = vpop.f32.mrb[0].mxu0
        %2475 = vmatprep.mubr.f32.mxu0 %v2076
        %2476 = vmatmul.mubr.f32.gmra.mrb[0].mxu0 %v2074
        %v2477 = vpop.f32.mrb[0].mxu0
        %v2478 = vadd.f32 0.0, %v2477
        %v2479 = vpop.f32.mrb[0].mxu0
        %2480 = vmatprep.mubr.f32.mxu0 %v2080
        %2481 = vmatmul.mubr.f32.gmra.mrb[0].mxu0 %v2078
        %v2482 = vpop.f32.mrb[0].mxu0
        %v2483 = vadd.f32 0.0, %v2482
        %v2484 = vpop.f32.mrb[0].mxu0
        %2485 = vmatprep.mubr.f32.mxu0 %v2084
        %2486 = vmatmul.mubr.f32.gmra.mrb[0].mxu0 %v2082
        %v2487 = vpop.f32.mrb[0].mxu0
        %v2488 = vadd.f32 0.0, %v2487
        %v2489 = vpop.f32.mrb[0].mxu0
        %2490 = vmatprep.mubr.f32.mxu0 %v2088
        %2491 = vmatmul.mubr.f32.gmra.mrb[0].mxu0 %v2086
        %v2492 = vpop.f32.mrb[0].mxu0
        %v2493 = vadd.f32 0.0, %v2492
        %v2494 = vpop.f32.mrb[0].mxu0
        %2495 = vmatprep.mubr.f32.mxu0 %v2092
        %2496 = vmatmul.mubr.f32.gmra.mrb[0].mxu0 %v2090
        %v2497 = vpop.f32.mrb[0].mxu0
        %v2498 = vadd.f32 0.0, %v2497
        %v2499 = vpop.f32.mrb[0].mxu0
        %2500 = vmatprep.mubr.f32.mxu0 %v2096
        %2501 = vmatmul.mubr.f32.gmra.mrb[0].mxu0 %v2094
        %v2502 = vpop.f32.mrb[0].mxu0
        %v2503 = vadd.f32 0.0, %v2502
        %v2504 = vpop.f32.mrb[0].mxu0
        %2505 = vmatprep.mubr.f32.mxu0 %v2100
        %2506 = vmatmul.mubr.f32.gmra.mrb[0].mxu0 %v2098
        %v2507 = vpop.f32.mrb[0].mxu0
        %v2508 = vadd.f32 0.0, %v2507
        %v2509 = vpop.f32.mrb[0].mxu0
        %2510 = vmatprep.mubr.f32.mxu0 %v2104
        %2511 = vmatmul.mubr.f32.gmra.mrb[0].mxu0 %v2102
        %v2512 = vpop.f32.mrb[0].mxu0
        %v2513 = vadd.f32 0.0, %v2512
        %v2514 = vpop.f32.mrb[0].mxu0
        %2515 = vmatprep.mubr.f32.mxu0 %v2108
        %2516 = vmatmul.mubr.f32.gmra.mrb[0].mxu0 %v2106
        %v2517 = vpop.f32.mrb[0].mxu0
        %v2518 = vadd.f32 0.0, %v2517
        %v2519 = vpop.f32.mrb[0].mxu0
        %2520 = vmatprep.mubr.f32.mxu0 %v2112
        %2521 = vmatmul.mubr.f32.gmra.mrb[0].mxu0 %v2110
        %v2522 = vpop.f32.mrb[0].mxu0
        %v2523 = vadd.f32 0.0, %v2522
        %v2524 = vpop.f32.mrb[0].mxu0
        %2525 = vmatprep.mubr.f32.mxu0 %v2116
        %2526 = vmatmul.mubr.f32.gmra.mrb[0].mxu0 %v2114
        %v2527 = vpop.f32.mrb[0].mxu0
        %v2528 = vadd.f32 0.0, %v2527
        %v2529 = vpop.f32.mrb[0].mxu0
        %2530 = vmatprep.mubr.f32.mxu0 %v2120
        %2531 = vmatmul.mubr.f32.gmra.mrb[0].mxu0 %v2118
        %v2532 = vpop.f32.mrb[0].mxu0
        %v2533 = vadd.f32 0.0, %v2532
        %v2534 = vpop.f32.mrb[0].mxu0
        %2535 = vmatprep.mubr.f32.mxu0 %v2124
        %2536 = vmatmul.mubr.f32.gmra.mrb[0].mxu0 %v2122
        %v2537 = vpop.f32.mrb[0].mxu0
        %v2538 = vadd.f32 0.0, %v2537
        %v2539 = vpop.f32.mrb[0].mxu0
        %2540 = vmatprep.mubr.f32.mxu0 %v2128
        %2541 = vmatmul.mubr.f32.gmra.mrb[0].mxu0 %v2126
        %v2542 = vpop.f32.mrb[0].mxu0
        %v2543 = vadd.f32 0.0, %v2542
        %v2544 = vpop.f32.mrb[0].mxu0
        %2545 = vdwg.mxu0
        %v2546 = vrcp.pop %v2131
        %v2547 = vrcp.pop %v2134
        %v2548 = vrcp.pop %v2137
        %v2549 = vrcp.pop %v2140
        %v2550 = vrcp.pop %v2143
        %v2551 = vrcp.pop %v2146
        %v2552 = vrcp.pop %v2149
        %v2553 = vrcp.pop %v2152
        %v2554 = vrcp.pop %v2155
        %v2555 = vrcp.pop %v2158
        %v2556 = vrcp.pop %v2161
        %v2557 = vrcp.pop %v2164
        %v2558 = vrcp.pop %v2167
        %v2559 = vrcp.pop %v2170
        %v2560 = vrcp.pop %v2173
        %v2561 = vrcp.pop %v2176
        %v2562 = vrcp.pop %v2179
        %v2563 = vrcp.pop %v2182
        %v2564 = vrcp.pop %v2185
        %v2565 = vrcp.pop %v2188
        %v2566 = vrcp.pop %v2191
        %v2567 = vrcp.pop %v2194
        %v2568 = vrcp.pop %v2197
        %v2569 = vrcp.pop %v2200
        %v2570 = vrcp.pop %v2203
        %v2571 = vrcp.pop %v2206
        %v2572 = vrcp.pop %v2209
        %v2573 = vrcp.pop %v2212
        %v2574 = vrcp.pop %v2215
        %v2575 = vrcp.pop %v2218
        %v2576 = vrcp.pop %v2221
        %v2577 = vrcp.pop %v2224
        %v2578 = vmul.f32 %v2388, %v2546
        %v2579 = vmul.f32 %v2393, %v2547
        %v2580 = vmul.f32 %v2398, %v2548
        %v2581 = vmul.f32 %v2403, %v2549
        %v2582 = vmul.f32 %v2408, %v2550
        %v2583 = vmul.f32 %v2413, %v2551
        %v2584 = vmul.f32 %v2418, %v2552
        %v2585 = vmul.f32 %v2423, %v2553
        %v2586 = vmul.f32 %v2428, %v2554
        %v2587 = vmul.f32 %v2433, %v2555
        %v2588 = vmul.f32 %v2438, %v2556
        %v2589 = vmul.f32 %v2443, %v2557
        %v2590 = vmul.f32 %v2448, %v2558
        %v2591 = vmul.f32 %v2453, %v2559
        %v2592 = vmul.f32 %v2458, %v2560
        %v2593 = vmul.f32 %v2463, %v2561
        %v2594 = vmul.f32 %v2468, %v2562
        %v2595 = vmul.f32 %v2473, %v2563
        %v2596 = vmul.f32 %v2478, %v2564
        %v2597 = vmul.f32 %v2483, %v2565
        %v2598 = vmul.f32 %v2488, %v2566
        %v2599 = vmul.f32 %v2493, %v2567
        %v2600 = vmul.f32 %v2498, %v2568
        %v2601 = vmul.f32 %v2503, %v2569
        %v2602 = vmul.f32 %v2508, %v2570
        %v2603 = vmul.f32 %v2513, %v2571
        %v2604 = vmul.f32 %v2518, %v2572
        %v2605 = vmul.f32 %v2523, %v2573
        %v2606 = vmul.f32 %v2528, %v2574
        %v2607 = vmul.f32 %v2533, %v2575
        %v2608 = vmul.f32 %v2538, %v2576
        %v2609 = vmul.f32 %v2543, %v2577
        %v2610 = vld [vmem:[%s4] sm:$0xff]
        %v2611 = vld [vmem:[%s4 + $0x8] sm:$0xff]
        %v2613 = vsel %vm1455, %v2578, 0
        %v2616 = vsel %vm1455, %v2579, 0
        %v2619 = vsel %vm1455, %v2580, 0
        %v2622 = vsel %vm1455, %v2581, 0
        %v2625 = vsel %vm1455, %v2582, 0
        %v2628 = vsel %vm1455, %v2583, 0
        %v2631 = vsel %vm1455, %v2584, 0
        %v2634 = vsel %vm1455, %v2585, 0
        %v2637 = vsel %vm1455, %v2586, 0
        %v2640 = vsel %vm1455, %v2587, 0
        %v2643 = vsel %vm1455, %v2588, 0
        %v2646 = vsel %vm1455, %v2589, 0
        %v2649 = vsel %vm1455, %v2590, 0
        %v2652 = vsel %vm1455, %v2591, 0
        %v2655 = vsel %vm1455, %v2592, 0
        %v2658 = vsel %vm1455, %v2593, 0
        %v2661 = vsel %vm1455, %v2594, 0
        %v2664 = vsel %vm1455, %v2595, 0
        %v2667 = vsel %vm1455, %v2596, 0
        %v2670 = vsel %vm1455, %v2597, 0
        %v2673 = vsel %vm1455, %v2598, 0
        %v2676 = vsel %vm1455, %v2599, 0
        %v2679 = vsel %vm1455, %v2600, 0
        %v2682 = vsel %vm1455, %v2601, 0
        %v2685 = vsel %vm1455, %v2602, 0
        %v2688 = vsel %vm1455, %v2603, 0
        %v2691 = vsel %vm1455, %v2604, 0
        %v2694 = vsel %vm1455, %v2605, 0
        %v2697 = vsel %vm1455, %v2606, 0
        %v2700 = vsel %vm1455, %v2607, 0
        %v2703 = vsel %vm1455, %v2608, 0
        %v2706 = vsel %vm1455, %v2609, 0
        %2708 = vmatprep.subr.mxu0 0.0
        %2709 = vmatpush1.msra.mxu0 %v2610
        %2710 = vmatprep.subr.mxu0 0.0
        %2711 = vmatpush1.msra.mxu0 %v2611
        %2712 = vmatprep.subr.mxu0 0.0
        %2713 = vmatpush1.msra.mxu0 0.0
        %2714 = vmatprep.subr.mxu0 0.0
        %2715 = vmatpush1.msra.mxu0 0.0
        %2716 = vmatprep.subr.mxu0 0.0
        %2717 = vmatpush1.msra.mxu0 0.0
        %2718 = vmatprep.subr.mxu0 0.0
        %2719 = vmatpush1.msra.mxu0 0.0
        %2720 = vmatprep.subr.mxu0 0.0
        %2721 = vmatpush1.msra.mxu0 0.0
        %2722 = vmatprep.subr.mxu0 0.0
        %2723 = vmatpush1.msra.mxu0 0.0
        %2724 = vmatprep.subr.mxu0 0.0
        %2725 = vmatpush1.msra.mxu0 0.0
        %2726 = vmatprep.subr.mxu0 0.0
        %2727 = vmatpush1.msra.mxu0 0.0
        %2728 = vmatprep.subr.mxu0 0.0
        %2729 = vmatpush1.msra.mxu0 0.0
        %2730 = vmatprep.subr.mxu0 0.0
        %2731 = vmatpush1.msra.mxu0 0.0
        %2732 = vmatprep.subr.mxu0 0.0
        %2733 = vmatpush1.msra.mxu0 0.0
        %2734 = vmatprep.subr.mxu0 0.0
        %2735 = vmatpush1.msra.mxu0 0.0
        %2736 = vmatprep.subr.mxu0 0.0
        %2737 = vmatpush1.msra.mxu0 0.0
        %2738 = vmatprep.subr.mxu0 0.0
        %2739 = vmatpush1.msra.mxu0 0.0
        %2740 = vmatprep.subr.mxu0 0.0
        %2741 = vmatpush1.msra.mxu0 0.0
        %2742 = vmatprep.subr.mxu0 0.0
        %2743 = vmatpush1.msra.mxu0 0.0
        %2744 = vmatprep.subr.mxu0 0.0
        %2745 = vmatpush1.msra.mxu0 0.0
        %2746 = vmatprep.subr.mxu0 0.0
        %2747 = vmatpush1.msra.mxu0 0.0
        %2748 = vmatprep.subr.mxu0 0.0
        %2749 = vmatpush1.msra.mxu0 0.0
        %2750 = vmatprep.subr.mxu0 0.0
        %2751 = vmatpush1.msra.mxu0 0.0
        %2752 = vmatprep.subr.mxu0 0.0
        %2753 = vmatpush1.msra.mxu0 0.0
        %2754 = vmatprep.subr.mxu0 0.0
        %2755 = vmatpush1.msra.mxu0 0.0
        %2756 = vmatprep.subr.mxu0 0.0
        %2757 = vmatpush1.msra.mxu0 0.0
        %2758 = vmatprep.subr.mxu0 0.0
        %2759 = vmatpush1.msra.mxu0 0.0
        %2760 = vmatprep.subr.mxu0 0.0
        %2761 = vmatpush1.msra.mxu0 0.0
        %2762 = vmatprep.subr.mxu0 0.0
        %2763 = vmatpush1.msra.mxu0 0.0
        %2764 = vmatprep.subr.mxu0 0.0
        %2765 = vmatpush1.msra.mxu0 0.0
        %2766 = vmatprep.subr.mxu0 0.0
        %2767 = vmatpush1.msra.mxu0 0.0
        %2768 = vmatprep.subr.mxu0 0.0
        %2769 = vmatpush1.msra.mxu0 0.0
        %2770 = vmatprep.subr.mxu0 0.0
        %2771 = vmatpush1.msra.mxu0 0.0
        %2772 = vmatprep.mubr.f32.mxu0 0.0
        %2773 = vmatmul.mubr.f32.gmra.mrb[0].mxu0 %v2613
        %v2774 = vpop.f32.mrb[0].mxu0
        %v2775 = vadd.f32 0.0, %v2774
        %v2776 = vpop.f32.mrb[0].mxu0
        %2777 = vmatprep.mubr.f32.mxu0 0.0
        %2778 = vmatmul.mubr.f32.gmra.mrb[0].mxu0 %v2616
        %v2779 = vpop.f32.mrb[0].mxu0
        %v2780 = vadd.f32 0.0, %v2779
        %v2781 = vpop.f32.mrb[0].mxu0
        %2782 = vmatprep.mubr.f32.mxu0 0.0
        %2783 = vmatmul.mubr.f32.gmra.mrb[0].mxu0 %v2619
        %v2784 = vpop.f32.mrb[0].mxu0
        %v2785 = vadd.f32 0.0, %v2784
        %v2786 = vpop.f32.mrb[0].mxu0
        %2787 = vmatprep.mubr.f32.mxu0 0.0
        %2788 = vmatmul.mubr.f32.gmra.mrb[0].mxu0 %v2622
        %v2789 = vpop.f32.mrb[0].mxu0
        %v2790 = vadd.f32 0.0, %v2789
        %v2791 = vpop.f32.mrb[0].mxu0
        %2792 = vmatprep.mubr.f32.mxu0 0.0
        %2793 = vmatmul.mubr.f32.gmra.mrb[0].mxu0 %v2625
        %v2794 = vpop.f32.mrb[0].mxu0
        %v2795 = vadd.f32 0.0, %v2794
        %v2796 = vpop.f32.mrb[0].mxu0
        %2797 = vmatprep.mubr.f32.mxu0 0.0
        %2798 = vmatmul.mubr.f32.gmra.mrb[0].mxu0 %v2628
        %v2799 = vpop.f32.mrb[0].mxu0
        %v2800 = vadd.f32 0.0, %v2799
        %v2801 = vpop.f32.mrb[0].mxu0
        %2802 = vmatprep.mubr.f32.mxu0 0.0
        %2803 = vmatmul.mubr.f32.gmra.mrb[0].mxu0 %v2631
        %v2804 = vpop.f32.mrb[0].mxu0
        %v2805 = vadd.f32 0.0, %v2804
        %v2806 = vpop.f32.mrb[0].mxu0
        %2807 = vmatprep.mubr.f32.mxu0 0.0
        %2808 = vmatmul.mubr.f32.gmra.mrb[0].mxu0 %v2634
        %v2809 = vpop.f32.mrb[0].mxu0
        %v2810 = vadd.f32 0.0, %v2809
        %v2811 = vpop.f32.mrb[0].mxu0
        %2812 = vmatprep.mubr.f32.mxu0 0.0
        %2813 = vmatmul.mubr.f32.gmra.mrb[0].mxu0 %v2637
        %v2814 = vpop.f32.mrb[0].mxu0
        %v2815 = vadd.f32 0.0, %v2814
        %v2816 = vpop.f32.mrb[0].mxu0
        %2817 = vmatprep.mubr.f32.mxu0 0.0
        %2818 = vmatmul.mubr.f32.gmra.mrb[0].mxu0 %v2640
        %v2819 = vpop.f32.mrb[0].mxu0
        %v2820 = vadd.f32 0.0, %v2819
        %v2821 = vpop.f32.mrb[0].mxu0
        %2822 = vmatprep.mubr.f32.mxu0 0.0
        %2823 = vmatmul.mubr.f32.gmra.mrb[0].mxu0 %v2643
        %v2824 = vpop.f32.mrb[0].mxu0
        %v2825 = vadd.f32 0.0, %v2824
        %v2826 = vpop.f32.mrb[0].mxu0
        %2827 = vmatprep.mubr.f32.mxu0 0.0
        %2828 = vmatmul.mubr.f32.gmra.mrb[0].mxu0 %v2646
        %v2829 = vpop.f32.mrb[0].mxu0
        %v2830 = vadd.f32 0.0, %v2829
        %v2831 = vpop.f32.mrb[0].mxu0
        %2832 = vmatprep.mubr.f32.mxu0 0.0
        %2833 = vmatmul.mubr.f32.gmra.mrb[0].mxu0 %v2649
        %v2834 = vpop.f32.mrb[0].mxu0
        %v2835 = vadd.f32 0.0, %v2834
        %v2836 = vpop.f32.mrb[0].mxu0
        %2837 = vmatprep.mubr.f32.mxu0 0.0
        %2838 = vmatmul.mubr.f32.gmra.mrb[0].mxu0 %v2652
        %v2839 = vpop.f32.mrb[0].mxu0
        %v2840 = vadd.f32 0.0, %v2839
        %v2841 = vpop.f32.mrb[0].mxu0
        %2842 = vmatprep.mubr.f32.mxu0 0.0
        %2843 = vmatmul.mubr.f32.gmra.mrb[0].mxu0 %v2655
        %v2844 = vpop.f32.mrb[0].mxu0
        %v2845 = vadd.f32 0.0, %v2844
        %v2846 = vpop.f32.mrb[0].mxu0
        %2847 = vmatprep.mubr.f32.mxu0 0.0
        %2848 = vmatmul.mubr.f32.gmra.mrb[0].mxu0 %v2658
        %v2849 = vpop.f32.mrb[0].mxu0
        %v2850 = vadd.f32 0.0, %v2849
        %v2851 = vpop.f32.mrb[0].mxu0
        %2852 = vmatprep.mubr.f32.mxu0 0.0
        %2853 = vmatmul.mubr.f32.gmra.mrb[0].mxu0 %v2661
        %v2854 = vpop.f32.mrb[0].mxu0
        %v2855 = vadd.f32 0.0, %v2854
        %v2856 = vpop.f32.mrb[0].mxu0
        %2857 = vmatprep.mubr.f32.mxu0 0.0
        %2858 = vmatmul.mubr.f32.gmra.mrb[0].mxu0 %v2664
        %v2859 = vpop.f32.mrb[0].mxu0
        %v2860 = vadd.f32 0.0, %v2859
        %v2861 = vpop.f32.mrb[0].mxu0
        %2862 = vmatprep.mubr.f32.mxu0 0.0
        %2863 = vmatmul.mubr.f32.gmra.mrb[0].mxu0 %v2667
        %v2864 = vpop.f32.mrb[0].mxu0
        %v2865 = vadd.f32 0.0, %v2864
        %v2866 = vpop.f32.mrb[0].mxu0
        %2867 = vmatprep.mubr.f32.mxu0 0.0
        %2868 = vmatmul.mubr.f32.gmra.mrb[0].mxu0 %v2670
        %v2869 = vpop.f32.mrb[0].mxu0
        %v2870 = vadd.f32 0.0, %v2869
        %v2871 = vpop.f32.mrb[0].mxu0
        %2872 = vmatprep.mubr.f32.mxu0 0.0
        %2873 = vmatmul.mubr.f32.gmra.mrb[0].mxu0 %v2673
        %v2874 = vpop.f32.mrb[0].mxu0
        %v2875 = vadd.f32 0.0, %v2874
        %v2876 = vpop.f32.mrb[0].mxu0
        %2877 = vmatprep.mubr.f32.mxu0 0.0
        %2878 = vmatmul.mubr.f32.gmra.mrb[0].mxu0 %v2676
        %v2879 = vpop.f32.mrb[0].mxu0
        %v2880 = vadd.f32 0.0, %v2879
        %v2881 = vpop.f32.mrb[0].mxu0
        %2882 = vmatprep.mubr.f32.mxu0 0.0
        %2883 = vmatmul.mubr.f32.gmra.mrb[0].mxu0 %v2679
        %v2884 = vpop.f32.mrb[0].mxu0
        %v2885 = vadd.f32 0.0, %v2884
        %v2886 = vpop.f32.mrb[0].mxu0
        %2887 = vmatprep.mubr.f32.mxu0 0.0
        %2888 = vmatmul.mubr.f32.gmra.mrb[0].mxu0 %v2682
        %v2889 = vpop.f32.mrb[0].mxu0
        %v2890 = vadd.f32 0.0, %v2889
        %v2891 = vpop.f32.mrb[0].mxu0
        %2892 = vmatprep.mubr.f32.mxu0 0.0
        %2893 = vmatmul.mubr.f32.gmra.mrb[0].mxu0 %v2685
        %v2894 = vpop.f32.mrb[0].mxu0
        %v2895 = vadd.f32 0.0, %v2894
        %v2896 = vpop.f32.mrb[0].mxu0
        %2897 = vmatprep.mubr.f32.mxu0 0.0
        %2898 = vmatmul.mubr.f32.gmra.mrb[0].mxu0 %v2688
        %v2899 = vpop.f32.mrb[0].mxu0
        %v2900 = vadd.f32 0.0, %v2899
        %v2901 = vpop.f32.mrb[0].mxu0
        %2902 = vmatprep.mubr.f32.mxu0 0.0
        %2903 = vmatmul.mubr.f32.gmra.mrb[0].mxu0 %v2691
        %v2904 = vpop.f32.mrb[0].mxu0
        %v2905 = vadd.f32 0.0, %v2904
        %v2906 = vpop.f32.mrb[0].mxu0
        %2907 = vmatprep.mubr.f32.mxu0 0.0
        %2908 = vmatmul.mubr.f32.gmra.mrb[0].mxu0 %v2694
        %v2909 = vpop.f32.mrb[0].mxu0
        %v2910 = vadd.f32 0.0, %v2909
        %v2911 = vpop.f32.mrb[0].mxu0
        %2912 = vmatprep.mubr.f32.mxu0 0.0
        %2913 = vmatmul.mubr.f32.gmra.mrb[0].mxu0 %v2697
        %v2914 = vpop.f32.mrb[0].mxu0
        %v2915 = vadd.f32 0.0, %v2914
        %v2916 = vpop.f32.mrb[0].mxu0
        %2917 = vmatprep.mubr.f32.mxu0 0.0
        %2918 = vmatmul.mubr.f32.gmra.mrb[0].mxu0 %v2700
        %v2919 = vpop.f32.mrb[0].mxu0
        %v2920 = vadd.f32 0.0, %v2919
        %v2921 = vpop.f32.mrb[0].mxu0
        %2922 = vmatprep.mubr.f32.mxu0 0.0
        %2923 = vmatmul.mubr.f32.gmra.mrb[0].mxu0 %v2703
        %v2924 = vpop.f32.mrb[0].mxu0
        %v2925 = vadd.f32 0.0, %v2924
        %v2926 = vpop.f32.mrb[0].mxu0
        %2927 = vmatprep.mubr.f32.mxu0 0.0
        %2928 = vmatmul.mubr.f32.gmra.mrb[0].mxu0 %v2706
        %v2929 = vpop.f32.mrb[0].mxu0
        %v2930 = vadd.f32 0.0, %v2929
        %v2931 = vpop.f32.mrb[0].mxu0
        %2932 = vdwg.mxu0
        %v2933 = vadd.f32 %v1327, %v2775
        %v2934 = vadd.f32 %v1328, %v2780
        %v2935 = vadd.f32 %v1329, %v2785
        %v2936 = vadd.f32 %v1330, %v2790
        %v2937 = vadd.f32 %v1331, %v2795
        %v2938 = vadd.f32 %v1332, %v2800
        %v2939 = vadd.f32 %v1333, %v2805
        %v2940 = vadd.f32 %v1334, %v2810
        %v2941 = vadd.f32 %v1335, %v2815
        %v2942 = vadd.f32 %v1336, %v2820
        %v2943 = vadd.f32 %v1337, %v2825
        %v2944 = vadd.f32 %v1338, %v2830
        %v2945 = vadd.f32 %v1339, %v2835
        %v2946 = vadd.f32 %v1340, %v2840
        %v2947 = vadd.f32 %v1341, %v2845
        %v2948 = vadd.f32 %v1342, %v2850
        %v2949 = vadd.f32 %v1343, %v2855
        %v2950 = vadd.f32 %v1344, %v2860
        %v2951 = vadd.f32 %v1345, %v2865
        %v2952 = vadd.f32 %v1346, %v2870
        %v2953 = vadd.f32 %v1347, %v2875
        %v2954 = vadd.f32 %v1348, %v2880
        %v2955 = vadd.f32 %v1349, %v2885
        %v2956 = vadd.f32 %v1350, %v2890
        %v2957 = vadd.f32 %v1351, %v2895
        %v2958 = vadd.f32 %v1352, %v2900
        %v2959 = vadd.f32 %v1353, %v2905
        %v2960 = vadd.f32 %v1354, %v2910
        %v2961 = vadd.f32 %v1355, %v2915
        %v2962 = vadd.f32 %v1356, %v2920
        %v2963 = vadd.f32 %v1357, %v2925
        %v2964 = vadd.f32 %v1358, %v2930
        %2965 = vrot.lane.b32.xlu0 %v1098, 112
        %v2966 = vpop.permute.xlu0 %2965
        %2967 = vrot.lane.b32.xlu0 %v1103, 112
        %v2968 = vpop.permute.xlu0 %2967
        %2969 = vrot.lane.b32.xlu0 %v1108, 112
        %v2970 = vpop.permute.xlu0 %2969
        %2971 = vrot.lane.b32.xlu0 %v1113, 112
        %v2972 = vpop.permute.xlu0 %2971
        %2973 = vrot.lane.b32.xlu0 %v1118, 112
        %v2974 = vpop.permute.xlu0 %2973
        %2975 = vrot.lane.b32.xlu0 %v1123, 112
        %v2976 = vpop.permute.xlu0 %2975
        %2977 = vrot.lane.b32.xlu0 %v1128, 112
        %v2978 = vpop.permute.xlu0 %2977
        %2979 = vrot.lane.b32.xlu0 %v1133, 112
        %v2980 = vpop.permute.xlu0 %2979
        %2981 = vrot.lane.b32.xlu0 %v1138, 112
        %v2982 = vpop.permute.xlu0 %2981
        %2983 = vrot.lane.b32.xlu0 %v1143, 112
        %v2984 = vpop.permute.xlu0 %2983
        %2985 = vrot.lane.b32.xlu0 %v1148, 112
        %v2986 = vpop.permute.xlu0 %2985
        %2987 = vrot.lane.b32.xlu0 %v1153, 112
        %v2988 = vpop.permute.xlu0 %2987
        %2989 = vrot.lane.b32.xlu0 %v1158, 112
        %v2990 = vpop.permute.xlu0 %2989
        %2991 = vrot.lane.b32.xlu0 %v1163, 112
        %v2992 = vpop.permute.xlu0 %2991
        %2993 = vrot.lane.b32.xlu0 %v1168, 112
        %v2994 = vpop.permute.xlu0 %2993
        %2995 = vrot.lane.b32.xlu0 %v1173, 112
        %v2996 = vpop.permute.xlu0 %2995
        %2997 = vrot.lane.b32.xlu0 %v1178, 112
        %v2998 = vpop.permute.xlu0 %2997
        %2999 = vrot.lane.b32.xlu0 %v1183, 112
        %v3000 = vpop.permute.xlu0 %2999
        %3001 = vrot.lane.b32.xlu0 %v1188, 112
        %v3002 = vpop.permute.xlu0 %3001
        %3003 = vrot.lane.b32.xlu0 %v1193, 112
        %v3004 = vpop.permute.xlu0 %3003
        %3005 = vrot.lane.b32.xlu0 %v1198, 112
        %v3006 = vpop.permute.xlu0 %3005
        %3007 = vrot.lane.b32.xlu0 %v1203, 112
        %v3008 = vpop.permute.xlu0 %3007
        %3009 = vrot.lane.b32.xlu0 %v1208, 112
        %v3010 = vpop.permute.xlu0 %3009
        %3011 = vrot.lane.b32.xlu0 %v1213, 112
        %v3012 = vpop.permute.xlu0 %3011
        %3013 = vrot.lane.b32.xlu0 %v1218, 112
        %v3014 = vpop.permute.xlu0 %3013
        %3015 = vrot.lane.b32.xlu0 %v1223, 112
        %v3016 = vpop.permute.xlu0 %3015
        %3017 = vrot.lane.b32.xlu0 %v1228, 112
        %v3018 = vpop.permute.xlu0 %3017
        %3019 = vrot.lane.b32.xlu0 %v1233, 112
        %v3020 = vpop.permute.xlu0 %3019
        %3021 = vrot.lane.b32.xlu0 %v1238, 112
        %v3022 = vpop.permute.xlu0 %3021
        %3023 = vrot.lane.b32.xlu0 %v1243, 112
        %v3024 = vpop.permute.xlu0 %3023
        %3025 = vrot.lane.b32.xlu0 %v1248, 112
        %v3026 = vpop.permute.xlu0 %3025
        %3027 = vrot.lane.b32.xlu0 %v1253, 112
        %v3028 = vpop.permute.xlu0 %3027
        %3029 = vrot.lane.b32.xlu0 %v1098, 80
        %v3030 = vpop.permute.xlu0 %3029
        %3031 = vrot.lane.b32.xlu0 %v1103, 80
        %v3032 = vpop.permute.xlu0 %3031
        %3033 = vrot.lane.b32.xlu0 %v1108, 80
        %v3034 = vpop.permute.xlu0 %3033
        %3035 = vrot.lane.b32.xlu0 %v1113, 80
        %v3036 = vpop.permute.xlu0 %3035
        %3037 = vrot.lane.b32.xlu0 %v1118, 80
        %v3038 = vpop.permute.xlu0 %3037
        %3039 = vrot.lane.b32.xlu0 %v1123, 80
        %v3040 = vpop.permute.xlu0 %3039
        %3041 = vrot.lane.b32.xlu0 %v1128, 80
        %v3042 = vpop.permute.xlu0 %3041
        %3043 = vrot.lane.b32.xlu0 %v1133, 80
        %v3044 = vpop.permute.xlu0 %3043
        %3045 = vrot.lane.b32.xlu0 %v1138, 80
        %v3046 = vpop.permute.xlu0 %3045
        %3047 = vrot.lane.b32.xlu0 %v1143, 80
        %v3048 = vpop.permute.xlu0 %3047
        %3049 = vrot.lane.b32.xlu0 %v1148, 80
        %v3050 = vpop.permute.xlu0 %3049
        %3051 = vrot.lane.b32.xlu0 %v1153, 80
        %v3052 = vpop.permute.xlu0 %3051
        %3053 = vrot.lane.b32.xlu0 %v1158, 80
        %v3054 = vpop.permute.xlu0 %3053
        %3055 = vrot.lane.b32.xlu0 %v1163, 80
        %v3056 = vpop.permute.xlu0 %3055
        %3057 = vrot.lane.b32.xlu0 %v1168, 80
        %v3058 = vpop.permute.xlu0 %3057
        %3059 = vrot.lane.b32.xlu0 %v1173, 80
        %v3060 = vpop.permute.xlu0 %3059
        %3061 = vrot.lane.b32.xlu0 %v1178, 80
        %v3062 = vpop.permute.xlu0 %3061
        %3063 = vrot.lane.b32.xlu0 %v1183, 80
        %v3064 = vpop.permute.xlu0 %3063
        %3065 = vrot.lane.b32.xlu0 %v1188, 80
        %v3066 = vpop.permute.xlu0 %3065
        %3067 = vrot.lane.b32.xlu0 %v1193, 80
        %v3068 = vpop.permute.xlu0 %3067
        %3069 = vrot.lane.b32.xlu0 %v1198, 80
        %v3070 = vpop.permute.xlu0 %3069
        %3071 = vrot.lane.b32.xlu0 %v1203, 80
        %v3072 = vpop.permute.xlu0 %3071
        %3073 = vrot.lane.b32.xlu0 %v1208, 80
        %v3074 = vpop.permute.xlu0 %3073
        %3075 = vrot.lane.b32.xlu0 %v1213, 80
        %v3076 = vpop.permute.xlu0 %3075
        %3077 = vrot.lane.b32.xlu0 %v1218, 80
        %v3078 = vpop.permute.xlu0 %3077
        %3079 = vrot.lane.b32.xlu0 %v1223, 80
        %v3080 = vpop.permute.xlu0 %3079
        %3081 = vrot.lane.b32.xlu0 %v1228, 80
        %v3082 = vpop.permute.xlu0 %3081
        %3083 = vrot.lane.b32.xlu0 %v1233, 80
        %v3084 = vpop.permute.xlu0 %3083
        %3085 = vrot.lane.b32.xlu0 %v1238, 80
        %v3086 = vpop.permute.xlu0 %3085
        %3087 = vrot.lane.b32.xlu0 %v1243, 80
        %v3088 = vpop.permute.xlu0 %3087
        %3089 = vrot.lane.b32.xlu0 %v1248, 80
        %v3090 = vpop.permute.xlu0 %3089
        %3091 = vrot.lane.b32.xlu0 %v1253, 80
        %v3092 = vpop.permute.xlu0 %3091
        %v3093 = vsel %vm1455, %v2966, 0
        %v3095 = vsel %vm1455, %v2968, 0
        %v3097 = vsel %vm1455, %v2970, 0
        %v3099 = vsel %vm1455, %v2972, 0
        %v3101 = vsel %vm1455, %v2974, 0
        %v3103 = vsel %vm1455, %v2976, 0
        %v3105 = vsel %vm1455, %v2978, 0
        %v3107 = vsel %vm1455, %v2980, 0
        %v3109 = vsel %vm1455, %v2982, 0
        %v3111 = vsel %vm1455, %v2984, 0
        %v3113 = vsel %vm1455, %v2986, 0
        %v3115 = vsel %vm1455, %v2988, 0
        %v3117 = vsel %vm1455, %v2990, 0
        %v3119 = vsel %vm1455, %v2992, 0
        %v3121 = vsel %vm1455, %v2994, 0
        %v3123 = vsel %vm1455, %v2996, 0
        %v3125 = vsel %vm1455, %v2998, 0
        %v3127 = vsel %vm1455, %v3000, 0
        %v3129 = vsel %vm1455, %v3002, 0
        %v3131 = vsel %vm1455, %v3004, 0
        %v3133 = vsel %vm1455, %v3006, 0
        %v3135 = vsel %vm1455, %v3008, 0
        %v3137 = vsel %vm1455, %v3010, 0
        %v3139 = vsel %vm1455, %v3012, 0
        %v3141 = vsel %vm1455, %v3014, 0
        %v3143 = vsel %vm1455, %v3016, 0
        %v3145 = vsel %vm1455, %v3018, 0
        %v3147 = vsel %vm1455, %v3020, 0
        %v3149 = vsel %vm1455, %v3022, 0
        %v3151 = vsel %vm1455, %v3024, 0
        %v3153 = vsel %vm1455, %v3026, 0
        %v3155 = vsel %vm1455, %v3028, 0
        %v3157 = vsel %vm1455, %v3030, 0
        %v3159 = vsel %vm1455, %v3032, 0
        %v3161 = vsel %vm1455, %v3034, 0
        %v3163 = vsel %vm1455, %v3036, 0
        %v3165 = vsel %vm1455, %v3038, 0
        %v3167 = vsel %vm1455, %v3040, 0
        %v3169 = vsel %vm1455, %v3042, 0
        %v3171 = vsel %vm1455, %v3044, 0
        %v3173 = vsel %vm1455, %v3046, 0
        %v3175 = vsel %vm1455, %v3048, 0
        %v3177 = vsel %vm1455, %v3050, 0
        %v3179 = vsel %vm1455, %v3052, 0
        %v3181 = vsel %vm1455, %v3054, 0
        %v3183 = vsel %vm1455, %v3056, 0
        %v3185 = vsel %vm1455, %v3058, 0
        %v3187 = vsel %vm1455, %v3060, 0
        %v3189 = vsel %vm1455, %v3062, 0
        %v3191 = vsel %vm1455, %v3064, 0
        %v3193 = vsel %vm1455, %v3066, 0
        %v3195 = vsel %vm1455, %v3068, 0
        %v3197 = vsel %vm1455, %v3070, 0
        %v3199 = vsel %vm1455, %v3072, 0
        %v3201 = vsel %vm1455, %v3074, 0
        %v3203 = vsel %vm1455, %v3076, 0
        %v3205 = vsel %vm1455, %v3078, 0
        %v3207 = vsel %vm1455, %v3080, 0
        %v3209 = vsel %vm1455, %v3082, 0
        %v3211 = vsel %vm1455, %v3084, 0
        %v3213 = vsel %vm1455, %v3086, 0
        %v3215 = vsel %vm1455, %v3088, 0
        %v3217 = vsel %vm1455, %v3090, 0
        %v3219 = vsel %vm1455, %v3092, 0
        %3221 = vmatprep.subr.mxu0 0.0
        %3222 = vmatpush1.xpose.msra.mxu0 %v3157
        %3223 = vmatprep.subr.mxu0 0.0
        %3224 = vmatpush1.xpose.msra.mxu0 %v3159
        %3225 = vmatprep.subr.mxu0 0.0
        %3226 = vmatpush1.xpose.msra.mxu0 %v3161
        %3227 = vmatprep.subr.mxu0 0.0
        %3228 = vmatpush1.xpose.msra.mxu0 %v3163
        %3229 = vmatprep.subr.mxu0 0.0
        %3230 = vmatpush1.xpose.msra.mxu0 %v3165
        %3231 = vmatprep.subr.mxu0 0.0
        %3232 = vmatpush1.xpose.msra.mxu0 %v3167
        %3233 = vmatprep.subr.mxu0 0.0
        %3234 = vmatpush1.xpose.msra.mxu0 %v3169
        %3235 = vmatprep.subr.mxu0 0.0
        %3236 = vmatpush1.xpose.msra.mxu0 %v3171
        %3237 = vmatprep.subr.mxu0 0.0
        %3238 = vmatpush1.xpose.msra.mxu0 %v3173
        %3239 = vmatprep.subr.mxu0 0.0
        %3240 = vmatpush1.xpose.msra.mxu0 %v3175
        %3241 = vmatprep.subr.mxu0 0.0
        %3242 = vmatpush1.xpose.msra.mxu0 %v3177
        %3243 = vmatprep.subr.mxu0 0.0
        %3244 = vmatpush1.xpose.msra.mxu0 %v3179
        %3245 = vmatprep.subr.mxu0 0.0
        %3246 = vmatpush1.xpose.msra.mxu0 %v3181
        %3247 = vmatprep.subr.mxu0 0.0
        %3248 = vmatpush1.xpose.msra.mxu0 %v3183
        %3249 = vmatprep.subr.mxu0 0.0
        %3250 = vmatpush1.xpose.msra.mxu0 %v3185
        %3251 = vmatprep.subr.mxu0 0.0
        %3252 = vmatpush1.xpose.msra.mxu0 %v3187
        %3253 = vmatprep.subr.mxu0 0.0
        %3254 = vmatpush1.xpose.msra.mxu0 %v3189
        %3255 = vmatprep.subr.mxu0 0.0
        %3256 = vmatpush1.xpose.msra.mxu0 %v3191
        %3257 = vmatprep.subr.mxu0 0.0
        %3258 = vmatpush1.xpose.msra.mxu0 %v3193
        %3259 = vmatprep.subr.mxu0 0.0
        %3260 = vmatpush1.xpose.msra.mxu0 %v3195
        %3261 = vmatprep.subr.mxu0 0.0
        %3262 = vmatpush1.xpose.msra.mxu0 %v3197
        %3263 = vmatprep.subr.mxu0 0.0
        %3264 = vmatpush1.xpose.msra.mxu0 %v3199
        %3265 = vmatprep.subr.mxu0 0.0
        %3266 = vmatpush1.xpose.msra.mxu0 %v3201
        %3267 = vmatprep.subr.mxu0 0.0
        %3268 = vmatpush1.xpose.msra.mxu0 %v3203
        %3269 = vmatprep.subr.mxu0 0.0
        %3270 = vmatpush1.xpose.msra.mxu0 %v3205
        %3271 = vmatprep.subr.mxu0 0.0
        %3272 = vmatpush1.xpose.msra.mxu0 %v3207
        %3273 = vmatprep.subr.mxu0 0.0
        %3274 = vmatpush1.xpose.msra.mxu0 %v3209
        %3275 = vmatprep.subr.mxu0 0.0
        %3276 = vmatpush1.xpose.msra.mxu0 %v3211
        %3277 = vmatprep.subr.mxu0 0.0
        %3278 = vmatpush1.xpose.msra.mxu0 %v3213
        %3279 = vmatprep.subr.mxu0 0.0
        %3280 = vmatpush1.xpose.msra.mxu0 %v3215
        %3281 = vmatprep.subr.mxu0 0.0
        %3282 = vmatpush1.xpose.msra.mxu0 %v3217
        %3283 = vmatprep.subr.mxu0 0.0
        %3284 = vmatpush1.xpose.msra.mxu0 %v3219
        %3285 = vmatprep.mubr.f32.mxu0 0.0
        %3286 = vmatmul.mubr.f32.gmra.mrb[0].mxu0 %v3093
        %v3287 = vpop.f32.mrb[0].mxu0
        %v3288 = vadd.f32 %v1256, %v3287
        %v3289 = vpop.f32.mrb[0].mxu0
        %v3290 = vadd.f32 %v1257, %v3289
        %3291 = vmatprep.mubr.f32.mxu0 0.0
        %3292 = vmatmul.mubr.f32.gmra.mrb[0].mxu0 %v3095
        %v3293 = vpop.f32.mrb[0].mxu0
        %v3294 = vadd.f32 %v1258, %v3293
        %v3295 = vpop.f32.mrb[0].mxu0
        %v3296 = vadd.f32 %v1259, %v3295
        %3297 = vmatprep.mubr.f32.mxu0 0.0
        %3298 = vmatmul.mubr.f32.gmra.mrb[0].mxu0 %v3097
        %v3299 = vpop.f32.mrb[0].mxu0
        %v3300 = vadd.f32 %v1260, %v3299
        %v3301 = vpop.f32.mrb[0].mxu0
        %v3302 = vadd.f32 %v1261, %v3301
        %3303 = vmatprep.mubr.f32.mxu0 0.0
        %3304 = vmatmul.mubr.f32.gmra.mrb[0].mxu0 %v3099
        %v3305 = vpop.f32.mrb[0].mxu0
        %v3306 = vadd.f32 %v1262, %v3305
        %v3307 = vpop.f32.mrb[0].mxu0
        %v3308 = vadd.f32 %v1263, %v3307
        %3309 = vmatprep.mubr.f32.mxu0 0.0
        %3310 = vmatmul.mubr.f32.gmra.mrb[0].mxu0 %v3101
        %v3311 = vpop.f32.mrb[0].mxu0
        %v3312 = vadd.f32 %v1264, %v3311
        %v3313 = vpop.f32.mrb[0].mxu0
        %v3314 = vadd.f32 %v1265, %v3313
        %3315 = vmatprep.mubr.f32.mxu0 0.0
        %3316 = vmatmul.mubr.f32.gmra.mrb[0].mxu0 %v3103
        %v3317 = vpop.f32.mrb[0].mxu0
        %v3318 = vadd.f32 %v1266, %v3317
        %v3319 = vpop.f32.mrb[0].mxu0
        %v3320 = vadd.f32 %v1267, %v3319
        %3321 = vmatprep.mubr.f32.mxu0 0.0
        %3322 = vmatmul.mubr.f32.gmra.mrb[0].mxu0 %v3105
        %v3323 = vpop.f32.mrb[0].mxu0
        %v3324 = vadd.f32 %v1268, %v3323
        %v3325 = vpop.f32.mrb[0].mxu0
        %v3326 = vadd.f32 %v1269, %v3325
        %3327 = vmatprep.mubr.f32.mxu0 0.0
        %3328 = vmatmul.mubr.f32.gmra.mrb[0].mxu0 %v3107
        %v3329 = vpop.f32.mrb[0].mxu0
        %v3330 = vadd.f32 %v1270, %v3329
        %v3331 = vpop.f32.mrb[0].mxu0
        %v3332 = vadd.f32 %v1271, %v3331
        %3333 = vmatprep.mubr.f32.mxu0 0.0
        %3334 = vmatmul.mubr.f32.gmra.mrb[0].mxu0 %v3109
        %v3335 = vpop.f32.mrb[0].mxu0
        %v3336 = vadd.f32 %v1272, %v3335
        %v3337 = vpop.f32.mrb[0].mxu0
        %v3338 = vadd.f32 %v1273, %v3337
        %3339 = vmatprep.mubr.f32.mxu0 0.0
        %3340 = vmatmul.mubr.f32.gmra.mrb[0].mxu0 %v3111
        %v3341 = vpop.f32.mrb[0].mxu0
        %v3342 = vadd.f32 %v1274, %v3341
        %v3343 = vpop.f32.mrb[0].mxu0
        %v3344 = vadd.f32 %v1275, %v3343
        %3345 = vmatprep.mubr.f32.mxu0 0.0
        %3346 = vmatmul.mubr.f32.gmra.mrb[0].mxu0 %v3113
        %v3347 = vpop.f32.mrb[0].mxu0
        %v3348 = vadd.f32 %v1276, %v3347
        %v3349 = vpop.f32.mrb[0].mxu0
        %v3350 = vadd.f32 %v1277, %v3349
        %3351 = vmatprep.mubr.f32.mxu0 0.0
        %3352 = vmatmul.mubr.f32.gmra.mrb[0].mxu0 %v3115
        %v3353 = vpop.f32.mrb[0].mxu0
        %v3354 = vadd.f32 %v1278, %v3353
        %v3355 = vpop.f32.mrb[0].mxu0
        %v3356 = vadd.f32 %v1279, %v3355
        %3357 = vmatprep.mubr.f32.mxu0 0.0
        %3358 = vmatmul.mubr.f32.gmra.mrb[0].mxu0 %v3117
        %v3359 = vpop.f32.mrb[0].mxu0
        %v3360 = vadd.f32 %v1280, %v3359
        %v3361 = vpop.f32.mrb[0].mxu0
        %v3362 = vadd.f32 %v1281, %v3361
        %3363 = vmatprep.mubr.f32.mxu0 0.0
        %3364 = vmatmul.mubr.f32.gmra.mrb[0].mxu0 %v3119
        %v3365 = vpop.f32.mrb[0].mxu0
        %v3366 = vadd.f32 %v1282, %v3365
        %v3367 = vpop.f32.mrb[0].mxu0
        %v3368 = vadd.f32 %v1283, %v3367
        %3369 = vmatprep.mubr.f32.mxu0 0.0
        %3370 = vmatmul.mubr.f32.gmra.mrb[0].mxu0 %v3121
        %v3371 = vpop.f32.mrb[0].mxu0
        %v3372 = vadd.f32 %v1284, %v3371
        %v3373 = vpop.f32.mrb[0].mxu0
        %v3374 = vadd.f32 %v1285, %v3373
        %3375 = vmatprep.mubr.f32.mxu0 0.0
        %3376 = vmatmul.mubr.f32.gmra.mrb[0].mxu0 %v3123
        %v3377 = vpop.f32.mrb[0].mxu0
        %v3378 = vadd.f32 %v1286, %v3377
        %v3379 = vpop.f32.mrb[0].mxu0
        %v3380 = vadd.f32 %v1287, %v3379
        %3381 = vmatprep.mubr.f32.mxu0 0.0
        %3382 = vmatmul.mubr.f32.gmra.mrb[0].mxu0 %v3125
        %v3383 = vpop.f32.mrb[0].mxu0
        %v3384 = vadd.f32 %v1288, %v3383
        %v3385 = vpop.f32.mrb[0].mxu0
        %v3386 = vadd.f32 %v1289, %v3385
        %3387 = vmatprep.mubr.f32.mxu0 0.0
        %3388 = vmatmul.mubr.f32.gmra.mrb[0].mxu0 %v3127
        %v3389 = vpop.f32.mrb[0].mxu0
        %v3390 = vadd.f32 %v1290, %v3389
        %v3391 = vpop.f32.mrb[0].mxu0
        %v3392 = vadd.f32 %v1291, %v3391
        %3393 = vmatprep.mubr.f32.mxu0 0.0
        %3394 = vmatmul.mubr.f32.gmra.mrb[0].mxu0 %v3129
        %v3395 = vpop.f32.mrb[0].mxu0
        %v3396 = vadd.f32 %v1292, %v3395
        %v3397 = vpop.f32.mrb[0].mxu0
        %v3398 = vadd.f32 %v1293, %v3397
        %3399 = vmatprep.mubr.f32.mxu0 0.0
        %3400 = vmatmul.mubr.f32.gmra.mrb[0].mxu0 %v3131
        %v3401 = vpop.f32.mrb[0].mxu0
        %v3402 = vadd.f32 %v1294, %v3401
        %v3403 = vpop.f32.mrb[0].mxu0
        %v3404 = vadd.f32 %v1295, %v3403
        %3405 = vmatprep.mubr.f32.mxu0 0.0
        %3406 = vmatmul.mubr.f32.gmra.mrb[0].mxu0 %v3133
        %v3407 = vpop.f32.mrb[0].mxu0
        %v3408 = vadd.f32 %v1296, %v3407
        %v3409 = vpop.f32.mrb[0].mxu0
        %v3410 = vadd.f32 %v1297, %v3409
        %3411 = vmatprep.mubr.f32.mxu0 0.0
        %3412 = vmatmul.mubr.f32.gmra.mrb[0].mxu0 %v3135
        %v3413 = vpop.f32.mrb[0].mxu0
        %v3414 = vadd.f32 %v1298, %v3413
        %v3415 = vpop.f32.mrb[0].mxu0
        %v3416 = vadd.f32 %v1299, %v3415
        %3417 = vmatprep.mubr.f32.mxu0 0.0
        %3418 = vmatmul.mubr.f32.gmra.mrb[0].mxu0 %v3137
        %v3419 = vpop.f32.mrb[0].mxu0
        %v3420 = vadd.f32 %v1300, %v3419
        %v3421 = vpop.f32.mrb[0].mxu0
        %v3422 = vadd.f32 %v1301, %v3421
        %3423 = vmatprep.mubr.f32.mxu0 0.0
        %3424 = vmatmul.mubr.f32.gmra.mrb[0].mxu0 %v3139
        %v3425 = vpop.f32.mrb[0].mxu0
        %v3426 = vadd.f32 %v1302, %v3425
        %v3427 = vpop.f32.mrb[0].mxu0
        %v3428 = vadd.f32 %v1303, %v3427
        %3429 = vmatprep.mubr.f32.mxu0 0.0
        %3430 = vmatmul.mubr.f32.gmra.mrb[0].mxu0 %v3141
        %v3431 = vpop.f32.mrb[0].mxu0
        %v3432 = vadd.f32 %v1304, %v3431
        %v3433 = vpop.f32.mrb[0].mxu0
        %v3434 = vadd.f32 %v1305, %v3433
        %3435 = vmatprep.mubr.f32.mxu0 0.0
        %3436 = vmatmul.mubr.f32.gmra.mrb[0].mxu0 %v3143
        %v3437 = vpop.f32.mrb[0].mxu0
        %v3438 = vadd.f32 %v1306, %v3437
        %v3439 = vpop.f32.mrb[0].mxu0
        %v3440 = vadd.f32 %v1307, %v3439
        %3441 = vmatprep.mubr.f32.mxu0 0.0
        %3442 = vmatmul.mubr.f32.gmra.mrb[0].mxu0 %v3145
        %v3443 = vpop.f32.mrb[0].mxu0
        %v3444 = vadd.f32 %v1308, %v3443
        %v3445 = vpop.f32.mrb[0].mxu0
        %v3446 = vadd.f32 %v1309, %v3445
        %3447 = vmatprep.mubr.f32.mxu0 0.0
        %3448 = vmatmul.mubr.f32.gmra.mrb[0].mxu0 %v3147
        %v3449 = vpop.f32.mrb[0].mxu0
        %v3450 = vadd.f32 %v1310, %v3449
        %v3451 = vpop.f32.mrb[0].mxu0
        %v3452 = vadd.f32 %v1311, %v3451
        %3453 = vmatprep.mubr.f32.mxu0 0.0
        %3454 = vmatmul.mubr.f32.gmra.mrb[0].mxu0 %v3149
        %v3455 = vpop.f32.mrb[0].mxu0
        %v3456 = vadd.f32 %v1312, %v3455
        %v3457 = vpop.f32.mrb[0].mxu0
        %v3458 = vadd.f32 %v1313, %v3457
        %3459 = vmatprep.mubr.f32.mxu0 0.0
        %3460 = vmatmul.mubr.f32.gmra.mrb[0].mxu0 %v3151
        %v3461 = vpop.f32.mrb[0].mxu0
        %v3462 = vadd.f32 %v1314, %v3461
        %v3463 = vpop.f32.mrb[0].mxu0
        %v3464 = vadd.f32 %v1315, %v3463
        %3465 = vmatprep.mubr.f32.mxu0 0.0
        %3466 = vmatmul.mubr.f32.gmra.mrb[0].mxu0 %v3153
        %v3467 = vpop.f32.mrb[0].mxu0
        %v3468 = vadd.f32 %v1316, %v3467
        %v3469 = vpop.f32.mrb[0].mxu0
        %v3470 = vadd.f32 %v1317, %v3469
        %3471 = vmatprep.mubr.f32.mxu0 0.0
        %3472 = vmatmul.mubr.f32.gmra.mrb[0].mxu0 %v3155
        %v3473 = vpop.f32.mrb[0].mxu0
        %v3474 = vadd.f32 %v1318, %v3473
        %v3475 = vpop.f32.mrb[0].mxu0
        %v3476 = vadd.f32 %v1319, %v3475
        %3477 = vdwg.mxu0
        %v3478 = vmax.f32 %v3288, %v3290
        %3479 = vmax.xlane.f32.xlu0 %v3478
        %v3480 = vpop.xlane.xlu0 %3479
        %v3481 = vmax.f32 %v3294, %v3296
        %3482 = vmax.xlane.f32.xlu0 %v3481
        %v3483 = vpop.xlane.xlu0 %3482
        %v3484 = vmax.f32 %v3300, %v3302
        %3485 = vmax.xlane.f32.xlu0 %v3484
        %v3486 = vpop.xlane.xlu0 %3485
        %v3487 = vmax.f32 %v3306, %v3308
        %3488 = vmax.xlane.f32.xlu0 %v3487
        %v3489 = vpop.xlane.xlu0 %3488
        %v3490 = vmax.f32 %v3312, %v3314
        %3491 = vmax.xlane.f32.xlu0 %v3490
        %v3492 = vpop.xlane.xlu0 %3491
        %v3493 = vmax.f32 %v3318, %v3320
        %3494 = vmax.xlane.f32.xlu0 %v3493
        %v3495 = vpop.xlane.xlu0 %3494
        %v3496 = vmax.f32 %v3324, %v3326
        %3497 = vmax.xlane.f32.xlu0 %v3496
        %v3498 = vpop.xlane.xlu0 %3497
        %v3499 = vmax.f32 %v3330, %v3332
        %3500 = vmax.xlane.f32.xlu0 %v3499
        %v3501 = vpop.xlane.xlu0 %3500
        %v3502 = vmax.f32 %v3336, %v3338
        %3503 = vmax.xlane.f32.xlu0 %v3502
        %v3504 = vpop.xlane.xlu0 %3503
        %v3505 = vmax.f32 %v3342, %v3344
        %3506 = vmax.xlane.f32.xlu0 %v3505
        %v3507 = vpop.xlane.xlu0 %3506
        %v3508 = vmax.f32 %v3348, %v3350
        %3509 = vmax.xlane.f32.xlu0 %v3508
        %v3510 = vpop.xlane.xlu0 %3509
        %v3511 = vmax.f32 %v3354, %v3356
        %3512 = vmax.xlane.f32.xlu0 %v3511
        %v3513 = vpop.xlane.xlu0 %3512
        %v3514 = vmax.f32 %v3360, %v3362
        %3515 = vmax.xlane.f32.xlu0 %v3514
        %v3516 = vpop.xlane.xlu0 %3515
        %v3517 = vmax.f32 %v3366, %v3368
        %3518 = vmax.xlane.f32.xlu0 %v3517
        %v3519 = vpop.xlane.xlu0 %3518
        %v3520 = vmax.f32 %v3372, %v3374
        %3521 = vmax.xlane.f32.xlu0 %v3520
        %v3522 = vpop.xlane.xlu0 %3521
        %v3523 = vmax.f32 %v3378, %v3380
        %3524 = vmax.xlane.f32.xlu0 %v3523
        %v3525 = vpop.xlane.xlu0 %3524
        %v3526 = vmax.f32 %v3384, %v3386
        %3527 = vmax.xlane.f32.xlu0 %v3526
        %v3528 = vpop.xlane.xlu0 %3527
        %v3529 = vmax.f32 %v3390, %v3392
        %3530 = vmax.xlane.f32.xlu0 %v3529
        %v3531 = vpop.xlane.xlu0 %3530
        %v3532 = vmax.f32 %v3396, %v3398
        %3533 = vmax.xlane.f32.xlu0 %v3532
        %v3534 = vpop.xlane.xlu0 %3533
        %v3535 = vmax.f32 %v3402, %v3404
        %3536 = vmax.xlane.f32.xlu0 %v3535
        %v3537 = vpop.xlane.xlu0 %3536
        %v3538 = vmax.f32 %v3408, %v3410
        %3539 = vmax.xlane.f32.xlu0 %v3538
        %v3540 = vpop.xlane.xlu0 %3539
        %v3541 = vmax.f32 %v3414, %v3416
        %3542 = vmax.xlane.f32.xlu0 %v3541
        %v3543 = vpop.xlane.xlu0 %3542
        %v3544 = vmax.f32 %v3420, %v3422
        %3545 = vmax.xlane.f32.xlu0 %v3544
        %v3546 = vpop.xlane.xlu0 %3545
        %v3547 = vmax.f32 %v3426, %v3428
        %3548 = vmax.xlane.f32.xlu0 %v3547
        %v3549 = vpop.xlane.xlu0 %3548
        %v3550 = vmax.f32 %v3432, %v3434
        %3551 = vmax.xlane.f32.xlu0 %v3550
        %v3552 = vpop.xlane.xlu0 %3551
        %v3553 = vmax.f32 %v3438, %v3440
        %3554 = vmax.xlane.f32.xlu0 %v3553
        %v3555 = vpop.xlane.xlu0 %3554
        %v3556 = vmax.f32 %v3444, %v3446
        %3557 = vmax.xlane.f32.xlu0 %v3556
        %v3558 = vpop.xlane.xlu0 %3557
        %v3559 = vmax.f32 %v3450, %v3452
        %3560 = vmax.xlane.f32.xlu0 %v3559
        %v3561 = vpop.xlane.xlu0 %3560
        %v3562 = vmax.f32 %v3456, %v3458
        %3563 = vmax.xlane.f32.xlu0 %v3562
        %v3564 = vpop.xlane.xlu0 %3563
        %v3565 = vmax.f32 %v3462, %v3464
        %3566 = vmax.xlane.f32.xlu0 %v3565
        %v3567 = vpop.xlane.xlu0 %3566
        %v3568 = vmax.f32 %v3468, %v3470
        %3569 = vmax.xlane.f32.xlu0 %v3568
        %v3570 = vpop.xlane.xlu0 %3569
        %v3571 = vmax.f32 %v3474, %v3476
        %3572 = vmax.xlane.f32.xlu0 %v3571
        %v3573 = vpop.xlane.xlu0 %3572
        %v3574 = vsub.f32 %v3288, %v3480
        %v3575 = vsub.f32 %v3290, %v3480
        %v3576 = vsub.f32 %v3294, %v3483
        %v3577 = vsub.f32 %v3296, %v3483
        %v3578 = vsub.f32 %v3300, %v3486
        %v3579 = vsub.f32 %v3302, %v3486
        %v3580 = vsub.f32 %v3306, %v3489
        %v3581 = vsub.f32 %v3308, %v3489
        %v3582 = vsub.f32 %v3312, %v3492
        %v3583 = vsub.f32 %v3314, %v3492
        %v3584 = vsub.f32 %v3318, %v3495
        %v3585 = vsub.f32 %v3320, %v3495
        %v3586 = vsub.f32 %v3324, %v3498
        %v3587 = vsub.f32 %v3326, %v3498
        %v3588 = vsub.f32 %v3330, %v3501
        %v3589 = vsub.f32 %v3332, %v3501
        %v3590 = vsub.f32 %v3336, %v3504
        %v3591 = vsub.f32 %v3338, %v3504
        %v3592 = vsub.f32 %v3342, %v3507
        %v3593 = vsub.f32 %v3344, %v3507
        %v3594 = vsub.f32 %v3348, %v3510
        %v3595 = vsub.f32 %v3350, %v3510
        %v3596 = vsub.f32 %v3354, %v3513
        %v3597 = vsub.f32 %v3356, %v3513
        %v3598 = vsub.f32 %v3360, %v3516
        %v3599 = vsub.f32 %v3362, %v3516
        %v3600 = vsub.f32 %v3366, %v3519
        %v3601 = vsub.f32 %v3368, %v3519
        %v3602 = vsub.f32 %v3372, %v3522
        %v3603 = vsub.f32 %v3374, %v3522
        %v3604 = vsub.f32 %v3378, %v3525
        %v3605 = vsub.f32 %v3380, %v3525
        %v3606 = vsub.f32 %v3384, %v3528
        %v3607 = vsub.f32 %v3386, %v3528
        %v3608 = vsub.f32 %v3390, %v3531
        %v3609 = vsub.f32 %v3392, %v3531
        %v3610 = vsub.f32 %v3396, %v3534
        %v3611 = vsub.f32 %v3398, %v3534
        %v3612 = vsub.f32 %v3402, %v3537
        %v3613 = vsub.f32 %v3404, %v3537
        %v3614 = vsub.f32 %v3408, %v3540
        %v3615 = vsub.f32 %v3410, %v3540
        %v3616 = vsub.f32 %v3414, %v3543
        %v3617 = vsub.f32 %v3416, %v3543
        %v3618 = vsub.f32 %v3420, %v3546
        %v3619 = vsub.f32 %v3422, %v3546
        %v3620 = vsub.f32 %v3426, %v3549
        %v3621 = vsub.f32 %v3428, %v3549
        %v3622 = vsub.f32 %v3432, %v3552
        %v3623 = vsub.f32 %v3434, %v3552
        %v3624 = vsub.f32 %v3438, %v3555
        %v3625 = vsub.f32 %v3440, %v3555
        %v3626 = vsub.f32 %v3444, %v3558
        %v3627 = vsub.f32 %v3446, %v3558
        %v3628 = vsub.f32 %v3450, %v3561
        %v3629 = vsub.f32 %v3452, %v3561
        %v3630 = vsub.f32 %v3456, %v3564
        %v3631 = vsub.f32 %v3458, %v3564
        %v3632 = vsub.f32 %v3462, %v3567
        %v3633 = vsub.f32 %v3464, %v3567
        %v3634 = vsub.f32 %v3468, %v3570
        %v3635 = vsub.f32 %v3470, %v3570
        %v3636 = vsub.f32 %v3474, %v3573
        %v3637 = vsub.f32 %v3476, %v3573
        %v3638 = vmul.f32 %v3574, 1.442695
        %v3639 = vpow.pop %v3638
        %v3640 = vmul.f32 %v3575, 1.442695
        %v3641 = vpow.pop %v3640
        %v3642 = vmul.f32 %v3576, 1.442695
        %v3643 = vpow.pop %v3642
        %v3644 = vmul.f32 %v3577, 1.442695
        %v3645 = vpow.pop %v3644
        %v3646 = vmul.f32 %v3578, 1.442695
        %v3647 = vpow.pop %v3646
        %v3648 = vmul.f32 %v3579, 1.442695
        %v3649 = vpow.pop %v3648
        %v3650 = vmul.f32 %v3580, 1.442695
        %v3651 = vpow.pop %v3650
        %v3652 = vmul.f32 %v3581, 1.442695
        %v3653 = vpow.pop %v3652
        %v3654 = vmul.f32 %v3582, 1.442695
        %v3655 = vpow.pop %v3654
        %v3656 = vmul.f32 %v3583, 1.442695
        %v3657 = vpow.pop %v3656
        %v3658 = vmul.f32 %v3584, 1.442695
        %v3659 = vpow.pop %v3658
        %v3660 = vmul.f32 %v3585, 1.442695
        %v3661 = vpow.pop %v3660
        %v3662 = vmul.f32 %v3586, 1.442695
        %v3663 = vpow.pop %v3662
        %v3664 = vmul.f32 %v3587, 1.442695
        %v3665 = vpow.pop %v3664
        %v3666 = vmul.f32 %v3588, 1.442695
        %v3667 = vpow.pop %v3666
        %v3668 = vmul.f32 %v3589, 1.442695
        %v3669 = vpow.pop %v3668
        %v3670 = vmul.f32 %v3590, 1.442695
        %v3671 = vpow.pop %v3670
        %v3672 = vmul.f32 %v3591, 1.442695
        %v3673 = vpow.pop %v3672
        %v3674 = vmul.f32 %v3592, 1.442695
        %v3675 = vpow.pop %v3674
        %v3676 = vmul.f32 %v3593, 1.442695
        %v3677 = vpow.pop %v3676
        %v3678 = vmul.f32 %v3594, 1.442695
        %v3679 = vpow.pop %v3678
        %v3680 = vmul.f32 %v3595, 1.442695
        %v3681 = vpow.pop %v3680
        %v3682 = vmul.f32 %v3596, 1.442695
        %v3683 = vpow.pop %v3682
        %v3684 = vmul.f32 %v3597, 1.442695
        %v3685 = vpow.pop %v3684
        %v3686 = vmul.f32 %v3598, 1.442695
        %v3687 = vpow.pop %v3686
        %v3688 = vmul.f32 %v3599, 1.442695
        %v3689 = vpow.pop %v3688
        %v3690 = vmul.f32 %v3600, 1.442695
        %v3691 = vpow.pop %v3690
        %v3692 = vmul.f32 %v3601, 1.442695
        %v3693 = vpow.pop %v3692
        %v3694 = vmul.f32 %v3602, 1.442695
        %v3695 = vpow.pop %v3694
        %v3696 = vmul.f32 %v3603, 1.442695
        %v3697 = vpow.pop %v3696
        %v3698 = vmul.f32 %v3604, 1.442695
        %v3699 = vpow.pop %v3698
        %v3700 = vmul.f32 %v3605, 1.442695
        %v3701 = vpow.pop %v3700
        %v3702 = vmul.f32 %v3606, 1.442695
        %v3703 = vpow.pop %v3702
        %v3704 = vmul.f32 %v3607, 1.442695
        %v3705 = vpow.pop %v3704
        %v3706 = vmul.f32 %v3608, 1.442695
        %v3707 = vpow.pop %v3706
        %v3708 = vmul.f32 %v3609, 1.442695
        %v3709 = vpow.pop %v3708
        %v3710 = vmul.f32 %v3610, 1.442695
        %v3711 = vpow.pop %v3710
        %v3712 = vmul.f32 %v3611, 1.442695
        %v3713 = vpow.pop %v3712
        %v3714 = vmul.f32 %v3612, 1.442695
        %v3715 = vpow.pop %v3714
        %v3716 = vmul.f32 %v3613, 1.442695
        %v3717 = vpow.pop %v3716
        %v3718 = vmul.f32 %v3614, 1.442695
        %v3719 = vpow.pop %v3718
        %v3720 = vmul.f32 %v3615, 1.442695
        %v3721 = vpow.pop %v3720
        %v3722 = vmul.f32 %v3616, 1.442695
        %v3723 = vpow.pop %v3722
        %v3724 = vmul.f32 %v3617, 1.442695
        %v3725 = vpow.pop %v3724
        %v3726 = vmul.f32 %v3618, 1.442695
        %v3727 = vpow.pop %v3726
        %v3728 = vmul.f32 %v3619, 1.442695
        %v3729 = vpow.pop %v3728
        %v3730 = vmul.f32 %v3620, 1.442695
        %v3731 = vpow.pop %v3730
        %v3732 = vmul.f32 %v3621, 1.442695
        %v3733 = vpow.pop %v3732
        %v3734 = vmul.f32 %v3622, 1.442695
        %v3735 = vpow.pop %v3734
        %v3736 = vmul.f32 %v3623, 1.442695
        %v3737 = vpow.pop %v3736
        %v3738 = vmul.f32 %v3624, 1.442695
        %v3739 = vpow.pop %v3738
        %v3740 = vmul.f32 %v3625, 1.442695
        %v3741 = vpow.pop %v3740
        %v3742 = vmul.f32 %v3626, 1.442695
        %v3743 = vpow.pop %v3742
        %v3744 = vmul.f32 %v3627, 1.442695
        %v3745 = vpow.pop %v3744
        %v3746 = vmul.f32 %v3628, 1.442695
        %v3747 = vpow.pop %v3746
        %v3748 = vmul.f32 %v3629, 1.442695
        %v3749 = vpow.pop %v3748
        %v3750 = vmul.f32 %v3630, 1.442695
        %v3751 = vpow.pop %v3750
        %v3752 = vmul.f32 %v3631, 1.442695
        %v3753 = vpow.pop %v3752
        %v3754 = vmul.f32 %v3632, 1.442695
        %v3755 = vpow.pop %v3754
        %v3756 = vmul.f32 %v3633, 1.442695
        %v3757 = vpow.pop %v3756
        %v3758 = vmul.f32 %v3634, 1.442695
        %v3759 = vpow.pop %v3758
        %v3760 = vmul.f32 %v3635, 1.442695
        %v3761 = vpow.pop %v3760
        %v3762 = vmul.f32 %v3636, 1.442695
        %v3763 = vpow.pop %v3762
        %v3764 = vmul.f32 %v3637, 1.442695
        %v3765 = vpow.pop %v3764
        %v3766 = vadd.f32 %v3639, %v3641
        %3767 = vadd.xlane.f32.xlu0 %v3766
        %v3768 = vpop.xlane.xlu0 %3767
        %v3769 = vadd.f32 %v3643, %v3645
        %3770 = vadd.xlane.f32.xlu0 %v3769
        %v3771 = vpop.xlane.xlu0 %3770
        %v3772 = vadd.f32 %v3647, %v3649
        %3773 = vadd.xlane.f32.xlu0 %v3772
        %v3774 = vpop.xlane.xlu0 %3773
        %v3775 = vadd.f32 %v3651, %v3653
        %3776 = vadd.xlane.f32.xlu0 %v3775
        %v3777 = vpop.xlane.xlu0 %3776
        %v3778 = vadd.f32 %v3655, %v3657
        %3779 = vadd.xlane.f32.xlu0 %v3778
        %v3780 = vpop.xlane.xlu0 %3779
        %v3781 = vadd.f32 %v3659, %v3661
        %3782 = vadd.xlane.f32.xlu0 %v3781
        %v3783 = vpop.xlane.xlu0 %3782
        %v3784 = vadd.f32 %v3663, %v3665
        %3785 = vadd.xlane.f32.xlu0 %v3784
        %v3786 = vpop.xlane.xlu0 %3785
        %v3787 = vadd.f32 %v3667, %v3669
        %3788 = vadd.xlane.f32.xlu0 %v3787
        %v3789 = vpop.xlane.xlu0 %3788
        %v3790 = vadd.f32 %v3671, %v3673
        %3791 = vadd.xlane.f32.xlu0 %v3790
        %v3792 = vpop.xlane.xlu0 %3791
        %v3793 = vadd.f32 %v3675, %v3677
        %3794 = vadd.xlane.f32.xlu0 %v3793
        %v3795 = vpop.xlane.xlu0 %3794
        %v3796 = vadd.f32 %v3679, %v3681
        %3797 = vadd.xlane.f32.xlu0 %v3796
        %v3798 = vpop.xlane.xlu0 %3797
        %v3799 = vadd.f32 %v3683, %v3685
        %3800 = vadd.xlane.f32.xlu0 %v3799
        %v3801 = vpop.xlane.xlu0 %3800
        %v3802 = vadd.f32 %v3687, %v3689
        %3803 = vadd.xlane.f32.xlu0 %v3802
        %v3804 = vpop.xlane.xlu0 %3803
        %v3805 = vadd.f32 %v3691, %v3693
        %3806 = vadd.xlane.f32.xlu0 %v3805
        %v3807 = vpop.xlane.xlu0 %3806
        %v3808 = vadd.f32 %v3695, %v3697
        %3809 = vadd.xlane.f32.xlu0 %v3808
        %v3810 = vpop.xlane.xlu0 %3809
        %v3811 = vadd.f32 %v3699, %v3701
        %3812 = vadd.xlane.f32.xlu0 %v3811
        %v3813 = vpop.xlane.xlu0 %3812
        %v3814 = vadd.f32 %v3703, %v3705
        %3815 = vadd.xlane.f32.xlu0 %v3814
        %v3816 = vpop.xlane.xlu0 %3815
        %v3817 = vadd.f32 %v3707, %v3709
        %3818 = vadd.xlane.f32.xlu0 %v3817
        %v3819 = vpop.xlane.xlu0 %3818
        %v3820 = vadd.f32 %v3711, %v3713
        %3821 = vadd.xlane.f32.xlu0 %v3820
        %v3822 = vpop.xlane.xlu0 %3821
        %v3823 = vadd.f32 %v3715, %v3717
        %3824 = vadd.xlane.f32.xlu0 %v3823
        %v3825 = vpop.xlane.xlu0 %3824
        %v3826 = vadd.f32 %v3719, %v3721
        %3827 = vadd.xlane.f32.xlu0 %v3826
        %v3828 = vpop.xlane.xlu0 %3827
        %v3829 = vadd.f32 %v3723, %v3725
        %3830 = vadd.xlane.f32.xlu0 %v3829
        %v3831 = vpop.xlane.xlu0 %3830
        %v3832 = vadd.f32 %v3727, %v3729
        %3833 = vadd.xlane.f32.xlu0 %v3832
        %v3834 = vpop.xlane.xlu0 %3833
        %v3835 = vadd.f32 %v3731, %v3733
        %3836 = vadd.xlane.f32.xlu0 %v3835
        %v3837 = vpop.xlane.xlu0 %3836
        %v3838 = vadd.f32 %v3735, %v3737
        %3839 = vadd.xlane.f32.xlu0 %v3838
        %v3840 = vpop.xlane.xlu0 %3839
        %v3841 = vadd.f32 %v3739, %v3741
        %3842 = vadd.xlane.f32.xlu0 %v3841
        %v3843 = vpop.xlane.xlu0 %3842
        %v3844 = vadd.f32 %v3743, %v3745
        %3845 = vadd.xlane.f32.xlu0 %v3844
        %v3846 = vpop.xlane.xlu0 %3845
        %v3847 = vadd.f32 %v3747, %v3749
        %3848 = vadd.xlane.f32.xlu0 %v3847
        %v3849 = vpop.xlane.xlu0 %3848
        %v3850 = vadd.f32 %v3751, %v3753
        %3851 = vadd.xlane.f32.xlu0 %v3850
        %v3852 = vpop.xlane.xlu0 %3851
        %v3853 = vadd.f32 %v3755, %v3757
        %3854 = vadd.xlane.f32.xlu0 %v3853
        %v3855 = vpop.xlane.xlu0 %3854
        %v3856 = vadd.f32 %v3759, %v3761
        %3857 = vadd.xlane.f32.xlu0 %v3856
        %v3858 = vpop.xlane.xlu0 %3857
        %v3859 = vadd.f32 %v3763, %v3765
        %3860 = vadd.xlane.f32.xlu0 %v3859
        %v3861 = vpop.xlane.xlu0 %3860
        %3862 = vrot.lane.b32.xlu0 %v1098, 48
        %v3863 = vpop.permute.xlu0 %3862
        %3864 = vrot.lane.b32.xlu0 %v1103, 48
        %v3865 = vpop.permute.xlu0 %3864
        %3866 = vrot.lane.b32.xlu0 %v1108, 48
        %v3867 = vpop.permute.xlu0 %3866
        %3868 = vrot.lane.b32.xlu0 %v1113, 48
        %v3869 = vpop.permute.xlu0 %3868
        %3870 = vrot.lane.b32.xlu0 %v1118, 48
        %v3871 = vpop.permute.xlu0 %3870
        %3872 = vrot.lane.b32.xlu0 %v1123, 48
        %v3873 = vpop.permute.xlu0 %3872
        %3874 = vrot.lane.b32.xlu0 %v1128, 48
        %v3875 = vpop.permute.xlu0 %3874
        %3876 = vrot.lane.b32.xlu0 %v1133, 48
        %v3877 = vpop.permute.xlu0 %3876
        %3878 = vrot.lane.b32.xlu0 %v1138, 48
        %v3879 = vpop.permute.xlu0 %3878
        %3880 = vrot.lane.b32.xlu0 %v1143, 48
        %v3881 = vpop.permute.xlu0 %3880
        %3882 = vrot.lane.b32.xlu0 %v1148, 48
        %v3883 = vpop.permute.xlu0 %3882
        %3884 = vrot.lane.b32.xlu0 %v1153, 48
        %v3885 = vpop.permute.xlu0 %3884
        %3886 = vrot.lane.b32.xlu0 %v1158, 48
        %v3887 = vpop.permute.xlu0 %3886
        %3888 = vrot.lane.b32.xlu0 %v1163, 48
        %v3889 = vpop.permute.xlu0 %3888
        %3890 = vrot.lane.b32.xlu0 %v1168, 48
        %v3891 = vpop.permute.xlu0 %3890
        %3892 = vrot.lane.b32.xlu0 %v1173, 48
        %v3893 = vpop.permute.xlu0 %3892
        %3894 = vrot.lane.b32.xlu0 %v1178, 48
        %v3895 = vpop.permute.xlu0 %3894
        %3896 = vrot.lane.b32.xlu0 %v1183, 48
        %v3897 = vpop.permute.xlu0 %3896
        %3898 = vrot.lane.b32.xlu0 %v1188, 48
        %v3899 = vpop.permute.xlu0 %3898
        %3900 = vrot.lane.b32.xlu0 %v1193, 48
        %v3901 = vpop.permute.xlu0 %3900
        %3902 = vrot.lane.b32.xlu0 %v1198, 48
        %v3903 = vpop.permute.xlu0 %3902
        %3904 = vrot.lane.b32.xlu0 %v1203, 48
        %v3905 = vpop.permute.xlu0 %3904
        %3906 = vrot.lane.b32.xlu0 %v1208, 48
        %v3907 = vpop.permute.xlu0 %3906
        %3908 = vrot.lane.b32.xlu0 %v1213, 48
        %v3909 = vpop.permute.xlu0 %3908
        %3910 = vrot.lane.b32.xlu0 %v1218, 48
        %v3911 = vpop.permute.xlu0 %3910
        %3912 = vrot.lane.b32.xlu0 %v1223, 48
        %v3913 = vpop.permute.xlu0 %3912
        %3914 = vrot.lane.b32.xlu0 %v1228, 48
        %v3915 = vpop.permute.xlu0 %3914
        %3916 = vrot.lane.b32.xlu0 %v1233, 48
        %v3917 = vpop.permute.xlu0 %3916
        %3918 = vrot.lane.b32.xlu0 %v1238, 48
        %v3919 = vpop.permute.xlu0 %3918
        %3920 = vrot.lane.b32.xlu0 %v1243, 48
        %v3921 = vpop.permute.xlu0 %3920
        %3922 = vrot.lane.b32.xlu0 %v1248, 48
        %v3923 = vpop.permute.xlu0 %3922
        %3924 = vrot.lane.b32.xlu0 %v1253, 48
        %v3925 = vpop.permute.xlu0 %3924
        %3958 = vmatprep.subr.mxu0 0.0
        %3959 = vmatpush1.msra.mxu0 %v3863
        %3960 = vmatprep.subr.mxu0 0.0
        %3961 = vmatpush1.msra.mxu0 %v3865
        %3962 = vmatprep.subr.mxu0 0.0
        %3963 = vmatpush1.msra.mxu0 %v3867
        %3964 = vmatprep.subr.mxu0 0.0
        %3965 = vmatpush1.msra.mxu0 %v3869
        %3966 = vmatprep.subr.mxu0 0.0
        %3967 = vmatpush1.msra.mxu0 %v3871
        %3968 = vmatprep.subr.mxu0 0.0
        %3969 = vmatpush1.msra.mxu0 %v3873
        %3970 = vmatprep.subr.mxu0 0.0
        %3971 = vmatpush1.msra.mxu0 %v3875
        %3972 = vmatprep.subr.mxu0 0.0
        %3973 = vmatpush1.msra.mxu0 %v3877
        %3974 = vmatprep.subr.mxu0 0.0
        %3975 = vmatpush1.msra.mxu0 %v3879
        %3976 = vmatprep.subr.mxu0 0.0
        %3977 = vmatpush1.msra.mxu0 %v3881
        %3978 = vmatprep.subr.mxu0 0.0
        %3979 = vmatpush1.msra.mxu0 %v3883
        %3980 = vmatprep.subr.mxu0 0.0
        %3981 = vmatpush1.msra.mxu0 %v3885
        %3982 = vmatprep.subr.mxu0 0.0
        %3983 = vmatpush1.msra.mxu0 %v3887
        %3984 = vmatprep.subr.mxu0 0.0
        %3985 = vmatpush1.msra.mxu0 %v3889
        %3986 = vmatprep.subr.mxu0 0.0
        %3987 = vmatpush1.msra.mxu0 %v3891
        %3988 = vmatprep.subr.mxu0 0.0
        %3989 = vmatpush1.msra.mxu0 %v3893
        %3990 = vmatprep.subr.mxu0 0.0
        %3991 = vmatpush1.msra.mxu0 %v3895
        %3992 = vmatprep.subr.mxu0 0.0
        %3993 = vmatpush1.msra.mxu0 %v3897
        %3994 = vmatprep.subr.mxu0 0.0
        %3995 = vmatpush1.msra.mxu0 %v3899
        %3996 = vmatprep.subr.mxu0 0.0
        %3997 = vmatpush1.msra.mxu0 %v3901
        %3998 = vmatprep.subr.mxu0 0.0
        %3999 = vmatpush1.msra.mxu0 %v3903
        %4000 = vmatprep.subr.mxu0 0.0
        %4001 = vmatpush1.msra.mxu0 %v3905
        %4002 = vmatprep.subr.mxu0 0.0
        %4003 = vmatpush1.msra.mxu0 %v3907
        %4004 = vmatprep.subr.mxu0 0.0
        %4005 = vmatpush1.msra.mxu0 %v3909
        %4006 = vmatprep.subr.mxu0 0.0
        %4007 = vmatpush1.msra.mxu0 %v3911
        %4008 = vmatprep.subr.mxu0 0.0
        %4009 = vmatpush1.msra.mxu0 %v3913
        %4010 = vmatprep.subr.mxu0 0.0
        %4011 = vmatpush1.msra.mxu0 %v3915
        %4012 = vmatprep.subr.mxu0 0.0
        %4013 = vmatpush1.msra.mxu0 %v3917
        %4014 = vmatprep.subr.mxu0 0.0
        %4015 = vmatpush1.msra.mxu0 %v3919
        %4016 = vmatprep.subr.mxu0 0.0
        %4017 = vmatpush1.msra.mxu0 %v3921
        %4018 = vmatprep.subr.mxu0 0.0
        %4019 = vmatpush1.msra.mxu0 %v3923
        %4020 = vmatprep.subr.mxu0 0.0
        %4021 = vmatpush1.msra.mxu0 %v3925
        %4022 = vmatprep.mubr.f32.mxu0 %v3641
        %4023 = vmatmul.mubr.f32.gmra.mrb[0].mxu0 %v3639
        %v4024 = vpop.f32.mrb[0].mxu0
        %v4025 = vadd.f32 0.0, %v4024
        %v4026 = vpop.f32.mrb[0].mxu0
        %4027 = vmatprep.mubr.f32.mxu0 %v3645
        %4028 = vmatmul.mubr.f32.gmra.mrb[0].mxu0 %v3643
        %v4029 = vpop.f32.mrb[0].mxu0
        %v4030 = vadd.f32 0.0, %v4029
        %v4031 = vpop.f32.mrb[0].mxu0
        %4032 = vmatprep.mubr.f32.mxu0 %v3649
        %4033 = vmatmul.mubr.f32.gmra.mrb[0].mxu0 %v3647
        %v4034 = vpop.f32.mrb[0].mxu0
        %v4035 = vadd.f32 0.0, %v4034
        %v4036 = vpop.f32.mrb[0].mxu0
        %4037 = vmatprep.mubr.f32.mxu0 %v3653
        %4038 = vmatmul.mubr.f32.gmra.mrb[0].mxu0 %v3651
        %v4039 = vpop.f32.mrb[0].mxu0
        %v4040 = vadd.f32 0.0, %v4039
        %v4041 = vpop.f32.mrb[0].mxu0
        %4042 = vmatprep.mubr.f32.mxu0 %v3657
        %4043 = vmatmul.mubr.f32.gmra.mrb[0].mxu0 %v3655
        %v4044 = vpop.f32.mrb[0].mxu0
        %v4045 = vadd.f32 0.0, %v4044
        %v4046 = vpop.f32.mrb[0].mxu0
        %4047 = vmatprep.mubr.f32.mxu0 %v3661
        %4048 = vmatmul.mubr.f32.gmra.mrb[0].mxu0 %v3659
        %v4049 = vpop.f32.mrb[0].mxu0
        %v4050 = vadd.f32 0.0, %v4049
        %v4051 = vpop.f32.mrb[0].mxu0
        %4052 = vmatprep.mubr.f32.mxu0 %v3665
        %4053 = vmatmul.mubr.f32.gmra.mrb[0].mxu0 %v3663
        %v4054 = vpop.f32.mrb[0].mxu0
        %v4055 = vadd.f32 0.0, %v4054
        %v4056 = vpop.f32.mrb[0].mxu0
        %4057 = vmatprep.mubr.f32.mxu0 %v3669
        %4058 = vmatmul.mubr.f32.gmra.mrb[0].mxu0 %v3667
        %v4059 = vpop.f32.mrb[0].mxu0
        %v4060 = vadd.f32 0.0, %v4059
        %v4061 = vpop.f32.mrb[0].mxu0
        %4062 = vmatprep.mubr.f32.mxu0 %v3673
        %4063 = vmatmul.mubr.f32.gmra.mrb[0].mxu0 %v3671
        %v4064 = vpop.f32.mrb[0].mxu0
        %v4065 = vadd.f32 0.0, %v4064
        %v4066 = vpop.f32.mrb[0].mxu0
        %4067 = vmatprep.mubr.f32.mxu0 %v3677
        %4068 = vmatmul.mubr.f32.gmra.mrb[0].mxu0 %v3675
        %v4069 = vpop.f32.mrb[0].mxu0
        %v4070 = vadd.f32 0.0, %v4069
        %v4071 = vpop.f32.mrb[0].mxu0
        %4072 = vmatprep.mubr.f32.mxu0 %v3681
        %4073 = vmatmul.mubr.f32.gmra.mrb[0].mxu0 %v3679
        %v4074 = vpop.f32.mrb[0].mxu0
        %v4075 = vadd.f32 0.0, %v4074
        %v4076 = vpop.f32.mrb[0].mxu0
        %4077 = vmatprep.mubr.f32.mxu0 %v3685
        %4078 = vmatmul.mubr.f32.gmra.mrb[0].mxu0 %v3683
        %v4079 = vpop.f32.mrb[0].mxu0
        %v4080 = vadd.f32 0.0, %v4079
        %v4081 = vpop.f32.mrb[0].mxu0
        %4082 = vmatprep.mubr.f32.mxu0 %v3689
        %4083 = vmatmul.mubr.f32.gmra.mrb[0].mxu0 %v3687
        %v4084 = vpop.f32.mrb[0].mxu0
        %v4085 = vadd.f32 0.0, %v4084
        %v4086 = vpop.f32.mrb[0].mxu0
        %4087 = vmatprep.mubr.f32.mxu0 %v3693
        %4088 = vmatmul.mubr.f32.gmra.mrb[0].mxu0 %v3691
        %v4089 = vpop.f32.mrb[0].mxu0
        %v4090 = vadd.f32 0.0, %v4089
        %v4091 = vpop.f32.mrb[0].mxu0
        %4092 = vmatprep.mubr.f32.mxu0 %v3697
        %4093 = vmatmul.mubr.f32.gmra.mrb[0].mxu0 %v3695
        %v4094 = vpop.f32.mrb[0].mxu0
        %v4095 = vadd.f32 0.0, %v4094
        %v4096 = vpop.f32.mrb[0].mxu0
        %4097 = vmatprep.mubr.f32.mxu0 %v3701
        %4098 = vmatmul.mubr.f32.gmra.mrb[0].mxu0 %v3699
        %v4099 = vpop.f32.mrb[0].mxu0
        %v4100 = vadd.f32 0.0, %v4099
        %v4101 = vpop.f32.mrb[0].mxu0
        %4102 = vmatprep.mubr.f32.mxu0 %v3705
        %4103 = vmatmul.mubr.f32.gmra.mrb[0].mxu0 %v3703
        %v4104 = vpop.f32.mrb[0].mxu0
        %v4105 = vadd.f32 0.0, %v4104
        %v4106 = vpop.f32.mrb[0].mxu0
        %4107 = vmatprep.mubr.f32.mxu0 %v3709
        %4108 = vmatmul.mubr.f32.gmra.mrb[0].mxu0 %v3707
        %v4109 = vpop.f32.mrb[0].mxu0
        %v4110 = vadd.f32 0.0, %v4109
        %v4111 = vpop.f32.mrb[0].mxu0
        %4112 = vmatprep.mubr.f32.mxu0 %v3713
        %4113 = vmatmul.mubr.f32.gmra.mrb[0].mxu0 %v3711
        %v4114 = vpop.f32.mrb[0].mxu0
        %v4115 = vadd.f32 0.0, %v4114
        %v4116 = vpop.f32.mrb[0].mxu0
        %4117 = vmatprep.mubr.f32.mxu0 %v3717
        %4118 = vmatmul.mubr.f32.gmra.mrb[0].mxu0 %v3715
        %v4119 = vpop.f32.mrb[0].mxu0
        %v4120 = vadd.f32 0.0, %v4119
        %v4121 = vpop.f32.mrb[0].mxu0
        %4122 = vmatprep.mubr.f32.mxu0 %v3721
        %4123 = vmatmul.mubr.f32.gmra.mrb[0].mxu0 %v3719
        %v4124 = vpop.f32.mrb[0].mxu0
        %v4125 = vadd.f32 0.0, %v4124
        %v4126 = vpop.f32.mrb[0].mxu0
        %4127 = vmatprep.mubr.f32.mxu0 %v3725
        %4128 = vmatmul.mubr.f32.gmra.mrb[0].mxu0 %v3723
        %v4129 = vpop.f32.mrb[0].mxu0
        %v4130 = vadd.f32 0.0, %v4129
        %v4131 = vpop.f32.mrb[0].mxu0
        %4132 = vmatprep.mubr.f32.mxu0 %v3729
        %4133 = vmatmul.mubr.f32.gmra.mrb[0].mxu0 %v3727
        %v4134 = vpop.f32.mrb[0].mxu0
        %v4135 = vadd.f32 0.0, %v4134
        %v4136 = vpop.f32.mrb[0].mxu0
        %4137 = vmatprep.mubr.f32.mxu0 %v3733
        %4138 = vmatmul.mubr.f32.gmra.mrb[0].mxu0 %v3731
        %v4139 = vpop.f32.mrb[0].mxu0
        %v4140 = vadd.f32 0.0, %v4139
        %v4141 = vpop.f32.mrb[0].mxu0
        %4142 = vmatprep.mubr.f32.mxu0 %v3737
        %4143 = vmatmul.mubr.f32.gmra.mrb[0].mxu0 %v3735
        %v4144 = vpop.f32.mrb[0].mxu0
        %v4145 = vadd.f32 0.0, %v4144
        %v4146 = vpop.f32.mrb[0].mxu0
        %4147 = vmatprep.mubr.f32.mxu0 %v3741
        %4148 = vmatmul.mubr.f32.gmra.mrb[0].mxu0 %v3739
        %v4149 = vpop.f32.mrb[0].mxu0
        %v4150 = vadd.f32 0.0, %v4149
        %v4151 = vpop.f32.mrb[0].mxu0
        %4152 = vmatprep.mubr.f32.mxu0 %v3745
        %4153 = vmatmul.mubr.f32.gmra.mrb[0].mxu0 %v3743
        %v4154 = vpop.f32.mrb[0].mxu0
        %v4155 = vadd.f32 0.0, %v4154
        %v4156 = vpop.f32.mrb[0].mxu0
        %4157 = vmatprep.mubr.f32.mxu0 %v3749
        %4158 = vmatmul.mubr.f32.gmra.mrb[0].mxu0 %v3747
        %v4159 = vpop.f32.mrb[0].mxu0
        %v4160 = vadd.f32 0.0, %v4159
        %v4161 = vpop.f32.mrb[0].mxu0
        %4162 = vmatprep.mubr.f32.mxu0 %v3753
        %4163 = vmatmul.mubr.f32.gmra.mrb[0].mxu0 %v3751
        %v4164 = vpop.f32.mrb[0].mxu0
        %v4165 = vadd.f32 0.0, %v4164
        %v4166 = vpop.f32.mrb[0].mxu0
        %4167 = vmatprep.mubr.f32.mxu0 %v3757
        %4168 = vmatmul.mubr.f32.gmra.mrb[0].mxu0 %v3755
        %v4169 = vpop.f32.mrb[0].mxu0
        %v4170 = vadd.f32 0.0, %v4169
        %v4171 = vpop.f32.mrb[0].mxu0
        %4172 = vmatprep.mubr.f32.mxu0 %v3761
        %4173 = vmatmul.mubr.f32.gmra.mrb[0].mxu0 %v3759
        %v4174 = vpop.f32.mrb[0].mxu0
        %v4175 = vadd.f32 0.0, %v4174
        %v4176 = vpop.f32.mrb[0].mxu0
        %4177 = vmatprep.mubr.f32.mxu0 %v3765
        %4178 = vmatmul.mubr.f32.gmra.mrb[0].mxu0 %v3763
        %v4179 = vpop.f32.mrb[0].mxu0
        %v4180 = vadd.f32 0.0, %v4179
        %v4181 = vpop.f32.mrb[0].mxu0
        %4182 = vdwg.mxu0
        %v4183 = vrcp.pop %v3768
        %v4184 = vrcp.pop %v3771
        %v4185 = vrcp.pop %v3774
        %v4186 = vrcp.pop %v3777
        %v4187 = vrcp.pop %v3780
        %v4188 = vrcp.pop %v3783
        %v4189 = vrcp.pop %v3786
        %v4190 = vrcp.pop %v3789
        %v4191 = vrcp.pop %v3792
        %v4192 = vrcp.pop %v3795
        %v4193 = vrcp.pop %v3798
        %v4194 = vrcp.pop %v3801
        %v4195 = vrcp.pop %v3804
        %v4196 = vrcp.pop %v3807
        %v4197 = vrcp.pop %v3810
        %v4198 = vrcp.pop %v3813
        %v4199 = vrcp.pop %v3816
        %v4200 = vrcp.pop %v3819
        %v4201 = vrcp.pop %v3822
        %v4202 = vrcp.pop %v3825
        %v4203 = vrcp.pop %v3828
        %v4204 = vrcp.pop %v3831
        %v4205 = vrcp.pop %v3834
        %v4206 = vrcp.pop %v3837
        %v4207 = vrcp.pop %v3840
        %v4208 = vrcp.pop %v3843
        %v4209 = vrcp.pop %v3846
        %v4210 = vrcp.pop %v3849
        %v4211 = vrcp.pop %v3852
        %v4212 = vrcp.pop %v3855
        %v4213 = vrcp.pop %v3858
        %v4214 = vrcp.pop %v3861
        %v4215 = vmul.f32 %v4025, %v4183
        %v4216 = vmul.f32 %v4030, %v4184
        %v4217 = vmul.f32 %v4035, %v4185
        %v4218 = vmul.f32 %v4040, %v4186
        %v4219 = vmul.f32 %v4045, %v4187
        %v4220 = vmul.f32 %v4050, %v4188
        %v4221 = vmul.f32 %v4055, %v4189
        %v4222 = vmul.f32 %v4060, %v4190
        %v4223 = vmul.f32 %v4065, %v4191
        %v4224 = vmul.f32 %v4070, %v4192
        %v4225 = vmul.f32 %v4075, %v4193
        %v4226 = vmul.f32 %v4080, %v4194
        %v4227 = vmul.f32 %v4085, %v4195
        %v4228 = vmul.f32 %v4090, %v4196
        %v4229 = vmul.f32 %v4095, %v4197
        %v4230 = vmul.f32 %v4100, %v4198
        %v4231 = vmul.f32 %v4105, %v4199
        %v4232 = vmul.f32 %v4110, %v4200
        %v4233 = vmul.f32 %v4115, %v4201
        %v4234 = vmul.f32 %v4120, %v4202
        %v4235 = vmul.f32 %v4125, %v4203
        %v4236 = vmul.f32 %v4130, %v4204
        %v4237 = vmul.f32 %v4135, %v4205
        %v4238 = vmul.f32 %v4140, %v4206
        %v4239 = vmul.f32 %v4145, %v4207
        %v4240 = vmul.f32 %v4150, %v4208
        %v4241 = vmul.f32 %v4155, %v4209
        %v4242 = vmul.f32 %v4160, %v4210
        %v4243 = vmul.f32 %v4165, %v4211
        %v4244 = vmul.f32 %v4170, %v4212
        %v4245 = vmul.f32 %v4175, %v4213
        %v4246 = vmul.f32 %v4180, %v4214
        %v4247 = vld [vmem:[%s4 + $0x10] sm:$0xff]
        %v4248 = vld [vmem:[%s4 + $0x18] sm:$0xff]
        %v4250 = vsel %vm1455, %v4215, 0
        %v4253 = vsel %vm1455, %v4216, 0
        %v4256 = vsel %vm1455, %v4217, 0
        %v4259 = vsel %vm1455, %v4218, 0
        %v4262 = vsel %vm1455, %v4219, 0
        %v4265 = vsel %vm1455, %v4220, 0
        %v4268 = vsel %vm1455, %v4221, 0
        %v4271 = vsel %vm1455, %v4222, 0
        %v4274 = vsel %vm1455, %v4223, 0
        %v4277 = vsel %vm1455, %v4224, 0
        %v4280 = vsel %vm1455, %v4225, 0
        %v4283 = vsel %vm1455, %v4226, 0
        %v4286 = vsel %vm1455, %v4227, 0
        %v4289 = vsel %vm1455, %v4228, 0
        %v4292 = vsel %vm1455, %v4229, 0
        %v4295 = vsel %vm1455, %v4230, 0
        %v4298 = vsel %vm1455, %v4231, 0
        %v4301 = vsel %vm1455, %v4232, 0
        %v4304 = vsel %vm1455, %v4233, 0
        %v4307 = vsel %vm1455, %v4234, 0
        %v4310 = vsel %vm1455, %v4235, 0
        %v4313 = vsel %vm1455, %v4236, 0
        %v4316 = vsel %vm1455, %v4237, 0
        %v4319 = vsel %vm1455, %v4238, 0
        %v4322 = vsel %vm1455, %v4239, 0
        %v4325 = vsel %vm1455, %v4240, 0
        %v4328 = vsel %vm1455, %v4241, 0
        %v4331 = vsel %vm1455, %v4242, 0
        %v4334 = vsel %vm1455, %v4243, 0
        %v4337 = vsel %vm1455, %v4244, 0
        %v4340 = vsel %vm1455, %v4245, 0
        %v4343 = vsel %vm1455, %v4246, 0
        %4345 = vmatprep.subr.mxu0 0.0
        %4346 = vmatpush1.msra.mxu0 %v4247
        %4347 = vmatprep.subr.mxu0 0.0
        %4348 = vmatpush1.msra.mxu0 %v4248
        %4349 = vmatprep.subr.mxu0 0.0
        %4350 = vmatpush1.msra.mxu0 0.0
        %4351 = vmatprep.subr.mxu0 0.0
        %4352 = vmatpush1.msra.mxu0 0.0
        %4353 = vmatprep.subr.mxu0 0.0
        %4354 = vmatpush1.msra.mxu0 0.0
        %4355 = vmatprep.subr.mxu0 0.0
        %4356 = vmatpush1.msra.mxu0 0.0
        %4357 = vmatprep.subr.mxu0 0.0
        %4358 = vmatpush1.msra.mxu0 0.0
        %4359 = vmatprep.subr.mxu0 0.0
        %4360 = vmatpush1.msra.mxu0 0.0
        %4361 = vmatprep.subr.mxu0 0.0
        %4362 = vmatpush1.msra.mxu0 0.0
        %4363 = vmatprep.subr.mxu0 0.0
        %4364 = vmatpush1.msra.mxu0 0.0
        %4365 = vmatprep.subr.mxu0 0.0
        %4366 = vmatpush1.msra.mxu0 0.0
        %4367 = vmatprep.subr.mxu0 0.0
        %4368 = vmatpush1.msra.mxu0 0.0
        %4369 = vmatprep.subr.mxu0 0.0
        %4370 = vmatpush1.msra.mxu0 0.0
        %4371 = vmatprep.subr.mxu0 0.0
        %4372 = vmatpush1.msra.mxu0 0.0
        %4373 = vmatprep.subr.mxu0 0.0
        %4374 = vmatpush1.msra.mxu0 0.0
        %4375 = vmatprep.subr.mxu0 0.0
        %4376 = vmatpush1.msra.mxu0 0.0
        %4377 = vmatprep.subr.mxu0 0.0
        %4378 = vmatpush1.msra.mxu0 0.0
        %4379 = vmatprep.subr.mxu0 0.0
        %4380 = vmatpush1.msra.mxu0 0.0
        %4381 = vmatprep.subr.mxu0 0.0
        %4382 = vmatpush1.msra.mxu0 0.0
        %4383 = vmatprep.subr.mxu0 0.0
        %4384 = vmatpush1.msra.mxu0 0.0
        %4385 = vmatprep.subr.mxu0 0.0
        %4386 = vmatpush1.msra.mxu0 0.0
        %4387 = vmatprep.subr.mxu0 0.0
        %4388 = vmatpush1.msra.mxu0 0.0
        %4389 = vmatprep.subr.mxu0 0.0
        %4390 = vmatpush1.msra.mxu0 0.0
        %4391 = vmatprep.subr.mxu0 0.0
        %4392 = vmatpush1.msra.mxu0 0.0
        %4393 = vmatprep.subr.mxu0 0.0
        %4394 = vmatpush1.msra.mxu0 0.0
        %4395 = vmatprep.subr.mxu0 0.0
        %4396 = vmatpush1.msra.mxu0 0.0
        %4397 = vmatprep.subr.mxu0 0.0
        %4398 = vmatpush1.msra.mxu0 0.0
        %4399 = vmatprep.subr.mxu0 0.0
        %4400 = vmatpush1.msra.mxu0 0.0
        %4401 = vmatprep.subr.mxu0 0.0
        %4402 = vmatpush1.msra.mxu0 0.0
        %4403 = vmatprep.subr.mxu0 0.0
        %4404 = vmatpush1.msra.mxu0 0.0
        %4405 = vmatprep.subr.mxu0 0.0
        %4406 = vmatpush1.msra.mxu0 0.0
        %4407 = vmatprep.subr.mxu0 0.0
        %4408 = vmatpush1.msra.mxu0 0.0
        %4409 = vmatprep.mubr.f32.mxu0 0.0
        %4410 = vmatmul.mubr.f32.gmra.mrb[0].mxu0 %v4250
        %v4411 = vpop.f32.mrb[0].mxu0
        %v4412 = vadd.f32 0.0, %v4411
        %v4413 = vpop.f32.mrb[0].mxu0
        %4414 = vmatprep.mubr.f32.mxu0 0.0
        %4415 = vmatmul.mubr.f32.gmra.mrb[0].mxu0 %v4253
        %v4416 = vpop.f32.mrb[0].mxu0
        %v4417 = vadd.f32 0.0, %v4416
        %v4418 = vpop.f32.mrb[0].mxu0
        %4419 = vmatprep.mubr.f32.mxu0 0.0
        %4420 = vmatmul.mubr.f32.gmra.mrb[0].mxu0 %v4256
        %v4421 = vpop.f32.mrb[0].mxu0
        %v4422 = vadd.f32 0.0, %v4421
        %v4423 = vpop.f32.mrb[0].mxu0
        %4424 = vmatprep.mubr.f32.mxu0 0.0
        %4425 = vmatmul.mubr.f32.gmra.mrb[0].mxu0 %v4259
        %v4426 = vpop.f32.mrb[0].mxu0
        %v4427 = vadd.f32 0.0, %v4426
        %v4428 = vpop.f32.mrb[0].mxu0
        %4429 = vmatprep.mubr.f32.mxu0 0.0
        %4430 = vmatmul.mubr.f32.gmra.mrb[0].mxu0 %v4262
        %v4431 = vpop.f32.mrb[0].mxu0
        %v4432 = vadd.f32 0.0, %v4431
        %v4433 = vpop.f32.mrb[0].mxu0
        %4434 = vmatprep.mubr.f32.mxu0 0.0
        %4435 = vmatmul.mubr.f32.gmra.mrb[0].mxu0 %v4265
        %v4436 = vpop.f32.mrb[0].mxu0
        %v4437 = vadd.f32 0.0, %v4436
        %v4438 = vpop.f32.mrb[0].mxu0
        %4439 = vmatprep.mubr.f32.mxu0 0.0
        %4440 = vmatmul.mubr.f32.gmra.mrb[0].mxu0 %v4268
        %v4441 = vpop.f32.mrb[0].mxu0
        %v4442 = vadd.f32 0.0, %v4441
        %v4443 = vpop.f32.mrb[0].mxu0
        %4444 = vmatprep.mubr.f32.mxu0 0.0
        %4445 = vmatmul.mubr.f32.gmra.mrb[0].mxu0 %v4271
        %v4446 = vpop.f32.mrb[0].mxu0
        %v4447 = vadd.f32 0.0, %v4446
        %v4448 = vpop.f32.mrb[0].mxu0
        %4449 = vmatprep.mubr.f32.mxu0 0.0
        %4450 = vmatmul.mubr.f32.gmra.mrb[0].mxu0 %v4274
        %v4451 = vpop.f32.mrb[0].mxu0
        %v4452 = vadd.f32 0.0, %v4451
        %v4453 = vpop.f32.mrb[0].mxu0
        %4454 = vmatprep.mubr.f32.mxu0 0.0
        %4455 = vmatmul.mubr.f32.gmra.mrb[0].mxu0 %v4277
        %v4456 = vpop.f32.mrb[0].mxu0
        %v4457 = vadd.f32 0.0, %v4456
        %v4458 = vpop.f32.mrb[0].mxu0
        %4459 = vmatprep.mubr.f32.mxu0 0.0
        %4460 = vmatmul.mubr.f32.gmra.mrb[0].mxu0 %v4280
        %v4461 = vpop.f32.mrb[0].mxu0
        %v4462 = vadd.f32 0.0, %v4461
        %v4463 = vpop.f32.mrb[0].mxu0
        %4464 = vmatprep.mubr.f32.mxu0 0.0
        %4465 = vmatmul.mubr.f32.gmra.mrb[0].mxu0 %v4283
        %v4466 = vpop.f32.mrb[0].mxu0
        %v4467 = vadd.f32 0.0, %v4466
        %v4468 = vpop.f32.mrb[0].mxu0
        %4469 = vmatprep.mubr.f32.mxu0 0.0
        %4470 = vmatmul.mubr.f32.gmra.mrb[0].mxu0 %v4286
        %v4471 = vpop.f32.mrb[0].mxu0
        %v4472 = vadd.f32 0.0, %v4471
        %v4473 = vpop.f32.mrb[0].mxu0
        %4474 = vmatprep.mubr.f32.mxu0 0.0
        %4475 = vmatmul.mubr.f32.gmra.mrb[0].mxu0 %v4289
        %v4476 = vpop.f32.mrb[0].mxu0
        %v4477 = vadd.f32 0.0, %v4476
        %v4478 = vpop.f32.mrb[0].mxu0
        %4479 = vmatprep.mubr.f32.mxu0 0.0
        %4480 = vmatmul.mubr.f32.gmra.mrb[0].mxu0 %v4292
        %v4481 = vpop.f32.mrb[0].mxu0
        %v4482 = vadd.f32 0.0, %v4481
        %v4483 = vpop.f32.mrb[0].mxu0
        %4484 = vmatprep.mubr.f32.mxu0 0.0
        %4485 = vmatmul.mubr.f32.gmra.mrb[0].mxu0 %v4295
        %v4486 = vpop.f32.mrb[0].mxu0
        %v4487 = vadd.f32 0.0, %v4486
        %v4488 = vpop.f32.mrb[0].mxu0
        %4489 = vmatprep.mubr.f32.mxu0 0.0
        %4490 = vmatmul.mubr.f32.gmra.mrb[0].mxu0 %v4298
        %v4491 = vpop.f32.mrb[0].mxu0
        %v4492 = vadd.f32 0.0, %v4491
        %v4493 = vpop.f32.mrb[0].mxu0
        %4494 = vmatprep.mubr.f32.mxu0 0.0
        %4495 = vmatmul.mubr.f32.gmra.mrb[0].mxu0 %v4301
        %v4496 = vpop.f32.mrb[0].mxu0
        %v4497 = vadd.f32 0.0, %v4496
        %v4498 = vpop.f32.mrb[0].mxu0
        %4499 = vmatprep.mubr.f32.mxu0 0.0
        %4500 = vmatmul.mubr.f32.gmra.mrb[0].mxu0 %v4304
        %v4501 = vpop.f32.mrb[0].mxu0
        %v4502 = vadd.f32 0.0, %v4501
        %v4503 = vpop.f32.mrb[0].mxu0
        %4504 = vmatprep.mubr.f32.mxu0 0.0
        %4505 = vmatmul.mubr.f32.gmra.mrb[0].mxu0 %v4307
        %v4506 = vpop.f32.mrb[0].mxu0
        %v4507 = vadd.f32 0.0, %v4506
        %v4508 = vpop.f32.mrb[0].mxu0
        %4509 = vmatprep.mubr.f32.mxu0 0.0
        %4510 = vmatmul.mubr.f32.gmra.mrb[0].mxu0 %v4310
        %v4511 = vpop.f32.mrb[0].mxu0
        %v4512 = vadd.f32 0.0, %v4511
        %v4513 = vpop.f32.mrb[0].mxu0
        %4514 = vmatprep.mubr.f32.mxu0 0.0
        %4515 = vmatmul.mubr.f32.gmra.mrb[0].mxu0 %v4313
        %v4516 = vpop.f32.mrb[0].mxu0
        %v4517 = vadd.f32 0.0, %v4516
        %v4518 = vpop.f32.mrb[0].mxu0
        %4519 = vmatprep.mubr.f32.mxu0 0.0
        %4520 = vmatmul.mubr.f32.gmra.mrb[0].mxu0 %v4316
        %v4521 = vpop.f32.mrb[0].mxu0
        %v4522 = vadd.f32 0.0, %v4521
        %v4523 = vpop.f32.mrb[0].mxu0
        %4524 = vmatprep.mubr.f32.mxu0 0.0
        %4525 = vmatmul.mubr.f32.gmra.mrb[0].mxu0 %v4319
        %v4526 = vpop.f32.mrb[0].mxu0
        %v4527 = vadd.f32 0.0, %v4526
        %v4528 = vpop.f32.mrb[0].mxu0
        %4529 = vmatprep.mubr.f32.mxu0 0.0
        %4530 = vmatmul.mubr.f32.gmra.mrb[0].mxu0 %v4322
        %v4531 = vpop.f32.mrb[0].mxu0
        %v4532 = vadd.f32 0.0, %v4531
        %v4533 = vpop.f32.mrb[0].mxu0
        %4534 = vmatprep.mubr.f32.mxu0 0.0
        %4535 = vmatmul.mubr.f32.gmra.mrb[0].mxu0 %v4325
        %v4536 = vpop.f32.mrb[0].mxu0
        %v4537 = vadd.f32 0.0, %v4536
        %v4538 = vpop.f32.mrb[0].mxu0
        %4539 = vmatprep.mubr.f32.mxu0 0.0
        %4540 = vmatmul.mubr.f32.gmra.mrb[0].mxu0 %v4328
        %v4541 = vpop.f32.mrb[0].mxu0
        %v4542 = vadd.f32 0.0, %v4541
        %v4543 = vpop.f32.mrb[0].mxu0
        %4544 = vmatprep.mubr.f32.mxu0 0.0
        %4545 = vmatmul.mubr.f32.gmra.mrb[0].mxu0 %v4331
        %v4546 = vpop.f32.mrb[0].mxu0
        %v4547 = vadd.f32 0.0, %v4546
        %v4548 = vpop.f32.mrb[0].mxu0
        %4549 = vmatprep.mubr.f32.mxu0 0.0
        %4550 = vmatmul.mubr.f32.gmra.mrb[0].mxu0 %v4334
        %v4551 = vpop.f32.mrb[0].mxu0
        %v4552 = vadd.f32 0.0, %v4551
        %v4553 = vpop.f32.mrb[0].mxu0
        %4554 = vmatprep.mubr.f32.mxu0 0.0
        %4555 = vmatmul.mubr.f32.gmra.mrb[0].mxu0 %v4337
        %v4556 = vpop.f32.mrb[0].mxu0
        %v4557 = vadd.f32 0.0, %v4556
        %v4558 = vpop.f32.mrb[0].mxu0
        %4559 = vmatprep.mubr.f32.mxu0 0.0
        %4560 = vmatmul.mubr.f32.gmra.mrb[0].mxu0 %v4340
        %v4561 = vpop.f32.mrb[0].mxu0
        %v4562 = vadd.f32 0.0, %v4561
        %v4563 = vpop.f32.mrb[0].mxu0
        %4564 = vmatprep.mubr.f32.mxu0 0.0
        %4565 = vmatmul.mubr.f32.gmra.mrb[0].mxu0 %v4343
        %v4566 = vpop.f32.mrb[0].mxu0
        %v4567 = vadd.f32 0.0, %v4566
        %v4568 = vpop.f32.mrb[0].mxu0
        %4569 = vdwg.mxu0
        %v4570 = vadd.f32 %v2933, %v4412
        %v4571 = vadd.f32 %v2934, %v4417
        %v4572 = vadd.f32 %v2935, %v4422
        %v4573 = vadd.f32 %v2936, %v4427
        %v4574 = vadd.f32 %v2937, %v4432
        %v4575 = vadd.f32 %v2938, %v4437
        %v4576 = vadd.f32 %v2939, %v4442
        %v4577 = vadd.f32 %v2940, %v4447
        %v4578 = vadd.f32 %v2941, %v4452
        %v4579 = vadd.f32 %v2942, %v4457
        %v4580 = vadd.f32 %v2943, %v4462
        %v4581 = vadd.f32 %v2944, %v4467
        %v4582 = vadd.f32 %v2945, %v4472
        %v4583 = vadd.f32 %v2946, %v4477
        %v4584 = vadd.f32 %v2947, %v4482
        %v4585 = vadd.f32 %v2948, %v4487
        %v4586 = vadd.f32 %v2949, %v4492
        %v4587 = vadd.f32 %v2950, %v4497
        %v4588 = vadd.f32 %v2951, %v4502
        %v4589 = vadd.f32 %v2952, %v4507
        %v4590 = vadd.f32 %v2953, %v4512
        %v4591 = vadd.f32 %v2954, %v4517
        %v4592 = vadd.f32 %v2955, %v4522
        %v4593 = vadd.f32 %v2956, %v4527
        %v4594 = vadd.f32 %v2957, %v4532
        %v4595 = vadd.f32 %v2958, %v4537
        %v4596 = vadd.f32 %v2959, %v4542
        %v4597 = vadd.f32 %v2960, %v4547
        %v4598 = vadd.f32 %v2961, %v4552
        %v4599 = vadd.f32 %v2962, %v4557
        %v4600 = vadd.f32 %v2963, %v4562
        %v4601 = vadd.f32 %v2964, %v4567
        %v4602 = vld [vmem:[%s6] sm:$0xff]
        %v4603 = vld [vmem:[%s6 + $0x8] sm:$0x1]
        %v4604 = vld [vmem:[%s7] sm:$0xff]
        %v4605 = vld [vmem:[%s7 + $0x8] sm:$0xff]
        %v4606 = vld [vmem:[%s7 + $0x10] sm:$0xff]
        %v4607 = vld [vmem:[%s7 + $0x18] sm:$0xff]
        %v4608 = vld [vmem:[%s7 + $0x20] sm:$0xff]
        %v4609 = vld [vmem:[%s7 + $0x28] sm:$0xff]
        %v4610 = vld [vmem:[%s7 + $0x30] sm:$0xff]
        %v4611 = vld [vmem:[%s7 + $0x38] sm:$0xff]
        %v4612 = vld [vmem:[%s7 + $0x40] sm:$0xff]
        %v4613 = vld [vmem:[%s7 + $0x48] sm:$0xff]
        %v4614 = vld [vmem:[%s7 + $0x50] sm:$0xff]
        %v4615 = vld [vmem:[%s7 + $0x58] sm:$0xff]
        %v4616 = vld [vmem:[%s7 + $0x60] sm:$0xff]
        %v4617 = vld [vmem:[%s7 + $0x68] sm:$0xff]
        %v4618 = vld [vmem:[%s7 + $0x70] sm:$0xff]
        %v4619 = vld [vmem:[%s7 + $0x78] sm:$0xff]
        %v4620 = vld [vmem:[%s7 + $0x80] sm:$0xff]
        %v4621 = vld [vmem:[%s7 + $0x88] sm:$0xff]
        %v4622 = vld [vmem:[%s7 + $0x90] sm:$0xff]
        %v4623 = vld [vmem:[%s7 + $0x98] sm:$0xff]
        %v4624 = vld [vmem:[%s7 + $0xa0] sm:$0xff]
        %v4625 = vld [vmem:[%s7 + $0xa8] sm:$0xff]
        %v4626 = vld [vmem:[%s7 + $0xb0] sm:$0xff]
        %v4627 = vld [vmem:[%s7 + $0xb8] sm:$0xff]
        %v4628 = vld [vmem:[%s7 + $0xc0] sm:$0xff]
        %v4629 = vld [vmem:[%s7 + $0xc8] sm:$0xff]
        %v4630 = vld [vmem:[%s7 + $0xd0] sm:$0xff]
        %v4631 = vld [vmem:[%s7 + $0xd8] sm:$0xff]
        %v4632 = vld [vmem:[%s7 + $0xe0] sm:$0xff]
        %v4633 = vld [vmem:[%s7 + $0xe8] sm:$0xff]
        %v4634 = vld [vmem:[%s7 + $0xf0] sm:$0xff]
        %v4635 = vld [vmem:[%s7 + $0xf8] sm:$0xff]
        %v4636 = vlaneseq
        %v4637 = vshrl.u32 %v4636, 7
        %v4638 = vsub.s32 4, %v4637
        %v4639 = vrot.slane %v4602, %v4638
        %v4640 = vmul.f32 %v4570, %v4639
        %v4641 = vmul.f32 %v4571, %v4639
        %v4642 = vmul.f32 %v4572, %v4639
        %v4643 = vmul.f32 %v4573, %v4639
        %v4644 = vmul.f32 %v4574, %v4639
        %v4645 = vmul.f32 %v4575, %v4639
        %v4646 = vmul.f32 %v4576, %v4639
        %v4647 = vmul.f32 %v4577, %v4639
        %v4648 = vmul.f32 %v4578, %v4639
        %v4649 = vmul.f32 %v4579, %v4639
        %v4650 = vmul.f32 %v4580, %v4639
        %v4651 = vmul.f32 %v4581, %v4639
        %v4652 = vmul.f32 %v4582, %v4639
        %v4653 = vmul.f32 %v4583, %v4639
        %v4654 = vmul.f32 %v4584, %v4639
        %v4655 = vmul.f32 %v4585, %v4639
        %v4656 = vmul.f32 %v4586, %v4639
        %v4657 = vmul.f32 %v4587, %v4639
        %v4658 = vmul.f32 %v4588, %v4639
        %v4659 = vmul.f32 %v4589, %v4639
        %v4660 = vmul.f32 %v4590, %v4639
        %v4661 = vmul.f32 %v4591, %v4639
        %v4662 = vmul.f32 %v4592, %v4639
        %v4663 = vmul.f32 %v4593, %v4639
        %v4664 = vmul.f32 %v4594, %v4639
        %v4665 = vmul.f32 %v4595, %v4639
        %v4666 = vmul.f32 %v4596, %v4639
        %v4667 = vmul.f32 %v4597, %v4639
        %v4668 = vmul.f32 %v4598, %v4639
        %v4669 = vmul.f32 %v4599, %v4639
        %v4670 = vmul.f32 %v4600, %v4639
        %v4671 = vmul.f32 %v4601, %v4639
        %v4672 = vrot.slane %v4570, 7
        %v4673 = vrot.slane %v4571, 7
        %v4674 = vrot.slane %v4572, 7
        %v4675 = vrot.slane %v4573, 7
        %v4676 = vrot.slane %v4574, 7
        %v4677 = vrot.slane %v4575, 7
        %v4678 = vrot.slane %v4576, 7
        %v4679 = vrot.slane %v4577, 7
        %v4680 = vrot.slane %v4578, 7
        %v4681 = vrot.slane %v4579, 7
        %v4682 = vrot.slane %v4580, 7
        %v4683 = vrot.slane %v4581, 7
        %v4684 = vrot.slane %v4582, 7
        %v4685 = vrot.slane %v4583, 7
        %v4686 = vrot.slane %v4584, 7
        %v4687 = vrot.slane %v4585, 7
        %v4688 = vrot.slane %v4586, 7
        %v4689 = vrot.slane %v4587, 7
        %v4690 = vrot.slane %v4588, 7
        %v4691 = vrot.slane %v4589, 7
        %v4692 = vrot.slane %v4590, 7
        %v4693 = vrot.slane %v4591, 7
        %v4694 = vrot.slane %v4592, 7
        %v4695 = vrot.slane %v4593, 7
        %v4696 = vrot.slane %v4594, 7
        %v4697 = vrot.slane %v4595, 7
        %v4698 = vrot.slane %v4596, 7
        %v4699 = vrot.slane %v4597, 7
        %v4700 = vrot.slane %v4598, 7
        %v4701 = vrot.slane %v4599, 7
        %v4702 = vrot.slane %v4600, 7
        %v4703 = vrot.slane %v4601, 7
        %v4704 = vlaneseq
        %v4705 = vshrl.u32 %v4704, 7
        %vm4706 = vcmp.lt.s32.totalorder %v4705, 1
        %v4707 = vsel %vm4706, %v4702, %v4703
        %v4708 = vsel %vm4706, %v4701, %v4702
        %v4709 = vsel %vm4706, %v4700, %v4701
        %v4710 = vsel %vm4706, %v4699, %v4700
        %v4711 = vsel %vm4706, %v4698, %v4699
        %v4712 = vsel %vm4706, %v4697, %v4698
        %v4713 = vsel %vm4706, %v4696, %v4697
        %v4714 = vsel %vm4706, %v4695, %v4696
        %v4715 = vsel %vm4706, %v4694, %v4695
        %v4716 = vsel %vm4706, %v4693, %v4694
        %v4717 = vsel %vm4706, %v4692, %v4693
        %v4718 = vsel %vm4706, %v4691, %v4692
        %v4719 = vsel %vm4706, %v4690, %v4691
        %v4720 = vsel %vm4706, %v4689, %v4690
        %v4721 = vsel %vm4706, %v4688, %v4689
        %v4722 = vsel %vm4706, %v4687, %v4688
        %v4723 = vsel %vm4706, %v4686, %v4687
        %v4724 = vsel %vm4706, %v4685, %v4686
        %v4725 = vsel %vm4706, %v4684, %v4685
        %v4726 = vsel %vm4706, %v4683, %v4684
        %v4727 = vsel %vm4706, %v4682, %v4683
        %v4728 = vsel %vm4706, %v4681, %v4682
        %v4729 = vsel %vm4706, %v4680, %v4681
        %v4730 = vsel %vm4706, %v4679, %v4680
        %v4731 = vsel %vm4706, %v4678, %v4679
        %v4732 = vsel %vm4706, %v4677, %v4678
        %v4733 = vsel %vm4706, %v4676, %v4677
        %v4734 = vsel %vm4706, %v4675, %v4676
        %v4735 = vsel %vm4706, %v4674, %v4675
        %v4736 = vsel %vm4706, %v4673, %v4674
        %v4737 = vsel %vm4706, %v4672, %v4673
        %v4738 = vsel %vm4706, %v4703, %v4672
        %4740 = vset.pattern.permute.xlu0 0
        %4741 = vperm.xlu0 %4740, %v4604
        %v4742 = vpop.permute.xlu0 %4741
        %4745 = vset.pattern.permute.xlu0 0
        %4746 = vperm.xlu0 %4745, %v4605
        %v4747 = vpop.permute.xlu0 %4746
        %4750 = vset.pattern.permute.xlu0 0
        %4751 = vperm.xlu0 %4750, %v4606
        %v4752 = vpop.permute.xlu0 %4751
        %4755 = vset.pattern.permute.xlu0 0
        %4756 = vperm.xlu0 %4755, %v4607
        %v4757 = vpop.permute.xlu0 %4756
        %4760 = vset.pattern.permute.xlu0 0
        %4761 = vperm.xlu0 %4760, %v4608
        %v4762 = vpop.permute.xlu0 %4761
        %4765 = vset.pattern.permute.xlu0 0
        %4766 = vperm.xlu0 %4765, %v4609
        %v4767 = vpop.permute.xlu0 %4766
        %4770 = vset.pattern.permute.xlu0 0
        %4771 = vperm.xlu0 %4770, %v4610
        %v4772 = vpop.permute.xlu0 %4771
        %4775 = vset.pattern.permute.xlu0 0
        %4776 = vperm.xlu0 %4775, %v4611
        %v4777 = vpop.permute.xlu0 %4776
        %4780 = vset.pattern.permute.xlu0 0
        %4781 = vperm.xlu0 %4780, %v4612
        %v4782 = vpop.permute.xlu0 %4781
        %4785 = vset.pattern.permute.xlu0 0
        %4786 = vperm.xlu0 %4785, %v4613
        %v4787 = vpop.permute.xlu0 %4786
        %4790 = vset.pattern.permute.xlu0 0
        %4791 = vperm.xlu0 %4790, %v4614
        %v4792 = vpop.permute.xlu0 %4791
        %4795 = vset.pattern.permute.xlu0 0
        %4796 = vperm.xlu0 %4795, %v4615
        %v4797 = vpop.permute.xlu0 %4796
        %4800 = vset.pattern.permute.xlu0 0
        %4801 = vperm.xlu0 %4800, %v4616
        %v4802 = vpop.permute.xlu0 %4801
        %4805 = vset.pattern.permute.xlu0 0
        %4806 = vperm.xlu0 %4805, %v4617
        %v4807 = vpop.permute.xlu0 %4806
        %4810 = vset.pattern.permute.xlu0 0
        %4811 = vperm.xlu0 %4810, %v4618
        %v4812 = vpop.permute.xlu0 %4811
        %4815 = vset.pattern.permute.xlu0 0
        %4816 = vperm.xlu0 %4815, %v4619
        %v4817 = vpop.permute.xlu0 %4816
        %4820 = vset.pattern.permute.xlu0 0
        %4821 = vperm.xlu0 %4820, %v4620
        %v4822 = vpop.permute.xlu0 %4821
        %4825 = vset.pattern.permute.xlu0 0
        %4826 = vperm.xlu0 %4825, %v4621
        %v4827 = vpop.permute.xlu0 %4826
        %4830 = vset.pattern.permute.xlu0 0
        %4831 = vperm.xlu0 %4830, %v4622
        %v4832 = vpop.permute.xlu0 %4831
        %4835 = vset.pattern.permute.xlu0 0
        %4836 = vperm.xlu0 %4835, %v4623
        %v4837 = vpop.permute.xlu0 %4836
        %4840 = vset.pattern.permute.xlu0 0
        %4841 = vperm.xlu0 %4840, %v4624
        %v4842 = vpop.permute.xlu0 %4841
        %4845 = vset.pattern.permute.xlu0 0
        %4846 = vperm.xlu0 %4845, %v4625
        %v4847 = vpop.permute.xlu0 %4846
        %4850 = vset.pattern.permute.xlu0 0
        %4851 = vperm.xlu0 %4850, %v4626
        %v4852 = vpop.permute.xlu0 %4851
        %4855 = vset.pattern.permute.xlu0 0
        %4856 = vperm.xlu0 %4855, %v4627
        %v4857 = vpop.permute.xlu0 %4856
        %4860 = vset.pattern.permute.xlu0 0
        %4861 = vperm.xlu0 %4860, %v4628
        %v4862 = vpop.permute.xlu0 %4861
        %4865 = vset.pattern.permute.xlu0 0
        %4866 = vperm.xlu0 %4865, %v4629
        %v4867 = vpop.permute.xlu0 %4866
        %4870 = vset.pattern.permute.xlu0 0
        %4871 = vperm.xlu0 %4870, %v4630
        %v4872 = vpop.permute.xlu0 %4871
        %4875 = vset.pattern.permute.xlu0 0
        %4876 = vperm.xlu0 %4875, %v4631
        %v4877 = vpop.permute.xlu0 %4876
        %4880 = vset.pattern.permute.xlu0 0
        %4881 = vperm.xlu0 %4880, %v4632
        %v4882 = vpop.permute.xlu0 %4881
        %4885 = vset.pattern.permute.xlu0 0
        %4886 = vperm.xlu0 %4885, %v4633
        %v4887 = vpop.permute.xlu0 %4886
        %4890 = vset.pattern.permute.xlu0 0
        %4891 = vperm.xlu0 %4890, %v4634
        %v4892 = vpop.permute.xlu0 %4891
        %4895 = vset.pattern.permute.xlu0 0
        %4896 = vperm.xlu0 %4895, %v4635
        %v4897 = vpop.permute.xlu0 %4896
        %v4899 = vmul.f32 %v4708, %v4742
        %v4900 = vmul.f32 %v4707, %v4747
        %v4901 = vmul.f32 %v4738, %v4752
        %v4902 = vmul.f32 %v4737, %v4757
        %v4903 = vmul.f32 %v4736, %v4762
        %v4904 = vmul.f32 %v4735, %v4767
        %v4905 = vmul.f32 %v4734, %v4772
        %v4906 = vmul.f32 %v4733, %v4777
        %v4907 = vmul.f32 %v4732, %v4782
        %v4908 = vmul.f32 %v4731, %v4787
        %v4909 = vmul.f32 %v4730, %v4792
        %v4910 = vmul.f32 %v4729, %v4797
        %v4911 = vmul.f32 %v4728, %v4802
        %v4912 = vmul.f32 %v4727, %v4807
        %v4913 = vmul.f32 %v4726, %v4812
        %v4914 = vmul.f32 %v4725, %v4817
        %v4915 = vmul.f32 %v4724, %v4822
        %v4916 = vmul.f32 %v4723, %v4827
        %v4917 = vmul.f32 %v4722, %v4832
        %v4918 = vmul.f32 %v4721, %v4837
        %v4919 = vmul.f32 %v4720, %v4842
        %v4920 = vmul.f32 %v4719, %v4847
        %v4921 = vmul.f32 %v4718, %v4852
        %v4922 = vmul.f32 %v4717, %v4857
        %v4923 = vmul.f32 %v4716, %v4862
        %v4924 = vmul.f32 %v4715, %v4867
        %v4925 = vmul.f32 %v4714, %v4872
        %v4926 = vmul.f32 %v4713, %v4877
        %v4927 = vmul.f32 %v4712, %v4882
        %v4928 = vmul.f32 %v4711, %v4887
        %v4929 = vmul.f32 %v4710, %v4892
        %v4930 = vmul.f32 %v4709, %v4897
        %v4931 = vlaneseq
        %v4932 = vshrl.u32 %v4931, 7
        %v4933 = vsub.s32 0, %v4932
        %v4934 = vrot.slane %v4602, %v4933
        %v4935 = vmul.f32 %v4899, %v4934
        %v4936 = vmul.f32 %v4900, %v4934
        %v4937 = vmul.f32 %v4901, %v4934
        %v4938 = vmul.f32 %v4902, %v4934
        %v4939 = vmul.f32 %v4903, %v4934
        %v4940 = vmul.f32 %v4904, %v4934
        %v4941 = vmul.f32 %v4905, %v4934
        %v4942 = vmul.f32 %v4906, %v4934
        %v4943 = vmul.f32 %v4907, %v4934
        %v4944 = vmul.f32 %v4908, %v4934
        %v4945 = vmul.f32 %v4909, %v4934
        %v4946 = vmul.f32 %v4910, %v4934
        %v4947 = vmul.f32 %v4911, %v4934
        %v4948 = vmul.f32 %v4912, %v4934
        %v4949 = vmul.f32 %v4913, %v4934
        %v4950 = vmul.f32 %v4914, %v4934
        %v4951 = vmul.f32 %v4915, %v4934
        %v4952 = vmul.f32 %v4916, %v4934
        %v4953 = vmul.f32 %v4917, %v4934
        %v4954 = vmul.f32 %v4918, %v4934
        %v4955 = vmul.f32 %v4919, %v4934
        %v4956 = vmul.f32 %v4920, %v4934
        %v4957 = vmul.f32 %v4921, %v4934
        %v4958 = vmul.f32 %v4922, %v4934
        %v4959 = vmul.f32 %v4923, %v4934
        %v4960 = vmul.f32 %v4924, %v4934
        %v4961 = vmul.f32 %v4925, %v4934
        %v4962 = vmul.f32 %v4926, %v4934
        %v4963 = vmul.f32 %v4927, %v4934
        %v4964 = vmul.f32 %v4928, %v4934
        %v4965 = vmul.f32 %v4929, %v4934
        %v4966 = vmul.f32 %v4930, %v4934
        %v4967 = vadd.f32 %v4640, %v4935
        %v4968 = vadd.f32 %v4641, %v4936
        %v4969 = vadd.f32 %v4642, %v4937
        %v4970 = vadd.f32 %v4643, %v4938
        %v4971 = vadd.f32 %v4644, %v4939
        %v4972 = vadd.f32 %v4645, %v4940
        %v4973 = vadd.f32 %v4646, %v4941
        %v4974 = vadd.f32 %v4647, %v4942
        %v4975 = vadd.f32 %v4648, %v4943
        %v4976 = vadd.f32 %v4649, %v4944
        %v4977 = vadd.f32 %v4650, %v4945
        %v4978 = vadd.f32 %v4651, %v4946
        %v4979 = vadd.f32 %v4652, %v4947
        %v4980 = vadd.f32 %v4653, %v4948
        %v4981 = vadd.f32 %v4654, %v4949
        %v4982 = vadd.f32 %v4655, %v4950
        %v4983 = vadd.f32 %v4656, %v4951
        %v4984 = vadd.f32 %v4657, %v4952
        %v4985 = vadd.f32 %v4658, %v4953
        %v4986 = vadd.f32 %v4659, %v4954
        %v4987 = vadd.f32 %v4660, %v4955
        %v4988 = vadd.f32 %v4661, %v4956
        %v4989 = vadd.f32 %v4662, %v4957
        %v4990 = vadd.f32 %v4663, %v4958
        %v4991 = vadd.f32 %v4664, %v4959
        %v4992 = vadd.f32 %v4665, %v4960
        %v4993 = vadd.f32 %v4666, %v4961
        %v4994 = vadd.f32 %v4667, %v4962
        %v4995 = vadd.f32 %v4668, %v4963
        %v4996 = vadd.f32 %v4669, %v4964
        %v4997 = vadd.f32 %v4670, %v4965
        %v4998 = vadd.f32 %v4671, %v4966
        %4999 = vset.pattern.permute.xlu0 1
        %5000 = vperm.xlu0 %4999, %v4604
        %v5001 = vpop.permute.xlu0 %5000
        %5003 = vset.pattern.permute.xlu0 1
        %5004 = vperm.xlu0 %5003, %v4605
        %v5005 = vpop.permute.xlu0 %5004
        %5007 = vset.pattern.permute.xlu0 1
        %5008 = vperm.xlu0 %5007, %v4606
        %v5009 = vpop.permute.xlu0 %5008
        %5011 = vset.pattern.permute.xlu0 1
        %5012 = vperm.xlu0 %5011, %v4607
        %v5013 = vpop.permute.xlu0 %5012
        %5015 = vset.pattern.permute.xlu0 1
        %5016 = vperm.xlu0 %5015, %v4608
        %v5017 = vpop.permute.xlu0 %5016
        %5019 = vset.pattern.permute.xlu0 1
        %5020 = vperm.xlu0 %5019, %v4609
        %v5021 = vpop.permute.xlu0 %5020
        %5023 = vset.pattern.permute.xlu0 1
        %5024 = vperm.xlu0 %5023, %v4610
        %v5025 = vpop.permute.xlu0 %5024
        %5027 = vset.pattern.permute.xlu0 1
        %5028 = vperm.xlu0 %5027, %v4611
        %v5029 = vpop.permute.xlu0 %5028
        %5031 = vset.pattern.permute.xlu0 1
        %5032 = vperm.xlu0 %5031, %v4612
        %v5033 = vpop.permute.xlu0 %5032
        %5035 = vset.pattern.permute.xlu0 1
        %5036 = vperm.xlu0 %5035, %v4613
        %v5037 = vpop.permute.xlu0 %5036
        %5039 = vset.pattern.permute.xlu0 1
        %5040 = vperm.xlu0 %5039, %v4614
        %v5041 = vpop.permute.xlu0 %5040
        %5043 = vset.pattern.permute.xlu0 1
        %5044 = vperm.xlu0 %5043, %v4615
        %v5045 = vpop.permute.xlu0 %5044
        %5047 = vset.pattern.permute.xlu0 1
        %5048 = vperm.xlu0 %5047, %v4616
        %v5049 = vpop.permute.xlu0 %5048
        %5051 = vset.pattern.permute.xlu0 1
        %5052 = vperm.xlu0 %5051, %v4617
        %v5053 = vpop.permute.xlu0 %5052
        %5055 = vset.pattern.permute.xlu0 1
        %5056 = vperm.xlu0 %5055, %v4618
        %v5057 = vpop.permute.xlu0 %5056
        %5059 = vset.pattern.permute.xlu0 1
        %5060 = vperm.xlu0 %5059, %v4619
        %v5061 = vpop.permute.xlu0 %5060
        %5063 = vset.pattern.permute.xlu0 1
        %5064 = vperm.xlu0 %5063, %v4620
        %v5065 = vpop.permute.xlu0 %5064
        %5067 = vset.pattern.permute.xlu0 1
        %5068 = vperm.xlu0 %5067, %v4621
        %v5069 = vpop.permute.xlu0 %5068
        %5071 = vset.pattern.permute.xlu0 1
        %5072 = vperm.xlu0 %5071, %v4622
        %v5073 = vpop.permute.xlu0 %5072
        %5075 = vset.pattern.permute.xlu0 1
        %5076 = vperm.xlu0 %5075, %v4623
        %v5077 = vpop.permute.xlu0 %5076
        %5079 = vset.pattern.permute.xlu0 1
        %5080 = vperm.xlu0 %5079, %v4624
        %v5081 = vpop.permute.xlu0 %5080
        %5083 = vset.pattern.permute.xlu0 1
        %5084 = vperm.xlu0 %5083, %v4625
        %v5085 = vpop.permute.xlu0 %5084
        %5087 = vset.pattern.permute.xlu0 1
        %5088 = vperm.xlu0 %5087, %v4626
        %v5089 = vpop.permute.xlu0 %5088
        %5091 = vset.pattern.permute.xlu0 1
        %5092 = vperm.xlu0 %5091, %v4627
        %v5093 = vpop.permute.xlu0 %5092
        %5095 = vset.pattern.permute.xlu0 1
        %5096 = vperm.xlu0 %5095, %v4628
        %v5097 = vpop.permute.xlu0 %5096
        %5099 = vset.pattern.permute.xlu0 1
        %5100 = vperm.xlu0 %5099, %v4629
        %v5101 = vpop.permute.xlu0 %5100
        %5103 = vset.pattern.permute.xlu0 1
        %5104 = vperm.xlu0 %5103, %v4630
        %v5105 = vpop.permute.xlu0 %5104
        %5107 = vset.pattern.permute.xlu0 1
        %5108 = vperm.xlu0 %5107, %v4631
        %v5109 = vpop.permute.xlu0 %5108
        %5111 = vset.pattern.permute.xlu0 1
        %5112 = vperm.xlu0 %5111, %v4632
        %v5113 = vpop.permute.xlu0 %5112
        %5115 = vset.pattern.permute.xlu0 1
        %5116 = vperm.xlu0 %5115, %v4633
        %v5117 = vpop.permute.xlu0 %5116
        %5119 = vset.pattern.permute.xlu0 1
        %5120 = vperm.xlu0 %5119, %v4634
        %v5121 = vpop.permute.xlu0 %5120
        %5123 = vset.pattern.permute.xlu0 1
        %5124 = vperm.xlu0 %5123, %v4635
        %v5125 = vpop.permute.xlu0 %5124
        %v5127 = vmul.f32 %v4600, %v5001
        %v5128 = vmul.f32 %v4601, %v5005
        %v5129 = vmul.f32 %v4570, %v5009
        %v5130 = vmul.f32 %v4571, %v5013
        %v5131 = vmul.f32 %v4572, %v5017
        %v5132 = vmul.f32 %v4573, %v5021
        %v5133 = vmul.f32 %v4574, %v5025
        %v5134 = vmul.f32 %v4575, %v5029
        %v5135 = vmul.f32 %v4576, %v5033
        %v5136 = vmul.f32 %v4577, %v5037
        %v5137 = vmul.f32 %v4578, %v5041
        %v5138 = vmul.f32 %v4579, %v5045
        %v5139 = vmul.f32 %v4580, %v5049
        %v5140 = vmul.f32 %v4581, %v5053
        %v5141 = vmul.f32 %v4582, %v5057
        %v5142 = vmul.f32 %v4583, %v5061
        %v5143 = vmul.f32 %v4584, %v5065
        %v5144 = vmul.f32 %v4585, %v5069
        %v5145 = vmul.f32 %v4586, %v5073
        %v5146 = vmul.f32 %v4587, %v5077
        %v5147 = vmul.f32 %v4588, %v5081
        %v5148 = vmul.f32 %v4589, %v5085
        %v5149 = vmul.f32 %v4590, %v5089
        %v5150 = vmul.f32 %v4591, %v5093
        %v5151 = vmul.f32 %v4592, %v5097
        %v5152 = vmul.f32 %v4593, %v5101
        %v5153 = vmul.f32 %v4594, %v5105
        %v5154 = vmul.f32 %v4595, %v5109
        %v5155 = vmul.f32 %v4596, %v5113
        %v5156 = vmul.f32 %v4597, %v5117
        %v5157 = vmul.f32 %v4598, %v5121
        %v5158 = vmul.f32 %v4599, %v5125
        %v5159 = vlaneseq
        %v5160 = vshrl.u32 %v5159, 7
        %v5161 = vsub.s32 1, %v5160
        %v5162 = vrot.slane %v4602, %v5161
        %v5163 = vmul.f32 %v5127, %v5162
        %v5164 = vmul.f32 %v5128, %v5162
        %v5165 = vmul.f32 %v5129, %v5162
        %v5166 = vmul.f32 %v5130, %v5162
        %v5167 = vmul.f32 %v5131, %v5162
        %v5168 = vmul.f32 %v5132, %v5162
        %v5169 = vmul.f32 %v5133, %v5162
        %v5170 = vmul.f32 %v5134, %v5162
        %v5171 = vmul.f32 %v5135, %v5162
        %v5172 = vmul.f32 %v5136, %v5162
        %v5173 = vmul.f32 %v5137, %v5162
        %v5174 = vmul.f32 %v5138, %v5162
        %v5175 = vmul.f32 %v5139, %v5162
        %v5176 = vmul.f32 %v5140, %v5162
        %v5177 = vmul.f32 %v5141, %v5162
        %v5178 = vmul.f32 %v5142, %v5162
        %v5179 = vmul.f32 %v5143, %v5162
        %v5180 = vmul.f32 %v5144, %v5162
        %v5181 = vmul.f32 %v5145, %v5162
        %v5182 = vmul.f32 %v5146, %v5162
        %v5183 = vmul.f32 %v5147, %v5162
        %v5184 = vmul.f32 %v5148, %v5162
        %v5185 = vmul.f32 %v5149, %v5162
        %v5186 = vmul.f32 %v5150, %v5162
        %v5187 = vmul.f32 %v5151, %v5162
        %v5188 = vmul.f32 %v5152, %v5162
        %v5189 = vmul.f32 %v5153, %v5162
        %v5190 = vmul.f32 %v5154, %v5162
        %v5191 = vmul.f32 %v5155, %v5162
        %v5192 = vmul.f32 %v5156, %v5162
        %v5193 = vmul.f32 %v5157, %v5162
        %v5194 = vmul.f32 %v5158, %v5162
        %v5195 = vadd.f32 %v4967, %v5163
        %v5196 = vadd.f32 %v4968, %v5164
        %v5197 = vadd.f32 %v4969, %v5165
        %v5198 = vadd.f32 %v4970, %v5166
        %v5199 = vadd.f32 %v4971, %v5167
        %v5200 = vadd.f32 %v4972, %v5168
        %v5201 = vadd.f32 %v4973, %v5169
        %v5202 = vadd.f32 %v4974, %v5170
        %v5203 = vadd.f32 %v4975, %v5171
        %v5204 = vadd.f32 %v4976, %v5172
        %v5205 = vadd.f32 %v4977, %v5173
        %v5206 = vadd.f32 %v4978, %v5174
        %v5207 = vadd.f32 %v4979, %v5175
        %v5208 = vadd.f32 %v4980, %v5176
        %v5209 = vadd.f32 %v4981, %v5177
        %v5210 = vadd.f32 %v4982, %v5178
        %v5211 = vadd.f32 %v4983, %v5179
        %v5212 = vadd.f32 %v4984, %v5180
        %v5213 = vadd.f32 %v4985, %v5181
        %v5214 = vadd.f32 %v4986, %v5182
        %v5215 = vadd.f32 %v4987, %v5183
        %v5216 = vadd.f32 %v4988, %v5184
        %v5217 = vadd.f32 %v4989, %v5185
        %v5218 = vadd.f32 %v4990, %v5186
        %v5219 = vadd.f32 %v4991, %v5187
        %v5220 = vadd.f32 %v4992, %v5188
        %v5221 = vadd.f32 %v4993, %v5189
        %v5222 = vadd.f32 %v4994, %v5190
        %v5223 = vadd.f32 %v4995, %v5191
        %v5224 = vadd.f32 %v4996, %v5192
        %v5225 = vadd.f32 %v4997, %v5193
        %v5226 = vadd.f32 %v4998, %v5194
        %v5227 = vrot.slane %v4570, 1
        %v5228 = vrot.slane %v4571, 1
        %v5229 = vrot.slane %v4572, 1
        %v5230 = vrot.slane %v4573, 1
        %v5231 = vrot.slane %v4574, 1
        %v5232 = vrot.slane %v4575, 1
        %v5233 = vrot.slane %v4576, 1
        %v5234 = vrot.slane %v4577, 1
        %v5235 = vrot.slane %v4578, 1
        %v5236 = vrot.slane %v4579, 1
        %v5237 = vrot.slane %v4580, 1
        %v5238 = vrot.slane %v4581, 1
        %v5239 = vrot.slane %v4582, 1
        %v5240 = vrot.slane %v4583, 1
        %v5241 = vrot.slane %v4584, 1
        %v5242 = vrot.slane %v4585, 1
        %v5243 = vrot.slane %v4586, 1
        %v5244 = vrot.slane %v4587, 1
        %v5245 = vrot.slane %v4588, 1
        %v5246 = vrot.slane %v4589, 1
        %v5247 = vrot.slane %v4590, 1
        %v5248 = vrot.slane %v4591, 1
        %v5249 = vrot.slane %v4592, 1
        %v5250 = vrot.slane %v4593, 1
        %v5251 = vrot.slane %v4594, 1
        %v5252 = vrot.slane %v4595, 1
        %v5253 = vrot.slane %v4596, 1
        %v5254 = vrot.slane %v4597, 1
        %v5255 = vrot.slane %v4598, 1
        %v5256 = vrot.slane %v4599, 1
        %v5257 = vrot.slane %v4600, 1
        %v5258 = vrot.slane %v4601, 1
        %vm5259 = vcmp.lt.s32.totalorder %v4705, 7
        %v5260 = vsel %vm5259, %v5257, %v5258
        %v5261 = vsel %vm5259, %v5256, %v5257
        %v5262 = vsel %vm5259, %v5255, %v5256
        %v5263 = vsel %vm5259, %v5254, %v5255
        %v5264 = vsel %vm5259, %v5253, %v5254
        %v5265 = vsel %vm5259, %v5252, %v5253
        %v5266 = vsel %vm5259, %v5251, %v5252
        %v5267 = vsel %vm5259, %v5250, %v5251
        %v5268 = vsel %vm5259, %v5249, %v5250
        %v5269 = vsel %vm5259, %v5248, %v5249
        %v5270 = vsel %vm5259, %v5247, %v5248
        %v5271 = vsel %vm5259, %v5246, %v5247
        %v5272 = vsel %vm5259, %v5245, %v5246
        %v5273 = vsel %vm5259, %v5244, %v5245
        %v5274 = vsel %vm5259, %v5243, %v5244
        %v5275 = vsel %vm5259, %v5242, %v5243
        %v5276 = vsel %vm5259, %v5241, %v5242
        %v5277 = vsel %vm5259, %v5240, %v5241
        %v5278 = vsel %vm5259, %v5239, %v5240
        %v5279 = vsel %vm5259, %v5238, %v5239
        %v5280 = vsel %vm5259, %v5237, %v5238
        %v5281 = vsel %vm5259, %v5236, %v5237
        %v5282 = vsel %vm5259, %v5235, %v5236
        %v5283 = vsel %vm5259, %v5234, %v5235
        %v5284 = vsel %vm5259, %v5233, %v5234
        %v5285 = vsel %vm5259, %v5232, %v5233
        %v5286 = vsel %vm5259, %v5231, %v5232
        %v5287 = vsel %vm5259, %v5230, %v5231
        %v5288 = vsel %vm5259, %v5229, %v5230
        %v5289 = vsel %vm5259, %v5228, %v5229
        %v5290 = vsel %vm5259, %v5227, %v5228
        %v5291 = vsel %vm5259, %v5258, %v5227
        %5292 = vset.pattern.permute.xlu0 2
        %5293 = vperm.xlu0 %5292, %v4604
        %v5294 = vpop.permute.xlu0 %5293
        %5296 = vset.pattern.permute.xlu0 2
        %5297 = vperm.xlu0 %5296, %v4605
        %v5298 = vpop.permute.xlu0 %5297
        %5300 = vset.pattern.permute.xlu0 2
        %5301 = vperm.xlu0 %5300, %v4606
        %v5302 = vpop.permute.xlu0 %5301
        %5304 = vset.pattern.permute.xlu0 2
        %5305 = vperm.xlu0 %5304, %v4607
        %v5306 = vpop.permute.xlu0 %5305
        %5308 = vset.pattern.permute.xlu0 2
        %5309 = vperm.xlu0 %5308, %v4608
        %v5310 = vpop.permute.xlu0 %5309
        %5312 = vset.pattern.permute.xlu0 2
        %5313 = vperm.xlu0 %5312, %v4609
        %v5314 = vpop.permute.xlu0 %5313
        %5316 = vset.pattern.permute.xlu0 2
        %5317 = vperm.xlu0 %5316, %v4610
        %v5318 = vpop.permute.xlu0 %5317
        %5320 = vset.pattern.permute.xlu0 2
        %5321 = vperm.xlu0 %5320, %v4611
        %v5322 = vpop.permute.xlu0 %5321
        %5324 = vset.pattern.permute.xlu0 2
        %5325 = vperm.xlu0 %5324, %v4612
        %v5326 = vpop.permute.xlu0 %5325
        %5328 = vset.pattern.permute.xlu0 2
        %5329 = vperm.xlu0 %5328, %v4613
        %v5330 = vpop.permute.xlu0 %5329
        %5332 = vset.pattern.permute.xlu0 2
        %5333 = vperm.xlu0 %5332, %v4614
        %v5334 = vpop.permute.xlu0 %5333
        %5336 = vset.pattern.permute.xlu0 2
        %5337 = vperm.xlu0 %5336, %v4615
        %v5338 = vpop.permute.xlu0 %5337
        %5340 = vset.pattern.permute.xlu0 2
        %5341 = vperm.xlu0 %5340, %v4616
        %v5342 = vpop.permute.xlu0 %5341
        %5344 = vset.pattern.permute.xlu0 2
        %5345 = vperm.xlu0 %5344, %v4617
        %v5346 = vpop.permute.xlu0 %5345
        %5348 = vset.pattern.permute.xlu0 2
        %5349 = vperm.xlu0 %5348, %v4618
        %v5350 = vpop.permute.xlu0 %5349
        %5352 = vset.pattern.permute.xlu0 2
        %5353 = vperm.xlu0 %5352, %v4619
        %v5354 = vpop.permute.xlu0 %5353
        %5356 = vset.pattern.permute.xlu0 2
        %5357 = vperm.xlu0 %5356, %v4620
        %v5358 = vpop.permute.xlu0 %5357
        %5360 = vset.pattern.permute.xlu0 2
        %5361 = vperm.xlu0 %5360, %v4621
        %v5362 = vpop.permute.xlu0 %5361
        %5364 = vset.pattern.permute.xlu0 2
        %5365 = vperm.xlu0 %5364, %v4622
        %v5366 = vpop.permute.xlu0 %5365
        %5368 = vset.pattern.permute.xlu0 2
        %5369 = vperm.xlu0 %5368, %v4623
        %v5370 = vpop.permute.xlu0 %5369
        %5372 = vset.pattern.permute.xlu0 2
        %5373 = vperm.xlu0 %5372, %v4624
        %v5374 = vpop.permute.xlu0 %5373
        %5376 = vset.pattern.permute.xlu0 2
        %5377 = vperm.xlu0 %5376, %v4625
        %v5378 = vpop.permute.xlu0 %5377
        %5380 = vset.pattern.permute.xlu0 2
        %5381 = vperm.xlu0 %5380, %v4626
        %v5382 = vpop.permute.xlu0 %5381
        %5384 = vset.pattern.permute.xlu0 2
        %5385 = vperm.xlu0 %5384, %v4627
        %v5386 = vpop.permute.xlu0 %5385
        %5388 = vset.pattern.permute.xlu0 2
        %5389 = vperm.xlu0 %5388, %v4628
        %v5390 = vpop.permute.xlu0 %5389
        %5392 = vset.pattern.permute.xlu0 2
        %5393 = vperm.xlu0 %5392, %v4629
        %v5394 = vpop.permute.xlu0 %5393
        %5396 = vset.pattern.permute.xlu0 2
        %5397 = vperm.xlu0 %5396, %v4630
        %v5398 = vpop.permute.xlu0 %5397
        %5400 = vset.pattern.permute.xlu0 2
        %5401 = vperm.xlu0 %5400, %v4631
        %v5402 = vpop.permute.xlu0 %5401
        %5404 = vset.pattern.permute.xlu0 2
        %5405 = vperm.xlu0 %5404, %v4632
        %v5406 = vpop.permute.xlu0 %5405
        %5408 = vset.pattern.permute.xlu0 2
        %5409 = vperm.xlu0 %5408, %v4633
        %v5410 = vpop.permute.xlu0 %5409
        %5412 = vset.pattern.permute.xlu0 2
        %5413 = vperm.xlu0 %5412, %v4634
        %v5414 = vpop.permute.xlu0 %5413
        %5416 = vset.pattern.permute.xlu0 2
        %5417 = vperm.xlu0 %5416, %v4635
        %v5418 = vpop.permute.xlu0 %5417
        %v5420 = vmul.f32 %v5260, %v5294
        %v5421 = vmul.f32 %v5291, %v5298
        %v5422 = vmul.f32 %v5290, %v5302
        %v5423 = vmul.f32 %v5289, %v5306
        %v5424 = vmul.f32 %v5288, %v5310
        %v5425 = vmul.f32 %v5287, %v5314
        %v5426 = vmul.f32 %v5286, %v5318
        %v5427 = vmul.f32 %v5285, %v5322
        %v5428 = vmul.f32 %v5284, %v5326
        %v5429 = vmul.f32 %v5283, %v5330
        %v5430 = vmul.f32 %v5282, %v5334
        %v5431 = vmul.f32 %v5281, %v5338
        %v5432 = vmul.f32 %v5280, %v5342
        %v5433 = vmul.f32 %v5279, %v5346
        %v5434 = vmul.f32 %v5278, %v5350
        %v5435 = vmul.f32 %v5277, %v5354
        %v5436 = vmul.f32 %v5276, %v5358
        %v5437 = vmul.f32 %v5275, %v5362
        %v5438 = vmul.f32 %v5274, %v5366
        %v5439 = vmul.f32 %v5273, %v5370
        %v5440 = vmul.f32 %v5272, %v5374
        %v5441 = vmul.f32 %v5271, %v5378
        %v5442 = vmul.f32 %v5270, %v5382
        %v5443 = vmul.f32 %v5269, %v5386
        %v5444 = vmul.f32 %v5268, %v5390
        %v5445 = vmul.f32 %v5267, %v5394
        %v5446 = vmul.f32 %v5266, %v5398
        %v5447 = vmul.f32 %v5265, %v5402
        %v5448 = vmul.f32 %v5264, %v5406
        %v5449 = vmul.f32 %v5263, %v5410
        %v5450 = vmul.f32 %v5262, %v5414
        %v5451 = vmul.f32 %v5261, %v5418
        %v5452 = vlaneseq
        %v5453 = vshrl.u32 %v5452, 7
        %v5454 = vsub.s32 2, %v5453
        %v5455 = vrot.slane %v4602, %v5454
        %v5456 = vmul.f32 %v5420, %v5455
        %v5457 = vmul.f32 %v5421, %v5455
        %v5458 = vmul.f32 %v5422, %v5455
        %v5459 = vmul.f32 %v5423, %v5455
        %v5460 = vmul.f32 %v5424, %v5455
        %v5461 = vmul.f32 %v5425, %v5455
        %v5462 = vmul.f32 %v5426, %v5455
        %v5463 = vmul.f32 %v5427, %v5455
        %v5464 = vmul.f32 %v5428, %v5455
        %v5465 = vmul.f32 %v5429, %v5455
        %v5466 = vmul.f32 %v5430, %v5455
        %v5467 = vmul.f32 %v5431, %v5455
        %v5468 = vmul.f32 %v5432, %v5455
        %v5469 = vmul.f32 %v5433, %v5455
        %v5470 = vmul.f32 %v5434, %v5455
        %v5471 = vmul.f32 %v5435, %v5455
        %v5472 = vmul.f32 %v5436, %v5455
        %v5473 = vmul.f32 %v5437, %v5455
        %v5474 = vmul.f32 %v5438, %v5455
        %v5475 = vmul.f32 %v5439, %v5455
        %v5476 = vmul.f32 %v5440, %v5455
        %v5477 = vmul.f32 %v5441, %v5455
        %v5478 = vmul.f32 %v5442, %v5455
        %v5479 = vmul.f32 %v5443, %v5455
        %v5480 = vmul.f32 %v5444, %v5455
        %v5481 = vmul.f32 %v5445, %v5455
        %v5482 = vmul.f32 %v5446, %v5455
        %v5483 = vmul.f32 %v5447, %v5455
        %v5484 = vmul.f32 %v5448, %v5455
        %v5485 = vmul.f32 %v5449, %v5455
        %v5486 = vmul.f32 %v5450, %v5455
        %v5487 = vmul.f32 %v5451, %v5455
        %v5488 = vadd.f32 %v5195, %v5456
        %v5489 = vadd.f32 %v5196, %v5457
        %v5490 = vadd.f32 %v5197, %v5458
        %v5491 = vadd.f32 %v5198, %v5459
        %v5492 = vadd.f32 %v5199, %v5460
        %v5493 = vadd.f32 %v5200, %v5461
        %v5494 = vadd.f32 %v5201, %v5462
        %v5495 = vadd.f32 %v5202, %v5463
        %v5496 = vadd.f32 %v5203, %v5464
        %v5497 = vadd.f32 %v5204, %v5465
        %v5498 = vadd.f32 %v5205, %v5466
        %v5499 = vadd.f32 %v5206, %v5467
        %v5500 = vadd.f32 %v5207, %v5468
        %v5501 = vadd.f32 %v5208, %v5469
        %v5502 = vadd.f32 %v5209, %v5470
        %v5503 = vadd.f32 %v5210, %v5471
        %v5504 = vadd.f32 %v5211, %v5472
        %v5505 = vadd.f32 %v5212, %v5473
        %v5506 = vadd.f32 %v5213, %v5474
        %v5507 = vadd.f32 %v5214, %v5475
        %v5508 = vadd.f32 %v5215, %v5476
        %v5509 = vadd.f32 %v5216, %v5477
        %v5510 = vadd.f32 %v5217, %v5478
        %v5511 = vadd.f32 %v5218, %v5479
        %v5512 = vadd.f32 %v5219, %v5480
        %v5513 = vadd.f32 %v5220, %v5481
        %v5514 = vadd.f32 %v5221, %v5482
        %v5515 = vadd.f32 %v5222, %v5483
        %v5516 = vadd.f32 %v5223, %v5484
        %v5517 = vadd.f32 %v5224, %v5485
        %v5518 = vadd.f32 %v5225, %v5486
        %v5519 = vadd.f32 %v5226, %v5487
        %5520 = vset.pattern.permute.xlu0 3
        %5521 = vperm.xlu0 %5520, %v4604
        %v5522 = vpop.permute.xlu0 %5521
        %5524 = vset.pattern.permute.xlu0 3
        %5525 = vperm.xlu0 %5524, %v4605
        %v5526 = vpop.permute.xlu0 %5525
        %5528 = vset.pattern.permute.xlu0 3
        %5529 = vperm.xlu0 %5528, %v4606
        %v5530 = vpop.permute.xlu0 %5529
        %5532 = vset.pattern.permute.xlu0 3
        %5533 = vperm.xlu0 %5532, %v4607
        %v5534 = vpop.permute.xlu0 %5533
        %5536 = vset.pattern.permute.xlu0 3
        %5537 = vperm.xlu0 %5536, %v4608
        %v5538 = vpop.permute.xlu0 %5537
        %5540 = vset.pattern.permute.xlu0 3
        %5541 = vperm.xlu0 %5540, %v4609
        %v5542 = vpop.permute.xlu0 %5541
        %5544 = vset.pattern.permute.xlu0 3
        %5545 = vperm.xlu0 %5544, %v4610
        %v5546 = vpop.permute.xlu0 %5545
        %5548 = vset.pattern.permute.xlu0 3
        %5549 = vperm.xlu0 %5548, %v4611
        %v5550 = vpop.permute.xlu0 %5549
        %5552 = vset.pattern.permute.xlu0 3
        %5553 = vperm.xlu0 %5552, %v4612
        %v5554 = vpop.permute.xlu0 %5553
        %5556 = vset.pattern.permute.xlu0 3
        %5557 = vperm.xlu0 %5556, %v4613
        %v5558 = vpop.permute.xlu0 %5557
        %5560 = vset.pattern.permute.xlu0 3
        %5561 = vperm.xlu0 %5560, %v4614
        %v5562 = vpop.permute.xlu0 %5561
        %5564 = vset.pattern.permute.xlu0 3
        %5565 = vperm.xlu0 %5564, %v4615
        %v5566 = vpop.permute.xlu0 %5565
        %5568 = vset.pattern.permute.xlu0 3
        %5569 = vperm.xlu0 %5568, %v4616
        %v5570 = vpop.permute.xlu0 %5569
        %5572 = vset.pattern.permute.xlu0 3
        %5573 = vperm.xlu0 %5572, %v4617
        %v5574 = vpop.permute.xlu0 %5573
        %5576 = vset.pattern.permute.xlu0 3
        %5577 = vperm.xlu0 %5576, %v4618
        %v5578 = vpop.permute.xlu0 %5577
        %5580 = vset.pattern.permute.xlu0 3
        %5581 = vperm.xlu0 %5580, %v4619
        %v5582 = vpop.permute.xlu0 %5581
        %5584 = vset.pattern.permute.xlu0 3
        %5585 = vperm.xlu0 %5584, %v4620
        %v5586 = vpop.permute.xlu0 %5585
        %5588 = vset.pattern.permute.xlu0 3
        %5589 = vperm.xlu0 %5588, %v4621
        %v5590 = vpop.permute.xlu0 %5589
        %5592 = vset.pattern.permute.xlu0 3
        %5593 = vperm.xlu0 %5592, %v4622
        %v5594 = vpop.permute.xlu0 %5593
        %5596 = vset.pattern.permute.xlu0 3
        %5597 = vperm.xlu0 %5596, %v4623
        %v5598 = vpop.permute.xlu0 %5597
        %5600 = vset.pattern.permute.xlu0 3
        %5601 = vperm.xlu0 %5600, %v4624
        %v5602 = vpop.permute.xlu0 %5601
        %5604 = vset.pattern.permute.xlu0 3
        %5605 = vperm.xlu0 %5604, %v4625
        %v5606 = vpop.permute.xlu0 %5605
        %5608 = vset.pattern.permute.xlu0 3
        %5609 = vperm.xlu0 %5608, %v4626
        %v5610 = vpop.permute.xlu0 %5609
        %5612 = vset.pattern.permute.xlu0 3
        %5613 = vperm.xlu0 %5612, %v4627
        %v5614 = vpop.permute.xlu0 %5613
        %5616 = vset.pattern.permute.xlu0 3
        %5617 = vperm.xlu0 %5616, %v4628
        %v5618 = vpop.permute.xlu0 %5617
        %5620 = vset.pattern.permute.xlu0 3
        %5621 = vperm.xlu0 %5620, %v4629
        %v5622 = vpop.permute.xlu0 %5621
        %5624 = vset.pattern.permute.xlu0 3
        %5625 = vperm.xlu0 %5624, %v4630
        %v5626 = vpop.permute.xlu0 %5625
        %5628 = vset.pattern.permute.xlu0 3
        %5629 = vperm.xlu0 %5628, %v4631
        %v5630 = vpop.permute.xlu0 %5629
        %5632 = vset.pattern.permute.xlu0 3
        %5633 = vperm.xlu0 %5632, %v4632
        %v5634 = vpop.permute.xlu0 %5633
        %5636 = vset.pattern.permute.xlu0 3
        %5637 = vperm.xlu0 %5636, %v4633
        %v5638 = vpop.permute.xlu0 %5637
        %5640 = vset.pattern.permute.xlu0 3
        %5641 = vperm.xlu0 %5640, %v4634
        %v5642 = vpop.permute.xlu0 %5641
        %5644 = vset.pattern.permute.xlu0 3
        %5645 = vperm.xlu0 %5644, %v4635
        %v5646 = vpop.permute.xlu0 %5645
        %v5648 = vmul.f32 %v4738, %v5522
        %v5649 = vmul.f32 %v4737, %v5526
        %v5650 = vmul.f32 %v4736, %v5530
        %v5651 = vmul.f32 %v4735, %v5534
        %v5652 = vmul.f32 %v4734, %v5538
        %v5653 = vmul.f32 %v4733, %v5542
        %v5654 = vmul.f32 %v4732, %v5546
        %v5655 = vmul.f32 %v4731, %v5550
        %v5656 = vmul.f32 %v4730, %v5554
        %v5657 = vmul.f32 %v4729, %v5558
        %v5658 = vmul.f32 %v4728, %v5562
        %v5659 = vmul.f32 %v4727, %v5566
        %v5660 = vmul.f32 %v4726, %v5570
        %v5661 = vmul.f32 %v4725, %v5574
        %v5662 = vmul.f32 %v4724, %v5578
        %v5663 = vmul.f32 %v4723, %v5582
        %v5664 = vmul.f32 %v4722, %v5586
        %v5665 = vmul.f32 %v4721, %v5590
        %v5666 = vmul.f32 %v4720, %v5594
        %v5667 = vmul.f32 %v4719, %v5598
        %v5668 = vmul.f32 %v4718, %v5602
        %v5669 = vmul.f32 %v4717, %v5606
        %v5670 = vmul.f32 %v4716, %v5610
        %v5671 = vmul.f32 %v4715, %v5614
        %v5672 = vmul.f32 %v4714, %v5618
        %v5673 = vmul.f32 %v4713, %v5622
        %v5674 = vmul.f32 %v4712, %v5626
        %v5675 = vmul.f32 %v4711, %v5630
        %v5676 = vmul.f32 %v4710, %v5634
        %v5677 = vmul.f32 %v4709, %v5638
        %v5678 = vmul.f32 %v4708, %v5642
        %v5679 = vmul.f32 %v4707, %v5646
        %v5680 = vlaneseq
        %v5681 = vshrl.u32 %v5680, 7
        %v5682 = vsub.s32 3, %v5681
        %v5683 = vrot.slane %v4602, %v5682
        %v5684 = vmul.f32 %v5648, %v5683
        %v5685 = vmul.f32 %v5649, %v5683
        %v5686 = vmul.f32 %v5650, %v5683
        %v5687 = vmul.f32 %v5651, %v5683
        %v5688 = vmul.f32 %v5652, %v5683
        %v5689 = vmul.f32 %v5653, %v5683
        %v5690 = vmul.f32 %v5654, %v5683
        %v5691 = vmul.f32 %v5655, %v5683
        %v5692 = vmul.f32 %v5656, %v5683
        %v5693 = vmul.f32 %v5657, %v5683
        %v5694 = vmul.f32 %v5658, %v5683
        %v5695 = vmul.f32 %v5659, %v5683
        %v5696 = vmul.f32 %v5660, %v5683
        %v5697 = vmul.f32 %v5661, %v5683
        %v5698 = vmul.f32 %v5662, %v5683
        %v5699 = vmul.f32 %v5663, %v5683
        %v5700 = vmul.f32 %v5664, %v5683
        %v5701 = vmul.f32 %v5665, %v5683
        %v5702 = vmul.f32 %v5666, %v5683
        %v5703 = vmul.f32 %v5667, %v5683
        %v5704 = vmul.f32 %v5668, %v5683
        %v5705 = vmul.f32 %v5669, %v5683
        %v5706 = vmul.f32 %v5670, %v5683
        %v5707 = vmul.f32 %v5671, %v5683
        %v5708 = vmul.f32 %v5672, %v5683
        %v5709 = vmul.f32 %v5673, %v5683
        %v5710 = vmul.f32 %v5674, %v5683
        %v5711 = vmul.f32 %v5675, %v5683
        %v5712 = vmul.f32 %v5676, %v5683
        %v5713 = vmul.f32 %v5677, %v5683
        %v5714 = vmul.f32 %v5678, %v5683
        %v5715 = vmul.f32 %v5679, %v5683
        %v5716 = vadd.f32 %v5488, %v5684
        %v5717 = vadd.f32 %v5489, %v5685
        %v5718 = vadd.f32 %v5490, %v5686
        %v5719 = vadd.f32 %v5491, %v5687
        %v5720 = vadd.f32 %v5492, %v5688
        %v5721 = vadd.f32 %v5493, %v5689
        %v5722 = vadd.f32 %v5494, %v5690
        %v5723 = vadd.f32 %v5495, %v5691
        %v5724 = vadd.f32 %v5496, %v5692
        %v5725 = vadd.f32 %v5497, %v5693
        %v5726 = vadd.f32 %v5498, %v5694
        %v5727 = vadd.f32 %v5499, %v5695
        %v5728 = vadd.f32 %v5500, %v5696
        %v5729 = vadd.f32 %v5501, %v5697
        %v5730 = vadd.f32 %v5502, %v5698
        %v5731 = vadd.f32 %v5503, %v5699
        %v5732 = vadd.f32 %v5504, %v5700
        %v5733 = vadd.f32 %v5505, %v5701
        %v5734 = vadd.f32 %v5506, %v5702
        %v5735 = vadd.f32 %v5507, %v5703
        %v5736 = vadd.f32 %v5508, %v5704
        %v5737 = vadd.f32 %v5509, %v5705
        %v5738 = vadd.f32 %v5510, %v5706
        %v5739 = vadd.f32 %v5511, %v5707
        %v5740 = vadd.f32 %v5512, %v5708
        %v5741 = vadd.f32 %v5513, %v5709
        %v5742 = vadd.f32 %v5514, %v5710
        %v5743 = vadd.f32 %v5515, %v5711
        %v5744 = vadd.f32 %v5516, %v5712
        %v5745 = vadd.f32 %v5517, %v5713
        %v5746 = vadd.f32 %v5518, %v5714
        %v5747 = vadd.f32 %v5519, %v5715
        %5748 = vset.pattern.permute.xlu0 5
        %5749 = vperm.xlu0 %5748, %v4604
        %v5750 = vpop.permute.xlu0 %5749
        %5752 = vset.pattern.permute.xlu0 5
        %5753 = vperm.xlu0 %5752, %v4605
        %v5754 = vpop.permute.xlu0 %5753
        %5756 = vset.pattern.permute.xlu0 5
        %5757 = vperm.xlu0 %5756, %v4606
        %v5758 = vpop.permute.xlu0 %5757
        %5760 = vset.pattern.permute.xlu0 5
        %5761 = vperm.xlu0 %5760, %v4607
        %v5762 = vpop.permute.xlu0 %5761
        %5764 = vset.pattern.permute.xlu0 5
        %5765 = vperm.xlu0 %5764, %v4608
        %v5766 = vpop.permute.xlu0 %5765
        %5768 = vset.pattern.permute.xlu0 5
        %5769 = vperm.xlu0 %5768, %v4609
        %v5770 = vpop.permute.xlu0 %5769
        %5772 = vset.pattern.permute.xlu0 5
        %5773 = vperm.xlu0 %5772, %v4610
        %v5774 = vpop.permute.xlu0 %5773
        %5776 = vset.pattern.permute.xlu0 5
        %5777 = vperm.xlu0 %5776, %v4611
        %v5778 = vpop.permute.xlu0 %5777
        %5780 = vset.pattern.permute.xlu0 5
        %5781 = vperm.xlu0 %5780, %v4612
        %v5782 = vpop.permute.xlu0 %5781
        %5784 = vset.pattern.permute.xlu0 5
        %5785 = vperm.xlu0 %5784, %v4613
        %v5786 = vpop.permute.xlu0 %5785
        %5788 = vset.pattern.permute.xlu0 5
        %5789 = vperm.xlu0 %5788, %v4614
        %v5790 = vpop.permute.xlu0 %5789
        %5792 = vset.pattern.permute.xlu0 5
        %5793 = vperm.xlu0 %5792, %v4615
        %v5794 = vpop.permute.xlu0 %5793
        %5796 = vset.pattern.permute.xlu0 5
        %5797 = vperm.xlu0 %5796, %v4616
        %v5798 = vpop.permute.xlu0 %5797
        %5800 = vset.pattern.permute.xlu0 5
        %5801 = vperm.xlu0 %5800, %v4617
        %v5802 = vpop.permute.xlu0 %5801
        %5804 = vset.pattern.permute.xlu0 5
        %5805 = vperm.xlu0 %5804, %v4618
        %v5806 = vpop.permute.xlu0 %5805
        %5808 = vset.pattern.permute.xlu0 5
        %5809 = vperm.xlu0 %5808, %v4619
        %v5810 = vpop.permute.xlu0 %5809
        %5812 = vset.pattern.permute.xlu0 5
        %5813 = vperm.xlu0 %5812, %v4620
        %v5814 = vpop.permute.xlu0 %5813
        %5816 = vset.pattern.permute.xlu0 5
        %5817 = vperm.xlu0 %5816, %v4621
        %v5818 = vpop.permute.xlu0 %5817
        %5820 = vset.pattern.permute.xlu0 5
        %5821 = vperm.xlu0 %5820, %v4622
        %v5822 = vpop.permute.xlu0 %5821
        %5824 = vset.pattern.permute.xlu0 5
        %5825 = vperm.xlu0 %5824, %v4623
        %v5826 = vpop.permute.xlu0 %5825
        %5828 = vset.pattern.permute.xlu0 5
        %5829 = vperm.xlu0 %5828, %v4624
        %v5830 = vpop.permute.xlu0 %5829
        %5832 = vset.pattern.permute.xlu0 5
        %5833 = vperm.xlu0 %5832, %v4625
        %v5834 = vpop.permute.xlu0 %5833
        %5836 = vset.pattern.permute.xlu0 5
        %5837 = vperm.xlu0 %5836, %v4626
        %v5838 = vpop.permute.xlu0 %5837
        %5840 = vset.pattern.permute.xlu0 5
        %5841 = vperm.xlu0 %5840, %v4627
        %v5842 = vpop.permute.xlu0 %5841
        %5844 = vset.pattern.permute.xlu0 5
        %5845 = vperm.xlu0 %5844, %v4628
        %v5846 = vpop.permute.xlu0 %5845
        %5848 = vset.pattern.permute.xlu0 5
        %5849 = vperm.xlu0 %5848, %v4629
        %v5850 = vpop.permute.xlu0 %5849
        %5852 = vset.pattern.permute.xlu0 5
        %5853 = vperm.xlu0 %5852, %v4630
        %v5854 = vpop.permute.xlu0 %5853
        %5856 = vset.pattern.permute.xlu0 5
        %5857 = vperm.xlu0 %5856, %v4631
        %v5858 = vpop.permute.xlu0 %5857
        %5860 = vset.pattern.permute.xlu0 5
        %5861 = vperm.xlu0 %5860, %v4632
        %v5862 = vpop.permute.xlu0 %5861
        %5864 = vset.pattern.permute.xlu0 5
        %5865 = vperm.xlu0 %5864, %v4633
        %v5866 = vpop.permute.xlu0 %5865
        %5868 = vset.pattern.permute.xlu0 5
        %5869 = vperm.xlu0 %5868, %v4634
        %v5870 = vpop.permute.xlu0 %5869
        %5872 = vset.pattern.permute.xlu0 5
        %5873 = vperm.xlu0 %5872, %v4635
        %v5874 = vpop.permute.xlu0 %5873
        %v5876 = vmul.f32 %v5290, %v5750
        %v5877 = vmul.f32 %v5289, %v5754
        %v5878 = vmul.f32 %v5288, %v5758
        %v5879 = vmul.f32 %v5287, %v5762
        %v5880 = vmul.f32 %v5286, %v5766
        %v5881 = vmul.f32 %v5285, %v5770
        %v5882 = vmul.f32 %v5284, %v5774
        %v5883 = vmul.f32 %v5283, %v5778
        %v5884 = vmul.f32 %v5282, %v5782
        %v5885 = vmul.f32 %v5281, %v5786
        %v5886 = vmul.f32 %v5280, %v5790
        %v5887 = vmul.f32 %v5279, %v5794
        %v5888 = vmul.f32 %v5278, %v5798
        %v5889 = vmul.f32 %v5277, %v5802
        %v5890 = vmul.f32 %v5276, %v5806
        %v5891 = vmul.f32 %v5275, %v5810
        %v5892 = vmul.f32 %v5274, %v5814
        %v5893 = vmul.f32 %v5273, %v5818
        %v5894 = vmul.f32 %v5272, %v5822
        %v5895 = vmul.f32 %v5271, %v5826
        %v5896 = vmul.f32 %v5270, %v5830
        %v5897 = vmul.f32 %v5269, %v5834
        %v5898 = vmul.f32 %v5268, %v5838
        %v5899 = vmul.f32 %v5267, %v5842
        %v5900 = vmul.f32 %v5266, %v5846
        %v5901 = vmul.f32 %v5265, %v5850
        %v5902 = vmul.f32 %v5264, %v5854
        %v5903 = vmul.f32 %v5263, %v5858
        %v5904 = vmul.f32 %v5262, %v5862
        %v5905 = vmul.f32 %v5261, %v5866
        %v5906 = vmul.f32 %v5260, %v5870
        %v5907 = vmul.f32 %v5291, %v5874
        %v5908 = vlaneseq
        %v5909 = vshrl.u32 %v5908, 7
        %v5910 = vsub.s32 5, %v5909
        %v5911 = vrot.slane %v4602, %v5910
        %v5912 = vmul.f32 %v5876, %v5911
        %v5913 = vmul.f32 %v5877, %v5911
        %v5914 = vmul.f32 %v5878, %v5911
        %v5915 = vmul.f32 %v5879, %v5911
        %v5916 = vmul.f32 %v5880, %v5911
        %v5917 = vmul.f32 %v5881, %v5911
        %v5918 = vmul.f32 %v5882, %v5911
        %v5919 = vmul.f32 %v5883, %v5911
        %v5920 = vmul.f32 %v5884, %v5911
        %v5921 = vmul.f32 %v5885, %v5911
        %v5922 = vmul.f32 %v5886, %v5911
        %v5923 = vmul.f32 %v5887, %v5911
        %v5924 = vmul.f32 %v5888, %v5911
        %v5925 = vmul.f32 %v5889, %v5911
        %v5926 = vmul.f32 %v5890, %v5911
        %v5927 = vmul.f32 %v5891, %v5911
        %v5928 = vmul.f32 %v5892, %v5911
        %v5929 = vmul.f32 %v5893, %v5911
        %v5930 = vmul.f32 %v5894, %v5911
        %v5931 = vmul.f32 %v5895, %v5911
        %v5932 = vmul.f32 %v5896, %v5911
        %v5933 = vmul.f32 %v5897, %v5911
        %v5934 = vmul.f32 %v5898, %v5911
        %v5935 = vmul.f32 %v5899, %v5911
        %v5936 = vmul.f32 %v5900, %v5911
        %v5937 = vmul.f32 %v5901, %v5911
        %v5938 = vmul.f32 %v5902, %v5911
        %v5939 = vmul.f32 %v5903, %v5911
        %v5940 = vmul.f32 %v5904, %v5911
        %v5941 = vmul.f32 %v5905, %v5911
        %v5942 = vmul.f32 %v5906, %v5911
        %v5943 = vmul.f32 %v5907, %v5911
        %v5944 = vadd.f32 %v5716, %v5912
        %v5945 = vadd.f32 %v5717, %v5913
        %v5946 = vadd.f32 %v5718, %v5914
        %v5947 = vadd.f32 %v5719, %v5915
        %v5948 = vadd.f32 %v5720, %v5916
        %v5949 = vadd.f32 %v5721, %v5917
        %v5950 = vadd.f32 %v5722, %v5918
        %v5951 = vadd.f32 %v5723, %v5919
        %v5952 = vadd.f32 %v5724, %v5920
        %v5953 = vadd.f32 %v5725, %v5921
        %v5954 = vadd.f32 %v5726, %v5922
        %v5955 = vadd.f32 %v5727, %v5923
        %v5956 = vadd.f32 %v5728, %v5924
        %v5957 = vadd.f32 %v5729, %v5925
        %v5958 = vadd.f32 %v5730, %v5926
        %v5959 = vadd.f32 %v5731, %v5927
        %v5960 = vadd.f32 %v5732, %v5928
        %v5961 = vadd.f32 %v5733, %v5929
        %v5962 = vadd.f32 %v5734, %v5930
        %v5963 = vadd.f32 %v5735, %v5931
        %v5964 = vadd.f32 %v5736, %v5932
        %v5965 = vadd.f32 %v5737, %v5933
        %v5966 = vadd.f32 %v5738, %v5934
        %v5967 = vadd.f32 %v5739, %v5935
        %v5968 = vadd.f32 %v5740, %v5936
        %v5969 = vadd.f32 %v5741, %v5937
        %v5970 = vadd.f32 %v5742, %v5938
        %v5971 = vadd.f32 %v5743, %v5939
        %v5972 = vadd.f32 %v5744, %v5940
        %v5973 = vadd.f32 %v5745, %v5941
        %v5974 = vadd.f32 %v5746, %v5942
        %v5975 = vadd.f32 %v5747, %v5943
        %5976 = vset.pattern.permute.xlu0 6
        %5977 = vperm.xlu0 %5976, %v4604
        %v5978 = vpop.permute.xlu0 %5977
        %5980 = vset.pattern.permute.xlu0 6
        %5981 = vperm.xlu0 %5980, %v4605
        %v5982 = vpop.permute.xlu0 %5981
        %5984 = vset.pattern.permute.xlu0 6
        %5985 = vperm.xlu0 %5984, %v4606
        %v5986 = vpop.permute.xlu0 %5985
        %5988 = vset.pattern.permute.xlu0 6
        %5989 = vperm.xlu0 %5988, %v4607
        %v5990 = vpop.permute.xlu0 %5989
        %5992 = vset.pattern.permute.xlu0 6
        %5993 = vperm.xlu0 %5992, %v4608
        %v5994 = vpop.permute.xlu0 %5993
        %5996 = vset.pattern.permute.xlu0 6
        %5997 = vperm.xlu0 %5996, %v4609
        %v5998 = vpop.permute.xlu0 %5997
        %6000 = vset.pattern.permute.xlu0 6
        %6001 = vperm.xlu0 %6000, %v4610
        %v6002 = vpop.permute.xlu0 %6001
        %6004 = vset.pattern.permute.xlu0 6
        %6005 = vperm.xlu0 %6004, %v4611
        %v6006 = vpop.permute.xlu0 %6005
        %6008 = vset.pattern.permute.xlu0 6
        %6009 = vperm.xlu0 %6008, %v4612
        %v6010 = vpop.permute.xlu0 %6009
        %6012 = vset.pattern.permute.xlu0 6
        %6013 = vperm.xlu0 %6012, %v4613
        %v6014 = vpop.permute.xlu0 %6013
        %6016 = vset.pattern.permute.xlu0 6
        %6017 = vperm.xlu0 %6016, %v4614
        %v6018 = vpop.permute.xlu0 %6017
        %6020 = vset.pattern.permute.xlu0 6
        %6021 = vperm.xlu0 %6020, %v4615
        %v6022 = vpop.permute.xlu0 %6021
        %6024 = vset.pattern.permute.xlu0 6
        %6025 = vperm.xlu0 %6024, %v4616
        %v6026 = vpop.permute.xlu0 %6025
        %6028 = vset.pattern.permute.xlu0 6
        %6029 = vperm.xlu0 %6028, %v4617
        %v6030 = vpop.permute.xlu0 %6029
        %6032 = vset.pattern.permute.xlu0 6
        %6033 = vperm.xlu0 %6032, %v4618
        %v6034 = vpop.permute.xlu0 %6033
        %6036 = vset.pattern.permute.xlu0 6
        %6037 = vperm.xlu0 %6036, %v4619
        %v6038 = vpop.permute.xlu0 %6037
        %6040 = vset.pattern.permute.xlu0 6
        %6041 = vperm.xlu0 %6040, %v4620
        %v6042 = vpop.permute.xlu0 %6041
        %6044 = vset.pattern.permute.xlu0 6
        %6045 = vperm.xlu0 %6044, %v4621
        %v6046 = vpop.permute.xlu0 %6045
        %6048 = vset.pattern.permute.xlu0 6
        %6049 = vperm.xlu0 %6048, %v4622
        %v6050 = vpop.permute.xlu0 %6049
        %6052 = vset.pattern.permute.xlu0 6
        %6053 = vperm.xlu0 %6052, %v4623
        %v6054 = vpop.permute.xlu0 %6053
        %6056 = vset.pattern.permute.xlu0 6
        %6057 = vperm.xlu0 %6056, %v4624
        %v6058 = vpop.permute.xlu0 %6057
        %6060 = vset.pattern.permute.xlu0 6
        %6061 = vperm.xlu0 %6060, %v4625
        %v6062 = vpop.permute.xlu0 %6061
        %6064 = vset.pattern.permute.xlu0 6
        %6065 = vperm.xlu0 %6064, %v4626
        %v6066 = vpop.permute.xlu0 %6065
        %6068 = vset.pattern.permute.xlu0 6
        %6069 = vperm.xlu0 %6068, %v4627
        %v6070 = vpop.permute.xlu0 %6069
        %6072 = vset.pattern.permute.xlu0 6
        %6073 = vperm.xlu0 %6072, %v4628
        %v6074 = vpop.permute.xlu0 %6073
        %6076 = vset.pattern.permute.xlu0 6
        %6077 = vperm.xlu0 %6076, %v4629
        %v6078 = vpop.permute.xlu0 %6077
        %6080 = vset.pattern.permute.xlu0 6
        %6081 = vperm.xlu0 %6080, %v4630
        %v6082 = vpop.permute.xlu0 %6081
        %6084 = vset.pattern.permute.xlu0 6
        %6085 = vperm.xlu0 %6084, %v4631
        %v6086 = vpop.permute.xlu0 %6085
        %6088 = vset.pattern.permute.xlu0 6
        %6089 = vperm.xlu0 %6088, %v4632
        %v6090 = vpop.permute.xlu0 %6089
        %6092 = vset.pattern.permute.xlu0 6
        %6093 = vperm.xlu0 %6092, %v4633
        %v6094 = vpop.permute.xlu0 %6093
        %6096 = vset.pattern.permute.xlu0 6
        %6097 = vperm.xlu0 %6096, %v4634
        %v6098 = vpop.permute.xlu0 %6097
        %6100 = vset.pattern.permute.xlu0 6
        %6101 = vperm.xlu0 %6100, %v4635
        %v6102 = vpop.permute.xlu0 %6101
        %v6104 = vmul.f32 %v4736, %v5978
        %v6105 = vmul.f32 %v4735, %v5982
        %v6106 = vmul.f32 %v4734, %v5986
        %v6107 = vmul.f32 %v4733, %v5990
        %v6108 = vmul.f32 %v4732, %v5994
        %v6109 = vmul.f32 %v4731, %v5998
        %v6110 = vmul.f32 %v4730, %v6002
        %v6111 = vmul.f32 %v4729, %v6006
        %v6112 = vmul.f32 %v4728, %v6010
        %v6113 = vmul.f32 %v4727, %v6014
        %v6114 = vmul.f32 %v4726, %v6018
        %v6115 = vmul.f32 %v4725, %v6022
        %v6116 = vmul.f32 %v4724, %v6026
        %v6117 = vmul.f32 %v4723, %v6030
        %v6118 = vmul.f32 %v4722, %v6034
        %v6119 = vmul.f32 %v4721, %v6038
        %v6120 = vmul.f32 %v4720, %v6042
        %v6121 = vmul.f32 %v4719, %v6046
        %v6122 = vmul.f32 %v4718, %v6050
        %v6123 = vmul.f32 %v4717, %v6054
        %v6124 = vmul.f32 %v4716, %v6058
        %v6125 = vmul.f32 %v4715, %v6062
        %v6126 = vmul.f32 %v4714, %v6066
        %v6127 = vmul.f32 %v4713, %v6070
        %v6128 = vmul.f32 %v4712, %v6074
        %v6129 = vmul.f32 %v4711, %v6078
        %v6130 = vmul.f32 %v4710, %v6082
        %v6131 = vmul.f32 %v4709, %v6086
        %v6132 = vmul.f32 %v4708, %v6090
        %v6133 = vmul.f32 %v4707, %v6094
        %v6134 = vmul.f32 %v4738, %v6098
        %v6135 = vmul.f32 %v4737, %v6102
        %v6136 = vlaneseq
        %v6137 = vshrl.u32 %v6136, 7
        %v6138 = vsub.s32 6, %v6137
        %v6139 = vrot.slane %v4602, %v6138
        %v6140 = vmul.f32 %v6104, %v6139
        %v6141 = vmul.f32 %v6105, %v6139
        %v6142 = vmul.f32 %v6106, %v6139
        %v6143 = vmul.f32 %v6107, %v6139
        %v6144 = vmul.f32 %v6108, %v6139
        %v6145 = vmul.f32 %v6109, %v6139
        %v6146 = vmul.f32 %v6110, %v6139
        %v6147 = vmul.f32 %v6111, %v6139
        %v6148 = vmul.f32 %v6112, %v6139
        %v6149 = vmul.f32 %v6113, %v6139
        %v6150 = vmul.f32 %v6114, %v6139
        %v6151 = vmul.f32 %v6115, %v6139
        %v6152 = vmul.f32 %v6116, %v6139
        %v6153 = vmul.f32 %v6117, %v6139
        %v6154 = vmul.f32 %v6118, %v6139
        %v6155 = vmul.f32 %v6119, %v6139
        %v6156 = vmul.f32 %v6120, %v6139
        %v6157 = vmul.f32 %v6121, %v6139
        %v6158 = vmul.f32 %v6122, %v6139
        %v6159 = vmul.f32 %v6123, %v6139
        %v6160 = vmul.f32 %v6124, %v6139
        %v6161 = vmul.f32 %v6125, %v6139
        %v6162 = vmul.f32 %v6126, %v6139
        %v6163 = vmul.f32 %v6127, %v6139
        %v6164 = vmul.f32 %v6128, %v6139
        %v6165 = vmul.f32 %v6129, %v6139
        %v6166 = vmul.f32 %v6130, %v6139
        %v6167 = vmul.f32 %v6131, %v6139
        %v6168 = vmul.f32 %v6132, %v6139
        %v6169 = vmul.f32 %v6133, %v6139
        %v6170 = vmul.f32 %v6134, %v6139
        %v6171 = vmul.f32 %v6135, %v6139
        %v6172 = vadd.f32 %v5944, %v6140
        %v6173 = vadd.f32 %v5945, %v6141
        %v6174 = vadd.f32 %v5946, %v6142
        %v6175 = vadd.f32 %v5947, %v6143
        %v6176 = vadd.f32 %v5948, %v6144
        %v6177 = vadd.f32 %v5949, %v6145
        %v6178 = vadd.f32 %v5950, %v6146
        %v6179 = vadd.f32 %v5951, %v6147
        %v6180 = vadd.f32 %v5952, %v6148
        %v6181 = vadd.f32 %v5953, %v6149
        %v6182 = vadd.f32 %v5954, %v6150
        %v6183 = vadd.f32 %v5955, %v6151
        %v6184 = vadd.f32 %v5956, %v6152
        %v6185 = vadd.f32 %v5957, %v6153
        %v6186 = vadd.f32 %v5958, %v6154
        %v6187 = vadd.f32 %v5959, %v6155
        %v6188 = vadd.f32 %v5960, %v6156
        %v6189 = vadd.f32 %v5961, %v6157
        %v6190 = vadd.f32 %v5962, %v6158
        %v6191 = vadd.f32 %v5963, %v6159
        %v6192 = vadd.f32 %v5964, %v6160
        %v6193 = vadd.f32 %v5965, %v6161
        %v6194 = vadd.f32 %v5966, %v6162
        %v6195 = vadd.f32 %v5967, %v6163
        %v6196 = vadd.f32 %v5968, %v6164
        %v6197 = vadd.f32 %v5969, %v6165
        %v6198 = vadd.f32 %v5970, %v6166
        %v6199 = vadd.f32 %v5971, %v6167
        %v6200 = vadd.f32 %v5972, %v6168
        %v6201 = vadd.f32 %v5973, %v6169
        %v6202 = vadd.f32 %v5974, %v6170
        %v6203 = vadd.f32 %v5975, %v6171
        %6204 = vset.pattern.permute.xlu0 7
        %6205 = vperm.xlu0 %6204, %v4604
        %v6206 = vpop.permute.xlu0 %6205
        %6208 = vset.pattern.permute.xlu0 7
        %6209 = vperm.xlu0 %6208, %v4605
        %v6210 = vpop.permute.xlu0 %6209
        %6212 = vset.pattern.permute.xlu0 7
        %6213 = vperm.xlu0 %6212, %v4606
        %v6214 = vpop.permute.xlu0 %6213
        %6216 = vset.pattern.permute.xlu0 7
        %6217 = vperm.xlu0 %6216, %v4607
        %v6218 = vpop.permute.xlu0 %6217
        %6220 = vset.pattern.permute.xlu0 7
        %6221 = vperm.xlu0 %6220, %v4608
        %v6222 = vpop.permute.xlu0 %6221
        %6224 = vset.pattern.permute.xlu0 7
        %6225 = vperm.xlu0 %6224, %v4609
        %v6226 = vpop.permute.xlu0 %6225
        %6228 = vset.pattern.permute.xlu0 7
        %6229 = vperm.xlu0 %6228, %v4610
        %v6230 = vpop.permute.xlu0 %6229
        %6232 = vset.pattern.permute.xlu0 7
        %6233 = vperm.xlu0 %6232, %v4611
        %v6234 = vpop.permute.xlu0 %6233
        %6236 = vset.pattern.permute.xlu0 7
        %6237 = vperm.xlu0 %6236, %v4612
        %v6238 = vpop.permute.xlu0 %6237
        %6240 = vset.pattern.permute.xlu0 7
        %6241 = vperm.xlu0 %6240, %v4613
        %v6242 = vpop.permute.xlu0 %6241
        %6244 = vset.pattern.permute.xlu0 7
        %6245 = vperm.xlu0 %6244, %v4614
        %v6246 = vpop.permute.xlu0 %6245
        %6248 = vset.pattern.permute.xlu0 7
        %6249 = vperm.xlu0 %6248, %v4615
        %v6250 = vpop.permute.xlu0 %6249
        %6252 = vset.pattern.permute.xlu0 7
        %6253 = vperm.xlu0 %6252, %v4616
        %v6254 = vpop.permute.xlu0 %6253
        %6256 = vset.pattern.permute.xlu0 7
        %6257 = vperm.xlu0 %6256, %v4617
        %v6258 = vpop.permute.xlu0 %6257
        %6260 = vset.pattern.permute.xlu0 7
        %6261 = vperm.xlu0 %6260, %v4618
        %v6262 = vpop.permute.xlu0 %6261
        %6264 = vset.pattern.permute.xlu0 7
        %6265 = vperm.xlu0 %6264, %v4619
        %v6266 = vpop.permute.xlu0 %6265
        %6268 = vset.pattern.permute.xlu0 7
        %6269 = vperm.xlu0 %6268, %v4620
        %v6270 = vpop.permute.xlu0 %6269
        %6272 = vset.pattern.permute.xlu0 7
        %6273 = vperm.xlu0 %6272, %v4621
        %v6274 = vpop.permute.xlu0 %6273
        %6276 = vset.pattern.permute.xlu0 7
        %6277 = vperm.xlu0 %6276, %v4622
        %v6278 = vpop.permute.xlu0 %6277
        %6280 = vset.pattern.permute.xlu0 7
        %6281 = vperm.xlu0 %6280, %v4623
        %v6282 = vpop.permute.xlu0 %6281
        %6284 = vset.pattern.permute.xlu0 7
        %6285 = vperm.xlu0 %6284, %v4624
        %v6286 = vpop.permute.xlu0 %6285
        %6288 = vset.pattern.permute.xlu0 7
        %6289 = vperm.xlu0 %6288, %v4625
        %v6290 = vpop.permute.xlu0 %6289
        %6292 = vset.pattern.permute.xlu0 7
        %6293 = vperm.xlu0 %6292, %v4626
        %v6294 = vpop.permute.xlu0 %6293
        %6296 = vset.pattern.permute.xlu0 7
        %6297 = vperm.xlu0 %6296, %v4627
        %v6298 = vpop.permute.xlu0 %6297
        %6300 = vset.pattern.permute.xlu0 7
        %6301 = vperm.xlu0 %6300, %v4628
        %v6302 = vpop.permute.xlu0 %6301
        %6304 = vset.pattern.permute.xlu0 7
        %6305 = vperm.xlu0 %6304, %v4629
        %v6306 = vpop.permute.xlu0 %6305
        %6308 = vset.pattern.permute.xlu0 7
        %6309 = vperm.xlu0 %6308, %v4630
        %v6310 = vpop.permute.xlu0 %6309
        %6312 = vset.pattern.permute.xlu0 7
        %6313 = vperm.xlu0 %6312, %v4631
        %v6314 = vpop.permute.xlu0 %6313
        %6316 = vset.pattern.permute.xlu0 7
        %6317 = vperm.xlu0 %6316, %v4632
        %v6318 = vpop.permute.xlu0 %6317
        %6320 = vset.pattern.permute.xlu0 7
        %6321 = vperm.xlu0 %6320, %v4633
        %v6322 = vpop.permute.xlu0 %6321
        %6324 = vset.pattern.permute.xlu0 7
        %6325 = vperm.xlu0 %6324, %v4634
        %v6326 = vpop.permute.xlu0 %6325
        %6328 = vset.pattern.permute.xlu0 7
        %6329 = vperm.xlu0 %6328, %v4635
        %v6330 = vpop.permute.xlu0 %6329
        %v6332 = vmul.f32 %v4572, %v6206
        %v6333 = vmul.f32 %v4573, %v6210
        %v6334 = vmul.f32 %v4574, %v6214
        %v6335 = vmul.f32 %v4575, %v6218
        %v6336 = vmul.f32 %v4576, %v6222
        %v6337 = vmul.f32 %v4577, %v6226
        %v6338 = vmul.f32 %v4578, %v6230
        %v6339 = vmul.f32 %v4579, %v6234
        %v6340 = vmul.f32 %v4580, %v6238
        %v6341 = vmul.f32 %v4581, %v6242
        %v6342 = vmul.f32 %v4582, %v6246
        %v6343 = vmul.f32 %v4583, %v6250
        %v6344 = vmul.f32 %v4584, %v6254
        %v6345 = vmul.f32 %v4585, %v6258
        %v6346 = vmul.f32 %v4586, %v6262
        %v6347 = vmul.f32 %v4587, %v6266
        %v6348 = vmul.f32 %v4588, %v6270
        %v6349 = vmul.f32 %v4589, %v6274
        %v6350 = vmul.f32 %v4590, %v6278
        %v6351 = vmul.f32 %v4591, %v6282
        %v6352 = vmul.f32 %v4592, %v6286
        %v6353 = vmul.f32 %v4593, %v6290
        %v6354 = vmul.f32 %v4594, %v6294
        %v6355 = vmul.f32 %v4595, %v6298
        %v6356 = vmul.f32 %v4596, %v6302
        %v6357 = vmul.f32 %v4597, %v6306
        %v6358 = vmul.f32 %v4598, %v6310
        %v6359 = vmul.f32 %v4599, %v6314
        %v6360 = vmul.f32 %v4600, %v6318
        %v6361 = vmul.f32 %v4601, %v6322
        %v6362 = vmul.f32 %v4570, %v6326
        %v6363 = vmul.f32 %v4571, %v6330
        %v6364 = vlaneseq
        %v6365 = vshrl.u32 %v6364, 7
        %v6366 = vsub.s32 7, %v6365
        %v6367 = vrot.slane %v4602, %v6366
        %v6368 = vmul.f32 %v6332, %v6367
        %v6369 = vmul.f32 %v6333, %v6367
        %v6370 = vmul.f32 %v6334, %v6367
        %v6371 = vmul.f32 %v6335, %v6367
        %v6372 = vmul.f32 %v6336, %v6367
        %v6373 = vmul.f32 %v6337, %v6367
        %v6374 = vmul.f32 %v6338, %v6367
        %v6375 = vmul.f32 %v6339, %v6367
        %v6376 = vmul.f32 %v6340, %v6367
        %v6377 = vmul.f32 %v6341, %v6367
        %v6378 = vmul.f32 %v6342, %v6367
        %v6379 = vmul.f32 %v6343, %v6367
        %v6380 = vmul.f32 %v6344, %v6367
        %v6381 = vmul.f32 %v6345, %v6367
        %v6382 = vmul.f32 %v6346, %v6367
        %v6383 = vmul.f32 %v6347, %v6367
        %v6384 = vmul.f32 %v6348, %v6367
        %v6385 = vmul.f32 %v6349, %v6367
        %v6386 = vmul.f32 %v6350, %v6367
        %v6387 = vmul.f32 %v6351, %v6367
        %v6388 = vmul.f32 %v6352, %v6367
        %v6389 = vmul.f32 %v6353, %v6367
        %v6390 = vmul.f32 %v6354, %v6367
        %v6391 = vmul.f32 %v6355, %v6367
        %v6392 = vmul.f32 %v6356, %v6367
        %v6393 = vmul.f32 %v6357, %v6367
        %v6394 = vmul.f32 %v6358, %v6367
        %v6395 = vmul.f32 %v6359, %v6367
        %v6396 = vmul.f32 %v6360, %v6367
        %v6397 = vmul.f32 %v6361, %v6367
        %v6398 = vmul.f32 %v6362, %v6367
        %v6399 = vmul.f32 %v6363, %v6367
        %v6400 = vadd.f32 %v6172, %v6368
        %v6401 = vadd.f32 %v6173, %v6369
        %v6402 = vadd.f32 %v6174, %v6370
        %v6403 = vadd.f32 %v6175, %v6371
        %v6404 = vadd.f32 %v6176, %v6372
        %v6405 = vadd.f32 %v6177, %v6373
        %v6406 = vadd.f32 %v6178, %v6374
        %v6407 = vadd.f32 %v6179, %v6375
        %v6408 = vadd.f32 %v6180, %v6376
        %v6409 = vadd.f32 %v6181, %v6377
        %v6410 = vadd.f32 %v6182, %v6378
        %v6411 = vadd.f32 %v6183, %v6379
        %v6412 = vadd.f32 %v6184, %v6380
        %v6413 = vadd.f32 %v6185, %v6381
        %v6414 = vadd.f32 %v6186, %v6382
        %v6415 = vadd.f32 %v6187, %v6383
        %v6416 = vadd.f32 %v6188, %v6384
        %v6417 = vadd.f32 %v6189, %v6385
        %v6418 = vadd.f32 %v6190, %v6386
        %v6419 = vadd.f32 %v6191, %v6387
        %v6420 = vadd.f32 %v6192, %v6388
        %v6421 = vadd.f32 %v6193, %v6389
        %v6422 = vadd.f32 %v6194, %v6390
        %v6423 = vadd.f32 %v6195, %v6391
        %v6424 = vadd.f32 %v6196, %v6392
        %v6425 = vadd.f32 %v6197, %v6393
        %v6426 = vadd.f32 %v6198, %v6394
        %v6427 = vadd.f32 %v6199, %v6395
        %v6428 = vadd.f32 %v6200, %v6396
        %v6429 = vadd.f32 %v6201, %v6397
        %v6430 = vadd.f32 %v6202, %v6398
        %v6431 = vadd.f32 %v6203, %v6399
        %6432 = vset.pattern.permute.xlu0 8
        %6433 = vperm.xlu0 %6432, %v4604
        %v6434 = vpop.permute.xlu0 %6433
        %6436 = vset.pattern.permute.xlu0 8
        %6437 = vperm.xlu0 %6436, %v4605
        %v6438 = vpop.permute.xlu0 %6437
        %6440 = vset.pattern.permute.xlu0 8
        %6441 = vperm.xlu0 %6440, %v4606
        %v6442 = vpop.permute.xlu0 %6441
        %6444 = vset.pattern.permute.xlu0 8
        %6445 = vperm.xlu0 %6444, %v4607
        %v6446 = vpop.permute.xlu0 %6445
        %6448 = vset.pattern.permute.xlu0 8
        %6449 = vperm.xlu0 %6448, %v4608
        %v6450 = vpop.permute.xlu0 %6449
        %6452 = vset.pattern.permute.xlu0 8
        %6453 = vperm.xlu0 %6452, %v4609
        %v6454 = vpop.permute.xlu0 %6453
        %6456 = vset.pattern.permute.xlu0 8
        %6457 = vperm.xlu0 %6456, %v4610
        %v6458 = vpop.permute.xlu0 %6457
        %6460 = vset.pattern.permute.xlu0 8
        %6461 = vperm.xlu0 %6460, %v4611
        %v6462 = vpop.permute.xlu0 %6461
        %6464 = vset.pattern.permute.xlu0 8
        %6465 = vperm.xlu0 %6464, %v4612
        %v6466 = vpop.permute.xlu0 %6465
        %6468 = vset.pattern.permute.xlu0 8
        %6469 = vperm.xlu0 %6468, %v4613
        %v6470 = vpop.permute.xlu0 %6469
        %6472 = vset.pattern.permute.xlu0 8
        %6473 = vperm.xlu0 %6472, %v4614
        %v6474 = vpop.permute.xlu0 %6473
        %6476 = vset.pattern.permute.xlu0 8
        %6477 = vperm.xlu0 %6476, %v4615
        %v6478 = vpop.permute.xlu0 %6477
        %6480 = vset.pattern.permute.xlu0 8
        %6481 = vperm.xlu0 %6480, %v4616
        %v6482 = vpop.permute.xlu0 %6481
        %6484 = vset.pattern.permute.xlu0 8
        %6485 = vperm.xlu0 %6484, %v4617
        %v6486 = vpop.permute.xlu0 %6485
        %6488 = vset.pattern.permute.xlu0 8
        %6489 = vperm.xlu0 %6488, %v4618
        %v6490 = vpop.permute.xlu0 %6489
        %6492 = vset.pattern.permute.xlu0 8
        %6493 = vperm.xlu0 %6492, %v4619
        %v6494 = vpop.permute.xlu0 %6493
        %6496 = vset.pattern.permute.xlu0 8
        %6497 = vperm.xlu0 %6496, %v4620
        %v6498 = vpop.permute.xlu0 %6497
        %6500 = vset.pattern.permute.xlu0 8
        %6501 = vperm.xlu0 %6500, %v4621
        %v6502 = vpop.permute.xlu0 %6501
        %6504 = vset.pattern.permute.xlu0 8
        %6505 = vperm.xlu0 %6504, %v4622
        %v6506 = vpop.permute.xlu0 %6505
        %6508 = vset.pattern.permute.xlu0 8
        %6509 = vperm.xlu0 %6508, %v4623
        %v6510 = vpop.permute.xlu0 %6509
        %6512 = vset.pattern.permute.xlu0 8
        %6513 = vperm.xlu0 %6512, %v4624
        %v6514 = vpop.permute.xlu0 %6513
        %6516 = vset.pattern.permute.xlu0 8
        %6517 = vperm.xlu0 %6516, %v4625
        %v6518 = vpop.permute.xlu0 %6517
        %6520 = vset.pattern.permute.xlu0 8
        %6521 = vperm.xlu0 %6520, %v4626
        %v6522 = vpop.permute.xlu0 %6521
        %6524 = vset.pattern.permute.xlu0 8
        %6525 = vperm.xlu0 %6524, %v4627
        %v6526 = vpop.permute.xlu0 %6525
        %6528 = vset.pattern.permute.xlu0 8
        %6529 = vperm.xlu0 %6528, %v4628
        %v6530 = vpop.permute.xlu0 %6529
        %6532 = vset.pattern.permute.xlu0 8
        %6533 = vperm.xlu0 %6532, %v4629
        %v6534 = vpop.permute.xlu0 %6533
        %6536 = vset.pattern.permute.xlu0 8
        %6537 = vperm.xlu0 %6536, %v4630
        %v6538 = vpop.permute.xlu0 %6537
        %6540 = vset.pattern.permute.xlu0 8
        %6541 = vperm.xlu0 %6540, %v4631
        %v6542 = vpop.permute.xlu0 %6541
        %6544 = vset.pattern.permute.xlu0 8
        %6545 = vperm.xlu0 %6544, %v4632
        %v6546 = vpop.permute.xlu0 %6545
        %6548 = vset.pattern.permute.xlu0 8
        %6549 = vperm.xlu0 %6548, %v4633
        %v6550 = vpop.permute.xlu0 %6549
        %6552 = vset.pattern.permute.xlu0 8
        %6553 = vperm.xlu0 %6552, %v4634
        %v6554 = vpop.permute.xlu0 %6553
        %6556 = vset.pattern.permute.xlu0 8
        %6557 = vperm.xlu0 %6556, %v4635
        %v6558 = vpop.permute.xlu0 %6557
        %v6560 = vmul.f32 %v5288, %v6434
        %v6561 = vmul.f32 %v5287, %v6438
        %v6562 = vmul.f32 %v5286, %v6442
        %v6563 = vmul.f32 %v5285, %v6446
        %v6564 = vmul.f32 %v5284, %v6450
        %v6565 = vmul.f32 %v5283, %v6454
        %v6566 = vmul.f32 %v5282, %v6458
        %v6567 = vmul.f32 %v5281, %v6462
        %v6568 = vmul.f32 %v5280, %v6466
        %v6569 = vmul.f32 %v5279, %v6470
        %v6570 = vmul.f32 %v5278, %v6474
        %v6571 = vmul.f32 %v5277, %v6478
        %v6572 = vmul.f32 %v5276, %v6482
        %v6573 = vmul.f32 %v5275, %v6486
        %v6574 = vmul.f32 %v5274, %v6490
        %v6575 = vmul.f32 %v5273, %v6494
        %v6576 = vmul.f32 %v5272, %v6498
        %v6577 = vmul.f32 %v5271, %v6502
        %v6578 = vmul.f32 %v5270, %v6506
        %v6579 = vmul.f32 %v5269, %v6510
        %v6580 = vmul.f32 %v5268, %v6514
        %v6581 = vmul.f32 %v5267, %v6518
        %v6582 = vmul.f32 %v5266, %v6522
        %v6583 = vmul.f32 %v5265, %v6526
        %v6584 = vmul.f32 %v5264, %v6530
        %v6585 = vmul.f32 %v5263, %v6534
        %v6586 = vmul.f32 %v5262, %v6538
        %v6587 = vmul.f32 %v5261, %v6542
        %v6588 = vmul.f32 %v5260, %v6546
        %v6589 = vmul.f32 %v5291, %v6550
        %v6590 = vmul.f32 %v5290, %v6554
        %v6591 = vmul.f32 %v5289, %v6558
        %v6592 = vlaneseq
        %v6593 = vshrl.u32 %v6592, 7
        %v6594 = vsub.s32 0, %v6593
        %v6595 = vrot.slane %v4603, %v6594
        %v6596 = vmul.f32 %v6560, %v6595
        %v6597 = vmul.f32 %v6561, %v6595
        %v6598 = vmul.f32 %v6562, %v6595
        %v6599 = vmul.f32 %v6563, %v6595
        %v6600 = vmul.f32 %v6564, %v6595
        %v6601 = vmul.f32 %v6565, %v6595
        %v6602 = vmul.f32 %v6566, %v6595
        %v6603 = vmul.f32 %v6567, %v6595
        %v6604 = vmul.f32 %v6568, %v6595
        %v6605 = vmul.f32 %v6569, %v6595
        %v6606 = vmul.f32 %v6570, %v6595
        %v6607 = vmul.f32 %v6571, %v6595
        %v6608 = vmul.f32 %v6572, %v6595
        %v6609 = vmul.f32 %v6573, %v6595
        %v6610 = vmul.f32 %v6574, %v6595
        %v6611 = vmul.f32 %v6575, %v6595
        %v6612 = vmul.f32 %v6576, %v6595
        %v6613 = vmul.f32 %v6577, %v6595
        %v6614 = vmul.f32 %v6578, %v6595
        %v6615 = vmul.f32 %v6579, %v6595
        %v6616 = vmul.f32 %v6580, %v6595
        %v6617 = vmul.f32 %v6581, %v6595
        %v6618 = vmul.f32 %v6582, %v6595
        %v6619 = vmul.f32 %v6583, %v6595
        %v6620 = vmul.f32 %v6584, %v6595
        %v6621 = vmul.f32 %v6585, %v6595
        %v6622 = vmul.f32 %v6586, %v6595
        %v6623 = vmul.f32 %v6587, %v6595
        %v6624 = vmul.f32 %v6588, %v6595
        %v6625 = vmul.f32 %v6589, %v6595
        %v6626 = vmul.f32 %v6590, %v6595
        %v6627 = vmul.f32 %v6591, %v6595
        %v6628 = vadd.f32 %v6400, %v6596
        %v6629 = vadd.f32 %v6401, %v6597
        %v6630 = vadd.f32 %v6402, %v6598
        %v6631 = vadd.f32 %v6403, %v6599
        %v6632 = vadd.f32 %v6404, %v6600
        %v6633 = vadd.f32 %v6405, %v6601
        %v6634 = vadd.f32 %v6406, %v6602
        %v6635 = vadd.f32 %v6407, %v6603
        %v6636 = vadd.f32 %v6408, %v6604
        %v6637 = vadd.f32 %v6409, %v6605
        %v6638 = vadd.f32 %v6410, %v6606
        %v6639 = vadd.f32 %v6411, %v6607
        %v6640 = vadd.f32 %v6412, %v6608
        %v6641 = vadd.f32 %v6413, %v6609
        %v6642 = vadd.f32 %v6414, %v6610
        %v6643 = vadd.f32 %v6415, %v6611
        %v6644 = vadd.f32 %v6416, %v6612
        %v6645 = vadd.f32 %v6417, %v6613
        %v6646 = vadd.f32 %v6418, %v6614
        %v6647 = vadd.f32 %v6419, %v6615
        %v6648 = vadd.f32 %v6420, %v6616
        %v6649 = vadd.f32 %v6421, %v6617
        %v6650 = vadd.f32 %v6422, %v6618
        %v6651 = vadd.f32 %v6423, %v6619
        %v6652 = vadd.f32 %v6424, %v6620
        %v6653 = vadd.f32 %v6425, %v6621
        %v6654 = vadd.f32 %v6426, %v6622
        %v6655 = vadd.f32 %v6427, %v6623
        %v6656 = vadd.f32 %v6428, %v6624
        %v6657 = vadd.f32 %v6429, %v6625
        %v6658 = vadd.f32 %v6430, %v6626
        %v6659 = vadd.f32 %v6431, %v6627
        %v6660 = vld [vmem:[%s8] sm:$0x1]
        %v6662 = vlaneseq
        %v6663 = vshrl.u32 %v6662, 7
        %v6664 = vsub.s32 0, %v6663
        %v6665 = vrot.slane %v6660, %v6664
        %v6667 = vadd.f32 %v6628, %v6665
        %v6668 = vadd.f32 %v6629, %v6665
        %v6669 = vadd.f32 %v6630, %v6665
        %v6670 = vadd.f32 %v6631, %v6665
        %v6671 = vadd.f32 %v6632, %v6665
        %v6672 = vadd.f32 %v6633, %v6665
        %v6673 = vadd.f32 %v6634, %v6665
        %v6674 = vadd.f32 %v6635, %v6665
        %v6675 = vadd.f32 %v6636, %v6665
        %v6676 = vadd.f32 %v6637, %v6665
        %v6677 = vadd.f32 %v6638, %v6665
        %v6678 = vadd.f32 %v6639, %v6665
        %v6679 = vadd.f32 %v6640, %v6665
        %v6680 = vadd.f32 %v6641, %v6665
        %v6681 = vadd.f32 %v6642, %v6665
        %v6682 = vadd.f32 %v6643, %v6665
        %v6683 = vadd.f32 %v6644, %v6665
        %v6684 = vadd.f32 %v6645, %v6665
        %v6685 = vadd.f32 %v6646, %v6665
        %v6686 = vadd.f32 %v6647, %v6665
        %v6687 = vadd.f32 %v6648, %v6665
        %v6688 = vadd.f32 %v6649, %v6665
        %v6689 = vadd.f32 %v6650, %v6665
        %v6690 = vadd.f32 %v6651, %v6665
        %v6691 = vadd.f32 %v6652, %v6665
        %v6692 = vadd.f32 %v6653, %v6665
        %v6693 = vadd.f32 %v6654, %v6665
        %v6694 = vadd.f32 %v6655, %v6665
        %v6695 = vadd.f32 %v6656, %v6665
        %v6696 = vadd.f32 %v6657, %v6665
        %v6697 = vadd.f32 %v6658, %v6665
        %v6698 = vadd.f32 %v6659, %v6665
        %v6699 = vsel %vm506, %v6667, 0.0
        %6700 = vadd.xlane.f32.xlu0 %v6699
        %v6701 = vpop.xlane.xlu0 %6700
        %v6702 = vsel %vm506, %v6668, 0.0
        %6703 = vadd.xlane.f32.xlu0 %v6702
        %v6704 = vpop.xlane.xlu0 %6703
        %v6705 = vsel %vm506, %v6669, 0.0
        %6706 = vadd.xlane.f32.xlu0 %v6705
        %v6707 = vpop.xlane.xlu0 %6706
        %v6708 = vsel %vm506, %v6670, 0.0
        %6709 = vadd.xlane.f32.xlu0 %v6708
        %v6710 = vpop.xlane.xlu0 %6709
        %v6711 = vsel %vm506, %v6671, 0.0
        %6712 = vadd.xlane.f32.xlu0 %v6711
        %v6713 = vpop.xlane.xlu0 %6712
        %v6714 = vsel %vm506, %v6672, 0.0
        %6715 = vadd.xlane.f32.xlu0 %v6714
        %v6716 = vpop.xlane.xlu0 %6715
        %v6717 = vsel %vm506, %v6673, 0.0
        %6718 = vadd.xlane.f32.xlu0 %v6717
        %v6719 = vpop.xlane.xlu0 %6718
        %v6720 = vsel %vm506, %v6674, 0.0
        %6721 = vadd.xlane.f32.xlu0 %v6720
        %v6722 = vpop.xlane.xlu0 %6721
        %v6723 = vsel %vm506, %v6675, 0.0
        %6724 = vadd.xlane.f32.xlu0 %v6723
        %v6725 = vpop.xlane.xlu0 %6724
        %v6726 = vsel %vm506, %v6676, 0.0
        %6727 = vadd.xlane.f32.xlu0 %v6726
        %v6728 = vpop.xlane.xlu0 %6727
        %v6729 = vsel %vm506, %v6677, 0.0
        %6730 = vadd.xlane.f32.xlu0 %v6729
        %v6731 = vpop.xlane.xlu0 %6730
        %v6732 = vsel %vm506, %v6678, 0.0
        %6733 = vadd.xlane.f32.xlu0 %v6732
        %v6734 = vpop.xlane.xlu0 %6733
        %v6735 = vsel %vm506, %v6679, 0.0
        %6736 = vadd.xlane.f32.xlu0 %v6735
        %v6737 = vpop.xlane.xlu0 %6736
        %v6738 = vsel %vm506, %v6680, 0.0
        %6739 = vadd.xlane.f32.xlu0 %v6738
        %v6740 = vpop.xlane.xlu0 %6739
        %v6741 = vsel %vm506, %v6681, 0.0
        %6742 = vadd.xlane.f32.xlu0 %v6741
        %v6743 = vpop.xlane.xlu0 %6742
        %v6744 = vsel %vm506, %v6682, 0.0
        %6745 = vadd.xlane.f32.xlu0 %v6744
        %v6746 = vpop.xlane.xlu0 %6745
        %v6747 = vsel %vm506, %v6683, 0.0
        %6748 = vadd.xlane.f32.xlu0 %v6747
        %v6749 = vpop.xlane.xlu0 %6748
        %v6750 = vsel %vm506, %v6684, 0.0
        %6751 = vadd.xlane.f32.xlu0 %v6750
        %v6752 = vpop.xlane.xlu0 %6751
        %v6753 = vsel %vm506, %v6685, 0.0
        %6754 = vadd.xlane.f32.xlu0 %v6753
        %v6755 = vpop.xlane.xlu0 %6754
        %v6756 = vsel %vm506, %v6686, 0.0
        %6757 = vadd.xlane.f32.xlu0 %v6756
        %v6758 = vpop.xlane.xlu0 %6757
        %v6759 = vsel %vm506, %v6687, 0.0
        %6760 = vadd.xlane.f32.xlu0 %v6759
        %v6761 = vpop.xlane.xlu0 %6760
        %v6762 = vsel %vm506, %v6688, 0.0
        %6763 = vadd.xlane.f32.xlu0 %v6762
        %v6764 = vpop.xlane.xlu0 %6763
        %v6765 = vsel %vm506, %v6689, 0.0
        %6766 = vadd.xlane.f32.xlu0 %v6765
        %v6767 = vpop.xlane.xlu0 %6766
        %v6768 = vsel %vm506, %v6690, 0.0
        %6769 = vadd.xlane.f32.xlu0 %v6768
        %v6770 = vpop.xlane.xlu0 %6769
        %v6771 = vsel %vm506, %v6691, 0.0
        %6772 = vadd.xlane.f32.xlu0 %v6771
        %v6773 = vpop.xlane.xlu0 %6772
        %v6774 = vsel %vm506, %v6692, 0.0
        %6775 = vadd.xlane.f32.xlu0 %v6774
        %v6776 = vpop.xlane.xlu0 %6775
        %v6777 = vsel %vm506, %v6693, 0.0
        %6778 = vadd.xlane.f32.xlu0 %v6777
        %v6779 = vpop.xlane.xlu0 %6778
        %v6780 = vsel %vm506, %v6694, 0.0
        %6781 = vadd.xlane.f32.xlu0 %v6780
        %v6782 = vpop.xlane.xlu0 %6781
        %v6783 = vsel %vm506, %v6695, 0.0
        %6784 = vadd.xlane.f32.xlu0 %v6783
        %v6785 = vpop.xlane.xlu0 %6784
        %v6786 = vsel %vm506, %v6696, 0.0
        %6787 = vadd.xlane.f32.xlu0 %v6786
        %v6788 = vpop.xlane.xlu0 %6787
        %v6789 = vsel %vm506, %v6697, 0.0
        %6790 = vadd.xlane.f32.xlu0 %v6789
        %v6791 = vpop.xlane.xlu0 %6790
        %v6792 = vsel %vm506, %v6698, 0.0
        %6793 = vadd.xlane.f32.xlu0 %v6792
        %v6794 = vpop.xlane.xlu0 %6793
        %v6795 = vmul.f32 %v6701, %v603
        %v6796 = vmul.f32 %v6704, %v603
        %v6797 = vmul.f32 %v6707, %v603
        %v6798 = vmul.f32 %v6710, %v603
        %v6799 = vmul.f32 %v6713, %v603
        %v6800 = vmul.f32 %v6716, %v603
        %v6801 = vmul.f32 %v6719, %v603
        %v6802 = vmul.f32 %v6722, %v603
        %v6803 = vmul.f32 %v6725, %v603
        %v6804 = vmul.f32 %v6728, %v603
        %v6805 = vmul.f32 %v6731, %v603
        %v6806 = vmul.f32 %v6734, %v603
        %v6807 = vmul.f32 %v6737, %v603
        %v6808 = vmul.f32 %v6740, %v603
        %v6809 = vmul.f32 %v6743, %v603
        %v6810 = vmul.f32 %v6746, %v603
        %v6811 = vmul.f32 %v6749, %v603
        %v6812 = vmul.f32 %v6752, %v603
        %v6813 = vmul.f32 %v6755, %v603
        %v6814 = vmul.f32 %v6758, %v603
        %v6815 = vmul.f32 %v6761, %v603
        %v6816 = vmul.f32 %v6764, %v603
        %v6817 = vmul.f32 %v6767, %v603
        %v6818 = vmul.f32 %v6770, %v603
        %v6819 = vmul.f32 %v6773, %v603
        %v6820 = vmul.f32 %v6776, %v603
        %v6821 = vmul.f32 %v6779, %v603
        %v6822 = vmul.f32 %v6782, %v603
        %v6823 = vmul.f32 %v6785, %v603
        %v6824 = vmul.f32 %v6788, %v603
        %v6825 = vmul.f32 %v6791, %v603
        %v6826 = vmul.f32 %v6794, %v603
        %v6827 = vsub.f32 %v6667, %v6795
        %v6828 = vsub.f32 %v6668, %v6796
        %v6829 = vsub.f32 %v6669, %v6797
        %v6830 = vsub.f32 %v6670, %v6798
        %v6831 = vsub.f32 %v6671, %v6799
        %v6832 = vsub.f32 %v6672, %v6800
        %v6833 = vsub.f32 %v6673, %v6801
        %v6834 = vsub.f32 %v6674, %v6802
        %v6835 = vsub.f32 %v6675, %v6803
        %v6836 = vsub.f32 %v6676, %v6804
        %v6837 = vsub.f32 %v6677, %v6805
        %v6838 = vsub.f32 %v6678, %v6806
        %v6839 = vsub.f32 %v6679, %v6807
        %v6840 = vsub.f32 %v6680, %v6808
        %v6841 = vsub.f32 %v6681, %v6809
        %v6842 = vsub.f32 %v6682, %v6810
        %v6843 = vsub.f32 %v6683, %v6811
        %v6844 = vsub.f32 %v6684, %v6812
        %v6845 = vsub.f32 %v6685, %v6813
        %v6846 = vsub.f32 %v6686, %v6814
        %v6847 = vsub.f32 %v6687, %v6815
        %v6848 = vsub.f32 %v6688, %v6816
        %v6849 = vsub.f32 %v6689, %v6817
        %v6850 = vsub.f32 %v6690, %v6818
        %v6851 = vsub.f32 %v6691, %v6819
        %v6852 = vsub.f32 %v6692, %v6820
        %v6853 = vsub.f32 %v6693, %v6821
        %v6854 = vsub.f32 %v6694, %v6822
        %v6855 = vsub.f32 %v6695, %v6823
        %v6856 = vsub.f32 %v6696, %v6824
        %v6857 = vsub.f32 %v6697, %v6825
        %v6858 = vsub.f32 %v6698, %v6826
        %v6859 = vmul.f32 %v6827, %v6827
        %v6860 = vmul.f32 %v6828, %v6828
        %v6861 = vmul.f32 %v6829, %v6829
        %v6862 = vmul.f32 %v6830, %v6830
        %v6863 = vmul.f32 %v6831, %v6831
        %v6864 = vmul.f32 %v6832, %v6832
        %v6865 = vmul.f32 %v6833, %v6833
        %v6866 = vmul.f32 %v6834, %v6834
        %v6867 = vmul.f32 %v6835, %v6835
        %v6868 = vmul.f32 %v6836, %v6836
        %v6869 = vmul.f32 %v6837, %v6837
        %v6870 = vmul.f32 %v6838, %v6838
        %v6871 = vmul.f32 %v6839, %v6839
        %v6872 = vmul.f32 %v6840, %v6840
        %v6873 = vmul.f32 %v6841, %v6841
        %v6874 = vmul.f32 %v6842, %v6842
        %v6875 = vmul.f32 %v6843, %v6843
        %v6876 = vmul.f32 %v6844, %v6844
        %v6877 = vmul.f32 %v6845, %v6845
        %v6878 = vmul.f32 %v6846, %v6846
        %v6879 = vmul.f32 %v6847, %v6847
        %v6880 = vmul.f32 %v6848, %v6848
        %v6881 = vmul.f32 %v6849, %v6849
        %v6882 = vmul.f32 %v6850, %v6850
        %v6883 = vmul.f32 %v6851, %v6851
        %v6884 = vmul.f32 %v6852, %v6852
        %v6885 = vmul.f32 %v6853, %v6853
        %v6886 = vmul.f32 %v6854, %v6854
        %v6887 = vmul.f32 %v6855, %v6855
        %v6888 = vmul.f32 %v6856, %v6856
        %v6889 = vmul.f32 %v6857, %v6857
        %v6890 = vmul.f32 %v6858, %v6858
        %v6891 = vsel %vm506, %v6859, 0.0
        %6892 = vadd.xlane.f32.xlu0 %v6891
        %v6893 = vpop.xlane.xlu0 %6892
        %v6894 = vsel %vm506, %v6860, 0.0
        %6895 = vadd.xlane.f32.xlu0 %v6894
        %v6896 = vpop.xlane.xlu0 %6895
        %v6897 = vsel %vm506, %v6861, 0.0
        %6898 = vadd.xlane.f32.xlu0 %v6897
        %v6899 = vpop.xlane.xlu0 %6898
        %v6900 = vsel %vm506, %v6862, 0.0
        %6901 = vadd.xlane.f32.xlu0 %v6900
        %v6902 = vpop.xlane.xlu0 %6901
        %v6903 = vsel %vm506, %v6863, 0.0
        %6904 = vadd.xlane.f32.xlu0 %v6903
        %v6905 = vpop.xlane.xlu0 %6904
        %v6906 = vsel %vm506, %v6864, 0.0
        %6907 = vadd.xlane.f32.xlu0 %v6906
        %v6908 = vpop.xlane.xlu0 %6907
        %v6909 = vsel %vm506, %v6865, 0.0
        %6910 = vadd.xlane.f32.xlu0 %v6909
        %v6911 = vpop.xlane.xlu0 %6910
        %v6912 = vsel %vm506, %v6866, 0.0
        %6913 = vadd.xlane.f32.xlu0 %v6912
        %v6914 = vpop.xlane.xlu0 %6913
        %v6915 = vsel %vm506, %v6867, 0.0
        %6916 = vadd.xlane.f32.xlu0 %v6915
        %v6917 = vpop.xlane.xlu0 %6916
        %v6918 = vsel %vm506, %v6868, 0.0
        %6919 = vadd.xlane.f32.xlu0 %v6918
        %v6920 = vpop.xlane.xlu0 %6919
        %v6921 = vsel %vm506, %v6869, 0.0
        %6922 = vadd.xlane.f32.xlu0 %v6921
        %v6923 = vpop.xlane.xlu0 %6922
        %v6924 = vsel %vm506, %v6870, 0.0
        %6925 = vadd.xlane.f32.xlu0 %v6924
        %v6926 = vpop.xlane.xlu0 %6925
        %v6927 = vsel %vm506, %v6871, 0.0
        %6928 = vadd.xlane.f32.xlu0 %v6927
        %v6929 = vpop.xlane.xlu0 %6928
        %v6930 = vsel %vm506, %v6872, 0.0
        %6931 = vadd.xlane.f32.xlu0 %v6930
        %v6932 = vpop.xlane.xlu0 %6931
        %v6933 = vsel %vm506, %v6873, 0.0
        %6934 = vadd.xlane.f32.xlu0 %v6933
        %v6935 = vpop.xlane.xlu0 %6934
        %v6936 = vsel %vm506, %v6874, 0.0
        %6937 = vadd.xlane.f32.xlu0 %v6936
        %v6938 = vpop.xlane.xlu0 %6937
        %v6939 = vsel %vm506, %v6875, 0.0
        %6940 = vadd.xlane.f32.xlu0 %v6939
        %v6941 = vpop.xlane.xlu0 %6940
        %v6942 = vsel %vm506, %v6876, 0.0
        %6943 = vadd.xlane.f32.xlu0 %v6942
        %v6944 = vpop.xlane.xlu0 %6943
        %v6945 = vsel %vm506, %v6877, 0.0
        %6946 = vadd.xlane.f32.xlu0 %v6945
        %v6947 = vpop.xlane.xlu0 %6946
        %v6948 = vsel %vm506, %v6878, 0.0
        %6949 = vadd.xlane.f32.xlu0 %v6948
        %v6950 = vpop.xlane.xlu0 %6949
        %v6951 = vsel %vm506, %v6879, 0.0
        %6952 = vadd.xlane.f32.xlu0 %v6951
        %v6953 = vpop.xlane.xlu0 %6952
        %v6954 = vsel %vm506, %v6880, 0.0
        %6955 = vadd.xlane.f32.xlu0 %v6954
        %v6956 = vpop.xlane.xlu0 %6955
        %v6957 = vsel %vm506, %v6881, 0.0
        %6958 = vadd.xlane.f32.xlu0 %v6957
        %v6959 = vpop.xlane.xlu0 %6958
        %v6960 = vsel %vm506, %v6882, 0.0
        %6961 = vadd.xlane.f32.xlu0 %v6960
        %v6962 = vpop.xlane.xlu0 %6961
        %v6963 = vsel %vm506, %v6883, 0.0
        %6964 = vadd.xlane.f32.xlu0 %v6963
        %v6965 = vpop.xlane.xlu0 %6964
        %v6966 = vsel %vm506, %v6884, 0.0
        %6967 = vadd.xlane.f32.xlu0 %v6966
        %v6968 = vpop.xlane.xlu0 %6967
        %v6969 = vsel %vm506, %v6885, 0.0
        %6970 = vadd.xlane.f32.xlu0 %v6969
        %v6971 = vpop.xlane.xlu0 %6970
        %v6972 = vsel %vm506, %v6886, 0.0
        %6973 = vadd.xlane.f32.xlu0 %v6972
        %v6974 = vpop.xlane.xlu0 %6973
        %v6975 = vsel %vm506, %v6887, 0.0
        %6976 = vadd.xlane.f32.xlu0 %v6975
        %v6977 = vpop.xlane.xlu0 %6976
        %v6978 = vsel %vm506, %v6888, 0.0
        %6979 = vadd.xlane.f32.xlu0 %v6978
        %v6980 = vpop.xlane.xlu0 %6979
        %v6981 = vsel %vm506, %v6889, 0.0
        %6982 = vadd.xlane.f32.xlu0 %v6981
        %v6983 = vpop.xlane.xlu0 %6982
        %v6984 = vsel %vm506, %v6890, 0.0
        %6985 = vadd.xlane.f32.xlu0 %v6984
        %v6986 = vpop.xlane.xlu0 %6985
        %v6987 = vmul.f32 %v6893, %v603
        %v6988 = vmul.f32 %v6896, %v603
        %v6989 = vmul.f32 %v6899, %v603
        %v6990 = vmul.f32 %v6902, %v603
        %v6991 = vmul.f32 %v6905, %v603
        %v6992 = vmul.f32 %v6908, %v603
        %v6993 = vmul.f32 %v6911, %v603
        %v6994 = vmul.f32 %v6914, %v603
        %v6995 = vmul.f32 %v6917, %v603
        %v6996 = vmul.f32 %v6920, %v603
        %v6997 = vmul.f32 %v6923, %v603
        %v6998 = vmul.f32 %v6926, %v603
        %v6999 = vmul.f32 %v6929, %v603
        %v7000 = vmul.f32 %v6932, %v603
        %v7001 = vmul.f32 %v6935, %v603
        %v7002 = vmul.f32 %v6938, %v603
        %v7003 = vmul.f32 %v6941, %v603
        %v7004 = vmul.f32 %v6944, %v603
        %v7005 = vmul.f32 %v6947, %v603
        %v7006 = vmul.f32 %v6950, %v603
        %v7007 = vmul.f32 %v6953, %v603
        %v7008 = vmul.f32 %v6956, %v603
        %v7009 = vmul.f32 %v6959, %v603
        %v7010 = vmul.f32 %v6962, %v603
        %v7011 = vmul.f32 %v6965, %v603
        %v7012 = vmul.f32 %v6968, %v603
        %v7013 = vmul.f32 %v6971, %v603
        %v7014 = vmul.f32 %v6974, %v603
        %v7015 = vmul.f32 %v6977, %v603
        %v7016 = vmul.f32 %v6980, %v603
        %v7017 = vmul.f32 %v6983, %v603
        %v7018 = vmul.f32 %v6986, %v603
        %v7019 = vadd.f32 %v6987, 1e-05
        %v7020 = vadd.f32 %v6988, 1e-05
        %v7021 = vadd.f32 %v6989, 1e-05
        %v7022 = vadd.f32 %v6990, 1e-05
        %v7023 = vadd.f32 %v6991, 1e-05
        %v7024 = vadd.f32 %v6992, 1e-05
        %v7025 = vadd.f32 %v6993, 1e-05
        %v7026 = vadd.f32 %v6994, 1e-05
        %v7027 = vadd.f32 %v6995, 1e-05
        %v7028 = vadd.f32 %v6996, 1e-05
        %v7029 = vadd.f32 %v6997, 1e-05
        %v7030 = vadd.f32 %v6998, 1e-05
        %v7031 = vadd.f32 %v6999, 1e-05
        %v7032 = vadd.f32 %v7000, 1e-05
        %v7033 = vadd.f32 %v7001, 1e-05
        %v7034 = vadd.f32 %v7002, 1e-05
        %v7035 = vadd.f32 %v7003, 1e-05
        %v7036 = vadd.f32 %v7004, 1e-05
        %v7037 = vadd.f32 %v7005, 1e-05
        %v7038 = vadd.f32 %v7006, 1e-05
        %v7039 = vadd.f32 %v7007, 1e-05
        %v7040 = vadd.f32 %v7008, 1e-05
        %v7041 = vadd.f32 %v7009, 1e-05
        %v7042 = vadd.f32 %v7010, 1e-05
        %v7043 = vadd.f32 %v7011, 1e-05
        %v7044 = vadd.f32 %v7012, 1e-05
        %v7045 = vadd.f32 %v7013, 1e-05
        %v7046 = vadd.f32 %v7014, 1e-05
        %v7047 = vadd.f32 %v7015, 1e-05
        %v7048 = vadd.f32 %v7016, 1e-05
        %v7049 = vadd.f32 %v7017, 1e-05
        %v7050 = vadd.f32 %v7018, 1e-05
        %v7051 = vrsqrt.pop %v7019
        %v7052 = vrsqrt.pop %v7020
        %v7053 = vrsqrt.pop %v7021
        %v7054 = vrsqrt.pop %v7022
        %v7055 = vrsqrt.pop %v7023
        %v7056 = vrsqrt.pop %v7024
        %v7057 = vrsqrt.pop %v7025
        %v7058 = vrsqrt.pop %v7026
        %v7059 = vrsqrt.pop %v7027
        %v7060 = vrsqrt.pop %v7028
        %v7061 = vrsqrt.pop %v7029
        %v7062 = vrsqrt.pop %v7030
        %v7063 = vrsqrt.pop %v7031
        %v7064 = vrsqrt.pop %v7032
        %v7065 = vrsqrt.pop %v7033
        %v7066 = vrsqrt.pop %v7034
        %v7067 = vrsqrt.pop %v7035
        %v7068 = vrsqrt.pop %v7036
        %v7069 = vrsqrt.pop %v7037
        %v7070 = vrsqrt.pop %v7038
        %v7071 = vrsqrt.pop %v7039
        %v7072 = vrsqrt.pop %v7040
        %v7073 = vrsqrt.pop %v7041
        %v7074 = vrsqrt.pop %v7042
        %v7075 = vrsqrt.pop %v7043
        %v7076 = vrsqrt.pop %v7044
        %v7077 = vrsqrt.pop %v7045
        %v7078 = vrsqrt.pop %v7046
        %v7079 = vrsqrt.pop %v7047
        %v7080 = vrsqrt.pop %v7048
        %v7081 = vrsqrt.pop %v7049
        %v7082 = vrsqrt.pop %v7050
        %v7083 = vmul.f32 %v6827, %v7051
        %v7084 = vmul.f32 %v6828, %v7052
        %v7085 = vmul.f32 %v6829, %v7053
        %v7086 = vmul.f32 %v6830, %v7054
        %v7087 = vmul.f32 %v6831, %v7055
        %v7088 = vmul.f32 %v6832, %v7056
        %v7089 = vmul.f32 %v6833, %v7057
        %v7090 = vmul.f32 %v6834, %v7058
        %v7091 = vmul.f32 %v6835, %v7059
        %v7092 = vmul.f32 %v6836, %v7060
        %v7093 = vmul.f32 %v6837, %v7061
        %v7094 = vmul.f32 %v6838, %v7062
        %v7095 = vmul.f32 %v6839, %v7063
        %v7096 = vmul.f32 %v6840, %v7064
        %v7097 = vmul.f32 %v6841, %v7065
        %v7098 = vmul.f32 %v6842, %v7066
        %v7099 = vmul.f32 %v6843, %v7067
        %v7100 = vmul.f32 %v6844, %v7068
        %v7101 = vmul.f32 %v6845, %v7069
        %v7102 = vmul.f32 %v6846, %v7070
        %v7103 = vmul.f32 %v6847, %v7071
        %v7104 = vmul.f32 %v6848, %v7072
        %v7105 = vmul.f32 %v6849, %v7073
        %v7106 = vmul.f32 %v6850, %v7074
        %v7107 = vmul.f32 %v6851, %v7075
        %v7108 = vmul.f32 %v6852, %v7076
        %v7109 = vmul.f32 %v6853, %v7077
        %v7110 = vmul.f32 %v6854, %v7078
        %v7111 = vmul.f32 %v6855, %v7079
        %v7112 = vmul.f32 %v6856, %v7080
        %v7113 = vmul.f32 %v6857, %v7081
        %v7114 = vmul.f32 %v6858, %v7082
        %v7115 = vld [vmem:[%s9] sm:$0xff]
        %v7116 = vld [vmem:[%s9 + $0x8] sm:$0xff]
        %v7117 = vld [vmem:[%s9 + $0x10] sm:$0xff]
        %v7118 = vld [vmem:[%s9 + $0x18] sm:$0xff]
        %v7119 = vld [vmem:[%s10] sm:$0x1]
        %v7121 = vlaneseq
        %v7122 = vshrl.u32 %v7121, 7
        %v7123 = vsub.s32 0, %v7122
        %v7124 = vrot.slane %v7119, %v7123
        %v7127 = vsel %vm506, %v7083, 0
        %v7130 = vsel %vm506, %v7084, 0
        %v7133 = vsel %vm506, %v7085, 0
        %v7136 = vsel %vm506, %v7086, 0
        %v7139 = vsel %vm506, %v7087, 0
        %v7142 = vsel %vm506, %v7088, 0
        %v7145 = vsel %vm506, %v7089, 0
        %v7148 = vsel %vm506, %v7090, 0
        %v7151 = vsel %vm506, %v7091, 0
        %v7154 = vsel %vm506, %v7092, 0
        %v7157 = vsel %vm506, %v7093, 0
        %v7160 = vsel %vm506, %v7094, 0
        %v7163 = vsel %vm506, %v7095, 0
        %v7166 = vsel %vm506, %v7096, 0
        %v7169 = vsel %vm506, %v7097, 0
        %v7172 = vsel %vm506, %v7098, 0
        %v7175 = vsel %vm506, %v7099, 0
        %v7178 = vsel %vm506, %v7100, 0
        %v7181 = vsel %vm506, %v7101, 0
        %v7184 = vsel %vm506, %v7102, 0
        %v7187 = vsel %vm506, %v7103, 0
        %v7190 = vsel %vm506, %v7104, 0
        %v7193 = vsel %vm506, %v7105, 0
        %v7196 = vsel %vm506, %v7106, 0
        %v7199 = vsel %vm506, %v7107, 0
        %v7202 = vsel %vm506, %v7108, 0
        %v7205 = vsel %vm506, %v7109, 0
        %v7208 = vsel %vm506, %v7110, 0
        %v7211 = vsel %vm506, %v7111, 0
        %v7214 = vsel %vm506, %v7112, 0
        %v7217 = vsel %vm506, %v7113, 0
        %v7220 = vsel %vm506, %v7114, 0
        %7222 = vmatprep.subr.mxu0 0.0
        %7223 = vmatpush1.msra.mxu0 %v7115
        %7224 = vmatprep.subr.mxu0 0.0
        %7225 = vmatpush1.msra.mxu0 %v7116
        %7226 = vmatprep.subr.mxu0 0.0
        %7227 = vmatpush1.msra.mxu0 %v7117
        %7228 = vmatprep.subr.mxu0 0.0
        %7229 = vmatpush1.msra.mxu0 %v7118
        %7230 = vmatprep.subr.mxu0 0.0
        %7231 = vmatpush1.msra.mxu0 0.0
        %7232 = vmatprep.subr.mxu0 0.0
        %7233 = vmatpush1.msra.mxu0 0.0
        %7234 = vmatprep.subr.mxu0 0.0
        %7235 = vmatpush1.msra.mxu0 0.0
        %7236 = vmatprep.subr.mxu0 0.0
        %7237 = vmatpush1.msra.mxu0 0.0
        %7238 = vmatprep.subr.mxu0 0.0
        %7239 = vmatpush1.msra.mxu0 0.0
        %7240 = vmatprep.subr.mxu0 0.0
        %7241 = vmatpush1.msra.mxu0 0.0
        %7242 = vmatprep.subr.mxu0 0.0
        %7243 = vmatpush1.msra.mxu0 0.0
        %7244 = vmatprep.subr.mxu0 0.0
        %7245 = vmatpush1.msra.mxu0 0.0
        %7246 = vmatprep.subr.mxu0 0.0
        %7247 = vmatpush1.msra.mxu0 0.0
        %7248 = vmatprep.subr.mxu0 0.0
        %7249 = vmatpush1.msra.mxu0 0.0
        %7250 = vmatprep.subr.mxu0 0.0
        %7251 = vmatpush1.msra.mxu0 0.0
        %7252 = vmatprep.subr.mxu0 0.0
        %7253 = vmatpush1.msra.mxu0 0.0
        %7254 = vmatprep.subr.mxu0 0.0
        %7255 = vmatpush1.msra.mxu0 0.0
        %7256 = vmatprep.subr.mxu0 0.0
        %7257 = vmatpush1.msra.mxu0 0.0
        %7258 = vmatprep.subr.mxu0 0.0
        %7259 = vmatpush1.msra.mxu0 0.0
        %7260 = vmatprep.subr.mxu0 0.0
        %7261 = vmatpush1.msra.mxu0 0.0
        %7262 = vmatprep.subr.mxu0 0.0
        %7263 = vmatpush1.msra.mxu0 0.0
        %7264 = vmatprep.subr.mxu0 0.0
        %7265 = vmatpush1.msra.mxu0 0.0
        %7266 = vmatprep.subr.mxu0 0.0
        %7267 = vmatpush1.msra.mxu0 0.0
        %7268 = vmatprep.subr.mxu0 0.0
        %7269 = vmatpush1.msra.mxu0 0.0
        %7270 = vmatprep.subr.mxu0 0.0
        %7271 = vmatpush1.msra.mxu0 0.0
        %7272 = vmatprep.subr.mxu0 0.0
        %7273 = vmatpush1.msra.mxu0 0.0
        %7274 = vmatprep.subr.mxu0 0.0
        %7275 = vmatpush1.msra.mxu0 0.0
        %7276 = vmatprep.subr.mxu0 0.0
        %7277 = vmatpush1.msra.mxu0 0.0
        %7278 = vmatprep.subr.mxu0 0.0
        %7279 = vmatpush1.msra.mxu0 0.0
        %7280 = vmatprep.subr.mxu0 0.0
        %7281 = vmatpush1.msra.mxu0 0.0
        %7282 = vmatprep.subr.mxu0 0.0
        %7283 = vmatpush1.msra.mxu0 0.0
        %7284 = vmatprep.subr.mxu0 0.0
        %7285 = vmatpush1.msra.mxu0 0.0
        %7286 = vmatprep.mubr.f32.mxu0 0.0
        %7287 = vmatmul.mubr.f32.gmra.mrb[0].mxu0 %v7127
        %v7288 = vpop.f32.mrb[0].mxu0
        %v7289 = vadd.f32 %v7124, %v7288
        %v7290 = vpop.f32.mrb[0].mxu0
        %7291 = vmatprep.mubr.f32.mxu0 0.0
        %7292 = vmatmul.mubr.f32.gmra.mrb[0].mxu0 %v7130
        %v7293 = vpop.f32.mrb[0].mxu0
        %v7294 = vadd.f32 %v7124, %v7293
        %v7295 = vpop.f32.mrb[0].mxu0
        %7296 = vmatprep.mubr.f32.mxu0 0.0
        %7297 = vmatmul.mubr.f32.gmra.mrb[0].mxu0 %v7133
        %v7298 = vpop.f32.mrb[0].mxu0
        %v7299 = vadd.f32 %v7124, %v7298
        %v7300 = vpop.f32.mrb[0].mxu0
        %7301 = vmatprep.mubr.f32.mxu0 0.0
        %7302 = vmatmul.mubr.f32.gmra.mrb[0].mxu0 %v7136
        %v7303 = vpop.f32.mrb[0].mxu0
        %v7304 = vadd.f32 %v7124, %v7303
        %v7305 = vpop.f32.mrb[0].mxu0
        %7306 = vmatprep.mubr.f32.mxu0 0.0
        %7307 = vmatmul.mubr.f32.gmra.mrb[0].mxu0 %v7139
        %v7308 = vpop.f32.mrb[0].mxu0
        %v7309 = vadd.f32 %v7124, %v7308
        %v7310 = vpop.f32.mrb[0].mxu0
        %7311 = vmatprep.mubr.f32.mxu0 0.0
        %7312 = vmatmul.mubr.f32.gmra.mrb[0].mxu0 %v7142
        %v7313 = vpop.f32.mrb[0].mxu0
        %v7314 = vadd.f32 %v7124, %v7313
        %v7315 = vpop.f32.mrb[0].mxu0
        %7316 = vmatprep.mubr.f32.mxu0 0.0
        %7317 = vmatmul.mubr.f32.gmra.mrb[0].mxu0 %v7145
        %v7318 = vpop.f32.mrb[0].mxu0
        %v7319 = vadd.f32 %v7124, %v7318
        %v7320 = vpop.f32.mrb[0].mxu0
        %7321 = vmatprep.mubr.f32.mxu0 0.0
        %7322 = vmatmul.mubr.f32.gmra.mrb[0].mxu0 %v7148
        %v7323 = vpop.f32.mrb[0].mxu0
        %v7324 = vadd.f32 %v7124, %v7323
        %v7325 = vpop.f32.mrb[0].mxu0
        %7326 = vmatprep.mubr.f32.mxu0 0.0
        %7327 = vmatmul.mubr.f32.gmra.mrb[0].mxu0 %v7151
        %v7328 = vpop.f32.mrb[0].mxu0
        %v7329 = vadd.f32 %v7124, %v7328
        %v7330 = vpop.f32.mrb[0].mxu0
        %7331 = vmatprep.mubr.f32.mxu0 0.0
        %7332 = vmatmul.mubr.f32.gmra.mrb[0].mxu0 %v7154
        %v7333 = vpop.f32.mrb[0].mxu0
        %v7334 = vadd.f32 %v7124, %v7333
        %v7335 = vpop.f32.mrb[0].mxu0
        %7336 = vmatprep.mubr.f32.mxu0 0.0
        %7337 = vmatmul.mubr.f32.gmra.mrb[0].mxu0 %v7157
        %v7338 = vpop.f32.mrb[0].mxu0
        %v7339 = vadd.f32 %v7124, %v7338
        %v7340 = vpop.f32.mrb[0].mxu0
        %7341 = vmatprep.mubr.f32.mxu0 0.0
        %7342 = vmatmul.mubr.f32.gmra.mrb[0].mxu0 %v7160
        %v7343 = vpop.f32.mrb[0].mxu0
        %v7344 = vadd.f32 %v7124, %v7343
        %v7345 = vpop.f32.mrb[0].mxu0
        %7346 = vmatprep.mubr.f32.mxu0 0.0
        %7347 = vmatmul.mubr.f32.gmra.mrb[0].mxu0 %v7163
        %v7348 = vpop.f32.mrb[0].mxu0
        %v7349 = vadd.f32 %v7124, %v7348
        %v7350 = vpop.f32.mrb[0].mxu0
        %7351 = vmatprep.mubr.f32.mxu0 0.0
        %7352 = vmatmul.mubr.f32.gmra.mrb[0].mxu0 %v7166
        %v7353 = vpop.f32.mrb[0].mxu0
        %v7354 = vadd.f32 %v7124, %v7353
        %v7355 = vpop.f32.mrb[0].mxu0
        %7356 = vmatprep.mubr.f32.mxu0 0.0
        %7357 = vmatmul.mubr.f32.gmra.mrb[0].mxu0 %v7169
        %v7358 = vpop.f32.mrb[0].mxu0
        %v7359 = vadd.f32 %v7124, %v7358
        %v7360 = vpop.f32.mrb[0].mxu0
        %7361 = vmatprep.mubr.f32.mxu0 0.0
        %7362 = vmatmul.mubr.f32.gmra.mrb[0].mxu0 %v7172
        %v7363 = vpop.f32.mrb[0].mxu0
        %v7364 = vadd.f32 %v7124, %v7363
        %v7365 = vpop.f32.mrb[0].mxu0
        %7366 = vmatprep.mubr.f32.mxu0 0.0
        %7367 = vmatmul.mubr.f32.gmra.mrb[0].mxu0 %v7175
        %v7368 = vpop.f32.mrb[0].mxu0
        %v7369 = vadd.f32 %v7124, %v7368
        %v7370 = vpop.f32.mrb[0].mxu0
        %7371 = vmatprep.mubr.f32.mxu0 0.0
        %7372 = vmatmul.mubr.f32.gmra.mrb[0].mxu0 %v7178
        %v7373 = vpop.f32.mrb[0].mxu0
        %v7374 = vadd.f32 %v7124, %v7373
        %v7375 = vpop.f32.mrb[0].mxu0
        %7376 = vmatprep.mubr.f32.mxu0 0.0
        %7377 = vmatmul.mubr.f32.gmra.mrb[0].mxu0 %v7181
        %v7378 = vpop.f32.mrb[0].mxu0
        %v7379 = vadd.f32 %v7124, %v7378
        %v7380 = vpop.f32.mrb[0].mxu0
        %7381 = vmatprep.mubr.f32.mxu0 0.0
        %7382 = vmatmul.mubr.f32.gmra.mrb[0].mxu0 %v7184
        %v7383 = vpop.f32.mrb[0].mxu0
        %v7384 = vadd.f32 %v7124, %v7383
        %v7385 = vpop.f32.mrb[0].mxu0
        %7386 = vmatprep.mubr.f32.mxu0 0.0
        %7387 = vmatmul.mubr.f32.gmra.mrb[0].mxu0 %v7187
        %v7388 = vpop.f32.mrb[0].mxu0
        %v7389 = vadd.f32 %v7124, %v7388
        %v7390 = vpop.f32.mrb[0].mxu0
        %7391 = vmatprep.mubr.f32.mxu0 0.0
        %7392 = vmatmul.mubr.f32.gmra.mrb[0].mxu0 %v7190
        %v7393 = vpop.f32.mrb[0].mxu0
        %v7394 = vadd.f32 %v7124, %v7393
        %v7395 = vpop.f32.mrb[0].mxu0
        %7396 = vmatprep.mubr.f32.mxu0 0.0
        %7397 = vmatmul.mubr.f32.gmra.mrb[0].mxu0 %v7193
        %v7398 = vpop.f32.mrb[0].mxu0
        %v7399 = vadd.f32 %v7124, %v7398
        %v7400 = vpop.f32.mrb[0].mxu0
        %7401 = vmatprep.mubr.f32.mxu0 0.0
        %7402 = vmatmul.mubr.f32.gmra.mrb[0].mxu0 %v7196
        %v7403 = vpop.f32.mrb[0].mxu0
        %v7404 = vadd.f32 %v7124, %v7403
        %v7405 = vpop.f32.mrb[0].mxu0
        %7406 = vmatprep.mubr.f32.mxu0 0.0
        %7407 = vmatmul.mubr.f32.gmra.mrb[0].mxu0 %v7199
        %v7408 = vpop.f32.mrb[0].mxu0
        %v7409 = vadd.f32 %v7124, %v7408
        %v7410 = vpop.f32.mrb[0].mxu0
        %7411 = vmatprep.mubr.f32.mxu0 0.0
        %7412 = vmatmul.mubr.f32.gmra.mrb[0].mxu0 %v7202
        %v7413 = vpop.f32.mrb[0].mxu0
        %v7414 = vadd.f32 %v7124, %v7413
        %v7415 = vpop.f32.mrb[0].mxu0
        %7416 = vmatprep.mubr.f32.mxu0 0.0
        %7417 = vmatmul.mubr.f32.gmra.mrb[0].mxu0 %v7205
        %v7418 = vpop.f32.mrb[0].mxu0
        %v7419 = vadd.f32 %v7124, %v7418
        %v7420 = vpop.f32.mrb[0].mxu0
        %7421 = vmatprep.mubr.f32.mxu0 0.0
        %7422 = vmatmul.mubr.f32.gmra.mrb[0].mxu0 %v7208
        %v7423 = vpop.f32.mrb[0].mxu0
        %v7424 = vadd.f32 %v7124, %v7423
        %v7425 = vpop.f32.mrb[0].mxu0
        %7426 = vmatprep.mubr.f32.mxu0 0.0
        %7427 = vmatmul.mubr.f32.gmra.mrb[0].mxu0 %v7211
        %v7428 = vpop.f32.mrb[0].mxu0
        %v7429 = vadd.f32 %v7124, %v7428
        %v7430 = vpop.f32.mrb[0].mxu0
        %7431 = vmatprep.mubr.f32.mxu0 0.0
        %7432 = vmatmul.mubr.f32.gmra.mrb[0].mxu0 %v7214
        %v7433 = vpop.f32.mrb[0].mxu0
        %v7434 = vadd.f32 %v7124, %v7433
        %v7435 = vpop.f32.mrb[0].mxu0
        %7436 = vmatprep.mubr.f32.mxu0 0.0
        %7437 = vmatmul.mubr.f32.gmra.mrb[0].mxu0 %v7217
        %v7438 = vpop.f32.mrb[0].mxu0
        %v7439 = vadd.f32 %v7124, %v7438
        %v7440 = vpop.f32.mrb[0].mxu0
        %7441 = vmatprep.mubr.f32.mxu0 0.0
        %7442 = vmatmul.mubr.f32.gmra.mrb[0].mxu0 %v7220
        %v7443 = vpop.f32.mrb[0].mxu0
        %v7444 = vadd.f32 %v7124, %v7443
        %v7445 = vpop.f32.mrb[0].mxu0
        %7446 = vdwg.mxu0
        %v7447 = vmul.f32 %v7289, 0.5
        %v7448 = vmul.f32 %v7294, 0.5
        %v7449 = vmul.f32 %v7299, 0.5
        %v7450 = vmul.f32 %v7304, 0.5
        %v7451 = vmul.f32 %v7309, 0.5
        %v7452 = vmul.f32 %v7314, 0.5
        %v7453 = vmul.f32 %v7319, 0.5
        %v7454 = vmul.f32 %v7324, 0.5
        %v7455 = vmul.f32 %v7329, 0.5
        %v7456 = vmul.f32 %v7334, 0.5
        %v7457 = vmul.f32 %v7339, 0.5
        %v7458 = vmul.f32 %v7344, 0.5
        %v7459 = vmul.f32 %v7349, 0.5
        %v7460 = vmul.f32 %v7354, 0.5
        %v7461 = vmul.f32 %v7359, 0.5
        %v7462 = vmul.f32 %v7364, 0.5
        %v7463 = vmul.f32 %v7369, 0.5
        %v7464 = vmul.f32 %v7374, 0.5
        %v7465 = vmul.f32 %v7379, 0.5
        %v7466 = vmul.f32 %v7384, 0.5
        %v7467 = vmul.f32 %v7389, 0.5
        %v7468 = vmul.f32 %v7394, 0.5
        %v7469 = vmul.f32 %v7399, 0.5
        %v7470 = vmul.f32 %v7404, 0.5
        %v7471 = vmul.f32 %v7409, 0.5
        %v7472 = vmul.f32 %v7414, 0.5
        %v7473 = vmul.f32 %v7419, 0.5
        %v7474 = vmul.f32 %v7424, 0.5
        %v7475 = vmul.f32 %v7429, 0.5
        %v7476 = vmul.f32 %v7434, 0.5
        %v7477 = vmul.f32 %v7439, 0.5
        %v7478 = vmul.f32 %v7444, 0.5
        %v7479 = vmul.f32 %v7289, 0.70710677
        %v7480 = vmul.f32 %v7294, 0.70710677
        %v7481 = vmul.f32 %v7299, 0.70710677
        %v7482 = vmul.f32 %v7304, 0.70710677
        %v7483 = vmul.f32 %v7309, 0.70710677
        %v7484 = vmul.f32 %v7314, 0.70710677
        %v7485 = vmul.f32 %v7319, 0.70710677
        %v7486 = vmul.f32 %v7324, 0.70710677
        %v7487 = vmul.f32 %v7329, 0.70710677
        %v7488 = vmul.f32 %v7334, 0.70710677
        %v7489 = vmul.f32 %v7339, 0.70710677
        %v7490 = vmul.f32 %v7344, 0.70710677
        %v7491 = vmul.f32 %v7349, 0.70710677
        %v7492 = vmul.f32 %v7354, 0.70710677
        %v7493 = vmul.f32 %v7359, 0.70710677
        %v7494 = vmul.f32 %v7364, 0.70710677
        %v7495 = vmul.f32 %v7369, 0.70710677
        %v7496 = vmul.f32 %v7374, 0.70710677
        %v7497 = vmul.f32 %v7379, 0.70710677
        %v7498 = vmul.f32 %v7384, 0.70710677
        %v7499 = vmul.f32 %v7389, 0.70710677
        %v7500 = vmul.f32 %v7394, 0.70710677
        %v7501 = vmul.f32 %v7399, 0.70710677
        %v7502 = vmul.f32 %v7404, 0.70710677
        %v7503 = vmul.f32 %v7409, 0.70710677
        %v7504 = vmul.f32 %v7414, 0.70710677
        %v7505 = vmul.f32 %v7419, 0.70710677
        %v7506 = vmul.f32 %v7424, 0.70710677
        %v7507 = vmul.f32 %v7429, 0.70710677
        %v7508 = vmul.f32 %v7434, 0.70710677
        %v7509 = vmul.f32 %v7439, 0.70710677
        %v7510 = vmul.f32 %v7444, 0.70710677
        %v7511 = vmax.f32 %v7479, -4.0
        %v7512 = vmax.f32 %v7480, -4.0
        %v7513 = vmax.f32 %v7481, -4.0
        %v7514 = vmax.f32 %v7482, -4.0
        %v7515 = vmax.f32 %v7483, -4.0
        %v7516 = vmax.f32 %v7484, -4.0
        %v7517 = vmax.f32 %v7485, -4.0
        %v7518 = vmax.f32 %v7486, -4.0
        %v7519 = vmax.f32 %v7487, -4.0
        %v7520 = vmax.f32 %v7488, -4.0
        %v7521 = vmax.f32 %v7489, -4.0
        %v7522 = vmax.f32 %v7490, -4.0
        %v7523 = vmax.f32 %v7491, -4.0
        %v7524 = vmax.f32 %v7492, -4.0
        %v7525 = vmax.f32 %v7493, -4.0
        %v7526 = vmax.f32 %v7494, -4.0
        %v7527 = vmax.f32 %v7495, -4.0
        %v7528 = vmax.f32 %v7496, -4.0
        %v7529 = vmax.f32 %v7497, -4.0
        %v7530 = vmax.f32 %v7498, -4.0
        %v7531 = vmax.f32 %v7499, -4.0
        %v7532 = vmax.f32 %v7500, -4.0
        %v7533 = vmax.f32 %v7501, -4.0
        %v7534 = vmax.f32 %v7502, -4.0
        %v7535 = vmax.f32 %v7503, -4.0
        %v7536 = vmax.f32 %v7504, -4.0
        %v7537 = vmax.f32 %v7505, -4.0
        %v7538 = vmax.f32 %v7506, -4.0
        %v7539 = vmax.f32 %v7507, -4.0
        %v7540 = vmax.f32 %v7508, -4.0
        %v7541 = vmax.f32 %v7509, -4.0
        %v7542 = vmax.f32 %v7510, -4.0
        %v7543 = vmin.f32 %v7511, 4.0
        %v7544 = vmin.f32 %v7512, 4.0
        %v7545 = vmin.f32 %v7513, 4.0
        %v7546 = vmin.f32 %v7514, 4.0
        %v7547 = vmin.f32 %v7515, 4.0
        %v7548 = vmin.f32 %v7516, 4.0
        %v7549 = vmin.f32 %v7517, 4.0
        %v7550 = vmin.f32 %v7518, 4.0
        %v7551 = vmin.f32 %v7519, 4.0
        %v7552 = vmin.f32 %v7520, 4.0
        %v7553 = vmin.f32 %v7521, 4.0
        %v7554 = vmin.f32 %v7522, 4.0
        %v7555 = vmin.f32 %v7523, 4.0
        %v7556 = vmin.f32 %v7524, 4.0
        %v7557 = vmin.f32 %v7525, 4.0
        %v7558 = vmin.f32 %v7526, 4.0
        %v7559 = vmin.f32 %v7527, 4.0
        %v7560 = vmin.f32 %v7528, 4.0
        %v7561 = vmin.f32 %v7529, 4.0
        %v7562 = vmin.f32 %v7530, 4.0
        %v7563 = vmin.f32 %v7531, 4.0
        %v7564 = vmin.f32 %v7532, 4.0
        %v7565 = vmin.f32 %v7533, 4.0
        %v7566 = vmin.f32 %v7534, 4.0
        %v7567 = vmin.f32 %v7535, 4.0
        %v7568 = vmin.f32 %v7536, 4.0
        %v7569 = vmin.f32 %v7537, 4.0
        %v7570 = vmin.f32 %v7538, 4.0
        %v7571 = vmin.f32 %v7539, 4.0
        %v7572 = vmin.f32 %v7540, 4.0
        %v7573 = vmin.f32 %v7541, 4.0
        %v7574 = vmin.f32 %v7542, 4.0
        %v7575 = vmul.f32 %v7543, %v7543
        %v7576 = vmul.f32 %v7544, %v7544
        %v7577 = vmul.f32 %v7545, %v7545
        %v7578 = vmul.f32 %v7546, %v7546
        %v7579 = vmul.f32 %v7547, %v7547
        %v7580 = vmul.f32 %v7548, %v7548
        %v7581 = vmul.f32 %v7549, %v7549
        %v7582 = vmul.f32 %v7550, %v7550
        %v7583 = vmul.f32 %v7551, %v7551
        %v7584 = vmul.f32 %v7552, %v7552
        %v7585 = vmul.f32 %v7553, %v7553
        %v7586 = vmul.f32 %v7554, %v7554
        %v7587 = vmul.f32 %v7555, %v7555
        %v7588 = vmul.f32 %v7556, %v7556
        %v7589 = vmul.f32 %v7557, %v7557
        %v7590 = vmul.f32 %v7558, %v7558
        %v7591 = vmul.f32 %v7559, %v7559
        %v7592 = vmul.f32 %v7560, %v7560
        %v7593 = vmul.f32 %v7561, %v7561
        %v7594 = vmul.f32 %v7562, %v7562
        %v7595 = vmul.f32 %v7563, %v7563
        %v7596 = vmul.f32 %v7564, %v7564
        %v7597 = vmul.f32 %v7565, %v7565
        %v7598 = vmul.f32 %v7566, %v7566
        %v7599 = vmul.f32 %v7567, %v7567
        %v7600 = vmul.f32 %v7568, %v7568
        %v7601 = vmul.f32 %v7569, %v7569
        %v7602 = vmul.f32 %v7570, %v7570
        %v7603 = vmul.f32 %v7571, %v7571
        %v7604 = vmul.f32 %v7572, %v7572
        %v7605 = vmul.f32 %v7573, %v7573
        %v7606 = vmul.f32 %v7574, %v7574
        %v7607 = vmul.f32 %v7575, -2.7261424e-10
        %v7608 = vmul.f32 %v7576, -2.7261424e-10
        %v7609 = vmul.f32 %v7577, -2.7261424e-10
        %v7610 = vmul.f32 %v7578, -2.7261424e-10
        %v7611 = vmul.f32 %v7579, -2.7261424e-10
        %v7612 = vmul.f32 %v7580, -2.7261424e-10
        %v7613 = vmul.f32 %v7581, -2.7261424e-10
        %v7614 = vmul.f32 %v7582, -2.7261424e-10
        %v7615 = vmul.f32 %v7583, -2.7261424e-10
        %v7616 = vmul.f32 %v7584, -2.7261424e-10
        %v7617 = vmul.f32 %v7585, -2.7261424e-10
        %v7618 = vmul.f32 %v7586, -2.7261424e-10
        %v7619 = vmul.f32 %v7587, -2.7261424e-10
        %v7620 = vmul.f32 %v7588, -2.7261424e-10
        %v7621 = vmul.f32 %v7589, -2.7261424e-10
        %v7622 = vmul.f32 %v7590, -2.7261424e-10
        %v7623 = vmul.f32 %v7591, -2.7261424e-10
        %v7624 = vmul.f32 %v7592, -2.7261424e-10
        %v7625 = vmul.f32 %v7593, -2.7261424e-10
        %v7626 = vmul.f32 %v7594, -2.7261424e-10
        %v7627 = vmul.f32 %v7595, -2.7261424e-10
        %v7628 = vmul.f32 %v7596, -2.7261424e-10
        %v7629 = vmul.f32 %v7597, -2.7261424e-10
        %v7630 = vmul.f32 %v7598, -2.7261424e-10
        %v7631 = vmul.f32 %v7599, -2.7261424e-10
        %v7632 = vmul.f32 %v7600, -2.7261424e-10
        %v7633 = vmul.f32 %v7601, -2.7261424e-10
        %v7634 = vmul.f32 %v7602, -2.7261424e-10
        %v7635 = vmul.f32 %v7603, -2.7261424e-10
        %v7636 = vmul.f32 %v7604, -2.7261424e-10
        %v7637 = vmul.f32 %v7605, -2.7261424e-10
        %v7638 = vmul.f32 %v7606, -2.7261424e-10
        %v7639 = vadd.f32 %v7607, 2.7706815e-08
        %v7640 = vadd.f32 %v7608, 2.7706815e-08
        %v7641 = vadd.f32 %v7609, 2.7706815e-08
        %v7642 = vadd.f32 %v7610, 2.7706815e-08
        %v7643 = vadd.f32 %v7611, 2.7706815e-08
        %v7644 = vadd.f32 %v7612, 2.7706815e-08
        %v7645 = vadd.f32 %v7613, 2.7706815e-08
        %v7646 = vadd.f32 %v7614, 2.7706815e-08
        %v7647 = vadd.f32 %v7615, 2.7706815e-08
        %v7648 = vadd.f32 %v7616, 2.7706815e-08
        %v7649 = vadd.f32 %v7617, 2.7706815e-08
        %v7650 = vadd.f32 %v7618, 2.7706815e-08
        %v7651 = vadd.f32 %v7619, 2.7706815e-08
        %v7652 = vadd.f32 %v7620, 2.7706815e-08
        %v7653 = vadd.f32 %v7621, 2.7706815e-08
        %v7654 = vadd.f32 %v7622, 2.7706815e-08
        %v7655 = vadd.f32 %v7623, 2.7706815e-08
        %v7656 = vadd.f32 %v7624, 2.7706815e-08
        %v7657 = vadd.f32 %v7625, 2.7706815e-08
        %v7658 = vadd.f32 %v7626, 2.7706815e-08
        %v7659 = vadd.f32 %v7627, 2.7706815e-08
        %v7660 = vadd.f32 %v7628, 2.7706815e-08
        %v7661 = vadd.f32 %v7629, 2.7706815e-08
        %v7662 = vadd.f32 %v7630, 2.7706815e-08
        %v7663 = vadd.f32 %v7631, 2.7706815e-08
        %v7664 = vadd.f32 %v7632, 2.7706815e-08
        %v7665 = vadd.f32 %v7633, 2.7706815e-08
        %v7666 = vadd.f32 %v7634, 2.7706815e-08
        %v7667 = vadd.f32 %v7635, 2.7706815e-08
        %v7668 = vadd.f32 %v7636, 2.7706815e-08
        %v7669 = vadd.f32 %v7637, 2.7706815e-08
        %v7670 = vadd.f32 %v7638, 2.7706815e-08
        %v7671 = vmul.f32 %v7639, %v7575
        %v7672 = vmul.f32 %v7640, %v7576
        %v7673 = vmul.f32 %v7641, %v7577
        %v7674 = vmul.f32 %v7642, %v7578
        %v7675 = vmul.f32 %v7643, %v7579
        %v7676 = vmul.f32 %v7644, %v7580
        %v7677 = vmul.f32 %v7645, %v7581
        %v7678 = vmul.f32 %v7646, %v7582
        %v7679 = vmul.f32 %v7647, %v7583
        %v7680 = vmul.f32 %v7648, %v7584
        %v7681 = vmul.f32 %v7649, %v7585
        %v7682 = vmul.f32 %v7650, %v7586
        %v7683 = vmul.f32 %v7651, %v7587
        %v7684 = vmul.f32 %v7652, %v7588
        %v7685 = vmul.f32 %v7653, %v7589
        %v7686 = vmul.f32 %v7654, %v7590
        %v7687 = vmul.f32 %v7655, %v7591
        %v7688 = vmul.f32 %v7656, %v7592
        %v7689 = vmul.f32 %v7657, %v7593
        %v7690 = vmul.f32 %v7658, %v7594
        %v7691 = vmul.f32 %v7659, %v7595
        %v7692 = vmul.f32 %v7660, %v7596
        %v7693 = vmul.f32 %v7661, %v7597
        %v7694 = vmul.f32 %v7662, %v7598
        %v7695 = vmul.f32 %v7663, %v7599
        %v7696 = vmul.f32 %v7664, %v7600
        %v7697 = vmul.f32 %v7665, %v7601
        %v7698 = vmul.f32 %v7666, %v7602
        %v7699 = vmul.f32 %v7667, %v7603
        %v7700 = vmul.f32 %v7668, %v7604
        %v7701 = vmul.f32 %v7669, %v7605
        %v7702 = vmul.f32 %v7670, %v7606
        %v7703 = vadd.f32 %v7671, -2.101024e-06
        %v7704 = vadd.f32 %v7672, -2.101024e-06
        %v7705 = vadd.f32 %v7673, -2.101024e-06
        %v7706 = vadd.f32 %v7674, -2.101024e-06
        %v7707 = vadd.f32 %v7675, -2.101024e-06
        %v7708 = vadd.f32 %v7676, -2.101024e-06
        %v7709 = vadd.f32 %v7677, -2.101024e-06
        %v7710 = vadd.f32 %v7678, -2.101024e-06
        %v7711 = vadd.f32 %v7679, -2.101024e-06
        %v7712 = vadd.f32 %v7680, -2.101024e-06
        %v7713 = vadd.f32 %v7681, -2.101024e-06
        %v7714 = vadd.f32 %v7682, -2.101024e-06
        %v7715 = vadd.f32 %v7683, -2.101024e-06
        %v7716 = vadd.f32 %v7684, -2.101024e-06
        %v7717 = vadd.f32 %v7685, -2.101024e-06
        %v7718 = vadd.f32 %v7686, -2.101024e-06
        %v7719 = vadd.f32 %v7687, -2.101024e-06
        %v7720 = vadd.f32 %v7688, -2.101024e-06
        %v7721 = vadd.f32 %v7689, -2.101024e-06
        %v7722 = vadd.f32 %v7690, -2.101024e-06
        %v7723 = vadd.f32 %v7691, -2.101024e-06
        %v7724 = vadd.f32 %v7692, -2.101024e-06
        %v7725 = vadd.f32 %v7693, -2.101024e-06
        %v7726 = vadd.f32 %v7694, -2.101024e-06
        %v7727 = vadd.f32 %v7695, -2.101024e-06
        %v7728 = vadd.f32 %v7696, -2.101024e-06
        %v7729 = vadd.f32 %v7697, -2.101024e-06
        %v7730 = vadd.f32 %v7698, -2.101024e-06
        %v7731 = vadd.f32 %v7699, -2.101024e-06
        %v7732 = vadd.f32 %v7700, -2.101024e-06
        %v7733 = vadd.f32 %v7701, -2.101024e-06
        %v7734 = vadd.f32 %v7702, -2.101024e-06
        %v7735 = vmul.f32 %v7703, %v7575
        %v7736 = vmul.f32 %v7704, %v7576
        %v7737 = vmul.f32 %v7705, %v7577
        %v7738 = vmul.f32 %v7706, %v7578
        %v7739 = vmul.f32 %v7707, %v7579
        %v7740 = vmul.f32 %v7708, %v7580
        %v7741 = vmul.f32 %v7709, %v7581
        %v7742 = vmul.f32 %v7710, %v7582
        %v7743 = vmul.f32 %v7711, %v7583
        %v7744 = vmul.f32 %v7712, %v7584
        %v7745 = vmul.f32 %v7713, %v7585
        %v7746 = vmul.f32 %v7714, %v7586
        %v7747 = vmul.f32 %v7715, %v7587
        %v7748 = vmul.f32 %v7716, %v7588
        %v7749 = vmul.f32 %v7717, %v7589
        %v7750 = vmul.f32 %v7718, %v7590
        %v7751 = vmul.f32 %v7719, %v7591
        %v7752 = vmul.f32 %v7720, %v7592
        %v7753 = vmul.f32 %v7721, %v7593
        %v7754 = vmul.f32 %v7722, %v7594
        %v7755 = vmul.f32 %v7723, %v7595
        %v7756 = vmul.f32 %v7724, %v7596
        %v7757 = vmul.f32 %v7725, %v7597
        %v7758 = vmul.f32 %v7726, %v7598
        %v7759 = vmul.f32 %v7727, %v7599
        %v7760 = vmul.f32 %v7728, %v7600
        %v7761 = vmul.f32 %v7729, %v7601
        %v7762 = vmul.f32 %v7730, %v7602
        %v7763 = vmul.f32 %v7731, %v7603
        %v7764 = vmul.f32 %v7732, %v7604
        %v7765 = vmul.f32 %v7733, %v7605
        %v7766 = vmul.f32 %v7734, %v7606
        %v7767 = vadd.f32 %v7735, -5.6925062e-05
        %v7768 = vadd.f32 %v7736, -5.6925062e-05
        %v7769 = vadd.f32 %v7737, -5.6925062e-05
        %v7770 = vadd.f32 %v7738, -5.6925062e-05
        %v7771 = vadd.f32 %v7739, -5.6925062e-05
        %v7772 = vadd.f32 %v7740, -5.6925062e-05
        %v7773 = vadd.f32 %v7741, -5.6925062e-05
        %v7774 = vadd.f32 %v7742, -5.6925062e-05
        %v7775 = vadd.f32 %v7743, -5.6925062e-05
        %v7776 = vadd.f32 %v7744, -5.6925062e-05
        %v7777 = vadd.f32 %v7745, -5.6925062e-05
        %v7778 = vadd.f32 %v7746, -5.6925062e-05
        %v7779 = vadd.f32 %v7747, -5.6925062e-05
        %v7780 = vadd.f32 %v7748, -5.6925062e-05
        %v7781 = vadd.f32 %v7749, -5.6925062e-05
        %v7782 = vadd.f32 %v7750, -5.6925062e-05
        %v7783 = vadd.f32 %v7751, -5.6925062e-05
        %v7784 = vadd.f32 %v7752, -5.6925062e-05
        %v7785 = vadd.f32 %v7753, -5.6925062e-05
        %v7786 = vadd.f32 %v7754, -5.6925062e-05
        %v7787 = vadd.f32 %v7755, -5.6925062e-05
        %v7788 = vadd.f32 %v7756, -5.6925062e-05
        %v7789 = vadd.f32 %v7757, -5.6925062e-05
        %v7790 = vadd.f32 %v7758, -5.6925062e-05
        %v7791 = vadd.f32 %v7759, -5.6925062e-05
        %v7792 = vadd.f32 %v7760, -5.6925062e-05
        %v7793 = vadd.f32 %v7761, -5.6925062e-05
        %v7794 = vadd.f32 %v7762, -5.6925062e-05
        %v7795 = vadd.f32 %v7763, -5.6925062e-05
        %v7796 = vadd.f32 %v7764, -5.6925062e-05
        %v7797 = vadd.f32 %v7765, -5.6925062e-05
        %v7798 = vadd.f32 %v7766, -5.6925062e-05
        %v7799 = vmul.f32 %v7767, %v7575
        %v7800 = vmul.f32 %v7768, %v7576
        %v7801 = vmul.f32 %v7769, %v7577
        %v7802 = vmul.f32 %v7770, %v7578
        %v7803 = vmul.f32 %v7771, %v7579
        %v7804 = vmul.f32 %v7772, %v7580
        %v7805 = vmul.f32 %v7773, %v7581
        %v7806 = vmul.f32 %v7774, %v7582
        %v7807 = vmul.f32 %v7775, %v7583
        %v7808 = vmul.f32 %v7776, %v7584
        %v7809 = vmul.f32 %v7777, %v7585
        %v7810 = vmul.f32 %v7778, %v7586
        %v7811 = vmul.f32 %v7779, %v7587
        %v7812 = vmul.f32 %v7780, %v7588
        %v7813 = vmul.f32 %v7781, %v7589
        %v7814 = vmul.f32 %v7782, %v7590
        %v7815 = vmul.f32 %v7783, %v7591
        %v7816 = vmul.f32 %v7784, %v7592
        %v7817 = vmul.f32 %v7785, %v7593
        %v7818 = vmul.f32 %v7786, %v7594
        %v7819 = vmul.f32 %v7787, %v7595
        %v7820 = vmul.f32 %v7788, %v7596
        %v7821 = vmul.f32 %v7789, %v7597
        %v7822 = vmul.f32 %v7790, %v7598
        %v7823 = vmul.f32 %v7791, %v7599
        %v7824 = vmul.f32 %v7792, %v7600
        %v7825 = vmul.f32 %v7793, %v7601
        %v7826 = vmul.f32 %v7794, %v7602
        %v7827 = vmul.f32 %v7795, %v7603
        %v7828 = vmul.f32 %v7796, %v7604
        %v7829 = vmul.f32 %v7797, %v7605
        %v7830 = vmul.f32 %v7798, %v7606
        %v7831 = vadd.f32 %v7799, -0.00073499064
        %v7832 = vadd.f32 %v7800, -0.00073499064
        %v7833 = vadd.f32 %v7801, -0.00073499064
        %v7834 = vadd.f32 %v7802, -0.00073499064
        %v7835 = vadd.f32 %v7803, -0.00073499064
        %v7836 = vadd.f32 %v7804, -0.00073499064
        %v7837 = vadd.f32 %v7805, -0.00073499064
        %v7838 = vadd.f32 %v7806, -0.00073499064
        %v7839 = vadd.f32 %v7807, -0.00073499064
        %v7840 = vadd.f32 %v7808, -0.00073499064
        %v7841 = vadd.f32 %v7809, -0.00073499064
        %v7842 = vadd.f32 %v7810, -0.00073499064
        %v7843 = vadd.f32 %v7811, -0.00073499064
        %v7844 = vadd.f32 %v7812, -0.00073499064
        %v7845 = vadd.f32 %v7813, -0.00073499064
        %v7846 = vadd.f32 %v7814, -0.00073499064
        %v7847 = vadd.f32 %v7815, -0.00073499064
        %v7848 = vadd.f32 %v7816, -0.00073499064
        %v7849 = vadd.f32 %v7817, -0.00073499064
        %v7850 = vadd.f32 %v7818, -0.00073499064
        %v7851 = vadd.f32 %v7819, -0.00073499064
        %v7852 = vadd.f32 %v7820, -0.00073499064
        %v7853 = vadd.f32 %v7821, -0.00073499064
        %v7854 = vadd.f32 %v7822, -0.00073499064
        %v7855 = vadd.f32 %v7823, -0.00073499064
        %v7856 = vadd.f32 %v7824, -0.00073499064
        %v7857 = vadd.f32 %v7825, -0.00073499064
        %v7858 = vadd.f32 %v7826, -0.00073499064
        %v7859 = vadd.f32 %v7827, -0.00073499064
        %v7860 = vadd.f32 %v7828, -0.00073499064
        %v7861 = vadd.f32 %v7829, -0.00073499064
        %v7862 = vadd.f32 %v7830, -0.00073499064
        %v7863 = vmul.f32 %v7831, %v7575
        %v7864 = vmul.f32 %v7832, %v7576
        %v7865 = vmul.f32 %v7833, %v7577
        %v7866 = vmul.f32 %v7834, %v7578
        %v7867 = vmul.f32 %v7835, %v7579
        %v7868 = vmul.f32 %v7836, %v7580
        %v7869 = vmul.f32 %v7837, %v7581
        %v7870 = vmul.f32 %v7838, %v7582
        %v7871 = vmul.f32 %v7839, %v7583
        %v7872 = vmul.f32 %v7840, %v7584
        %v7873 = vmul.f32 %v7841, %v7585
        %v7874 = vmul.f32 %v7842, %v7586
        %v7875 = vmul.f32 %v7843, %v7587
        %v7876 = vmul.f32 %v7844, %v7588
        %v7877 = vmul.f32 %v7845, %v7589
        %v7878 = vmul.f32 %v7846, %v7590
        %v7879 = vmul.f32 %v7847, %v7591
        %v7880 = vmul.f32 %v7848, %v7592
        %v7881 = vmul.f32 %v7849, %v7593
        %v7882 = vmul.f32 %v7850, %v7594
        %v7883 = vmul.f32 %v7851, %v7595
        %v7884 = vmul.f32 %v7852, %v7596
        %v7885 = vmul.f32 %v7853, %v7597
        %v7886 = vmul.f32 %v7854, %v7598
        %v7887 = vmul.f32 %v7855, %v7599
        %v7888 = vmul.f32 %v7856, %v7600
        %v7889 = vmul.f32 %v7857, %v7601
        %v7890 = vmul.f32 %v7858, %v7602
        %v7891 = vmul.f32 %v7859, %v7603
        %v7892 = vmul.f32 %v7860, %v7604
        %v7893 = vmul.f32 %v7861, %v7605
        %v7894 = vmul.f32 %v7862, %v7606
        %v7895 = vadd.f32 %v7863, -0.0029546
        %v7896 = vadd.f32 %v7864, -0.0029546
        %v7897 = vadd.f32 %v7865, -0.0029546
        %v7898 = vadd.f32 %v7866, -0.0029546
        %v7899 = vadd.f32 %v7867, -0.0029546
        %v7900 = vadd.f32 %v7868, -0.0029546
        %v7901 = vadd.f32 %v7869, -0.0029546
        %v7902 = vadd.f32 %v7870, -0.0029546
        %v7903 = vadd.f32 %v7871, -0.0029546
        %v7904 = vadd.f32 %v7872, -0.0029546
        %v7905 = vadd.f32 %v7873, -0.0029546
        %v7906 = vadd.f32 %v7874, -0.0029546
        %v7907 = vadd.f32 %v7875, -0.0029546
        %v7908 = vadd.f32 %v7876, -0.0029546
        %v7909 = vadd.f32 %v7877, -0.0029546
        %v7910 = vadd.f32 %v7878, -0.0029546
        %v7911 = vadd.f32 %v7879, -0.0029546
        %v7912 = vadd.f32 %v7880, -0.0029546
        %v7913 = vadd.f32 %v7881, -0.0029546
        %v7914 = vadd.f32 %v7882, -0.0029546
        %v7915 = vadd.f32 %v7883, -0.0029546
        %v7916 = vadd.f32 %v7884, -0.0029546
        %v7917 = vadd.f32 %v7885, -0.0029546
        %v7918 = vadd.f32 %v7886, -0.0029546
        %v7919 = vadd.f32 %v7887, -0.0029546
        %v7920 = vadd.f32 %v7888, -0.0029546
        %v7921 = vadd.f32 %v7889, -0.0029546
        %v7922 = vadd.f32 %v7890, -0.0029546
        %v7923 = vadd.f32 %v7891, -0.0029546
        %v7924 = vadd.f32 %v7892, -0.0029546
        %v7925 = vadd.f32 %v7893, -0.0029546
        %v7926 = vadd.f32 %v7894, -0.0029546
        %v7927 = vmul.f32 %v7895, %v7575
        %v7928 = vmul.f32 %v7896, %v7576
        %v7929 = vmul.f32 %v7897, %v7577
        %v7930 = vmul.f32 %v7898, %v7578
        %v7931 = vmul.f32 %v7899, %v7579
        %v7932 = vmul.f32 %v7900, %v7580
        %v7933 = vmul.f32 %v7901, %v7581
        %v7934 = vmul.f32 %v7902, %v7582
        %v7935 = vmul.f32 %v7903, %v7583
        %v7936 = vmul.f32 %v7904, %v7584
        %v7937 = vmul.f32 %v7905, %v7585
        %v7938 = vmul.f32 %v7906, %v7586
        %v7939 = vmul.f32 %v7907, %v7587
        %v7940 = vmul.f32 %v7908, %v7588
        %v7941 = vmul.f32 %v7909, %v7589
        %v7942 = vmul.f32 %v7910, %v7590
        %v7943 = vmul.f32 %v7911, %v7591
        %v7944 = vmul.f32 %v7912, %v7592
        %v7945 = vmul.f32 %v7913, %v7593
        %v7946 = vmul.f32 %v7914, %v7594
        %v7947 = vmul.f32 %v7915, %v7595
        %v7948 = vmul.f32 %v7916, %v7596
        %v7949 = vmul.f32 %v7917, %v7597
        %v7950 = vmul.f32 %v7918, %v7598
        %v7951 = vmul.f32 %v7919, %v7599
        %v7952 = vmul.f32 %v7920, %v7600
        %v7953 = vmul.f32 %v7921, %v7601
        %v7954 = vmul.f32 %v7922, %v7602
        %v7955 = vmul.f32 %v7923, %v7603
        %v7956 = vmul.f32 %v7924, %v7604
        %v7957 = vmul.f32 %v7925, %v7605
        %v7958 = vmul.f32 %v7926, %v7606
        %v7959 = vadd.f32 %v7927, -0.016096033
        %v7960 = vadd.f32 %v7928, -0.016096033
        %v7961 = vadd.f32 %v7929, -0.016096033
        %v7962 = vadd.f32 %v7930, -0.016096033
        %v7963 = vadd.f32 %v7931, -0.016096033
        %v7964 = vadd.f32 %v7932, -0.016096033
        %v7965 = vadd.f32 %v7933, -0.016096033
        %v7966 = vadd.f32 %v7934, -0.016096033
        %v7967 = vadd.f32 %v7935, -0.016096033
        %v7968 = vadd.f32 %v7936, -0.016096033
        %v7969 = vadd.f32 %v7937, -0.016096033
        %v7970 = vadd.f32 %v7938, -0.016096033
        %v7971 = vadd.f32 %v7939, -0.016096033
        %v7972 = vadd.f32 %v7940, -0.016096033
        %v7973 = vadd.f32 %v7941, -0.016096033
        %v7974 = vadd.f32 %v7942, -0.016096033
        %v7975 = vadd.f32 %v7943, -0.016096033
        %v7976 = vadd.f32 %v7944, -0.016096033
        %v7977 = vadd.f32 %v7945, -0.016096033
        %v7978 = vadd.f32 %v7946, -0.016096033
        %v7979 = vadd.f32 %v7947, -0.016096033
        %v7980 = vadd.f32 %v7948, -0.016096033
        %v7981 = vadd.f32 %v7949, -0.016096033
        %v7982 = vadd.f32 %v7950, -0.016096033
        %v7983 = vadd.f32 %v7951, -0.016096033
        %v7984 = vadd.f32 %v7952, -0.016096033
        %v7985 = vadd.f32 %v7953, -0.016096033
        %v7986 = vadd.f32 %v7954, -0.016096033
        %v7987 = vadd.f32 %v7955, -0.016096033
        %v7988 = vadd.f32 %v7956, -0.016096033
        %v7989 = vadd.f32 %v7957, -0.016096033
        %v7990 = vadd.f32 %v7958, -0.016096033
        %v7991 = vmul.f32 %v7959, %v7543
        %v7992 = vmul.f32 %v7960, %v7544
        %v7993 = vmul.f32 %v7961, %v7545
        %v7994 = vmul.f32 %v7962, %v7546
        %v7995 = vmul.f32 %v7963, %v7547
        %v7996 = vmul.f32 %v7964, %v7548
        %v7997 = vmul.f32 %v7965, %v7549
        %v7998 = vmul.f32 %v7966, %v7550
        %v7999 = vmul.f32 %v7967, %v7551
        %v8000 = vmul.f32 %v7968, %v7552
        %v8001 = vmul.f32 %v7969, %v7553
        %v8002 = vmul.f32 %v7970, %v7554
        %v8003 = vmul.f32 %v7971, %v7555
        %v8004 = vmul.f32 %v7972, %v7556
        %v8005 = vmul.f32 %v7973, %v7557
        %v8006 = vmul.f32 %v7974, %v7558
        %v8007 = vmul.f32 %v7975, %v7559
        %v8008 = vmul.f32 %v7976, %v7560
        %v8009 = vmul.f32 %v7977, %v7561
        %v8010 = vmul.f32 %v7978, %v7562
        %v8011 = vmul.f32 %v7979, %v7563
        %v8012 = vmul.f32 %v7980, %v7564
        %v8013 = vmul.f32 %v7981, %v7565
        %v8014 = vmul.f32 %v7982, %v7566
        %v8015 = vmul.f32 %v7983, %v7567
        %v8016 = vmul.f32 %v7984, %v7568
        %v8017 = vmul.f32 %v7985, %v7569
        %v8018 = vmul.f32 %v7986, %v7570
        %v8019 = vmul.f32 %v7987, %v7571
        %v8020 = vmul.f32 %v7988, %v7572
        %v8021 = vmul.f32 %v7989, %v7573
        %v8022 = vmul.f32 %v7990, %v7574
        %v8023 = vmul.f32 %v7575, -1.45660715e-05
        %v8024 = vmul.f32 %v7576, -1.45660715e-05
        %v8025 = vmul.f32 %v7577, -1.45660715e-05
        %v8026 = vmul.f32 %v7578, -1.45660715e-05
        %v8027 = vmul.f32 %v7579, -1.45660715e-05
        %v8028 = vmul.f32 %v7580, -1.45660715e-05
        %v8029 = vmul.f32 %v7581, -1.45660715e-05
        %v8030 = vmul.f32 %v7582, -1.45660715e-05
        %v8031 = vmul.f32 %v7583, -1.45660715e-05
        %v8032 = vmul.f32 %v7584, -1.45660715e-05
        %v8033 = vmul.f32 %v7585, -1.45660715e-05
        %v8034 = vmul.f32 %v7586, -1.45660715e-05
        %v8035 = vmul.f32 %v7587, -1.45660715e-05
        %v8036 = vmul.f32 %v7588, -1.45660715e-05
        %v8037 = vmul.f32 %v7589, -1.45660715e-05
        %v8038 = vmul.f32 %v7590, -1.45660715e-05
        %v8039 = vmul.f32 %v7591, -1.45660715e-05
        %v8040 = vmul.f32 %v7592, -1.45660715e-05
        %v8041 = vmul.f32 %v7593, -1.45660715e-05
        %v8042 = vmul.f32 %v7594, -1.45660715e-05
        %v8043 = vmul.f32 %v7595, -1.45660715e-05
        %v8044 = vmul.f32 %v7596, -1.45660715e-05
        %v8045 = vmul.f32 %v7597, -1.45660715e-05
        %v8046 = vmul.f32 %v7598, -1.45660715e-05
        %v8047 = vmul.f32 %v7599, -1.45660715e-05
        %v8048 = vmul.f32 %v7600, -1.45660715e-05
        %v8049 = vmul.f32 %v7601, -1.45660715e-05
        %v8050 = vmul.f32 %v7602, -1.45660715e-05
        %v8051 = vmul.f32 %v7603, -1.45660715e-05
        %v8052 = vmul.f32 %v7604, -1.45660715e-05
        %v8053 = vmul.f32 %v7605, -1.45660715e-05
        %v8054 = vmul.f32 %v7606, -1.45660715e-05
        %v8055 = vadd.f32 %v8023, -0.00021337405
        %v8056 = vadd.f32 %v8024, -0.00021337405
        %v8057 = vadd.f32 %v8025, -0.00021337405
        %v8058 = vadd.f32 %v8026, -0.00021337405
        %v8059 = vadd.f32 %v8027, -0.00021337405
        %v8060 = vadd.f32 %v8028, -0.00021337405
        %v8061 = vadd.f32 %v8029, -0.00021337405
        %v8062 = vadd.f32 %v8030, -0.00021337405
        %v8063 = vadd.f32 %v8031, -0.00021337405
        %v8064 = vadd.f32 %v8032, -0.00021337405
        %v8065 = vadd.f32 %v8033, -0.00021337405
        %v8066 = vadd.f32 %v8034, -0.00021337405
        %v8067 = vadd.f32 %v8035, -0.00021337405
        %v8068 = vadd.f32 %v8036, -0.00021337405
        %v8069 = vadd.f32 %v8037, -0.00021337405
        %v8070 = vadd.f32 %v8038, -0.00021337405
        %v8071 = vadd.f32 %v8039, -0.00021337405
        %v8072 = vadd.f32 %v8040, -0.00021337405
        %v8073 = vadd.f32 %v8041, -0.00021337405
        %v8074 = vadd.f32 %v8042, -0.00021337405
        %v8075 = vadd.f32 %v8043, -0.00021337405
        %v8076 = vadd.f32 %v8044, -0.00021337405
        %v8077 = vadd.f32 %v8045, -0.00021337405
        %v8078 = vadd.f32 %v8046, -0.00021337405
        %v8079 = vadd.f32 %v8047, -0.00021337405
        %v8080 = vadd.f32 %v8048, -0.00021337405
        %v8081 = vadd.f32 %v8049, -0.00021337405
        %v8082 = vadd.f32 %v8050, -0.00021337405
        %v8083 = vadd.f32 %v8051, -0.00021337405
        %v8084 = vadd.f32 %v8052, -0.00021337405
        %v8085 = vadd.f32 %v8053, -0.00021337405
        %v8086 = vadd.f32 %v8054, -0.00021337405
        %v8087 = vmul.f32 %v8055, %v7575
        %v8088 = vmul.f32 %v8056, %v7576
        %v8089 = vmul.f32 %v8057, %v7577
        %v8090 = vmul.f32 %v8058, %v7578
        %v8091 = vmul.f32 %v8059, %v7579
        %v8092 = vmul.f32 %v8060, %v7580
        %v8093 = vmul.f32 %v8061, %v7581
        %v8094 = vmul.f32 %v8062, %v7582
        %v8095 = vmul.f32 %v8063, %v7583
        %v8096 = vmul.f32 %v8064, %v7584
        %v8097 = vmul.f32 %v8065, %v7585
        %v8098 = vmul.f32 %v8066, %v7586
        %v8099 = vmul.f32 %v8067, %v7587
        %v8100 = vmul.f32 %v8068, %v7588
        %v8101 = vmul.f32 %v8069, %v7589
        %v8102 = vmul.f32 %v8070, %v7590
        %v8103 = vmul.f32 %v8071, %v7591
        %v8104 = vmul.f32 %v8072, %v7592
        %v8105 = vmul.f32 %v8073, %v7593
        %v8106 = vmul.f32 %v8074, %v7594
        %v8107 = vmul.f32 %v8075, %v7595
        %v8108 = vmul.f32 %v8076, %v7596
        %v8109 = vmul.f32 %v8077, %v7597
        %v8110 = vmul.f32 %v8078, %v7598
        %v8111 = vmul.f32 %v8079, %v7599
        %v8112 = vmul.f32 %v8080, %v7600
        %v8113 = vmul.f32 %v8081, %v7601
        %v8114 = vmul.f32 %v8082, %v7602
        %v8115 = vmul.f32 %v8083, %v7603
        %v8116 = vmul.f32 %v8084, %v7604
        %v8117 = vmul.f32 %v8085, %v7605
        %v8118 = vmul.f32 %v8086, %v7606
        %v8119 = vadd.f32 %v8087, -0.001682827
        %v8120 = vadd.f32 %v8088, -0.001682827
        %v8121 = vadd.f32 %v8089, -0.001682827
        %v8122 = vadd.f32 %v8090, -0.001682827
        %v8123 = vadd.f32 %v8091, -0.001682827
        %v8124 = vadd.f32 %v8092, -0.001682827
        %v8125 = vadd.f32 %v8093, -0.001682827
        %v8126 = vadd.f32 %v8094, -0.001682827
        %v8127 = vadd.f32 %v8095, -0.001682827
        %v8128 = vadd.f32 %v8096, -0.001682827
        %v8129 = vadd.f32 %v8097, -0.001682827
        %v8130 = vadd.f32 %v8098, -0.001682827
        %v8131 = vadd.f32 %v8099, -0.001682827
        %v8132 = vadd.f32 %v8100, -0.001682827
        %v8133 = vadd.f32 %v8101, -0.001682827
        %v8134 = vadd.f32 %v8102, -0.001682827
        %v8135 = vadd.f32 %v8103, -0.001682827
        %v8136 = vadd.f32 %v8104, -0.001682827
        %v8137 = vadd.f32 %v8105, -0.001682827
        %v8138 = vadd.f32 %v8106, -0.001682827
        %v8139 = vadd.f32 %v8107, -0.001682827
        %v8140 = vadd.f32 %v8108, -0.001682827
        %v8141 = vadd.f32 %v8109, -0.001682827
        %v8142 = vadd.f32 %v8110, -0.001682827
        %v8143 = vadd.f32 %v8111, -0.001682827
        %v8144 = vadd.f32 %v8112, -0.001682827
        %v8145 = vadd.f32 %v8113, -0.001682827
        %v8146 = vadd.f32 %v8114, -0.001682827
        %v8147 = vadd.f32 %v8115, -0.001682827
        %v8148 = vadd.f32 %v8116, -0.001682827
        %v8149 = vadd.f32 %v8117, -0.001682827
        %v8150 = vadd.f32 %v8118, -0.001682827
        %v8151 = vmul.f32 %v8119, %v7575
        %v8152 = vmul.f32 %v8120, %v7576
        %v8153 = vmul.f32 %v8121, %v7577
        %v8154 = vmul.f32 %v8122, %v7578
        %v8155 = vmul.f32 %v8123, %v7579
        %v8156 = vmul.f32 %v8124, %v7580
        %v8157 = vmul.f32 %v8125, %v7581
        %v8158 = vmul.f32 %v8126, %v7582
        %v8159 = vmul.f32 %v8127, %v7583
        %v8160 = vmul.f32 %v8128, %v7584
        %v8161 = vmul.f32 %v8129, %v7585
        %v8162 = vmul.f32 %v8130, %v7586
        %v8163 = vmul.f32 %v8131, %v7587
        %v8164 = vmul.f32 %v8132, %v7588
        %v8165 = vmul.f32 %v8133, %v7589
        %v8166 = vmul.f32 %v8134, %v7590
        %v8167 = vmul.f32 %v8135, %v7591
        %v8168 = vmul.f32 %v8136, %v7592
        %v8169 = vmul.f32 %v8137, %v7593
        %v8170 = vmul.f32 %v8138, %v7594
        %v8171 = vmul.f32 %v8139, %v7595
        %v8172 = vmul.f32 %v8140, %v7596
        %v8173 = vmul.f32 %v8141, %v7597
        %v8174 = vmul.f32 %v8142, %v7598
        %v8175 = vmul.f32 %v8143, %v7599
        %v8176 = vmul.f32 %v8144, %v7600
        %v8177 = vmul.f32 %v8145, %v7601
        %v8178 = vmul.f32 %v8146, %v7602
        %v8179 = vmul.f32 %v8147, %v7603
        %v8180 = vmul.f32 %v8148, %v7604
        %v8181 = vmul.f32 %v8149, %v7605
        %v8182 = vmul.f32 %v8150, %v7606
        %v8183 = vadd.f32 %v8151, -0.0073733293
        %v8184 = vadd.f32 %v8152, -0.0073733293
        %v8185 = vadd.f32 %v8153, -0.0073733293
        %v8186 = vadd.f32 %v8154, -0.0073733293
        %v8187 = vadd.f32 %v8155, -0.0073733293
        %v8188 = vadd.f32 %v8156, -0.0073733293
        %v8189 = vadd.f32 %v8157, -0.0073733293
        %v8190 = vadd.f32 %v8158, -0.0073733293
        %v8191 = vadd.f32 %v8159, -0.0073733293
        %v8192 = vadd.f32 %v8160, -0.0073733293
        %v8193 = vadd.f32 %v8161, -0.0073733293
        %v8194 = vadd.f32 %v8162, -0.0073733293
        %v8195 = vadd.f32 %v8163, -0.0073733293
        %v8196 = vadd.f32 %v8164, -0.0073733293
        %v8197 = vadd.f32 %v8165, -0.0073733293
        %v8198 = vadd.f32 %v8166, -0.0073733293
        %v8199 = vadd.f32 %v8167, -0.0073733293
        %v8200 = vadd.f32 %v8168, -0.0073733293
        %v8201 = vadd.f32 %v8169, -0.0073733293
        %v8202 = vadd.f32 %v8170, -0.0073733293
        %v8203 = vadd.f32 %v8171, -0.0073733293
        %v8204 = vadd.f32 %v8172, -0.0073733293
        %v8205 = vadd.f32 %v8173, -0.0073733293
        %v8206 = vadd.f32 %v8174, -0.0073733293
        %v8207 = vadd.f32 %v8175, -0.0073733293
        %v8208 = vadd.f32 %v8176, -0.0073733293
        %v8209 = vadd.f32 %v8177, -0.0073733293
        %v8210 = vadd.f32 %v8178, -0.0073733293
        %v8211 = vadd.f32 %v8179, -0.0073733293
        %v8212 = vadd.f32 %v8180, -0.0073733293
        %v8213 = vadd.f32 %v8181, -0.0073733293
        %v8214 = vadd.f32 %v8182, -0.0073733293
        %v8215 = vmul.f32 %v8183, %v7575
        %v8216 = vmul.f32 %v8184, %v7576
        %v8217 = vmul.f32 %v8185, %v7577
        %v8218 = vmul.f32 %v8186, %v7578
        %v8219 = vmul.f32 %v8187, %v7579
        %v8220 = vmul.f32 %v8188, %v7580
        %v8221 = vmul.f32 %v8189, %v7581
        %v8222 = vmul.f32 %v8190, %v7582
        %v8223 = vmul.f32 %v8191, %v7583
        %v8224 = vmul.f32 %v8192, %v7584
        %v8225 = vmul.f32 %v8193, %v7585
        %v8226 = vmul.f32 %v8194, %v7586
        %v8227 = vmul.f32 %v8195, %v7587
        %v8228 = vmul.f32 %v8196, %v7588
        %v8229 = vmul.f32 %v8197, %v7589
        %v8230 = vmul.f32 %v8198, %v7590
        %v8231 = vmul.f32 %v8199, %v7591
        %v8232 = vmul.f32 %v8200, %v7592
        %v8233 = vmul.f32 %v8201, %v7593
        %v8234 = vmul.f32 %v8202, %v7594
        %v8235 = vmul.f32 %v8203, %v7595
        %v8236 = vmul.f32 %v8204, %v7596
        %v8237 = vmul.f32 %v8205, %v7597
        %v8238 = vmul.f32 %v8206, %v7598
        %v8239 = vmul.f32 %v8207, %v7599
        %v8240 = vmul.f32 %v8208, %v7600
        %v8241 = vmul.f32 %v8209, %v7601
        %v8242 = vmul.f32 %v8210, %v7602
        %v8243 = vmul.f32 %v8211, %v7603
        %v8244 = vmul.f32 %v8212, %v7604
        %v8245 = vmul.f32 %v8213, %v7605
        %v8246 = vmul.f32 %v8214, %v7606
        %v8247 = vadd.f32 %v8215, -0.014264739
        %v8248 = vadd.f32 %v8216, -0.014264739
        %v8249 = vadd.f32 %v8217, -0.014264739
        %v8250 = vadd.f32 %v8218, -0.014264739
        %v8251 = vadd.f32 %v8219, -0.014264739
        %v8252 = vadd.f32 %v8220, -0.014264739
        %v8253 = vadd.f32 %v8221, -0.014264739
        %v8254 = vadd.f32 %v8222, -0.014264739
        %v8255 = vadd.f32 %v8223, -0.014264739
        %v8256 = vadd.f32 %v8224, -0.014264739
        %v8257 = vadd.f32 %v8225, -0.014264739
        %v8258 = vadd.f32 %v8226, -0.014264739
        %v8259 = vadd.f32 %v8227, -0.014264739
        %v8260 = vadd.f32 %v8228, -0.014264739
        %v8261 = vadd.f32 %v8229, -0.014264739
        %v8262 = vadd.f32 %v8230, -0.014264739
        %v8263 = vadd.f32 %v8231, -0.014264739
        %v8264 = vadd.f32 %v8232, -0.014264739
        %v8265 = vadd.f32 %v8233, -0.014264739
        %v8266 = vadd.f32 %v8234, -0.014264739
        %v8267 = vadd.f32 %v8235, -0.014264739
        %v8268 = vadd.f32 %v8236, -0.014264739
        %v8269 = vadd.f32 %v8237, -0.014264739
        %v8270 = vadd.f32 %v8238, -0.014264739
        %v8271 = vadd.f32 %v8239, -0.014264739
        %v8272 = vadd.f32 %v8240, -0.014264739
        %v8273 = vadd.f32 %v8241, -0.014264739
        %v8274 = vadd.f32 %v8242, -0.014264739
        %v8275 = vadd.f32 %v8243, -0.014264739
        %v8276 = vadd.f32 %v8244, -0.014264739
        %v8277 = vadd.f32 %v8245, -0.014264739
        %v8278 = vadd.f32 %v8246, -0.014264739
        %v8279 = vrcp.pop %v8247
        %v8280 = vmul.f32 %v7991, %v8279
        %v8281 = vrcp.pop %v8248
        %v8282 = vmul.f32 %v7992, %v8281
        %v8283 = vrcp.pop %v8249
        %v8284 = vmul.f32 %v7993, %v8283
        %v8285 = vrcp.pop %v8250
        %v8286 = vmul.f32 %v7994, %v8285
        %v8287 = vrcp.pop %v8251
        %v8288 = vmul.f32 %v7995, %v8287
        %v8289 = vrcp.pop %v8252
        %v8290 = vmul.f32 %v7996, %v8289
        %v8291 = vrcp.pop %v8253
        %v8292 = vmul.f32 %v7997, %v8291
        %v8293 = vrcp.pop %v8254
        %v8294 = vmul.f32 %v7998, %v8293
        %v8295 = vrcp.pop %v8255
        %v8296 = vmul.f32 %v7999, %v8295
        %v8297 = vrcp.pop %v8256
        %v8298 = vmul.f32 %v8000, %v8297
        %v8299 = vrcp.pop %v8257
        %v8300 = vmul.f32 %v8001, %v8299
        %v8301 = vrcp.pop %v8258
        %v8302 = vmul.f32 %v8002, %v8301
        %v8303 = vrcp.pop %v8259
        %v8304 = vmul.f32 %v8003, %v8303
        %v8305 = vrcp.pop %v8260
        %v8306 = vmul.f32 %v8004, %v8305
        %v8307 = vrcp.pop %v8261
        %v8308 = vmul.f32 %v8005, %v8307
        %v8309 = vrcp.pop %v8262
        %v8310 = vmul.f32 %v8006, %v8309
        %v8311 = vrcp.pop %v8263
        %v8312 = vmul.f32 %v8007, %v8311
        %v8313 = vrcp.pop %v8264
        %v8314 = vmul.f32 %v8008, %v8313
        %v8315 = vrcp.pop %v8265
        %v8316 = vmul.f32 %v8009, %v8315
        %v8317 = vrcp.pop %v8266
        %v8318 = vmul.f32 %v8010, %v8317
        %v8319 = vrcp.pop %v8267
        %v8320 = vmul.f32 %v8011, %v8319
        %v8321 = vrcp.pop %v8268
        %v8322 = vmul.f32 %v8012, %v8321
        %v8323 = vrcp.pop %v8269
        %v8324 = vmul.f32 %v8013, %v8323
        %v8325 = vrcp.pop %v8270
        %v8326 = vmul.f32 %v8014, %v8325
        %v8327 = vrcp.pop %v8271
        %v8328 = vmul.f32 %v8015, %v8327
        %v8329 = vrcp.pop %v8272
        %v8330 = vmul.f32 %v8016, %v8329
        %v8331 = vrcp.pop %v8273
        %v8332 = vmul.f32 %v8017, %v8331
        %v8333 = vrcp.pop %v8274
        %v8334 = vmul.f32 %v8018, %v8333
        %v8335 = vrcp.pop %v8275
        %v8336 = vmul.f32 %v8019, %v8335
        %v8337 = vrcp.pop %v8276
        %v8338 = vmul.f32 %v8020, %v8337
        %v8339 = vrcp.pop %v8277
        %v8340 = vmul.f32 %v8021, %v8339
        %v8341 = vrcp.pop %v8278
        %v8342 = vmul.f32 %v8022, %v8341
        %v8343 = vadd.f32 %v8280, 1.0
        %v8344 = vadd.f32 %v8282, 1.0
        %v8345 = vadd.f32 %v8284, 1.0
        %v8346 = vadd.f32 %v8286, 1.0
        %v8347 = vadd.f32 %v8288, 1.0
        %v8348 = vadd.f32 %v8290, 1.0
        %v8349 = vadd.f32 %v8292, 1.0
        %v8350 = vadd.f32 %v8294, 1.0
        %v8351 = vadd.f32 %v8296, 1.0
        %v8352 = vadd.f32 %v8298, 1.0
        %v8353 = vadd.f32 %v8300, 1.0
        %v8354 = vadd.f32 %v8302, 1.0
        %v8355 = vadd.f32 %v8304, 1.0
        %v8356 = vadd.f32 %v8306, 1.0
        %v8357 = vadd.f32 %v8308, 1.0
        %v8358 = vadd.f32 %v8310, 1.0
        %v8359 = vadd.f32 %v8312, 1.0
        %v8360 = vadd.f32 %v8314, 1.0
        %v8361 = vadd.f32 %v8316, 1.0
        %v8362 = vadd.f32 %v8318, 1.0
        %v8363 = vadd.f32 %v8320, 1.0
        %v8364 = vadd.f32 %v8322, 1.0
        %v8365 = vadd.f32 %v8324, 1.0
        %v8366 = vadd.f32 %v8326, 1.0
        %v8367 = vadd.f32 %v8328, 1.0
        %v8368 = vadd.f32 %v8330, 1.0
        %v8369 = vadd.f32 %v8332, 1.0
        %v8370 = vadd.f32 %v8334, 1.0
        %v8371 = vadd.f32 %v8336, 1.0
        %v8372 = vadd.f32 %v8338, 1.0
        %v8373 = vadd.f32 %v8340, 1.0
        %v8374 = vadd.f32 %v8342, 1.0
        %v8375 = vmul.f32 %v7447, %v8343
        %v8376 = vmul.f32 %v7448, %v8344
        %v8377 = vmul.f32 %v7449, %v8345
        %v8378 = vmul.f32 %v7450, %v8346
        %v8379 = vmul.f32 %v7451, %v8347
        %v8380 = vmul.f32 %v7452, %v8348
        %v8381 = vmul.f32 %v7453, %v8349
        %v8382 = vmul.f32 %v7454, %v8350
        %v8383 = vmul.f32 %v7455, %v8351
        %v8384 = vmul.f32 %v7456, %v8352
        %v8385 = vmul.f32 %v7457, %v8353
        %v8386 = vmul.f32 %v7458, %v8354
        %v8387 = vmul.f32 %v7459, %v8355
        %v8388 = vmul.f32 %v7460, %v8356
        %v8389 = vmul.f32 %v7461, %v8357
        %v8390 = vmul.f32 %v7462, %v8358
        %v8391 = vmul.f32 %v7463, %v8359
        %v8392 = vmul.f32 %v7464, %v8360
        %v8393 = vmul.f32 %v7465, %v8361
        %v8394 = vmul.f32 %v7466, %v8362
        %v8395 = vmul.f32 %v7467, %v8363
        %v8396 = vmul.f32 %v7468, %v8364
        %v8397 = vmul.f32 %v7469, %v8365
        %v8398 = vmul.f32 %v7470, %v8366
        %v8399 = vmul.f32 %v7471, %v8367
        %v8400 = vmul.f32 %v7472, %v8368
        %v8401 = vmul.f32 %v7473, %v8369
        %v8402 = vmul.f32 %v7474, %v8370
        %v8403 = vmul.f32 %v7475, %v8371
        %v8404 = vmul.f32 %v7476, %v8372
        %v8405 = vmul.f32 %v7477, %v8373
        %v8406 = vmul.f32 %v7478, %v8374
        %v8407 = vld [vmem:[%s11] sm:$0xff]
        %v8408 = vld [vmem:[%s11 + $0x8] sm:$0xff]
        %v8409 = vld [vmem:[%s11 + $0x10] sm:$0xff]
        %v8410 = vld [vmem:[%s11 + $0x18] sm:$0xff]
        %v8411 = vld [vmem:[%s11 + $0x20] sm:$0xff]
        %v8412 = vld [vmem:[%s11 + $0x28] sm:$0xff]
        %v8413 = vld [vmem:[%s11 + $0x30] sm:$0xff]
        %v8414 = vld [vmem:[%s11 + $0x38] sm:$0xff]
        %v8415 = vld [vmem:[%s12] sm:$0x1]
        %v8417 = vlaneseq
        %v8418 = vshrl.u32 %v8417, 7
        %v8419 = vsub.s32 0, %v8418
        %v8420 = vrot.slane %v8415, %v8419
        %vm8422 = vcmask 523264
        %v8424 = vsel %vm8422, %v8375, 0
        %v8427 = vsel %vm8422, %v8376, 0
        %v8430 = vsel %vm8422, %v8377, 0
        %v8433 = vsel %vm8422, %v8378, 0
        %v8436 = vsel %vm8422, %v8379, 0
        %v8439 = vsel %vm8422, %v8380, 0
        %v8442 = vsel %vm8422, %v8381, 0
        %v8445 = vsel %vm8422, %v8382, 0
        %v8448 = vsel %vm8422, %v8383, 0
        %v8451 = vsel %vm8422, %v8384, 0
        %v8454 = vsel %vm8422, %v8385, 0
        %v8457 = vsel %vm8422, %v8386, 0
        %v8460 = vsel %vm8422, %v8387, 0
        %v8463 = vsel %vm8422, %v8388, 0
        %v8466 = vsel %vm8422, %v8389, 0
        %v8469 = vsel %vm8422, %v8390, 0
        %v8472 = vsel %vm8422, %v8391, 0
        %v8475 = vsel %vm8422, %v8392, 0
        %v8478 = vsel %vm8422, %v8393, 0
        %v8481 = vsel %vm8422, %v8394, 0
        %v8484 = vsel %vm8422, %v8395, 0
        %v8487 = vsel %vm8422, %v8396, 0
        %v8490 = vsel %vm8422, %v8397, 0
        %v8493 = vsel %vm8422, %v8398, 0
        %v8496 = vsel %vm8422, %v8399, 0
        %v8499 = vsel %vm8422, %v8400, 0
        %v8502 = vsel %vm8422, %v8401, 0
        %v8505 = vsel %vm8422, %v8402, 0
        %v8508 = vsel %vm8422, %v8403, 0
        %v8511 = vsel %vm8422, %v8404, 0
        %v8514 = vsel %vm8422, %v8405, 0
        %v8517 = vsel %vm8422, %v8406, 0
        %8519 = vmatprep.subr.mxu0 0.0
        %8520 = vmatpush1.msra.mxu0 %v8407
        %8521 = vmatprep.subr.mxu0 0.0
        %8522 = vmatpush1.msra.mxu0 %v8408
        %8523 = vmatprep.subr.mxu0 0.0
        %8524 = vmatpush1.msra.mxu0 %v8409
        %8525 = vmatprep.subr.mxu0 0.0
        %8526 = vmatpush1.msra.mxu0 %v8410
        %8527 = vmatprep.subr.mxu0 0.0
        %8528 = vmatpush1.msra.mxu0 %v8411
        %8529 = vmatprep.subr.mxu0 0.0
        %8530 = vmatpush1.msra.mxu0 %v8412
        %8531 = vmatprep.subr.mxu0 0.0
        %8532 = vmatpush1.msra.mxu0 %v8413
        %8533 = vmatprep.subr.mxu0 0.0
        %8534 = vmatpush1.msra.mxu0 %v8414
        %8535 = vmatprep.subr.mxu0 0.0
        %8536 = vmatpush1.msra.mxu0 0.0
        %8537 = vmatprep.subr.mxu0 0.0
        %8538 = vmatpush1.msra.mxu0 0.0
        %8539 = vmatprep.subr.mxu0 0.0
        %8540 = vmatpush1.msra.mxu0 0.0
        %8541 = vmatprep.subr.mxu0 0.0
        %8542 = vmatpush1.msra.mxu0 0.0
        %8543 = vmatprep.subr.mxu0 0.0
        %8544 = vmatpush1.msra.mxu0 0.0
        %8545 = vmatprep.subr.mxu0 0.0
        %8546 = vmatpush1.msra.mxu0 0.0
        %8547 = vmatprep.subr.mxu0 0.0
        %8548 = vmatpush1.msra.mxu0 0.0
        %8549 = vmatprep.subr.mxu0 0.0
        %8550 = vmatpush1.msra.mxu0 0.0
        %8551 = vmatprep.subr.mxu0 0.0
        %8552 = vmatpush1.msra.mxu0 0.0
        %8553 = vmatprep.subr.mxu0 0.0
        %8554 = vmatpush1.msra.mxu0 0.0
        %8555 = vmatprep.subr.mxu0 0.0
        %8556 = vmatpush1.msra.mxu0 0.0
        %8557 = vmatprep.subr.mxu0 0.0
        %8558 = vmatpush1.msra.mxu0 0.0
        %8559 = vmatprep.subr.mxu0 0.0
        %8560 = vmatpush1.msra.mxu0 0.0
        %8561 = vmatprep.subr.mxu0 0.0
        %8562 = vmatpush1.msra.mxu0 0.0
        %8563 = vmatprep.subr.mxu0 0.0
        %8564 = vmatpush1.msra.mxu0 0.0
        %8565 = vmatprep.subr.mxu0 0.0
        %8566 = vmatpush1.msra.mxu0 0.0
        %8567 = vmatprep.subr.mxu0 0.0
        %8568 = vmatpush1.msra.mxu0 0.0
        %8569 = vmatprep.subr.mxu0 0.0
        %8570 = vmatpush1.msra.mxu0 0.0
        %8571 = vmatprep.subr.mxu0 0.0
        %8572 = vmatpush1.msra.mxu0 0.0
        %8573 = vmatprep.subr.mxu0 0.0
        %8574 = vmatpush1.msra.mxu0 0.0
        %8575 = vmatprep.subr.mxu0 0.0
        %8576 = vmatpush1.msra.mxu0 0.0
        %8577 = vmatprep.subr.mxu0 0.0
        %8578 = vmatpush1.msra.mxu0 0.0
        %8579 = vmatprep.subr.mxu0 0.0
        %8580 = vmatpush1.msra.mxu0 0.0
        %8581 = vmatprep.subr.mxu0 0.0
        %8582 = vmatpush1.msra.mxu0 0.0
        %8583 = vmatprep.mubr.f32.mxu0 0.0
        %8584 = vmatmul.mubr.f32.gmra.mrb[0].mxu0 %v8424
        %v8585 = vpop.f32.mrb[0].mxu0
        %v8586 = vadd.f32 %v8420, %v8585
        %v8587 = vpop.f32.mrb[0].mxu0
        %8588 = vmatprep.mubr.f32.mxu0 0.0
        %8589 = vmatmul.mubr.f32.gmra.mrb[0].mxu0 %v8427
        %v8590 = vpop.f32.mrb[0].mxu0
        %v8591 = vadd.f32 %v8420, %v8590
        %v8592 = vpop.f32.mrb[0].mxu0
        %8593 = vmatprep.mubr.f32.mxu0 0.0
        %8594 = vmatmul.mubr.f32.gmra.mrb[0].mxu0 %v8430
        %v8595 = vpop.f32.mrb[0].mxu0
        %v8596 = vadd.f32 %v8420, %v8595
        %v8597 = vpop.f32.mrb[0].mxu0
        %8598 = vmatprep.mubr.f32.mxu0 0.0
        %8599 = vmatmul.mubr.f32.gmra.mrb[0].mxu0 %v8433
        %v8600 = vpop.f32.mrb[0].mxu0
        %v8601 = vadd.f32 %v8420, %v8600
        %v8602 = vpop.f32.mrb[0].mxu0
        %8603 = vmatprep.mubr.f32.mxu0 0.0
        %8604 = vmatmul.mubr.f32.gmra.mrb[0].mxu0 %v8436
        %v8605 = vpop.f32.mrb[0].mxu0
        %v8606 = vadd.f32 %v8420, %v8605
        %v8607 = vpop.f32.mrb[0].mxu0
        %8608 = vmatprep.mubr.f32.mxu0 0.0
        %8609 = vmatmul.mubr.f32.gmra.mrb[0].mxu0 %v8439
        %v8610 = vpop.f32.mrb[0].mxu0
        %v8611 = vadd.f32 %v8420, %v8610
        %v8612 = vpop.f32.mrb[0].mxu0
        %8613 = vmatprep.mubr.f32.mxu0 0.0
        %8614 = vmatmul.mubr.f32.gmra.mrb[0].mxu0 %v8442
        %v8615 = vpop.f32.mrb[0].mxu0
        %v8616 = vadd.f32 %v8420, %v8615
        %v8617 = vpop.f32.mrb[0].mxu0
        %8618 = vmatprep.mubr.f32.mxu0 0.0
        %8619 = vmatmul.mubr.f32.gmra.mrb[0].mxu0 %v8445
        %v8620 = vpop.f32.mrb[0].mxu0
        %v8621 = vadd.f32 %v8420, %v8620
        %v8622 = vpop.f32.mrb[0].mxu0
        %8623 = vmatprep.mubr.f32.mxu0 0.0
        %8624 = vmatmul.mubr.f32.gmra.mrb[0].mxu0 %v8448
        %v8625 = vpop.f32.mrb[0].mxu0
        %v8626 = vadd.f32 %v8420, %v8625
        %v8627 = vpop.f32.mrb[0].mxu0
        %8628 = vmatprep.mubr.f32.mxu0 0.0
        %8629 = vmatmul.mubr.f32.gmra.mrb[0].mxu0 %v8451
        %v8630 = vpop.f32.mrb[0].mxu0
        %v8631 = vadd.f32 %v8420, %v8630
        %v8632 = vpop.f32.mrb[0].mxu0
        %8633 = vmatprep.mubr.f32.mxu0 0.0
        %8634 = vmatmul.mubr.f32.gmra.mrb[0].mxu0 %v8454
        %v8635 = vpop.f32.mrb[0].mxu0
        %v8636 = vadd.f32 %v8420, %v8635
        %v8637 = vpop.f32.mrb[0].mxu0
        %8638 = vmatprep.mubr.f32.mxu0 0.0
        %8639 = vmatmul.mubr.f32.gmra.mrb[0].mxu0 %v8457
        %v8640 = vpop.f32.mrb[0].mxu0
        %v8641 = vadd.f32 %v8420, %v8640
        %v8642 = vpop.f32.mrb[0].mxu0
        %8643 = vmatprep.mubr.f32.mxu0 0.0
        %8644 = vmatmul.mubr.f32.gmra.mrb[0].mxu0 %v8460
        %v8645 = vpop.f32.mrb[0].mxu0
        %v8646 = vadd.f32 %v8420, %v8645
        %v8647 = vpop.f32.mrb[0].mxu0
        %8648 = vmatprep.mubr.f32.mxu0 0.0
        %8649 = vmatmul.mubr.f32.gmra.mrb[0].mxu0 %v8463
        %v8650 = vpop.f32.mrb[0].mxu0
        %v8651 = vadd.f32 %v8420, %v8650
        %v8652 = vpop.f32.mrb[0].mxu0
        %8653 = vmatprep.mubr.f32.mxu0 0.0
        %8654 = vmatmul.mubr.f32.gmra.mrb[0].mxu0 %v8466
        %v8655 = vpop.f32.mrb[0].mxu0
        %v8656 = vadd.f32 %v8420, %v8655
        %v8657 = vpop.f32.mrb[0].mxu0
        %8658 = vmatprep.mubr.f32.mxu0 0.0
        %8659 = vmatmul.mubr.f32.gmra.mrb[0].mxu0 %v8469
        %v8660 = vpop.f32.mrb[0].mxu0
        %v8661 = vadd.f32 %v8420, %v8660
        %v8662 = vpop.f32.mrb[0].mxu0
        %8663 = vmatprep.mubr.f32.mxu0 0.0
        %8664 = vmatmul.mubr.f32.gmra.mrb[0].mxu0 %v8472
        %v8665 = vpop.f32.mrb[0].mxu0
        %v8666 = vadd.f32 %v8420, %v8665
        %v8667 = vpop.f32.mrb[0].mxu0
        %8668 = vmatprep.mubr.f32.mxu0 0.0
        %8669 = vmatmul.mubr.f32.gmra.mrb[0].mxu0 %v8475
        %v8670 = vpop.f32.mrb[0].mxu0
        %v8671 = vadd.f32 %v8420, %v8670
        %v8672 = vpop.f32.mrb[0].mxu0
        %8673 = vmatprep.mubr.f32.mxu0 0.0
        %8674 = vmatmul.mubr.f32.gmra.mrb[0].mxu0 %v8478
        %v8675 = vpop.f32.mrb[0].mxu0
        %v8676 = vadd.f32 %v8420, %v8675
        %v8677 = vpop.f32.mrb[0].mxu0
        %8678 = vmatprep.mubr.f32.mxu0 0.0
        %8679 = vmatmul.mubr.f32.gmra.mrb[0].mxu0 %v8481
        %v8680 = vpop.f32.mrb[0].mxu0
        %v8681 = vadd.f32 %v8420, %v8680
        %v8682 = vpop.f32.mrb[0].mxu0
        %8683 = vmatprep.mubr.f32.mxu0 0.0
        %8684 = vmatmul.mubr.f32.gmra.mrb[0].mxu0 %v8484
        %v8685 = vpop.f32.mrb[0].mxu0
        %v8686 = vadd.f32 %v8420, %v8685
        %v8687 = vpop.f32.mrb[0].mxu0
        %8688 = vmatprep.mubr.f32.mxu0 0.0
        %8689 = vmatmul.mubr.f32.gmra.mrb[0].mxu0 %v8487
        %v8690 = vpop.f32.mrb[0].mxu0
        %v8691 = vadd.f32 %v8420, %v8690
        %v8692 = vpop.f32.mrb[0].mxu0
        %8693 = vmatprep.mubr.f32.mxu0 0.0
        %8694 = vmatmul.mubr.f32.gmra.mrb[0].mxu0 %v8490
        %v8695 = vpop.f32.mrb[0].mxu0
        %v8696 = vadd.f32 %v8420, %v8695
        %v8697 = vpop.f32.mrb[0].mxu0
        %8698 = vmatprep.mubr.f32.mxu0 0.0
        %8699 = vmatmul.mubr.f32.gmra.mrb[0].mxu0 %v8493
        %v8700 = vpop.f32.mrb[0].mxu0
        %v8701 = vadd.f32 %v8420, %v8700
        %v8702 = vpop.f32.mrb[0].mxu0
        %8703 = vmatprep.mubr.f32.mxu0 0.0
        %8704 = vmatmul.mubr.f32.gmra.mrb[0].mxu0 %v8496
        %v8705 = vpop.f32.mrb[0].mxu0
        %v8706 = vadd.f32 %v8420, %v8705
        %v8707 = vpop.f32.mrb[0].mxu0
        %8708 = vmatprep.mubr.f32.mxu0 0.0
        %8709 = vmatmul.mubr.f32.gmra.mrb[0].mxu0 %v8499
        %v8710 = vpop.f32.mrb[0].mxu0
        %v8711 = vadd.f32 %v8420, %v8710
        %v8712 = vpop.f32.mrb[0].mxu0
        %8713 = vmatprep.mubr.f32.mxu0 0.0
        %8714 = vmatmul.mubr.f32.gmra.mrb[0].mxu0 %v8502
        %v8715 = vpop.f32.mrb[0].mxu0
        %v8716 = vadd.f32 %v8420, %v8715
        %v8717 = vpop.f32.mrb[0].mxu0
        %8718 = vmatprep.mubr.f32.mxu0 0.0
        %8719 = vmatmul.mubr.f32.gmra.mrb[0].mxu0 %v8505
        %v8720 = vpop.f32.mrb[0].mxu0
        %v8721 = vadd.f32 %v8420, %v8720
        %v8722 = vpop.f32.mrb[0].mxu0
        %8723 = vmatprep.mubr.f32.mxu0 0.0
        %8724 = vmatmul.mubr.f32.gmra.mrb[0].mxu0 %v8508
        %v8725 = vpop.f32.mrb[0].mxu0
        %v8726 = vadd.f32 %v8420, %v8725
        %v8727 = vpop.f32.mrb[0].mxu0
        %8728 = vmatprep.mubr.f32.mxu0 0.0
        %8729 = vmatmul.mubr.f32.gmra.mrb[0].mxu0 %v8511
        %v8730 = vpop.f32.mrb[0].mxu0
        %v8731 = vadd.f32 %v8420, %v8730
        %v8732 = vpop.f32.mrb[0].mxu0
        %8733 = vmatprep.mubr.f32.mxu0 0.0
        %8734 = vmatmul.mubr.f32.gmra.mrb[0].mxu0 %v8514
        %v8735 = vpop.f32.mrb[0].mxu0
        %v8736 = vadd.f32 %v8420, %v8735
        %v8737 = vpop.f32.mrb[0].mxu0
        %8738 = vmatprep.mubr.f32.mxu0 0.0
        %8739 = vmatmul.mubr.f32.gmra.mrb[0].mxu0 %v8517
        %v8740 = vpop.f32.mrb[0].mxu0
        %v8741 = vadd.f32 %v8420, %v8740
        %v8742 = vpop.f32.mrb[0].mxu0
        %8743 = vdwg.mxu0
        %v8744 = vadd.f32 %v8586, %v6667
        %v8745 = vadd.f32 %v8591, %v6668
        %v8746 = vadd.f32 %v8596, %v6669
        %v8747 = vadd.f32 %v8601, %v6670
        %v8748 = vadd.f32 %v8606, %v6671
        %v8749 = vadd.f32 %v8611, %v6672
        %v8750 = vadd.f32 %v8616, %v6673
        %v8751 = vadd.f32 %v8621, %v6674
        %v8752 = vadd.f32 %v8626, %v6675
        %v8753 = vadd.f32 %v8631, %v6676
        %v8754 = vadd.f32 %v8636, %v6677
        %v8755 = vadd.f32 %v8641, %v6678
        %v8756 = vadd.f32 %v8646, %v6679
        %v8757 = vadd.f32 %v8651, %v6680
        %v8758 = vadd.f32 %v8656, %v6681
        %v8759 = vadd.f32 %v8661, %v6682
        %v8760 = vadd.f32 %v8666, %v6683
        %v8761 = vadd.f32 %v8671, %v6684
        %v8762 = vadd.f32 %v8676, %v6685
        %v8763 = vadd.f32 %v8681, %v6686
        %v8764 = vadd.f32 %v8686, %v6687
        %v8765 = vadd.f32 %v8691, %v6688
        %v8766 = vadd.f32 %v8696, %v6689
        %v8767 = vadd.f32 %v8701, %v6690
        %v8768 = vadd.f32 %v8706, %v6691
        %v8769 = vadd.f32 %v8711, %v6692
        %v8770 = vadd.f32 %v8716, %v6693
        %v8771 = vadd.f32 %v8721, %v6694
        %v8772 = vadd.f32 %v8726, %v6695
        %v8773 = vadd.f32 %v8731, %v6696
        %v8774 = vadd.f32 %v8736, %v6697
        %v8775 = vadd.f32 %v8741, %v6698
        %8776 = vst.msk [vmem:[%s473] sm:$0xff] %vm506, %v8744
        %8777 = vst.msk [vmem:[%s473 + $0x8] sm:$0xff] %vm506, %v8745
        %8778 = vst.msk [vmem:[%s473 + $0x10] sm:$0xff] %vm506, %v8746
        %8779 = vst.msk [vmem:[%s473 + $0x18] sm:$0xff] %vm506, %v8747
        %8780 = vst.msk [vmem:[%s473 + $0x20] sm:$0xff] %vm506, %v8748
        %8781 = vst.msk [vmem:[%s473 + $0x28] sm:$0xff] %vm506, %v8749
        %8782 = vst.msk [vmem:[%s473 + $0x30] sm:$0xff] %vm506, %v8750
        %8783 = vst.msk [vmem:[%s473 + $0x38] sm:$0xff] %vm506, %v8751
        %8784 = vst.msk [vmem:[%s473 + $0x40] sm:$0xff] %vm506, %v8752
        %8785 = vst.msk [vmem:[%s473 + $0x48] sm:$0xff] %vm506, %v8753
        %8786 = vst.msk [vmem:[%s473 + $0x50] sm:$0xff] %vm506, %v8754
        %8787 = vst.msk [vmem:[%s473 + $0x58] sm:$0xff] %vm506, %v8755
        %8788 = vst.msk [vmem:[%s473 + $0x60] sm:$0xff] %vm506, %v8756
        %8789 = vst.msk [vmem:[%s473 + $0x68] sm:$0xff] %vm506, %v8757
        %8790 = vst.msk [vmem:[%s473 + $0x70] sm:$0xff] %vm506, %v8758
        %8791 = vst.msk [vmem:[%s473 + $0x78] sm:$0xff] %vm506, %v8759
        %8792 = vst.msk [vmem:[%s473 + $0x80] sm:$0xff] %vm506, %v8760
        %8793 = vst.msk [vmem:[%s473 + $0x88] sm:$0xff] %vm506, %v8761
        %8794 = vst.msk [vmem:[%s473 + $0x90] sm:$0xff] %vm506, %v8762
        %8795 = vst.msk [vmem:[%s473 + $0x98] sm:$0xff] %vm506, %v8763
        %8796 = vst.msk [vmem:[%s473 + $0xa0] sm:$0xff] %vm506, %v8764
        %8797 = vst.msk [vmem:[%s473 + $0xa8] sm:$0xff] %vm506, %v8765
        %8798 = vst.msk [vmem:[%s473 + $0xb0] sm:$0xff] %vm506, %v8766
        %8799 = vst.msk [vmem:[%s473 + $0xb8] sm:$0xff] %vm506, %v8767
        %8800 = vst.msk [vmem:[%s473 + $0xc0] sm:$0xff] %vm506, %v8768
        %8801 = vst.msk [vmem:[%s473 + $0xc8] sm:$0xff] %vm506, %v8769
        %8802 = vst.msk [vmem:[%s473 + $0xd0] sm:$0xff] %vm506, %v8770
        %8803 = vst.msk [vmem:[%s473 + $0xd8] sm:$0xff] %vm506, %v8771
        %8804 = vst.msk [vmem:[%s473 + $0xe0] sm:$0xff] %vm506, %v8772
        %8805 = vst.msk [vmem:[%s473 + $0xe8] sm:$0xff] %vm506, %v8773
        %8806 = vst.msk [vmem:[%s473 + $0xf0] sm:$0xff] %vm506, %v8774
        %8807 = vst.msk [vmem:[%s473 + $0xf8] sm:$0xff] %vm506, %v8775
        %s8808 = sand.u32 %s317, 1
        %s8809 = scalar_lea.sflag [#allocation4], %s8808
        %s8810 = sand.u32 %s317, 1
        %s8811 = smul.addr %s8810, 256
        %s8812 = scalar_lea.vmem [#allocation7], %s8811
        // Predicated region
        $region81: #{swin_block_forward.1} parent=71 // pred_check
          %p8813 = pneg %p327
        $region82: #{swin_block_forward.1} parent=71 // pred_check_branch
          %8815 = sbr.rel (%p8813) target = $region84
        $region83: #{swin_block_forward.1} parent=71 // pred_region
          %s8817 = ssub.s32 4096, 4096
          %8818 = vsyncadd %s8809, %s8817
          %s8819 = smul.addr %s31, 32
          %s8820 = smul.addr %s8819, 128
          %s8821 = scalar_lea.hbm %s13, %s8820
          %s8822 = sshll.u32 %s8812, 4
          %s8823 = int_to_ptr.vmem [resolvable:$true] %s8822
          %8828 = dma.vmem_to_hbm [thread:$0]  %s8823, 4096, %s8821, %s8809, 128, 128, 8
        $region84: #{swin_block_forward.1} parent=71 // pred_fallthru
          _
      $region72: #{swin_block_forward.1} parent=5 // pred_fallthru
        _
      %p8829 = scmp.le.s32.totalorder 2, %s26
      // Predicated region
      $region85: #{swin_block_forward.1} parent=5 // pred_check
        %p8830 = pneg %p8829
      $region86: #{swin_block_forward.1} parent=5 // pred_check_branch
        %8832 = sbr.rel (%p8830) target = $region88
      $region87: #{swin_block_forward.1} parent=5 // pred_region
        %s8833 = ssub.s32 %s26, 2
        // Predicated region
        $region89: #{swin_block_forward.1} parent=87 // pred_check
          %p8834 = pneg %p333
        $region90: #{swin_block_forward.1} parent=87 // pred_check_branch
          %8836 = sbr.rel (%p8834) target = $region92
        $region91: #{swin_block_forward.1} parent=87 // pred_region
          %s8837 = sand.u32 %s318, 1
          %s8838 = scalar_lea.sflag [#allocation4], %s8837
          %s8839 = sand.u32 %s318, 1
          %s8840 = smul.addr %s8839, 256
          %s8841 = scalar_lea.vmem [#allocation7], %s8840
          %8842 = dma.done %s8838, 4096
        $region92: #{swin_block_forward.1} parent=87 // pred_fallthru
          _
      $region88: #{swin_block_forward.1} parent=5 // pred_fallthru
        _
    $region6: #{swin_block_forward.1} parent=1 // loop_footer
      %s30 = sadd.s32 1, %s26
    $region7: #{swin_block_forward.1} parent=1 // loop_footer_branch
      %25 = sbr.rel target = $region3
    $region8: #{swin_block_forward.1} parent=1 // loop_exit
      _
    %8843 = vsyncpa [#allocation3], 1
    %s8844 = scalar_lea.sflag [#allocation3], 1
    %8845 = vsyncpa %s8844, 1
    %8846 = vsyncpa [#allocation6], 1
    %8847 = vsyncpa [#allocation4], 1
    %s8848 = scalar_lea.sflag [#allocation4], 1
    %8849 = vsyncpa %s8848, 1

</llo_original>
